<compile_context>
chip_gen: v7x
topology: tpu7x:2x2x1
jax: 0.10.0
libtpu: 0.0.40
codegen_flags: <defaults>
</compile_context>

<pallas_src>
import functools

import jax
import jax.numpy as jnp
import numpy as np
from jax import lax
from jax.experimental import pallas as pl
from jax.experimental.pallas import tpu as pltpu


def _round_up(x, m):
    return (x + m - 1) // m * m


# ------------------------------- kernel --------------------------------------

def _conv_mapping_kernel(x_ref, w_ref, mask_h_ref, mask_b_ref, pool_ref,
                         out_ref, scr_h, scr_b, *, n_res, cp, w_head, w_body):
    """One image: head 3x3 conv -> 2x2 maxpool -> n_res resblocks -> tail conv.

    x_ref:    (1, cp, nh)  f32   channel-padded, spatially flat (row*W + col)
    w_ref:    (L, cp, K)   bf16  stacked taps + bias column, K = 9*cp + 8
    mask_*:   (9, n)       f32   0/1 border masks per conv tap
    pool_ref: (nh, nb)     bf16  0/1 maxpool lane-selection matrix
    out_ref:  (1, cp, nb)  f32
    scr_*:    (K, n)       bf16  stacked-tap slab (one per stage width)
    """
    k0 = 9 * cp
    nh = x_ref.shape[-1]
    nb = out_ref.shape[-1]

    # Constant rows of the stacked slab: row k0 = 1.0 (multiplies the bias
    # column of the stacked weights), rows k0+1 .. K-1 = 0.  Written once.
    def init_bias_rows(scr, n):
        rows = lax.broadcasted_iota(jnp.int32, (8, n), 0)
        scr[pl.ds(k0, 8), :] = jnp.where(rows == 0, 1.0, 0.0).astype(scr.dtype)

    init_bias_rows(scr_h, nh)
    init_bias_rows(scr_b, nb)

    def stack_taps(x, mask_ref, scr, w_img, n):
        # 8 chained rolls: column shifts (+-1) once, then row shifts (+-W).
        col = {0: x,
               1: pltpu.roll(x, n - 1, axis=1),    # reads x[f + 1]
               -1: pltpu.roll(x, 1, axis=1)}       # reads x[f - 1]
        t = 0
        for oy in (-1, 0, 1):
            for ox in (-1, 0, 1):
                xs = col[ox]
                if oy != 0:
                    xs = pltpu.roll(xs, (-oy * w_img) % n, axis=1)
                if not (oy == 0 and ox == 0):      # center mask is all-ones
                    xs = xs * mask_ref[pl.ds(t, 1), :]
                scr[pl.ds(t * cp, cp), :] = xs.astype(scr.dtype)
                t += 1

    def conv(x, layer, mask_ref, scr, w_img, n):
        # One tap-fused MXU matmul: (cp, K) @ (K, n); bias included via the
        # ones-row / bias-column trick.  f32 accumulation.
        stack_taps(x, mask_ref, scr, w_img, n)
        return jnp.dot(w_ref[layer], scr[...],
                       preferred_element_type=jnp.float32)

    x = x_ref[0]                                              # (cp, nh) f32

    # ---- head: 3x3 conv, then fused MaxPool2d(2, 2) --------------------------
    y = conv(x, 0, mask_h_ref, scr_h, w_head, nh)
    m = y
    for off in (1, w_head, w_head + 1):                       # 2x2 window max
        m = jnp.maximum(m, pltpu.roll(y, nh - off, axis=1))
    # 0/1 selection matmul picks the even (row, col) lanes and re-flattens to
    # the pooled lane layout (selected lanes never hit slab wrap-around; lanes
    # beyond hp*wp map to zero columns).
    x = jnp.dot(m.astype(pool_ref.dtype), pool_ref[...],
                preferred_element_type=jnp.float32)           # (cp, nb)

    # ---- body: n_res x [conv -> relu -> conv -> (+x)] -------------------------
    for r in range(n_res):
        h = jnp.maximum(conv(x, 1 + 2 * r, mask_b_ref, scr_b, w_body, nb), 0.0)
        x = conv(h, 2 + 2 * r, mask_b_ref, scr_b, w_body, nb) + x

    # ---- tail: 3x3 conv (cp -> out_dim, zero-padded to cp rows) --------------
    out = conv(x, 1 + 2 * n_res, mask_b_ref, scr_b, w_body, nb)
    out_ref[0] = out.astype(out_ref.dtype)


# --------------------------- host-side constants ------------------------------

def _tap_masks(height, width, n_pad):
    """(9, n_pad) 0/1 masks for the 9 conv taps ('same' padding), per image."""
    f = np.arange(n_pad)
    i, j = f // width, f % width
    valid = f < height * width
    masks = []
    for oy in (-1, 0, 1):
        for ox in (-1, 0, 1):
            m = (valid & (i + oy >= 0) & (i + oy < height) &
                 (j + ox >= 0) & (j + ox < width))
            masks.append(m.astype(np.float32))
    return jnp.asarray(np.stack(masks))


def _pool_matrix(height, width, nh_pad, nb_pad):
    """(nh_pad, nb_pad) 0/1 matrix selecting even (row, col) lanes, per image."""
    hp, wp = height // 2, width // 2
    p = np.zeros((nh_pad, nb_pad), np.float32)
    for io in range(hp):
        for jo in range(wp):
            p[2 * io * width + 2 * jo, io * wp + jo] = 1.0
    return jnp.asarray(p, jnp.bfloat16)


def _stack_conv(wt, bs, cp, k_tot):
    """(Cout,Cin,3,3) + (Cout,) -> (cp, k_tot) stacked weight row.

    Column layout: [t*cp + ci] for tap t = ky*3 + kx; bias at column 9*cp.
    """
    cout, cin = wt.shape[0], wt.shape[1]
    taps = jnp.transpose(wt, (2, 3, 0, 1)).reshape(9, cout, cin)
    taps = jnp.pad(taps, ((0, 0), (0, cp - cout), (0, cp - cin)))
    w_row = jnp.transpose(taps, (1, 0, 2)).reshape(cp, 9 * cp)
    bias = jnp.pad(bs.reshape(cout, 1),
                   ((0, cp - cout), (0, k_tot - 9 * cp - 1)))
    return jnp.concatenate([w_row, bias], axis=1)


# ------------------------------ forward wrapper --------------------------------

def conv_mapping_forward(feature, pose, params):
    """feature: (B, c, h, w), pose: (B, l, l) -> (B, out_dim, h//2, w//2)."""
    b, c, h, w = feature.shape
    assert h % 2 == 0 and w % 2 == 0, "MaxPool2d(2,2) needs even H, W"
    l = pose.shape[1]
    pose_r = jnp.broadcast_to(pose.reshape(b, l * l, 1, 1), (b, l * l, h, w))
    feat = jnp.concatenate([feature, pose_r], axis=1)          # (B, Cin, H, W)
    cin = feat.shape[1]

    hp, wp = h // 2, w // 2
    out_dim = params["tail"][0].shape[0]
    n_res = len(params["res"])

    cp = _round_up(cin, 16)          # channel pad: bf16 sublane-pack multiple
    assert out_dim <= cp
    nh = _round_up(h * w, 128)       # head lanes  (full-lane rolls/stores)
    nb = _round_up(hp * wp, 128)     # body lanes
    k_tot = 9 * cp + 8               # stacked taps + bias/ones block

    # Activations: (B, cp, nh) f32, lane = row*W + col; zero channel/lane pad.
    x = feat.reshape(b, cin, h * w).astype(jnp.float32)
    x = jnp.pad(x, ((0, 0), (0, cp - cin), (0, nh - h * w)))

    # Lane-dense bf16 stacked weights: (n_layers, cp, k_tot), bias folded in.
    layers = [params["head"]]
    for blk in params["res"]:
        layers.extend(blk)
    layers.append(params["tail"])
    w_all = jnp.stack([_stack_conv(wt, bs, cp, k_tot)
                       for wt, bs in layers]).astype(jnp.bfloat16)

    mask_h = _tap_masks(h, w, nh)                  # (9, nh) f32
    mask_b = _tap_masks(hp, wp, nb)                # (9, nb) f32
    pool_m = _pool_matrix(h, w, nh, nb)            # (nh, nb) bf16

    kernel = functools.partial(_conv_mapping_kernel, n_res=n_res, cp=cp,
                               w_head=w, w_body=wp)

    out_p = pl.pallas_call(
        kernel,
        out_shape=jax.ShapeDtypeStruct((b, cp, nb), jnp.float32),
        grid_spec=pltpu.PrefetchScalarGridSpec(
            num_scalar_prefetch=0,
            grid=(b,),
            in_specs=[
                pl.BlockSpec((1, cp, nh), lambda i: (i, 0, 0)),   # x (per image)
                pl.BlockSpec(w_all.shape, lambda i: (0, 0, 0)),   # weights
                pl.BlockSpec((9, nh), lambda i: (0, 0)),          # head masks
                pl.BlockSpec((9, nb), lambda i: (0, 0)),          # body masks
                pl.BlockSpec((nh, nb), lambda i: (0, 0)),         # pool select
            ],
            out_specs=pl.BlockSpec((1, cp, nb), lambda i: (i, 0, 0)),
            scratch_shapes=[pltpu.VMEM((k_tot, nh), jnp.bfloat16),
                            pltpu.VMEM((k_tot, nb), jnp.bfloat16)]),
        compiler_params=pltpu.CompilerParams(
            dimension_semantics=("parallel",)),
    )(x, w_all, mask_h, mask_b, pool_m)

    return out_p[:, :out_dim, :hp * wp].reshape(b, out_dim, hp, wp)


# --------------------------------- params --------------------------------------

def init_params(key, in_dim, out_dim=12, kernel_size=3, n_resblocks=5):
    def conv_params(k, cout, cin):
        k1, k2 = jax.random.split(k)
        fan_in = cin * kernel_size * kernel_size
        scale = 1.0 / np.sqrt(fan_in)
        w = jax.random.uniform(k1, (cout, cin, kernel_size, kernel_size),
                               jnp.float32, -scale, scale)
        b = jax.random.uniform(k2, (cout,), jnp.float32, -scale, scale)
        return w, b

    keys = jax.random.split(key, 2 + 2 * n_resblocks)
    return {
        "head": conv_params(keys[0], in_dim, in_dim),
        "res": [(conv_params(keys[1 + 2 * i], in_dim, in_dim),
                 conv_params(keys[2 + 2 * i], in_dim, in_dim))
                for i in range(n_resblocks)],
        "tail": conv_params(keys[-1], out_dim, in_dim),
    }


# --------------------------- pure-JAX reference --------------------------------

def _ref_conv(x, w, b):
    y = lax.conv_general_dilated(x, w, (1, 1), "SAME",
                                 dimension_numbers=("NCHW", "OIHW", "NCHW"))
    return y + b.reshape(1, -1, 1, 1)


def _ref_forward(feature, pose, params):
    B, c, h, w = feature.shape
    l = pose.shape[1]
    pose_r = jnp.broadcast_to(pose.reshape(B, l * l, 1, 1), (B, l * l, h, w))
    x = jnp.concatenate([feature, pose_r], axis=1)
    hw, hb = params["head"]
    x = _ref_conv(x, hw, hb)
    x = lax.reduce_window(x, -jnp.inf, lax.max, (1, 1, 2, 2), (1, 1, 2, 2),
                          "VALID")
    for (w1, b1), (w2, b2) in params["res"]:
        r = jnp.maximum(_ref_conv(x, w1, b1), 0.0)
        x = _ref_conv(r, w2, b2) + x
    tw, tb = params["tail"]
    return _ref_conv(x, tw, tb)


# ----------------------------------- main ---------------------------------------

if __name__ == "__main__":
    key = jax.random.PRNGKey(0)
    k_feat, k_pose, k_param = jax.random.split(key, 3)

    B, c, h, w = 2, 4, 16, 16
    l = 4
    in_dim = c + l * l        # feature channels + flattened pose
    out_dim = 12

    feature = jax.random.normal(k_feat, (B, c, h, w), jnp.float32)
    pose = jax.random.normal(k_pose, (B, l, l), jnp.float32)
    params = init_params(k_param, in_dim, out_dim=out_dim, n_resblocks=5)

    fwd = jax.jit(conv_mapping_forward)
    out = jax.block_until_ready(fwd(feature, pose, params))

    ref = jax.block_until_ready(_ref_forward(feature, pose, params))
    assert out.shape == (B, out_dim, h // 2, w // 2)
    # bf16 MXU operands (weights / stacked taps / pool) vs an f32 reference:
    # tolerance is widened accordingly (12 conv layers of ~2^-9 rounding).
    np.testing.assert_allclose(np.asarray(out), np.asarray(ref),
                               rtol=1e-1, atol=5e-2)

    print("KERNEL_OK")
</pallas_src>

<mosaic_0001>
module attributes {stable_mosaic.version = 11 : i64} {
  func.func @_conv_mapping_kernel(%arg0: i32, %arg1: memref<1x32x256xf32, #tpu.memory_space<vmem>>, %arg2: memref<12x32x296xbf16, #tpu.memory_space<vmem>>, %arg3: memref<9x256xf32, #tpu.memory_space<vmem>>, %arg4: memref<9x128xf32, #tpu.memory_space<vmem>>, %arg5: memref<256x128xbf16, #tpu.memory_space<vmem>>, %arg6: memref<1x32x128xf32, #tpu.memory_space<vmem>>, %arg7: memref<296x256xbf16, #tpu.memory_space<vmem>>, %arg8: memref<296x128xbf16, #tpu.memory_space<vmem>>) attributes {dimension_semantics = [#tpu.dimension_semantics<parallel>], iteration_bounds = array<i64: 2>, scalar_prefetch = 0 : i64, scratch_operands = 2 : i64, tpu.core_type = #tpu.core_type<tc>, window_params = [{transform_indices = @transform_0, window_bounds = array<i64: 1, 32, 256>}, {pipeline_mode = #tpu.pipeline_mode<synchronous>, transform_indices = @transform_1, window_bounds = array<i64: 12, 32, 296>}, {pipeline_mode = #tpu.pipeline_mode<synchronous>, transform_indices = @transform_2, window_bounds = array<i64: 9, 256>}, {pipeline_mode = #tpu.pipeline_mode<synchronous>, transform_indices = @transform_3, window_bounds = array<i64: 9, 128>}, {pipeline_mode = #tpu.pipeline_mode<synchronous>, transform_indices = @transform_4, window_bounds = array<i64: 256, 128>}, {transform_indices = @transform_5, window_bounds = array<i64: 1, 32, 128>}]} {
    %0 = tpu.iota {dimensions = array<i32: 0>} : vector<8x256xi32>
    %c0_i32 = arith.constant 0 : i32
    %1 = vector.broadcast %c0_i32 : i32 to vector<8x256xi32>
    %2 = arith.cmpi eq, %0, %1 : vector<8x256xi32>
    %cst = arith.constant 1.000000e+00 : f32
    %cst_0 = arith.constant 0.000000e+00 : f32
    %3 = vector.broadcast %cst : f32 to vector<8x256xf32>
    %4 = vector.broadcast %cst_0 : f32 to vector<8x256xf32>
    %5 = arith.select %2, %3, %4 : vector<8x256xi1>, vector<8x256xf32>
    %6 = arith.truncf %5 : vector<8x256xf32> to vector<8x256xbf16>
    %c288 = arith.constant 288 : index
    %c0 = arith.constant 0 : index
    %7 = vector.load %arg7[%c288, %c0] : memref<296x256xbf16, #tpu.memory_space<vmem>>, vector<8x256xbf16>
    tpu.vector_store %arg7[%c288, %c0], %6 {strides = array<i32>} : memref<296x256xbf16, #tpu.memory_space<vmem>>, vector<8x256xbf16>,
    %8 = tpu.iota {dimensions = array<i32: 0>} : vector<8x128xi32>
    %c0_i32_1 = arith.constant 0 : i32
    %9 = vector.broadcast %c0_i32_1 : i32 to vector<8x128xi32>
    %10 = arith.cmpi eq, %8, %9 : vector<8x128xi32>
    %cst_2 = arith.constant 1.000000e+00 : f32
    %cst_3 = arith.constant 0.000000e+00 : f32
    %11 = vector.broadcast %cst_2 : f32 to vector<8x128xf32>
    %12 = vector.broadcast %cst_3 : f32 to vector<8x128xf32>
    %13 = arith.select %10, %11, %12 : vector<8x128xi1>, vector<8x128xf32>
    %14 = arith.truncf %13 : vector<8x128xf32> to vector<8x128xbf16>
    %c288_4 = arith.constant 288 : index
    %c0_5 = arith.constant 0 : index
    %15 = vector.load %arg8[%c288_4, %c0_5] : memref<296x128xbf16, #tpu.memory_space<vmem>>, vector<8x128xbf16>
    tpu.vector_store %arg8[%c288_4, %c0_5], %14 {strides = array<i32>} : memref<296x128xbf16, #tpu.memory_space<vmem>>, vector<8x128xbf16>,
    %c0_6 = arith.constant 0 : index
    %c0_7 = arith.constant 0 : index
    %c0_8 = arith.constant 0 : index
    %16 = vector.load %arg1[%c0_6, %c0_7, %c0_8] : memref<1x32x256xf32, #tpu.memory_space<vmem>>, vector<1x32x256xf32>
    %17 = vector.shape_cast %16 : vector<1x32x256xf32> to vector<32x256xf32>
    %c255_i32 = arith.constant 255 : i32
    %18 = tpu.dynamic_rotate %17 by %c255_i32 dim 1 : vector<32x256xf32>, i32 -> vector<32x256xf32>
    %c1_i32 = arith.constant 1 : i32
    %19 = tpu.dynamic_rotate %17 by %c1_i32 dim 1 : vector<32x256xf32>, i32 -> vector<32x256xf32>
    %c16_i32 = arith.constant 16 : i32
    %20 = tpu.dynamic_rotate %19 by %c16_i32 dim 1 : vector<32x256xf32>, i32 -> vector<32x256xf32>
    %c0_9 = arith.constant 0 : index
    %c0_10 = arith.constant 0 : index
    %21 = vector.load %arg3[%c0_9, %c0_10] : memref<9x256xf32, #tpu.memory_space<vmem>>, vector<1x256xf32>
    %22 = vector.broadcast %21 : vector<1x256xf32> to vector<32x256xf32>
    %23 = arith.mulf %20, %22 : vector<32x256xf32>
    %24 = arith.truncf %23 : vector<32x256xf32> to vector<32x256xbf16>
    %c0_11 = arith.constant 0 : index
    %c0_12 = arith.constant 0 : index
    %25 = vector.load %arg7[%c0_11, %c0_12] : memref<296x256xbf16, #tpu.memory_space<vmem>>, vector<32x256xbf16>
    tpu.vector_store %arg7[%c0_11, %c0_12], %24 {strides = array<i32>} : memref<296x256xbf16, #tpu.memory_space<vmem>>, vector<32x256xbf16>,
    %c16_i32_13 = arith.constant 16 : i32
    %26 = tpu.dynamic_rotate %17 by %c16_i32_13 dim 1 : vector<32x256xf32>, i32 -> vector<32x256xf32>
    %c1 = arith.constant 1 : index
    %c0_14 = arith.constant 0 : index
    %27 = vector.load %arg3[%c1, %c0_14] : memref<9x256xf32, #tpu.memory_space<vmem>>, vector<1x256xf32>
    %28 = vector.broadcast %27 : vector<1x256xf32> to vector<32x256xf32>
    %29 = arith.mulf %26, %28 : vector<32x256xf32>
    %30 = arith.truncf %29 : vector<32x256xf32> to vector<32x256xbf16>
    %c32 = arith.constant 32 : index
    %c0_15 = arith.constant 0 : index
    %31 = vector.load %arg7[%c32, %c0_15] : memref<296x256xbf16, #tpu.memory_space<vmem>>, vector<32x256xbf16>
    tpu.vector_store %arg7[%c32, %c0_15], %30 {strides = array<i32>} : memref<296x256xbf16, #tpu.memory_space<vmem>>, vector<32x256xbf16>,
    %c16_i32_16 = arith.constant 16 : i32
    %32 = tpu.dynamic_rotate %18 by %c16_i32_16 dim 1 : vector<32x256xf32>, i32 -> vector<32x256xf32>
    %c2 = arith.constant 2 : index
    %c0_17 = arith.constant 0 : index
    %33 = vector.load %arg3[%c2, %c0_17] : memref<9x256xf32, #tpu.memory_space<vmem>>, vector<1x256xf32>
    %34 = vector.broadcast %33 : vector<1x256xf32> to vector<32x256xf32>
    %35 = arith.mulf %32, %34 : vector<32x256xf32>
    %36 = arith.truncf %35 : vector<32x256xf32> to vector<32x256xbf16>
    %c64 = arith.constant 64 : index
    %c0_18 = arith.constant 0 : index
    %37 = vector.load %arg7[%c64, %c0_18] : memref<296x256xbf16, #tpu.memory_space<vmem>>, vector<32x256xbf16>
    tpu.vector_store %arg7[%c64, %c0_18], %36 {strides = array<i32>} : memref<296x256xbf16, #tpu.memory_space<vmem>>, vector<32x256xbf16>,
    %c3 = arith.constant 3 : index
    %c0_19 = arith.constant 0 : index
    %38 = vector.load %arg3[%c3, %c0_19] : memref<9x256xf32, #tpu.memory_space<vmem>>, vector<1x256xf32>
    %39 = vector.broadcast %38 : vector<1x256xf32> to vector<32x256xf32>
    %40 = arith.mulf %19, %39 : vector<32x256xf32>
    %41 = arith.truncf %40 : vector<32x256xf32> to vector<32x256xbf16>
    %c96 = arith.constant 96 : index
    %c0_20 = arith.constant 0 : index
    %42 = vector.load %arg7[%c96, %c0_20] : memref<296x256xbf16, #tpu.memory_space<vmem>>, vector<32x256xbf16>
    tpu.vector_store %arg7[%c96, %c0_20], %41 {strides = array<i32>} : memref<296x256xbf16, #tpu.memory_space<vmem>>, vector<32x256xbf16>,
    %43 = arith.truncf %17 : vector<32x256xf32> to vector<32x256xbf16>
    %c128 = arith.constant 128 : index
    %c0_21 = arith.constant 0 : index
    %44 = vector.load %arg7[%c128, %c0_21] : memref<296x256xbf16, #tpu.memory_space<vmem>>, vector<32x256xbf16>
    tpu.vector_store %arg7[%c128, %c0_21], %43 {strides = array<i32>} : memref<296x256xbf16, #tpu.memory_space<vmem>>, vector<32x256xbf16>,
    %c5 = arith.constant 5 : index
    %c0_22 = arith.constant 0 : index
    %45 = vector.load %arg3[%c5, %c0_22] : memref<9x256xf32, #tpu.memory_space<vmem>>, vector<1x256xf32>
    %46 = vector.broadcast %45 : vector<1x256xf32> to vector<32x256xf32>
    %47 = arith.mulf %18, %46 : vector<32x256xf32>
    %48 = arith.truncf %47 : vector<32x256xf32> to vector<32x256xbf16>
    %c160 = arith.constant 160 : index
    %c0_23 = arith.constant 0 : index
    %49 = vector.load %arg7[%c160, %c0_23] : memref<296x256xbf16, #tpu.memory_space<vmem>>, vector<32x256xbf16>
    tpu.vector_store %arg7[%c160, %c0_23], %48 {strides = array<i32>} : memref<296x256xbf16, #tpu.memory_space<vmem>>, vector<32x256xbf16>,
    %c240_i32 = arith.constant 240 : i32
    %50 = tpu.dynamic_rotate %19 by %c240_i32 dim 1 : vector<32x256xf32>, i32 -> vector<32x256xf32>
    %c6 = arith.constant 6 : index
    %c0_24 = arith.constant 0 : index
    %51 = vector.load %arg3[%c6, %c0_24] : memref<9x256xf32, #tpu.memory_space<vmem>>, vector<1x256xf32>
    %52 = vector.broadcast %51 : vector<1x256xf32> to vector<32x256xf32>
    %53 = arith.mulf %50, %52 : vector<32x256xf32>
    %54 = arith.truncf %53 : vector<32x256xf32> to vector<32x256xbf16>
    %c192 = arith.constant 192 : index
    %c0_25 = arith.constant 0 : index
    %55 = vector.load %arg7[%c192, %c0_25] : memref<296x256xbf16, #tpu.memory_space<vmem>>, vector<32x256xbf16>
    tpu.vector_store %arg7[%c192, %c0_25], %54 {strides = array<i32>} : memref<296x256xbf16, #tpu.memory_space<vmem>>, vector<32x256xbf16>,
    %c240_i32_26 = arith.constant 240 : i32
    %56 = tpu.dynamic_rotate %17 by %c240_i32_26 dim 1 : vector<32x256xf32>, i32 -> vector<32x256xf32>
    %c7 = arith.constant 7 : index
    %c0_27 = arith.constant 0 : index
    %57 = vector.load %arg3[%c7, %c0_27] : memref<9x256xf32, #tpu.memory_space<vmem>>, vector<1x256xf32>
    %58 = vector.broadcast %57 : vector<1x256xf32> to vector<32x256xf32>
    %59 = arith.mulf %56, %58 : vector<32x256xf32>
    %60 = arith.truncf %59 : vector<32x256xf32> to vector<32x256xbf16>
    %c224 = arith.constant 224 : index
    %c0_28 = arith.constant 0 : index
    %61 = vector.load %arg7[%c224, %c0_28] : memref<296x256xbf16, #tpu.memory_space<vmem>>, vector<32x256xbf16>
    tpu.vector_store %arg7[%c224, %c0_28], %60 {strides = array<i32>} : memref<296x256xbf16, #tpu.memory_space<vmem>>, vector<32x256xbf16>,
    %c240_i32_29 = arith.constant 240 : i32
    %62 = tpu.dynamic_rotate %18 by %c240_i32_29 dim 1 : vector<32x256xf32>, i32 -> vector<32x256xf32>
    %c8 = arith.constant 8 : index
    %c0_30 = arith.constant 0 : index
    %63 = vector.load %arg3[%c8, %c0_30] : memref<9x256xf32, #tpu.memory_space<vmem>>, vector<1x256xf32>
    %64 = vector.broadcast %63 : vector<1x256xf32> to vector<32x256xf32>
    %65 = arith.mulf %62, %64 : vector<32x256xf32>
    %66 = arith.truncf %65 : vector<32x256xf32> to vector<32x256xbf16>
    %c256 = arith.constant 256 : index
    %c0_31 = arith.constant 0 : index
    %67 = vector.load %arg7[%c256, %c0_31] : memref<296x256xbf16, #tpu.memory_space<vmem>>, vector<32x256xbf16>
    tpu.vector_store %arg7[%c256, %c0_31], %66 {strides = array<i32>} : memref<296x256xbf16, #tpu.memory_space<vmem>>, vector<32x256xbf16>,
    %c0_32 = arith.constant 0 : index
    %c0_33 = arith.constant 0 : index
    %c0_34 = arith.constant 0 : index
    %68 = vector.load %arg2[%c0_32, %c0_33, %c0_34] : memref<12x32x296xbf16, #tpu.memory_space<vmem>>, vector<1x32x296xbf16>
    %69 = vector.shape_cast %68 : vector<1x32x296xbf16> to vector<32x296xbf16>
    %c0_35 = arith.constant 0 : index
    %c0_36 = arith.constant 0 : index
    %70 = vector.load %arg7[%c0_35, %c0_36] : memref<296x256xbf16, #tpu.memory_space<vmem>>, vector<296x256xbf16>
    %cst_37 = arith.constant dense<0.000000e+00> : vector<32x256xf32>
    %71 = tpu.matmul %69, %70, %cst_37 {dimension_numbers = #tpu.dot_dimension_numbers<[1], [0], [0], [1], [0, 0, 1, 1], [], []>} : vector<32x296xbf16>, vector<296x256xbf16>, vector<32x256xf32> -> vector<32x256xf32>
    %c255_i32_38 = arith.constant 255 : i32
    %72 = tpu.dynamic_rotate %71 by %c255_i32_38 dim 1 : vector<32x256xf32>, i32 -> vector<32x256xf32>
    %73 = arith.maximumf %71, %72 : vector<32x256xf32>
    %c240_i32_39 = arith.constant 240 : i32
    %74 = tpu.dynamic_rotate %71 by %c240_i32_39 dim 1 : vector<32x256xf32>, i32 -> vector<32x256xf32>
    %75 = arith.maximumf %73, %74 : vector<32x256xf32>
    %c239_i32 = arith.constant 239 : i32
    %76 = tpu.dynamic_rotate %71 by %c239_i32 dim 1 : vector<32x256xf32>, i32 -> vector<32x256xf32>
    %77 = arith.maximumf %75, %76 : vector<32x256xf32>
    %78 = arith.truncf %77 : vector<32x256xf32> to vector<32x256xbf16>
    %c0_40 = arith.constant 0 : index
    %c0_41 = arith.constant 0 : index
    %79 = vector.load %arg5[%c0_40, %c0_41] : memref<256x128xbf16, #tpu.memory_space<vmem>>, vector<256x128xbf16>
    %cst_42 = arith.constant dense<0.000000e+00> : vector<32x128xf32>
    %80 = tpu.matmul %78, %79, %cst_42 {dimension_numbers = #tpu.dot_dimension_numbers<[1], [0], [0], [1], [0, 0, 1, 1], [], []>} : vector<32x256xbf16>, vector<256x128xbf16>, vector<32x128xf32> -> vector<32x128xf32>
    %c127_i32 = arith.constant 127 : i32
    %81 = tpu.dynamic_rotate %80 by %c127_i32 dim 1 : vector<32x128xf32>, i32 -> vector<32x128xf32>
    %c1_i32_43 = arith.constant 1 : i32
    %82 = tpu.dynamic_rotate %80 by %c1_i32_43 dim 1 : vector<32x128xf32>, i32 -> vector<32x128xf32>
    %c8_i32 = arith.constant 8 : i32
    %83 = tpu.dynamic_rotate %82 by %c8_i32 dim 1 : vector<32x128xf32>, i32 -> vector<32x128xf32>
    %c0_44 = arith.constant 0 : index
    %c0_45 = arith.constant 0 : index
    %84 = vector.load %arg4[%c0_44, %c0_45] : memref<9x128xf32, #tpu.memory_space<vmem>>, vector<1x128xf32>
    %85 = vector.broadcast %84 : vector<1x128xf32> to vector<32x128xf32>
    %86 = arith.mulf %83, %85 : vector<32x128xf32>
    %87 = arith.truncf %86 : vector<32x128xf32> to vector<32x128xbf16>
    %c0_46 = arith.constant 0 : index
    %c0_47 = arith.constant 0 : index
    %88 = vector.load %arg8[%c0_46, %c0_47] : memref<296x128xbf16, #tpu.memory_space<vmem>>, vector<32x128xbf16>
    tpu.vector_store %arg8[%c0_46, %c0_47], %87 {strides = array<i32>} : memref<296x128xbf16, #tpu.memory_space<vmem>>, vector<32x128xbf16>,
    %c8_i32_48 = arith.constant 8 : i32
    %89 = tpu.dynamic_rotate %80 by %c8_i32_48 dim 1 : vector<32x128xf32>, i32 -> vector<32x128xf32>
    %c1_49 = arith.constant 1 : index
    %c0_50 = arith.constant 0 : index
    %90 = vector.load %arg4[%c1_49, %c0_50] : memref<9x128xf32, #tpu.memory_space<vmem>>, vector<1x128xf32>
    %91 = vector.broadcast %90 : vector<1x128xf32> to vector<32x128xf32>
    %92 = arith.mulf %89, %91 : vector<32x128xf32>
    %93 = arith.truncf %92 : vector<32x128xf32> to vector<32x128xbf16>
    %c32_51 = arith.constant 32 : index
    %c0_52 = arith.constant 0 : index
    %94 = vector.load %arg8[%c32_51, %c0_52] : memref<296x128xbf16, #tpu.memory_space<vmem>>, vector<32x128xbf16>
    tpu.vector_store %arg8[%c32_51, %c0_52], %93 {strides = array<i32>} : memref<296x128xbf16, #tpu.memory_space<vmem>>, vector<32x128xbf16>,
    %c8_i32_53 = arith.constant 8 : i32
    %95 = tpu.dynamic_rotate %81 by %c8_i32_53 dim 1 : vector<32x128xf32>, i32 -> vector<32x128xf32>
    %c2_54 = arith.constant 2 : index
    %c0_55 = arith.constant 0 : index
    %96 = vector.load %arg4[%c2_54, %c0_55] : memref<9x128xf32, #tpu.memory_space<vmem>>, vector<1x128xf32>
    %97 = vector.broadcast %96 : vector<1x128xf32> to vector<32x128xf32>
    %98 = arith.mulf %95, %97 : vector<32x128xf32>
    %99 = arith.truncf %98 : vector<32x128xf32> to vector<32x128xbf16>
    %c64_56 = arith.constant 64 : index
    %c0_57 = arith.constant 0 : index
    %100 = vector.load %arg8[%c64_56, %c0_57] : memref<296x128xbf16, #tpu.memory_space<vmem>>, vector<32x128xbf16>
    tpu.vector_store %arg8[%c64_56, %c0_57], %99 {strides = array<i32>} : memref<296x128xbf16, #tpu.memory_space<vmem>>, vector<32x128xbf16>,
    %c3_58 = arith.constant 3 : index
    %c0_59 = arith.constant 0 : index
    %101 = vector.load %arg4[%c3_58, %c0_59] : memref<9x128xf32, #tpu.memory_space<vmem>>, vector<1x128xf32>
    %102 = vector.broadcast %101 : vector<1x128xf32> to vector<32x128xf32>
    %103 = arith.mulf %82, %102 : vector<32x128xf32>
    %104 = arith.truncf %103 : vector<32x128xf32> to vector<32x128xbf16>
    %c96_60 = arith.constant 96 : index
    %c0_61 = arith.constant 0 : index
    %105 = vector.load %arg8[%c96_60, %c0_61] : memref<296x128xbf16, #tpu.memory_space<vmem>>, vector<32x128xbf16>
    tpu.vector_store %arg8[%c96_60, %c0_61], %104 {strides = array<i32>} : memref<296x128xbf16, #tpu.memory_space<vmem>>, vector<32x128xbf16>,
    %106 = arith.truncf %80 : vector<32x128xf32> to vector<32x128xbf16>
    %c128_62 = arith.constant 128 : index
    %c0_63 = arith.constant 0 : index
    %107 = vector.load %arg8[%c128_62, %c0_63] : memref<296x128xbf16, #tpu.memory_space<vmem>>, vector<32x128xbf16>
    tpu.vector_store %arg8[%c128_62, %c0_63], %106 {strides = array<i32>} : memref<296x128xbf16, #tpu.memory_space<vmem>>, vector<32x128xbf16>,
    %c5_64 = arith.constant 5 : index
    %c0_65 = arith.constant 0 : index
    %108 = vector.load %arg4[%c5_64, %c0_65] : memref<9x128xf32, #tpu.memory_space<vmem>>, vector<1x128xf32>
    %109 = vector.broadcast %108 : vector<1x128xf32> to vector<32x128xf32>
    %110 = arith.mulf %81, %109 : vector<32x128xf32>
    %111 = arith.truncf %110 : vector<32x128xf32> to vector<32x128xbf16>
    %c160_66 = arith.constant 160 : index
    %c0_67 = arith.constant 0 : index
    %112 = vector.load %arg8[%c160_66, %c0_67] : memref<296x128xbf16, #tpu.memory_space<vmem>>, vector<32x128xbf16>
    tpu.vector_store %arg8[%c160_66, %c0_67], %111 {strides = array<i32>} : memref<296x128xbf16, #tpu.memory_space<vmem>>, vector<32x128xbf16>,
    %c120_i32 = arith.constant 120 : i32
    %113 = tpu.dynamic_rotate %82 by %c120_i32 dim 1 : vector<32x128xf32>, i32 -> vector<32x128xf32>
    %c6_68 = arith.constant 6 : index
    %c0_69 = arith.constant 0 : index
    %114 = vector.load %arg4[%c6_68, %c0_69] : memref<9x128xf32, #tpu.memory_space<vmem>>, vector<1x128xf32>
    %115 = vector.broadcast %114 : vector<1x128xf32> to vector<32x128xf32>
    %116 = arith.mulf %113, %115 : vector<32x128xf32>
    %117 = arith.truncf %116 : vector<32x128xf32> to vector<32x128xbf16>
    %c192_70 = arith.constant 192 : index
    %c0_71 = arith.constant 0 : index
    %118 = vector.load %arg8[%c192_70, %c0_71] : memref<296x128xbf16, #tpu.memory_space<vmem>>, vector<32x128xbf16>
    tpu.vector_store %arg8[%c192_70, %c0_71], %117 {strides = array<i32>} : memref<296x128xbf16, #tpu.memory_space<vmem>>, vector<32x128xbf16>,
    %c120_i32_72 = arith.constant 120 : i32
    %119 = tpu.dynamic_rotate %80 by %c120_i32_72 dim 1 : vector<32x128xf32>, i32 -> vector<32x128xf32>
    %c7_73 = arith.constant 7 : index
    %c0_74 = arith.constant 0 : index
    %120 = vector.load %arg4[%c7_73, %c0_74] : memref<9x128xf32, #tpu.memory_space<vmem>>, vector<1x128xf32>
    %121 = vector.broadcast %120 : vector<1x128xf32> to vector<32x128xf32>
    %122 = arith.mulf %119, %121 : vector<32x128xf32>
    %123 = arith.truncf %122 : vector<32x128xf32> to vector<32x128xbf16>
    %c224_75 = arith.constant 224 : index
    %c0_76 = arith.constant 0 : index
    %124 = vector.load %arg8[%c224_75, %c0_76] : memref<296x128xbf16, #tpu.memory_space<vmem>>, vector<32x128xbf16>
    tpu.vector_store %arg8[%c224_75, %c0_76], %123 {strides = array<i32>} : memref<296x128xbf16, #tpu.memory_space<vmem>>, vector<32x128xbf16>,
    %c120_i32_77 = arith.constant 120 : i32
    %125 = tpu.dynamic_rotate %81 by %c120_i32_77 dim 1 : vector<32x128xf32>, i32 -> vector<32x128xf32>
    %c8_78 = arith.constant 8 : index
    %c0_79 = arith.constant 0 : index
    %126 = vector.load %arg4[%c8_78, %c0_79] : memref<9x128xf32, #tpu.memory_space<vmem>>, vector<1x128xf32>
    %127 = vector.broadcast %126 : vector<1x128xf32> to vector<32x128xf32>
    %128 = arith.mulf %125, %127 : vector<32x128xf32>
    %129 = arith.truncf %128 : vector<32x128xf32> to vector<32x128xbf16>
    %c256_80 = arith.constant 256 : index
    %c0_81 = arith.constant 0 : index
    %130 = vector.load %arg8[%c256_80, %c0_81] : memref<296x128xbf16, #tpu.memory_space<vmem>>, vector<32x128xbf16>
    tpu.vector_store %arg8[%c256_80, %c0_81], %129 {strides = array<i32>} : memref<296x128xbf16, #tpu.memory_space<vmem>>, vector<32x128xbf16>,
    %c1_82 = arith.constant 1 : index
    %c0_83 = arith.constant 0 : index
    %c0_84 = arith.constant 0 : index
    %131 = vector.load %arg2[%c1_82, %c0_83, %c0_84] : memref<12x32x296xbf16, #tpu.memory_space<vmem>>, vector<1x32x296xbf16>
    %132 = vector.shape_cast %131 : vector<1x32x296xbf16> to vector<32x296xbf16>
    %c0_85 = arith.constant 0 : index
    %c0_86 = arith.constant 0 : index
    %133 = vector.load %arg8[%c0_85, %c0_86] : memref<296x128xbf16, #tpu.memory_space<vmem>>, vector<296x128xbf16>
    %cst_87 = arith.constant dense<0.000000e+00> : vector<32x128xf32>
    %134 = tpu.matmul %132, %133, %cst_87 {dimension_numbers = #tpu.dot_dimension_numbers<[1], [0], [0], [1], [0, 0, 1, 1], [], []>} : vector<32x296xbf16>, vector<296x128xbf16>, vector<32x128xf32> -> vector<32x128xf32>
    %cst_88 = arith.constant 0.000000e+00 : f32
    %135 = vector.broadcast %cst_88 : f32 to vector<32x128xf32>
    %136 = arith.maximumf %134, %135 : vector<32x128xf32>
    %c127_i32_89 = arith.constant 127 : i32
    %137 = tpu.dynamic_rotate %136 by %c127_i32_89 dim 1 : vector<32x128xf32>, i32 -> vector<32x128xf32>
    %c1_i32_90 = arith.constant 1 : i32
    %138 = tpu.dynamic_rotate %136 by %c1_i32_90 dim 1 : vector<32x128xf32>, i32 -> vector<32x128xf32>
    %c8_i32_91 = arith.constant 8 : i32
    %139 = tpu.dynamic_rotate %138 by %c8_i32_91 dim 1 : vector<32x128xf32>, i32 -> vector<32x128xf32>
    %c0_92 = arith.constant 0 : index
    %c0_93 = arith.constant 0 : index
    %140 = vector.load %arg4[%c0_92, %c0_93] : memref<9x128xf32, #tpu.memory_space<vmem>>, vector<1x128xf32>
    %141 = vector.broadcast %140 : vector<1x128xf32> to vector<32x128xf32>
    %142 = arith.mulf %139, %141 : vector<32x128xf32>
    %143 = arith.truncf %142 : vector<32x128xf32> to vector<32x128xbf16>
    %c0_94 = arith.constant 0 : index
    %c0_95 = arith.constant 0 : index
    %144 = vector.load %arg8[%c0_94, %c0_95] : memref<296x128xbf16, #tpu.memory_space<vmem>>, vector<32x128xbf16>
    tpu.vector_store %arg8[%c0_94, %c0_95], %143 {strides = array<i32>} : memref<296x128xbf16, #tpu.memory_space<vmem>>, vector<32x128xbf16>,
    %c8_i32_96 = arith.constant 8 : i32
    %145 = tpu.dynamic_rotate %136 by %c8_i32_96 dim 1 : vector<32x128xf32>, i32 -> vector<32x128xf32>
    %c1_97 = arith.constant 1 : index
    %c0_98 = arith.constant 0 : index
    %146 = vector.load %arg4[%c1_97, %c0_98] : memref<9x128xf32, #tpu.memory_space<vmem>>, vector<1x128xf32>
    %147 = vector.broadcast %146 : vector<1x128xf32> to vector<32x128xf32>
    %148 = arith.mulf %145, %147 : vector<32x128xf32>
    %149 = arith.truncf %148 : vector<32x128xf32> to vector<32x128xbf16>
    %c32_99 = arith.constant 32 : index
    %c0_100 = arith.constant 0 : index
    %150 = vector.load %arg8[%c32_99, %c0_100] : memref<296x128xbf16, #tpu.memory_space<vmem>>, vector<32x128xbf16>
    tpu.vector_store %arg8[%c32_99, %c0_100], %149 {strides = array<i32>} : memref<296x128xbf16, #tpu.memory_space<vmem>>, vector<32x128xbf16>,
    %c8_i32_101 = arith.constant 8 : i32
    %151 = tpu.dynamic_rotate %137 by %c8_i32_101 dim 1 : vector<32x128xf32>, i32 -> vector<32x128xf32>
    %c2_102 = arith.constant 2 : index
    %c0_103 = arith.constant 0 : index
    %152 = vector.load %arg4[%c2_102, %c0_103] : memref<9x128xf32, #tpu.memory_space<vmem>>, vector<1x128xf32>
    %153 = vector.broadcast %152 : vector<1x128xf32> to vector<32x128xf32>
    %154 = arith.mulf %151, %153 : vector<32x128xf32>
    %155 = arith.truncf %154 : vector<32x128xf32> to vector<32x128xbf16>
    %c64_104 = arith.constant 64 : index
    %c0_105 = arith.constant 0 : index
    %156 = vector.load %arg8[%c64_104, %c0_105] : memref<296x128xbf16, #tpu.memory_space<vmem>>, vector<32x128xbf16>
    tpu.vector_store %arg8[%c64_104, %c0_105], %155 {strides = array<i32>} : memref<296x128xbf16, #tpu.memory_space<vmem>>, vector<32x128xbf16>,
    %c3_106 = arith.constant 3 : index
    %c0_107 = arith.constant 0 : index
    %157 = vector.load %arg4[%c3_106, %c0_107] : memref<9x128xf32, #tpu.memory_space<vmem>>, vector<1x128xf32>
    %158 = vector.broadcast %157 : vector<1x128xf32> to vector<32x128xf32>
    %159 = arith.mulf %138, %158 : vector<32x128xf32>
    %160 = arith.truncf %159 : vector<32x128xf32> to vector<32x128xbf16>
    %c96_108 = arith.constant 96 : index
    %c0_109 = arith.constant 0 : index
    %161 = vector.load %arg8[%c96_108, %c0_109] : memref<296x128xbf16, #tpu.memory_space<vmem>>, vector<32x128xbf16>
    tpu.vector_store %arg8[%c96_108, %c0_109], %160 {strides = array<i32>} : memref<296x128xbf16, #tpu.memory_space<vmem>>, vector<32x128xbf16>,
    %162 = arith.truncf %136 : vector<32x128xf32> to vector<32x128xbf16>
    %c128_110 = arith.constant 128 : index
    %c0_111 = arith.constant 0 : index
    %163 = vector.load %arg8[%c128_110, %c0_111] : memref<296x128xbf16, #tpu.memory_space<vmem>>, vector<32x128xbf16>
    tpu.vector_store %arg8[%c128_110, %c0_111], %162 {strides = array<i32>} : memref<296x128xbf16, #tpu.memory_space<vmem>>, vector<32x128xbf16>,
    %c5_112 = arith.constant 5 : index
    %c0_113 = arith.constant 0 : index
    %164 = vector.load %arg4[%c5_112, %c0_113] : memref<9x128xf32, #tpu.memory_space<vmem>>, vector<1x128xf32>
    %165 = vector.broadcast %164 : vector<1x128xf32> to vector<32x128xf32>
    %166 = arith.mulf %137, %165 : vector<32x128xf32>
    %167 = arith.truncf %166 : vector<32x128xf32> to vector<32x128xbf16>
    %c160_114 = arith.constant 160 : index
    %c0_115 = arith.constant 0 : index
    %168 = vector.load %arg8[%c160_114, %c0_115] : memref<296x128xbf16, #tpu.memory_space<vmem>>, vector<32x128xbf16>
    tpu.vector_store %arg8[%c160_114, %c0_115], %167 {strides = array<i32>} : memref<296x128xbf16, #tpu.memory_space<vmem>>, vector<32x128xbf16>,
    %c120_i32_116 = arith.constant 120 : i32
    %169 = tpu.dynamic_rotate %138 by %c120_i32_116 dim 1 : vector<32x128xf32>, i32 -> vector<32x128xf32>
    %c6_117 = arith.constant 6 : index
    %c0_118 = arith.constant 0 : index
    %170 = vector.load %arg4[%c6_117, %c0_118] : memref<9x128xf32, #tpu.memory_space<vmem>>, vector<1x128xf32>
    %171 = vector.broadcast %170 : vector<1x128xf32> to vector<32x128xf32>
    %172 = arith.mulf %169, %171 : vector<32x128xf32>
    %173 = arith.truncf %172 : vector<32x128xf32> to vector<32x128xbf16>
    %c192_119 = arith.constant 192 : index
    %c0_120 = arith.constant 0 : index
    %174 = vector.load %arg8[%c192_119, %c0_120] : memref<296x128xbf16, #tpu.memory_space<vmem>>, vector<32x128xbf16>
    tpu.vector_store %arg8[%c192_119, %c0_120], %173 {strides = array<i32>} : memref<296x128xbf16, #tpu.memory_space<vmem>>, vector<32x128xbf16>,
    %c120_i32_121 = arith.constant 120 : i32
    %175 = tpu.dynamic_rotate %136 by %c120_i32_121 dim 1 : vector<32x128xf32>, i32 -> vector<32x128xf32>
    %c7_122 = arith.constant 7 : index
    %c0_123 = arith.constant 0 : index
    %176 = vector.load %arg4[%c7_122, %c0_123] : memref<9x128xf32, #tpu.memory_space<vmem>>, vector<1x128xf32>
    %177 = vector.broadcast %176 : vector<1x128xf32> to vector<32x128xf32>
    %178 = arith.mulf %175, %177 : vector<32x128xf32>
    %179 = arith.truncf %178 : vector<32x128xf32> to vector<32x128xbf16>
    %c224_124 = arith.constant 224 : index
    %c0_125 = arith.constant 0 : index
    %180 = vector.load %arg8[%c224_124, %c0_125] : memref<296x128xbf16, #tpu.memory_space<vmem>>, vector<32x128xbf16>
    tpu.vector_store %arg8[%c224_124, %c0_125], %179 {strides = array<i32>} : memref<296x128xbf16, #tpu.memory_space<vmem>>, vector<32x128xbf16>,
    %c120_i32_126 = arith.constant 120 : i32
    %181 = tpu.dynamic_rotate %137 by %c120_i32_126 dim 1 : vector<32x128xf32>, i32 -> vector<32x128xf32>
    %c8_127 = arith.constant 8 : index
    %c0_128 = arith.constant 0 : index
    %182 = vector.load %arg4[%c8_127, %c0_128] : memref<9x128xf32, #tpu.memory_space<vmem>>, vector<1x128xf32>
    %183 = vector.broadcast %182 : vector<1x128xf32> to vector<32x128xf32>
    %184 = arith.mulf %181, %183 : vector<32x128xf32>
    %185 = arith.truncf %184 : vector<32x128xf32> to vector<32x128xbf16>
    %c256_129 = arith.constant 256 : index
    %c0_130 = arith.constant 0 : index
    %186 = vector.load %arg8[%c256_129, %c0_130] : memref<296x128xbf16, #tpu.memory_space<vmem>>, vector<32x128xbf16>
    tpu.vector_store %arg8[%c256_129, %c0_130], %185 {strides = array<i32>} : memref<296x128xbf16, #tpu.memory_space<vmem>>, vector<32x128xbf16>,
    %c2_131 = arith.constant 2 : index
    %c0_132 = arith.constant 0 : index
    %c0_133 = arith.constant 0 : index
    %187 = vector.load %arg2[%c2_131, %c0_132, %c0_133] : memref<12x32x296xbf16, #tpu.memory_space<vmem>>, vector<1x32x296xbf16>
    %188 = vector.shape_cast %187 : vector<1x32x296xbf16> to vector<32x296xbf16>
    %c0_134 = arith.constant 0 : index
    %c0_135 = arith.constant 0 : index
    %189 = vector.load %arg8[%c0_134, %c0_135] : memref<296x128xbf16, #tpu.memory_space<vmem>>, vector<296x128xbf16>
    %cst_136 = arith.constant dense<0.000000e+00> : vector<32x128xf32>
    %190 = tpu.matmul %188, %189, %cst_136 {dimension_numbers = #tpu.dot_dimension_numbers<[1], [0], [0], [1], [0, 0, 1, 1], [], []>} : vector<32x296xbf16>, vector<296x128xbf16>, vector<32x128xf32> -> vector<32x128xf32>
    %191 = arith.addf %190, %80 : vector<32x128xf32>
    %c127_i32_137 = arith.constant 127 : i32
    %192 = tpu.dynamic_rotate %191 by %c127_i32_137 dim 1 : vector<32x128xf32>, i32 -> vector<32x128xf32>
    %c1_i32_138 = arith.constant 1 : i32
    %193 = tpu.dynamic_rotate %191 by %c1_i32_138 dim 1 : vector<32x128xf32>, i32 -> vector<32x128xf32>
    %c8_i32_139 = arith.constant 8 : i32
    %194 = tpu.dynamic_rotate %193 by %c8_i32_139 dim 1 : vector<32x128xf32>, i32 -> vector<32x128xf32>
    %c0_140 = arith.constant 0 : index
    %c0_141 = arith.constant 0 : index
    %195 = vector.load %arg4[%c0_140, %c0_141] : memref<9x128xf32, #tpu.memory_space<vmem>>, vector<1x128xf32>
    %196 = vector.broadcast %195 : vector<1x128xf32> to vector<32x128xf32>
    %197 = arith.mulf %194, %196 : vector<32x128xf32>
    %198 = arith.truncf %197 : vector<32x128xf32> to vector<32x128xbf16>
    %c0_142 = arith.constant 0 : index
    %c0_143 = arith.constant 0 : index
    %199 = vector.load %arg8[%c0_142, %c0_143] : memref<296x128xbf16, #tpu.memory_space<vmem>>, vector<32x128xbf16>
    tpu.vector_store %arg8[%c0_142, %c0_143], %198 {strides = array<i32>} : memref<296x128xbf16, #tpu.memory_space<vmem>>, vector<32x128xbf16>,
    %c8_i32_144 = arith.constant 8 : i32
    %200 = tpu.dynamic_rotate %191 by %c8_i32_144 dim 1 : vector<32x128xf32>, i32 -> vector<32x128xf32>
    %c1_145 = arith.constant 1 : index
    %c0_146 = arith.constant 0 : index
    %201 = vector.load %arg4[%c1_145, %c0_146] : memref<9x128xf32, #tpu.memory_space<vmem>>, vector<1x128xf32>
    %202 = vector.broadcast %201 : vector<1x128xf32> to vector<32x128xf32>
    %203 = arith.mulf %200, %202 : vector<32x128xf32>
    %204 = arith.truncf %203 : vector<32x128xf32> to vector<32x128xbf16>
    %c32_147 = arith.constant 32 : index
    %c0_148 = arith.constant 0 : index
    %205 = vector.load %arg8[%c32_147, %c0_148] : memref<296x128xbf16, #tpu.memory_space<vmem>>, vector<32x128xbf16>
    tpu.vector_store %arg8[%c32_147, %c0_148], %204 {strides = array<i32>} : memref<296x128xbf16, #tpu.memory_space<vmem>>, vector<32x128xbf16>,
    %c8_i32_149 = arith.constant 8 : i32
    %206 = tpu.dynamic_rotate %192 by %c8_i32_149 dim 1 : vector<32x128xf32>, i32 -> vector<32x128xf32>
    %c2_150 = arith.constant 2 : index
    %c0_151 = arith.constant 0 : index
    %207 = vector.load %arg4[%c2_150, %c0_151] : memref<9x128xf32, #tpu.memory_space<vmem>>, vector<1x128xf32>
    %208 = vector.broadcast %207 : vector<1x128xf32> to vector<32x128xf32>
    %209 = arith.mulf %206, %208 : vector<32x128xf32>
    %210 = arith.truncf %209 : vector<32x128xf32> to vector<32x128xbf16>
    %c64_152 = arith.constant 64 : index
    %c0_153 = arith.constant 0 : index
    %211 = vector.load %arg8[%c64_152, %c0_153] : memref<296x128xbf16, #tpu.memory_space<vmem>>, vector<32x128xbf16>
    tpu.vector_store %arg8[%c64_152, %c0_153], %210 {strides = array<i32>} : memref<296x128xbf16, #tpu.memory_space<vmem>>, vector<32x128xbf16>,
    %c3_154 = arith.constant 3 : index
    %c0_155 = arith.constant 0 : index
    %212 = vector.load %arg4[%c3_154, %c0_155] : memref<9x128xf32, #tpu.memory_space<vmem>>, vector<1x128xf32>
    %213 = vector.broadcast %212 : vector<1x128xf32> to vector<32x128xf32>
    %214 = arith.mulf %193, %213 : vector<32x128xf32>
    %215 = arith.truncf %214 : vector<32x128xf32> to vector<32x128xbf16>
    %c96_156 = arith.constant 96 : index
    %c0_157 = arith.constant 0 : index
    %216 = vector.load %arg8[%c96_156, %c0_157] : memref<296x128xbf16, #tpu.memory_space<vmem>>, vector<32x128xbf16>
    tpu.vector_store %arg8[%c96_156, %c0_157], %215 {strides = array<i32>} : memref<296x128xbf16, #tpu.memory_space<vmem>>, vector<32x128xbf16>,
    %217 = arith.truncf %191 : vector<32x128xf32> to vector<32x128xbf16>
    %c128_158 = arith.constant 128 : index
    %c0_159 = arith.constant 0 : index
    %218 = vector.load %arg8[%c128_158, %c0_159] : memref<296x128xbf16, #tpu.memory_space<vmem>>, vector<32x128xbf16>
    tpu.vector_store %arg8[%c128_158, %c0_159], %217 {strides = array<i32>} : memref<296x128xbf16, #tpu.memory_space<vmem>>, vector<32x128xbf16>,
    %c5_160 = arith.constant 5 : index
    %c0_161 = arith.constant 0 : index
    %219 = vector.load %arg4[%c5_160, %c0_161] : memref<9x128xf32, #tpu.memory_space<vmem>>, vector<1x128xf32>
    %220 = vector.broadcast %219 : vector<1x128xf32> to vector<32x128xf32>
    %221 = arith.mulf %192, %220 : vector<32x128xf32>
    %222 = arith.truncf %221 : vector<32x128xf32> to vector<32x128xbf16>
    %c160_162 = arith.constant 160 : index
    %c0_163 = arith.constant 0 : index
    %223 = vector.load %arg8[%c160_162, %c0_163] : memref<296x128xbf16, #tpu.memory_space<vmem>>, vector<32x128xbf16>
    tpu.vector_store %arg8[%c160_162, %c0_163], %222 {strides = array<i32>} : memref<296x128xbf16, #tpu.memory_space<vmem>>, vector<32x128xbf16>,
    %c120_i32_164 = arith.constant 120 : i32
    %224 = tpu.dynamic_rotate %193 by %c120_i32_164 dim 1 : vector<32x128xf32>, i32 -> vector<32x128xf32>
    %c6_165 = arith.constant 6 : index
    %c0_166 = arith.constant 0 : index
    %225 = vector.load %arg4[%c6_165, %c0_166] : memref<9x128xf32, #tpu.memory_space<vmem>>, vector<1x128xf32>
    %226 = vector.broadcast %225 : vector<1x128xf32> to vector<32x128xf32>
    %227 = arith.mulf %224, %226 : vector<32x128xf32>
    %228 = arith.truncf %227 : vector<32x128xf32> to vector<32x128xbf16>
    %c192_167 = arith.constant 192 : index
    %c0_168 = arith.constant 0 : index
    %229 = vector.load %arg8[%c192_167, %c0_168] : memref<296x128xbf16, #tpu.memory_space<vmem>>, vector<32x128xbf16>
    tpu.vector_store %arg8[%c192_167, %c0_168], %228 {strides = array<i32>} : memref<296x128xbf16, #tpu.memory_space<vmem>>, vector<32x128xbf16>,
    %c120_i32_169 = arith.constant 120 : i32
    %230 = tpu.dynamic_rotate %191 by %c120_i32_169 dim 1 : vector<32x128xf32>, i32 -> vector<32x128xf32>
    %c7_170 = arith.constant 7 : index
    %c0_171 = arith.constant 0 : index
    %231 = vector.load %arg4[%c7_170, %c0_171] : memref<9x128xf32, #tpu.memory_space<vmem>>, vector<1x128xf32>
    %232 = vector.broadcast %231 : vector<1x128xf32> to vector<32x128xf32>
    %233 = arith.mulf %230, %232 : vector<32x128xf32>
    %234 = arith.truncf %233 : vector<32x128xf32> to vector<32x128xbf16>
    %c224_172 = arith.constant 224 : index
    %c0_173 = arith.constant 0 : index
    %235 = vector.load %arg8[%c224_172, %c0_173] : memref<296x128xbf16, #tpu.memory_space<vmem>>, vector<32x128xbf16>
    tpu.vector_store %arg8[%c224_172, %c0_173], %234 {strides = array<i32>} : memref<296x128xbf16, #tpu.memory_space<vmem>>, vector<32x128xbf16>,
    %c120_i32_174 = arith.constant 120 : i32
    %236 = tpu.dynamic_rotate %192 by %c120_i32_174 dim 1 : vector<32x128xf32>, i32 -> vector<32x128xf32>
    %c8_175 = arith.constant 8 : index
    %c0_176 = arith.constant 0 : index
    %237 = vector.load %arg4[%c8_175, %c0_176] : memref<9x128xf32, #tpu.memory_space<vmem>>, vector<1x128xf32>
    %238 = vector.broadcast %237 : vector<1x128xf32> to vector<32x128xf32>
    %239 = arith.mulf %236, %238 : vector<32x128xf32>
    %240 = arith.truncf %239 : vector<32x128xf32> to vector<32x128xbf16>
    %c256_177 = arith.constant 256 : index
    %c0_178 = arith.constant 0 : index
    %241 = vector.load %arg8[%c256_177, %c0_178] : memref<296x128xbf16, #tpu.memory_space<vmem>>, vector<32x128xbf16>
    tpu.vector_store %arg8[%c256_177, %c0_178], %240 {strides = array<i32>} : memref<296x128xbf16, #tpu.memory_space<vmem>>, vector<32x128xbf16>,
    %c3_179 = arith.constant 3 : index
    %c0_180 = arith.constant 0 : index
    %c0_181 = arith.constant 0 : index
    %242 = vector.load %arg2[%c3_179, %c0_180, %c0_181] : memref<12x32x296xbf16, #tpu.memory_space<vmem>>, vector<1x32x296xbf16>
    %243 = vector.shape_cast %242 : vector<1x32x296xbf16> to vector<32x296xbf16>
    %c0_182 = arith.constant 0 : index
    %c0_183 = arith.constant 0 : index
    %244 = vector.load %arg8[%c0_182, %c0_183] : memref<296x128xbf16, #tpu.memory_space<vmem>>, vector<296x128xbf16>
    %cst_184 = arith.constant dense<0.000000e+00> : vector<32x128xf32>
    %245 = tpu.matmul %243, %244, %cst_184 {dimension_numbers = #tpu.dot_dimension_numbers<[1], [0], [0], [1], [0, 0, 1, 1], [], []>} : vector<32x296xbf16>, vector<296x128xbf16>, vector<32x128xf32> -> vector<32x128xf32>
    %cst_185 = arith.constant 0.000000e+00 : f32
    %246 = vector.broadcast %cst_185 : f32 to vector<32x128xf32>
    %247 = arith.maximumf %245, %246 : vector<32x128xf32>
    %c127_i32_186 = arith.constant 127 : i32
    %248 = tpu.dynamic_rotate %247 by %c127_i32_186 dim 1 : vector<32x128xf32>, i32 -> vector<32x128xf32>
    %c1_i32_187 = arith.constant 1 : i32
    %249 = tpu.dynamic_rotate %247 by %c1_i32_187 dim 1 : vector<32x128xf32>, i32 -> vector<32x128xf32>
    %c8_i32_188 = arith.constant 8 : i32
    %250 = tpu.dynamic_rotate %249 by %c8_i32_188 dim 1 : vector<32x128xf32>, i32 -> vector<32x128xf32>
    %c0_189 = arith.constant 0 : index
    %c0_190 = arith.constant 0 : index
    %251 = vector.load %arg4[%c0_189, %c0_190] : memref<9x128xf32, #tpu.memory_space<vmem>>, vector<1x128xf32>
    %252 = vector.broadcast %251 : vector<1x128xf32> to vector<32x128xf32>
    %253 = arith.mulf %250, %252 : vector<32x128xf32>
    %254 = arith.truncf %253 : vector<32x128xf32> to vector<32x128xbf16>
    %c0_191 = arith.constant 0 : index
    %c0_192 = arith.constant 0 : index
    %255 = vector.load %arg8[%c0_191, %c0_192] : memref<296x128xbf16, #tpu.memory_space<vmem>>, vector<32x128xbf16>
    tpu.vector_store %arg8[%c0_191, %c0_192], %254 {strides = array<i32>} : memref<296x128xbf16, #tpu.memory_space<vmem>>, vector<32x128xbf16>,
    %c8_i32_193 = arith.constant 8 : i32
    %256 = tpu.dynamic_rotate %247 by %c8_i32_193 dim 1 : vector<32x128xf32>, i32 -> vector<32x128xf32>
    %c1_194 = arith.constant 1 : index
    %c0_195 = arith.constant 0 : index
    %257 = vector.load %arg4[%c1_194, %c0_195] : memref<9x128xf32, #tpu.memory_space<vmem>>, vector<1x128xf32>
    %258 = vector.broadcast %257 : vector<1x128xf32> to vector<32x128xf32>
    %259 = arith.mulf %256, %258 : vector<32x128xf32>
    %260 = arith.truncf %259 : vector<32x128xf32> to vector<32x128xbf16>
    %c32_196 = arith.constant 32 : index
    %c0_197 = arith.constant 0 : index
    %261 = vector.load %arg8[%c32_196, %c0_197] : memref<296x128xbf16, #tpu.memory_space<vmem>>, vector<32x128xbf16>
    tpu.vector_store %arg8[%c32_196, %c0_197], %260 {strides = array<i32>} : memref<296x128xbf16, #tpu.memory_space<vmem>>, vector<32x128xbf16>,
    %c8_i32_198 = arith.constant 8 : i32
    %262 = tpu.dynamic_rotate %248 by %c8_i32_198 dim 1 : vector<32x128xf32>, i32 -> vector<32x128xf32>
    %c2_199 = arith.constant 2 : index
    %c0_200 = arith.constant 0 : index
    %263 = vector.load %arg4[%c2_199, %c0_200] : memref<9x128xf32, #tpu.memory_space<vmem>>, vector<1x128xf32>
    %264 = vector.broadcast %263 : vector<1x128xf32> to vector<32x128xf32>
    %265 = arith.mulf %262, %264 : vector<32x128xf32>
    %266 = arith.truncf %265 : vector<32x128xf32> to vector<32x128xbf16>
    %c64_201 = arith.constant 64 : index
    %c0_202 = arith.constant 0 : index
    %267 = vector.load %arg8[%c64_201, %c0_202] : memref<296x128xbf16, #tpu.memory_space<vmem>>, vector<32x128xbf16>
    tpu.vector_store %arg8[%c64_201, %c0_202], %266 {strides = array<i32>} : memref<296x128xbf16, #tpu.memory_space<vmem>>, vector<32x128xbf16>,
    %c3_203 = arith.constant 3 : index
    %c0_204 = arith.constant 0 : index
    %268 = vector.load %arg4[%c3_203, %c0_204] : memref<9x128xf32, #tpu.memory_space<vmem>>, vector<1x128xf32>
    %269 = vector.broadcast %268 : vector<1x128xf32> to vector<32x128xf32>
    %270 = arith.mulf %249, %269 : vector<32x128xf32>
    %271 = arith.truncf %270 : vector<32x128xf32> to vector<32x128xbf16>
    %c96_205 = arith.constant 96 : index
    %c0_206 = arith.constant 0 : index
    %272 = vector.load %arg8[%c96_205, %c0_206] : memref<296x128xbf16, #tpu.memory_space<vmem>>, vector<32x128xbf16>
    tpu.vector_store %arg8[%c96_205, %c0_206], %271 {strides = array<i32>} : memref<296x128xbf16, #tpu.memory_space<vmem>>, vector<32x128xbf16>,
    %273 = arith.truncf %247 : vector<32x128xf32> to vector<32x128xbf16>
    %c128_207 = arith.constant 128 : index
    %c0_208 = arith.constant 0 : index
    %274 = vector.load %arg8[%c128_207, %c0_208] : memref<296x128xbf16, #tpu.memory_space<vmem>>, vector<32x128xbf16>
    tpu.vector_store %arg8[%c128_207, %c0_208], %273 {strides = array<i32>} : memref<296x128xbf16, #tpu.memory_space<vmem>>, vector<32x128xbf16>,
    %c5_209 = arith.constant 5 : index
    %c0_210 = arith.constant 0 : index
    %275 = vector.load %arg4[%c5_209, %c0_210] : memref<9x128xf32, #tpu.memory_space<vmem>>, vector<1x128xf32>
    %276 = vector.broadcast %275 : vector<1x128xf32> to vector<32x128xf32>
    %277 = arith.mulf %248, %276 : vector<32x128xf32>
    %278 = arith.truncf %277 : vector<32x128xf32> to vector<32x128xbf16>
    %c160_211 = arith.constant 160 : index
    %c0_212 = arith.constant 0 : index
    %279 = vector.load %arg8[%c160_211, %c0_212] : memref<296x128xbf16, #tpu.memory_space<vmem>>, vector<32x128xbf16>
    tpu.vector_store %arg8[%c160_211, %c0_212], %278 {strides = array<i32>} : memref<296x128xbf16, #tpu.memory_space<vmem>>, vector<32x128xbf16>,
    %c120_i32_213 = arith.constant 120 : i32
    %280 = tpu.dynamic_rotate %249 by %c120_i32_213 dim 1 : vector<32x128xf32>, i32 -> vector<32x128xf32>
    %c6_214 = arith.constant 6 : index
    %c0_215 = arith.constant 0 : index
    %281 = vector.load %arg4[%c6_214, %c0_215] : memref<9x128xf32, #tpu.memory_space<vmem>>, vector<1x128xf32>
    %282 = vector.broadcast %281 : vector<1x128xf32> to vector<32x128xf32>
    %283 = arith.mulf %280, %282 : vector<32x128xf32>
    %284 = arith.truncf %283 : vector<32x128xf32> to vector<32x128xbf16>
    %c192_216 = arith.constant 192 : index
    %c0_217 = arith.constant 0 : index
    %285 = vector.load %arg8[%c192_216, %c0_217] : memref<296x128xbf16, #tpu.memory_space<vmem>>, vector<32x128xbf16>
    tpu.vector_store %arg8[%c192_216, %c0_217], %284 {strides = array<i32>} : memref<296x128xbf16, #tpu.memory_space<vmem>>, vector<32x128xbf16>,
    %c120_i32_218 = arith.constant 120 : i32
    %286 = tpu.dynamic_rotate %247 by %c120_i32_218 dim 1 : vector<32x128xf32>, i32 -> vector<32x128xf32>
    %c7_219 = arith.constant 7 : index
    %c0_220 = arith.constant 0 : index
    %287 = vector.load %arg4[%c7_219, %c0_220] : memref<9x128xf32, #tpu.memory_space<vmem>>, vector<1x128xf32>
    %288 = vector.broadcast %287 : vector<1x128xf32> to vector<32x128xf32>
    %289 = arith.mulf %286, %288 : vector<32x128xf32>
    %290 = arith.truncf %289 : vector<32x128xf32> to vector<32x128xbf16>
    %c224_221 = arith.constant 224 : index
    %c0_222 = arith.constant 0 : index
    %291 = vector.load %arg8[%c224_221, %c0_222] : memref<296x128xbf16, #tpu.memory_space<vmem>>, vector<32x128xbf16>
    tpu.vector_store %arg8[%c224_221, %c0_222], %290 {strides = array<i32>} : memref<296x128xbf16, #tpu.memory_space<vmem>>, vector<32x128xbf16>,
    %c120_i32_223 = arith.constant 120 : i32
    %292 = tpu.dynamic_rotate %248 by %c120_i32_223 dim 1 : vector<32x128xf32>, i32 -> vector<32x128xf32>
    %c8_224 = arith.constant 8 : index
    %c0_225 = arith.constant 0 : index
    %293 = vector.load %arg4[%c8_224, %c0_225] : memref<9x128xf32, #tpu.memory_space<vmem>>, vector<1x128xf32>
    %294 = vector.broadcast %293 : vector<1x128xf32> to vector<32x128xf32>
    %295 = arith.mulf %292, %294 : vector<32x128xf32>
    %296 = arith.truncf %295 : vector<32x128xf32> to vector<32x128xbf16>
    %c256_226 = arith.constant 256 : index
    %c0_227 = arith.constant 0 : index
    %297 = vector.load %arg8[%c256_226, %c0_227] : memref<296x128xbf16, #tpu.memory_space<vmem>>, vector<32x128xbf16>
    tpu.vector_store %arg8[%c256_226, %c0_227], %296 {strides = array<i32>} : memref<296x128xbf16, #tpu.memory_space<vmem>>, vector<32x128xbf16>,
    %c4 = arith.constant 4 : index
    %c0_228 = arith.constant 0 : index
    %c0_229 = arith.constant 0 : index
    %298 = vector.load %arg2[%c4, %c0_228, %c0_229] : memref<12x32x296xbf16, #tpu.memory_space<vmem>>, vector<1x32x296xbf16>
    %299 = vector.shape_cast %298 : vector<1x32x296xbf16> to vector<32x296xbf16>
    %c0_230 = arith.constant 0 : index
    %c0_231 = arith.constant 0 : index
    %300 = vector.load %arg8[%c0_230, %c0_231] : memref<296x128xbf16, #tpu.memory_space<vmem>>, vector<296x128xbf16>
    %cst_232 = arith.constant dense<0.000000e+00> : vector<32x128xf32>
    %301 = tpu.matmul %299, %300, %cst_232 {dimension_numbers = #tpu.dot_dimension_numbers<[1], [0], [0], [1], [0, 0, 1, 1], [], []>} : vector<32x296xbf16>, vector<296x128xbf16>, vector<32x128xf32> -> vector<32x128xf32>
    %302 = arith.addf %301, %191 : vector<32x128xf32>
    %c127_i32_233 = arith.constant 127 : i32
    %303 = tpu.dynamic_rotate %302 by %c127_i32_233 dim 1 : vector<32x128xf32>, i32 -> vector<32x128xf32>
    %c1_i32_234 = arith.constant 1 : i32
    %304 = tpu.dynamic_rotate %302 by %c1_i32_234 dim 1 : vector<32x128xf32>, i32 -> vector<32x128xf32>
    %c8_i32_235 = arith.constant 8 : i32
    %305 = tpu.dynamic_rotate %304 by %c8_i32_235 dim 1 : vector<32x128xf32>, i32 -> vector<32x128xf32>
    %c0_236 = arith.constant 0 : index
    %c0_237 = arith.constant 0 : index
    %306 = vector.load %arg4[%c0_236, %c0_237] : memref<9x128xf32, #tpu.memory_space<vmem>>, vector<1x128xf32>
    %307 = vector.broadcast %306 : vector<1x128xf32> to vector<32x128xf32>
    %308 = arith.mulf %305, %307 : vector<32x128xf32>
    %309 = arith.truncf %308 : vector<32x128xf32> to vector<32x128xbf16>
    %c0_238 = arith.constant 0 : index
    %c0_239 = arith.constant 0 : index
    %310 = vector.load %arg8[%c0_238, %c0_239] : memref<296x128xbf16, #tpu.memory_space<vmem>>, vector<32x128xbf16>
    tpu.vector_store %arg8[%c0_238, %c0_239], %309 {strides = array<i32>} : memref<296x128xbf16, #tpu.memory_space<vmem>>, vector<32x128xbf16>,
    %c8_i32_240 = arith.constant 8 : i32
    %311 = tpu.dynamic_rotate %302 by %c8_i32_240 dim 1 : vector<32x128xf32>, i32 -> vector<32x128xf32>
    %c1_241 = arith.constant 1 : index
    %c0_242 = arith.constant 0 : index
    %312 = vector.load %arg4[%c1_241, %c0_242] : memref<9x128xf32, #tpu.memory_space<vmem>>, vector<1x128xf32>
    %313 = vector.broadcast %312 : vector<1x128xf32> to vector<32x128xf32>
    %314 = arith.mulf %311, %313 : vector<32x128xf32>
    %315 = arith.truncf %314 : vector<32x128xf32> to vector<32x128xbf16>
    %c32_243 = arith.constant 32 : index
    %c0_244 = arith.constant 0 : index
    %316 = vector.load %arg8[%c32_243, %c0_244] : memref<296x128xbf16, #tpu.memory_space<vmem>>, vector<32x128xbf16>
    tpu.vector_store %arg8[%c32_243, %c0_244], %315 {strides = array<i32>} : memref<296x128xbf16, #tpu.memory_space<vmem>>, vector<32x128xbf16>,
    %c8_i32_245 = arith.constant 8 : i32
    %317 = tpu.dynamic_rotate %303 by %c8_i32_245 dim 1 : vector<32x128xf32>, i32 -> vector<32x128xf32>
    %c2_246 = arith.constant 2 : index
    %c0_247 = arith.constant 0 : index
    %318 = vector.load %arg4[%c2_246, %c0_247] : memref<9x128xf32, #tpu.memory_space<vmem>>, vector<1x128xf32>
    %319 = vector.broadcast %318 : vector<1x128xf32> to vector<32x128xf32>
    %320 = arith.mulf %317, %319 : vector<32x128xf32>
    %321 = arith.truncf %320 : vector<32x128xf32> to vector<32x128xbf16>
    %c64_248 = arith.constant 64 : index
    %c0_249 = arith.constant 0 : index
    %322 = vector.load %arg8[%c64_248, %c0_249] : memref<296x128xbf16, #tpu.memory_space<vmem>>, vector<32x128xbf16>
    tpu.vector_store %arg8[%c64_248, %c0_249], %321 {strides = array<i32>} : memref<296x128xbf16, #tpu.memory_space<vmem>>, vector<32x128xbf16>,
    %c3_250 = arith.constant 3 : index
    %c0_251 = arith.constant 0 : index
    %323 = vector.load %arg4[%c3_250, %c0_251] : memref<9x128xf32, #tpu.memory_space<vmem>>, vector<1x128xf32>
    %324 = vector.broadcast %323 : vector<1x128xf32> to vector<32x128xf32>
    %325 = arith.mulf %304, %324 : vector<32x128xf32>
    %326 = arith.truncf %325 : vector<32x128xf32> to vector<32x128xbf16>
    %c96_252 = arith.constant 96 : index
    %c0_253 = arith.constant 0 : index
    %327 = vector.load %arg8[%c96_252, %c0_253] : memref<296x128xbf16, #tpu.memory_space<vmem>>, vector<32x128xbf16>
    tpu.vector_store %arg8[%c96_252, %c0_253], %326 {strides = array<i32>} : memref<296x128xbf16, #tpu.memory_space<vmem>>, vector<32x128xbf16>,
    %328 = arith.truncf %302 : vector<32x128xf32> to vector<32x128xbf16>
    %c128_254 = arith.constant 128 : index
    %c0_255 = arith.constant 0 : index
    %329 = vector.load %arg8[%c128_254, %c0_255] : memref<296x128xbf16, #tpu.memory_space<vmem>>, vector<32x128xbf16>
    tpu.vector_store %arg8[%c128_254, %c0_255], %328 {strides = array<i32>} : memref<296x128xbf16, #tpu.memory_space<vmem>>, vector<32x128xbf16>,
    %c5_256 = arith.constant 5 : index
    %c0_257 = arith.constant 0 : index
    %330 = vector.load %arg4[%c5_256, %c0_257] : memref<9x128xf32, #tpu.memory_space<vmem>>, vector<1x128xf32>
    %331 = vector.broadcast %330 : vector<1x128xf32> to vector<32x128xf32>
    %332 = arith.mulf %303, %331 : vector<32x128xf32>
    %333 = arith.truncf %332 : vector<32x128xf32> to vector<32x128xbf16>
    %c160_258 = arith.constant 160 : index
    %c0_259 = arith.constant 0 : index
    %334 = vector.load %arg8[%c160_258, %c0_259] : memref<296x128xbf16, #tpu.memory_space<vmem>>, vector<32x128xbf16>
    tpu.vector_store %arg8[%c160_258, %c0_259], %333 {strides = array<i32>} : memref<296x128xbf16, #tpu.memory_space<vmem>>, vector<32x128xbf16>,
    %c120_i32_260 = arith.constant 120 : i32
    %335 = tpu.dynamic_rotate %304 by %c120_i32_260 dim 1 : vector<32x128xf32>, i32 -> vector<32x128xf32>
    %c6_261 = arith.constant 6 : index
    %c0_262 = arith.constant 0 : index
    %336 = vector.load %arg4[%c6_261, %c0_262] : memref<9x128xf32, #tpu.memory_space<vmem>>, vector<1x128xf32>
    %337 = vector.broadcast %336 : vector<1x128xf32> to vector<32x128xf32>
    %338 = arith.mulf %335, %337 : vector<32x128xf32>
    %339 = arith.truncf %338 : vector<32x128xf32> to vector<32x128xbf16>
    %c192_263 = arith.constant 192 : index
    %c0_264 = arith.constant 0 : index
    %340 = vector.load %arg8[%c192_263, %c0_264] : memref<296x128xbf16, #tpu.memory_space<vmem>>, vector<32x128xbf16>
    tpu.vector_store %arg8[%c192_263, %c0_264], %339 {strides = array<i32>} : memref<296x128xbf16, #tpu.memory_space<vmem>>, vector<32x128xbf16>,
    %c120_i32_265 = arith.constant 120 : i32
    %341 = tpu.dynamic_rotate %302 by %c120_i32_265 dim 1 : vector<32x128xf32>, i32 -> vector<32x128xf32>
    %c7_266 = arith.constant 7 : index
    %c0_267 = arith.constant 0 : index
    %342 = vector.load %arg4[%c7_266, %c0_267] : memref<9x128xf32, #tpu.memory_space<vmem>>, vector<1x128xf32>
    %343 = vector.broadcast %342 : vector<1x128xf32> to vector<32x128xf32>
    %344 = arith.mulf %341, %343 : vector<32x128xf32>
    %345 = arith.truncf %344 : vector<32x128xf32> to vector<32x128xbf16>
    %c224_268 = arith.constant 224 : index
    %c0_269 = arith.constant 0 : index
    %346 = vector.load %arg8[%c224_268, %c0_269] : memref<296x128xbf16, #tpu.memory_space<vmem>>, vector<32x128xbf16>
    tpu.vector_store %arg8[%c224_268, %c0_269], %345 {strides = array<i32>} : memref<296x128xbf16, #tpu.memory_space<vmem>>, vector<32x128xbf16>,
    %c120_i32_270 = arith.constant 120 : i32
    %347 = tpu.dynamic_rotate %303 by %c120_i32_270 dim 1 : vector<32x128xf32>, i32 -> vector<32x128xf32>
    %c8_271 = arith.constant 8 : index
    %c0_272 = arith.constant 0 : index
    %348 = vector.load %arg4[%c8_271, %c0_272] : memref<9x128xf32, #tpu.memory_space<vmem>>, vector<1x128xf32>
    %349 = vector.broadcast %348 : vector<1x128xf32> to vector<32x128xf32>
    %350 = arith.mulf %347, %349 : vector<32x128xf32>
    %351 = arith.truncf %350 : vector<32x128xf32> to vector<32x128xbf16>
    %c256_273 = arith.constant 256 : index
    %c0_274 = arith.constant 0 : index
    %352 = vector.load %arg8[%c256_273, %c0_274] : memref<296x128xbf16, #tpu.memory_space<vmem>>, vector<32x128xbf16>
    tpu.vector_store %arg8[%c256_273, %c0_274], %351 {strides = array<i32>} : memref<296x128xbf16, #tpu.memory_space<vmem>>, vector<32x128xbf16>,
    %c5_275 = arith.constant 5 : index
    %c0_276 = arith.constant 0 : index
    %c0_277 = arith.constant 0 : index
    %353 = vector.load %arg2[%c5_275, %c0_276, %c0_277] : memref<12x32x296xbf16, #tpu.memory_space<vmem>>, vector<1x32x296xbf16>
    %354 = vector.shape_cast %353 : vector<1x32x296xbf16> to vector<32x296xbf16>
    %c0_278 = arith.constant 0 : index
    %c0_279 = arith.constant 0 : index
    %355 = vector.load %arg8[%c0_278, %c0_279] : memref<296x128xbf16, #tpu.memory_space<vmem>>, vector<296x128xbf16>
    %cst_280 = arith.constant dense<0.000000e+00> : vector<32x128xf32>
    %356 = tpu.matmul %354, %355, %cst_280 {dimension_numbers = #tpu.dot_dimension_numbers<[1], [0], [0], [1], [0, 0, 1, 1], [], []>} : vector<32x296xbf16>, vector<296x128xbf16>, vector<32x128xf32> -> vector<32x128xf32>
    %cst_281 = arith.constant 0.000000e+00 : f32
    %357 = vector.broadcast %cst_281 : f32 to vector<32x128xf32>
    %358 = arith.maximumf %356, %357 : vector<32x128xf32>
    %c127_i32_282 = arith.constant 127 : i32
    %359 = tpu.dynamic_rotate %358 by %c127_i32_282 dim 1 : vector<32x128xf32>, i32 -> vector<32x128xf32>
    %c1_i32_283 = arith.constant 1 : i32
    %360 = tpu.dynamic_rotate %358 by %c1_i32_283 dim 1 : vector<32x128xf32>, i32 -> vector<32x128xf32>
    %c8_i32_284 = arith.constant 8 : i32
    %361 = tpu.dynamic_rotate %360 by %c8_i32_284 dim 1 : vector<32x128xf32>, i32 -> vector<32x128xf32>
    %c0_285 = arith.constant 0 : index
    %c0_286 = arith.constant 0 : index
    %362 = vector.load %arg4[%c0_285, %c0_286] : memref<9x128xf32, #tpu.memory_space<vmem>>, vector<1x128xf32>
    %363 = vector.broadcast %362 : vector<1x128xf32> to vector<32x128xf32>
    %364 = arith.mulf %361, %363 : vector<32x128xf32>
    %365 = arith.truncf %364 : vector<32x128xf32> to vector<32x128xbf16>
    %c0_287 = arith.constant 0 : index
    %c0_288 = arith.constant 0 : index
    %366 = vector.load %arg8[%c0_287, %c0_288] : memref<296x128xbf16, #tpu.memory_space<vmem>>, vector<32x128xbf16>
    tpu.vector_store %arg8[%c0_287, %c0_288], %365 {strides = array<i32>} : memref<296x128xbf16, #tpu.memory_space<vmem>>, vector<32x128xbf16>,
    %c8_i32_289 = arith.constant 8 : i32
    %367 = tpu.dynamic_rotate %358 by %c8_i32_289 dim 1 : vector<32x128xf32>, i32 -> vector<32x128xf32>
    %c1_290 = arith.constant 1 : index
    %c0_291 = arith.constant 0 : index
    %368 = vector.load %arg4[%c1_290, %c0_291] : memref<9x128xf32, #tpu.memory_space<vmem>>, vector<1x128xf32>
    %369 = vector.broadcast %368 : vector<1x128xf32> to vector<32x128xf32>
    %370 = arith.mulf %367, %369 : vector<32x128xf32>
    %371 = arith.truncf %370 : vector<32x128xf32> to vector<32x128xbf16>
    %c32_292 = arith.constant 32 : index
    %c0_293 = arith.constant 0 : index
    %372 = vector.load %arg8[%c32_292, %c0_293] : memref<296x128xbf16, #tpu.memory_space<vmem>>, vector<32x128xbf16>
    tpu.vector_store %arg8[%c32_292, %c0_293], %371 {strides = array<i32>} : memref<296x128xbf16, #tpu.memory_space<vmem>>, vector<32x128xbf16>,
    %c8_i32_294 = arith.constant 8 : i32
    %373 = tpu.dynamic_rotate %359 by %c8_i32_294 dim 1 : vector<32x128xf32>, i32 -> vector<32x128xf32>
    %c2_295 = arith.constant 2 : index
    %c0_296 = arith.constant 0 : index
    %374 = vector.load %arg4[%c2_295, %c0_296] : memref<9x128xf32, #tpu.memory_space<vmem>>, vector<1x128xf32>
    %375 = vector.broadcast %374 : vector<1x128xf32> to vector<32x128xf32>
    %376 = arith.mulf %373, %375 : vector<32x128xf32>
    %377 = arith.truncf %376 : vector<32x128xf32> to vector<32x128xbf16>
    %c64_297 = arith.constant 64 : index
    %c0_298 = arith.constant 0 : index
    %378 = vector.load %arg8[%c64_297, %c0_298] : memref<296x128xbf16, #tpu.memory_space<vmem>>, vector<32x128xbf16>
    tpu.vector_store %arg8[%c64_297, %c0_298], %377 {strides = array<i32>} : memref<296x128xbf16, #tpu.memory_space<vmem>>, vector<32x128xbf16>,
    %c3_299 = arith.constant 3 : index
    %c0_300 = arith.constant 0 : index
    %379 = vector.load %arg4[%c3_299, %c0_300] : memref<9x128xf32, #tpu.memory_space<vmem>>, vector<1x128xf32>
    %380 = vector.broadcast %379 : vector<1x128xf32> to vector<32x128xf32>
    %381 = arith.mulf %360, %380 : vector<32x128xf32>
    %382 = arith.truncf %381 : vector<32x128xf32> to vector<32x128xbf16>
    %c96_301 = arith.constant 96 : index
    %c0_302 = arith.constant 0 : index
    %383 = vector.load %arg8[%c96_301, %c0_302] : memref<296x128xbf16, #tpu.memory_space<vmem>>, vector<32x128xbf16>
    tpu.vector_store %arg8[%c96_301, %c0_302], %382 {strides = array<i32>} : memref<296x128xbf16, #tpu.memory_space<vmem>>, vector<32x128xbf16>,
    %384 = arith.truncf %358 : vector<32x128xf32> to vector<32x128xbf16>
    %c128_303 = arith.constant 128 : index
    %c0_304 = arith.constant 0 : index
    %385 = vector.load %arg8[%c128_303, %c0_304] : memref<296x128xbf16, #tpu.memory_space<vmem>>, vector<32x128xbf16>
    tpu.vector_store %arg8[%c128_303, %c0_304], %384 {strides = array<i32>} : memref<296x128xbf16, #tpu.memory_space<vmem>>, vector<32x128xbf16>,
    %c5_305 = arith.constant 5 : index
    %c0_306 = arith.constant 0 : index
    %386 = vector.load %arg4[%c5_305, %c0_306] : memref<9x128xf32, #tpu.memory_space<vmem>>, vector<1x128xf32>
    %387 = vector.broadcast %386 : vector<1x128xf32> to vector<32x128xf32>
    %388 = arith.mulf %359, %387 : vector<32x128xf32>
    %389 = arith.truncf %388 : vector<32x128xf32> to vector<32x128xbf16>
    %c160_307 = arith.constant 160 : index
    %c0_308 = arith.constant 0 : index
    %390 = vector.load %arg8[%c160_307, %c0_308] : memref<296x128xbf16, #tpu.memory_space<vmem>>, vector<32x128xbf16>
    tpu.vector_store %arg8[%c160_307, %c0_308], %389 {strides = array<i32>} : memref<296x128xbf16, #tpu.memory_space<vmem>>, vector<32x128xbf16>,
    %c120_i32_309 = arith.constant 120 : i32
    %391 = tpu.dynamic_rotate %360 by %c120_i32_309 dim 1 : vector<32x128xf32>, i32 -> vector<32x128xf32>
    %c6_310 = arith.constant 6 : index
    %c0_311 = arith.constant 0 : index
    %392 = vector.load %arg4[%c6_310, %c0_311] : memref<9x128xf32, #tpu.memory_space<vmem>>, vector<1x128xf32>
    %393 = vector.broadcast %392 : vector<1x128xf32> to vector<32x128xf32>
    %394 = arith.mulf %391, %393 : vector<32x128xf32>
    %395 = arith.truncf %394 : vector<32x128xf32> to vector<32x128xbf16>
    %c192_312 = arith.constant 192 : index
    %c0_313 = arith.constant 0 : index
    %396 = vector.load %arg8[%c192_312, %c0_313] : memref<296x128xbf16, #tpu.memory_space<vmem>>, vector<32x128xbf16>
    tpu.vector_store %arg8[%c192_312, %c0_313], %395 {strides = array<i32>} : memref<296x128xbf16, #tpu.memory_space<vmem>>, vector<32x128xbf16>,
    %c120_i32_314 = arith.constant 120 : i32
    %397 = tpu.dynamic_rotate %358 by %c120_i32_314 dim 1 : vector<32x128xf32>, i32 -> vector<32x128xf32>
    %c7_315 = arith.constant 7 : index
    %c0_316 = arith.constant 0 : index
    %398 = vector.load %arg4[%c7_315, %c0_316] : memref<9x128xf32, #tpu.memory_space<vmem>>, vector<1x128xf32>
    %399 = vector.broadcast %398 : vector<1x128xf32> to vector<32x128xf32>
    %400 = arith.mulf %397, %399 : vector<32x128xf32>
    %401 = arith.truncf %400 : vector<32x128xf32> to vector<32x128xbf16>
    %c224_317 = arith.constant 224 : index
    %c0_318 = arith.constant 0 : index
    %402 = vector.load %arg8[%c224_317, %c0_318] : memref<296x128xbf16, #tpu.memory_space<vmem>>, vector<32x128xbf16>
    tpu.vector_store %arg8[%c224_317, %c0_318], %401 {strides = array<i32>} : memref<296x128xbf16, #tpu.memory_space<vmem>>, vector<32x128xbf16>,
    %c120_i32_319 = arith.constant 120 : i32
    %403 = tpu.dynamic_rotate %359 by %c120_i32_319 dim 1 : vector<32x128xf32>, i32 -> vector<32x128xf32>
    %c8_320 = arith.constant 8 : index
    %c0_321 = arith.constant 0 : index
    %404 = vector.load %arg4[%c8_320, %c0_321] : memref<9x128xf32, #tpu.memory_space<vmem>>, vector<1x128xf32>
    %405 = vector.broadcast %404 : vector<1x128xf32> to vector<32x128xf32>
    %406 = arith.mulf %403, %405 : vector<32x128xf32>
    %407 = arith.truncf %406 : vector<32x128xf32> to vector<32x128xbf16>
    %c256_322 = arith.constant 256 : index
    %c0_323 = arith.constant 0 : index
    %408 = vector.load %arg8[%c256_322, %c0_323] : memref<296x128xbf16, #tpu.memory_space<vmem>>, vector<32x128xbf16>
    tpu.vector_store %arg8[%c256_322, %c0_323], %407 {strides = array<i32>} : memref<296x128xbf16, #tpu.memory_space<vmem>>, vector<32x128xbf16>,
    %c6_324 = arith.constant 6 : index
    %c0_325 = arith.constant 0 : index
    %c0_326 = arith.constant 0 : index
    %409 = vector.load %arg2[%c6_324, %c0_325, %c0_326] : memref<12x32x296xbf16, #tpu.memory_space<vmem>>, vector<1x32x296xbf16>
    %410 = vector.shape_cast %409 : vector<1x32x296xbf16> to vector<32x296xbf16>
    %c0_327 = arith.constant 0 : index
    %c0_328 = arith.constant 0 : index
    %411 = vector.load %arg8[%c0_327, %c0_328] : memref<296x128xbf16, #tpu.memory_space<vmem>>, vector<296x128xbf16>
    %cst_329 = arith.constant dense<0.000000e+00> : vector<32x128xf32>
    %412 = tpu.matmul %410, %411, %cst_329 {dimension_numbers = #tpu.dot_dimension_numbers<[1], [0], [0], [1], [0, 0, 1, 1], [], []>} : vector<32x296xbf16>, vector<296x128xbf16>, vector<32x128xf32> -> vector<32x128xf32>
    %413 = arith.addf %412, %302 : vector<32x128xf32>
    %c127_i32_330 = arith.constant 127 : i32
    %414 = tpu.dynamic_rotate %413 by %c127_i32_330 dim 1 : vector<32x128xf32>, i32 -> vector<32x128xf32>
    %c1_i32_331 = arith.constant 1 : i32
    %415 = tpu.dynamic_rotate %413 by %c1_i32_331 dim 1 : vector<32x128xf32>, i32 -> vector<32x128xf32>
    %c8_i32_332 = arith.constant 8 : i32
    %416 = tpu.dynamic_rotate %415 by %c8_i32_332 dim 1 : vector<32x128xf32>, i32 -> vector<32x128xf32>
    %c0_333 = arith.constant 0 : index
    %c0_334 = arith.constant 0 : index
    %417 = vector.load %arg4[%c0_333, %c0_334] : memref<9x128xf32, #tpu.memory_space<vmem>>, vector<1x128xf32>
    %418 = vector.broadcast %417 : vector<1x128xf32> to vector<32x128xf32>
    %419 = arith.mulf %416, %418 : vector<32x128xf32>
    %420 = arith.truncf %419 : vector<32x128xf32> to vector<32x128xbf16>
    %c0_335 = arith.constant 0 : index
    %c0_336 = arith.constant 0 : index
    %421 = vector.load %arg8[%c0_335, %c0_336] : memref<296x128xbf16, #tpu.memory_space<vmem>>, vector<32x128xbf16>
    tpu.vector_store %arg8[%c0_335, %c0_336], %420 {strides = array<i32>} : memref<296x128xbf16, #tpu.memory_space<vmem>>, vector<32x128xbf16>,
    %c8_i32_337 = arith.constant 8 : i32
    %422 = tpu.dynamic_rotate %413 by %c8_i32_337 dim 1 : vector<32x128xf32>, i32 -> vector<32x128xf32>
    %c1_338 = arith.constant 1 : index
    %c0_339 = arith.constant 0 : index
    %423 = vector.load %arg4[%c1_338, %c0_339] : memref<9x128xf32, #tpu.memory_space<vmem>>, vector<1x128xf32>
    %424 = vector.broadcast %423 : vector<1x128xf32> to vector<32x128xf32>
    %425 = arith.mulf %422, %424 : vector<32x128xf32>
    %426 = arith.truncf %425 : vector<32x128xf32> to vector<32x128xbf16>
    %c32_340 = arith.constant 32 : index
    %c0_341 = arith.constant 0 : index
    %427 = vector.load %arg8[%c32_340, %c0_341] : memref<296x128xbf16, #tpu.memory_space<vmem>>, vector<32x128xbf16>
    tpu.vector_store %arg8[%c32_340, %c0_341], %426 {strides = array<i32>} : memref<296x128xbf16, #tpu.memory_space<vmem>>, vector<32x128xbf16>,
    %c8_i32_342 = arith.constant 8 : i32
    %428 = tpu.dynamic_rotate %414 by %c8_i32_342 dim 1 : vector<32x128xf32>, i32 -> vector<32x128xf32>
    %c2_343 = arith.constant 2 : index
    %c0_344 = arith.constant 0 : index
    %429 = vector.load %arg4[%c2_343, %c0_344] : memref<9x128xf32, #tpu.memory_space<vmem>>, vector<1x128xf32>
    %430 = vector.broadcast %429 : vector<1x128xf32> to vector<32x128xf32>
    %431 = arith.mulf %428, %430 : vector<32x128xf32>
    %432 = arith.truncf %431 : vector<32x128xf32> to vector<32x128xbf16>
    %c64_345 = arith.constant 64 : index
    %c0_346 = arith.constant 0 : index
    %433 = vector.load %arg8[%c64_345, %c0_346] : memref<296x128xbf16, #tpu.memory_space<vmem>>, vector<32x128xbf16>
    tpu.vector_store %arg8[%c64_345, %c0_346], %432 {strides = array<i32>} : memref<296x128xbf16, #tpu.memory_space<vmem>>, vector<32x128xbf16>,
    %c3_347 = arith.constant 3 : index
    %c0_348 = arith.constant 0 : index
    %434 = vector.load %arg4[%c3_347, %c0_348] : memref<9x128xf32, #tpu.memory_space<vmem>>, vector<1x128xf32>
    %435 = vector.broadcast %434 : vector<1x128xf32> to vector<32x128xf32>
    %436 = arith.mulf %415, %435 : vector<32x128xf32>
    %437 = arith.truncf %436 : vector<32x128xf32> to vector<32x128xbf16>
    %c96_349 = arith.constant 96 : index
    %c0_350 = arith.constant 0 : index
    %438 = vector.load %arg8[%c96_349, %c0_350] : memref<296x128xbf16, #tpu.memory_space<vmem>>, vector<32x128xbf16>
    tpu.vector_store %arg8[%c96_349, %c0_350], %437 {strides = array<i32>} : memref<296x128xbf16, #tpu.memory_space<vmem>>, vector<32x128xbf16>,
    %439 = arith.truncf %413 : vector<32x128xf32> to vector<32x128xbf16>
    %c128_351 = arith.constant 128 : index
    %c0_352 = arith.constant 0 : index
    %440 = vector.load %arg8[%c128_351, %c0_352] : memref<296x128xbf16, #tpu.memory_space<vmem>>, vector<32x128xbf16>
    tpu.vector_store %arg8[%c128_351, %c0_352], %439 {strides = array<i32>} : memref<296x128xbf16, #tpu.memory_space<vmem>>, vector<32x128xbf16>,
    %c5_353 = arith.constant 5 : index
    %c0_354 = arith.constant 0 : index
    %441 = vector.load %arg4[%c5_353, %c0_354] : memref<9x128xf32, #tpu.memory_space<vmem>>, vector<1x128xf32>
    %442 = vector.broadcast %441 : vector<1x128xf32> to vector<32x128xf32>
    %443 = arith.mulf %414, %442 : vector<32x128xf32>
    %444 = arith.truncf %443 : vector<32x128xf32> to vector<32x128xbf16>
    %c160_355 = arith.constant 160 : index
    %c0_356 = arith.constant 0 : index
    %445 = vector.load %arg8[%c160_355, %c0_356] : memref<296x128xbf16, #tpu.memory_space<vmem>>, vector<32x128xbf16>
    tpu.vector_store %arg8[%c160_355, %c0_356], %444 {strides = array<i32>} : memref<296x128xbf16, #tpu.memory_space<vmem>>, vector<32x128xbf16>,
    %c120_i32_357 = arith.constant 120 : i32
    %446 = tpu.dynamic_rotate %415 by %c120_i32_357 dim 1 : vector<32x128xf32>, i32 -> vector<32x128xf32>
    %c6_358 = arith.constant 6 : index
    %c0_359 = arith.constant 0 : index
    %447 = vector.load %arg4[%c6_358, %c0_359] : memref<9x128xf32, #tpu.memory_space<vmem>>, vector<1x128xf32>
    %448 = vector.broadcast %447 : vector<1x128xf32> to vector<32x128xf32>
    %449 = arith.mulf %446, %448 : vector<32x128xf32>
    %450 = arith.truncf %449 : vector<32x128xf32> to vector<32x128xbf16>
    %c192_360 = arith.constant 192 : index
    %c0_361 = arith.constant 0 : index
    %451 = vector.load %arg8[%c192_360, %c0_361] : memref<296x128xbf16, #tpu.memory_space<vmem>>, vector<32x128xbf16>
    tpu.vector_store %arg8[%c192_360, %c0_361], %450 {strides = array<i32>} : memref<296x128xbf16, #tpu.memory_space<vmem>>, vector<32x128xbf16>,
    %c120_i32_362 = arith.constant 120 : i32
    %452 = tpu.dynamic_rotate %413 by %c120_i32_362 dim 1 : vector<32x128xf32>, i32 -> vector<32x128xf32>
    %c7_363 = arith.constant 7 : index
    %c0_364 = arith.constant 0 : index
    %453 = vector.load %arg4[%c7_363, %c0_364] : memref<9x128xf32, #tpu.memory_space<vmem>>, vector<1x128xf32>
    %454 = vector.broadcast %453 : vector<1x128xf32> to vector<32x128xf32>
    %455 = arith.mulf %452, %454 : vector<32x128xf32>
    %456 = arith.truncf %455 : vector<32x128xf32> to vector<32x128xbf16>
    %c224_365 = arith.constant 224 : index
    %c0_366 = arith.constant 0 : index
    %457 = vector.load %arg8[%c224_365, %c0_366] : memref<296x128xbf16, #tpu.memory_space<vmem>>, vector<32x128xbf16>
    tpu.vector_store %arg8[%c224_365, %c0_366], %456 {strides = array<i32>} : memref<296x128xbf16, #tpu.memory_space<vmem>>, vector<32x128xbf16>,
    %c120_i32_367 = arith.constant 120 : i32
    %458 = tpu.dynamic_rotate %414 by %c120_i32_367 dim 1 : vector<32x128xf32>, i32 -> vector<32x128xf32>
    %c8_368 = arith.constant 8 : index
    %c0_369 = arith.constant 0 : index
    %459 = vector.load %arg4[%c8_368, %c0_369] : memref<9x128xf32, #tpu.memory_space<vmem>>, vector<1x128xf32>
    %460 = vector.broadcast %459 : vector<1x128xf32> to vector<32x128xf32>
    %461 = arith.mulf %458, %460 : vector<32x128xf32>
    %462 = arith.truncf %461 : vector<32x128xf32> to vector<32x128xbf16>
    %c256_370 = arith.constant 256 : index
    %c0_371 = arith.constant 0 : index
    %463 = vector.load %arg8[%c256_370, %c0_371] : memref<296x128xbf16, #tpu.memory_space<vmem>>, vector<32x128xbf16>
    tpu.vector_store %arg8[%c256_370, %c0_371], %462 {strides = array<i32>} : memref<296x128xbf16, #tpu.memory_space<vmem>>, vector<32x128xbf16>,
    %c7_372 = arith.constant 7 : index
    %c0_373 = arith.constant 0 : index
    %c0_374 = arith.constant 0 : index
    %464 = vector.load %arg2[%c7_372, %c0_373, %c0_374] : memref<12x32x296xbf16, #tpu.memory_space<vmem>>, vector<1x32x296xbf16>
    %465 = vector.shape_cast %464 : vector<1x32x296xbf16> to vector<32x296xbf16>
    %c0_375 = arith.constant 0 : index
    %c0_376 = arith.constant 0 : index
    %466 = vector.load %arg8[%c0_375, %c0_376] : memref<296x128xbf16, #tpu.memory_space<vmem>>, vector<296x128xbf16>
    %cst_377 = arith.constant dense<0.000000e+00> : vector<32x128xf32>
    %467 = tpu.matmul %465, %466, %cst_377 {dimension_numbers = #tpu.dot_dimension_numbers<[1], [0], [0], [1], [0, 0, 1, 1], [], []>} : vector<32x296xbf16>, vector<296x128xbf16>, vector<32x128xf32> -> vector<32x128xf32>
    %cst_378 = arith.constant 0.000000e+00 : f32
    %468 = vector.broadcast %cst_378 : f32 to vector<32x128xf32>
    %469 = arith.maximumf %467, %468 : vector<32x128xf32>
    %c127_i32_379 = arith.constant 127 : i32
    %470 = tpu.dynamic_rotate %469 by %c127_i32_379 dim 1 : vector<32x128xf32>, i32 -> vector<32x128xf32>
    %c1_i32_380 = arith.constant 1 : i32
    %471 = tpu.dynamic_rotate %469 by %c1_i32_380 dim 1 : vector<32x128xf32>, i32 -> vector<32x128xf32>
    %c8_i32_381 = arith.constant 8 : i32
    %472 = tpu.dynamic_rotate %471 by %c8_i32_381 dim 1 : vector<32x128xf32>, i32 -> vector<32x128xf32>
    %c0_382 = arith.constant 0 : index
    %c0_383 = arith.constant 0 : index
    %473 = vector.load %arg4[%c0_382, %c0_383] : memref<9x128xf32, #tpu.memory_space<vmem>>, vector<1x128xf32>
    %474 = vector.broadcast %473 : vector<1x128xf32> to vector<32x128xf32>
    %475 = arith.mulf %472, %474 : vector<32x128xf32>
    %476 = arith.truncf %475 : vector<32x128xf32> to vector<32x128xbf16>
    %c0_384 = arith.constant 0 : index
    %c0_385 = arith.constant 0 : index
    %477 = vector.load %arg8[%c0_384, %c0_385] : memref<296x128xbf16, #tpu.memory_space<vmem>>, vector<32x128xbf16>
    tpu.vector_store %arg8[%c0_384, %c0_385], %476 {strides = array<i32>} : memref<296x128xbf16, #tpu.memory_space<vmem>>, vector<32x128xbf16>,
    %c8_i32_386 = arith.constant 8 : i32
    %478 = tpu.dynamic_rotate %469 by %c8_i32_386 dim 1 : vector<32x128xf32>, i32 -> vector<32x128xf32>
    %c1_387 = arith.constant 1 : index
    %c0_388 = arith.constant 0 : index
    %479 = vector.load %arg4[%c1_387, %c0_388] : memref<9x128xf32, #tpu.memory_space<vmem>>, vector<1x128xf32>
    %480 = vector.broadcast %479 : vector<1x128xf32> to vector<32x128xf32>
    %481 = arith.mulf %478, %480 : vector<32x128xf32>
    %482 = arith.truncf %481 : vector<32x128xf32> to vector<32x128xbf16>
    %c32_389 = arith.constant 32 : index
    %c0_390 = arith.constant 0 : index
    %483 = vector.load %arg8[%c32_389, %c0_390] : memref<296x128xbf16, #tpu.memory_space<vmem>>, vector<32x128xbf16>
    tpu.vector_store %arg8[%c32_389, %c0_390], %482 {strides = array<i32>} : memref<296x128xbf16, #tpu.memory_space<vmem>>, vector<32x128xbf16>,
    %c8_i32_391 = arith.constant 8 : i32
    %484 = tpu.dynamic_rotate %470 by %c8_i32_391 dim 1 : vector<32x128xf32>, i32 -> vector<32x128xf32>
    %c2_392 = arith.constant 2 : index
    %c0_393 = arith.constant 0 : index
    %485 = vector.load %arg4[%c2_392, %c0_393] : memref<9x128xf32, #tpu.memory_space<vmem>>, vector<1x128xf32>
    %486 = vector.broadcast %485 : vector<1x128xf32> to vector<32x128xf32>
    %487 = arith.mulf %484, %486 : vector<32x128xf32>
    %488 = arith.truncf %487 : vector<32x128xf32> to vector<32x128xbf16>
    %c64_394 = arith.constant 64 : index
    %c0_395 = arith.constant 0 : index
    %489 = vector.load %arg8[%c64_394, %c0_395] : memref<296x128xbf16, #tpu.memory_space<vmem>>, vector<32x128xbf16>
    tpu.vector_store %arg8[%c64_394, %c0_395], %488 {strides = array<i32>} : memref<296x128xbf16, #tpu.memory_space<vmem>>, vector<32x128xbf16>,
    %c3_396 = arith.constant 3 : index
    %c0_397 = arith.constant 0 : index
    %490 = vector.load %arg4[%c3_396, %c0_397] : memref<9x128xf32, #tpu.memory_space<vmem>>, vector<1x128xf32>
    %491 = vector.broadcast %490 : vector<1x128xf32> to vector<32x128xf32>
    %492 = arith.mulf %471, %491 : vector<32x128xf32>
    %493 = arith.truncf %492 : vector<32x128xf32> to vector<32x128xbf16>
    %c96_398 = arith.constant 96 : index
    %c0_399 = arith.constant 0 : index
    %494 = vector.load %arg8[%c96_398, %c0_399] : memref<296x128xbf16, #tpu.memory_space<vmem>>, vector<32x128xbf16>
    tpu.vector_store %arg8[%c96_398, %c0_399], %493 {strides = array<i32>} : memref<296x128xbf16, #tpu.memory_space<vmem>>, vector<32x128xbf16>,
    %495 = arith.truncf %469 : vector<32x128xf32> to vector<32x128xbf16>
    %c128_400 = arith.constant 128 : index
    %c0_401 = arith.constant 0 : index
    %496 = vector.load %arg8[%c128_400, %c0_401] : memref<296x128xbf16, #tpu.memory_space<vmem>>, vector<32x128xbf16>
    tpu.vector_store %arg8[%c128_400, %c0_401], %495 {strides = array<i32>} : memref<296x128xbf16, #tpu.memory_space<vmem>>, vector<32x128xbf16>,
    %c5_402 = arith.constant 5 : index
    %c0_403 = arith.constant 0 : index
    %497 = vector.load %arg4[%c5_402, %c0_403] : memref<9x128xf32, #tpu.memory_space<vmem>>, vector<1x128xf32>
    %498 = vector.broadcast %497 : vector<1x128xf32> to vector<32x128xf32>
    %499 = arith.mulf %470, %498 : vector<32x128xf32>
    %500 = arith.truncf %499 : vector<32x128xf32> to vector<32x128xbf16>
    %c160_404 = arith.constant 160 : index
    %c0_405 = arith.constant 0 : index
    %501 = vector.load %arg8[%c160_404, %c0_405] : memref<296x128xbf16, #tpu.memory_space<vmem>>, vector<32x128xbf16>
    tpu.vector_store %arg8[%c160_404, %c0_405], %500 {strides = array<i32>} : memref<296x128xbf16, #tpu.memory_space<vmem>>, vector<32x128xbf16>,
    %c120_i32_406 = arith.constant 120 : i32
    %502 = tpu.dynamic_rotate %471 by %c120_i32_406 dim 1 : vector<32x128xf32>, i32 -> vector<32x128xf32>
    %c6_407 = arith.constant 6 : index
    %c0_408 = arith.constant 0 : index
    %503 = vector.load %arg4[%c6_407, %c0_408] : memref<9x128xf32, #tpu.memory_space<vmem>>, vector<1x128xf32>
    %504 = vector.broadcast %503 : vector<1x128xf32> to vector<32x128xf32>
    %505 = arith.mulf %502, %504 : vector<32x128xf32>
    %506 = arith.truncf %505 : vector<32x128xf32> to vector<32x128xbf16>
    %c192_409 = arith.constant 192 : index
    %c0_410 = arith.constant 0 : index
    %507 = vector.load %arg8[%c192_409, %c0_410] : memref<296x128xbf16, #tpu.memory_space<vmem>>, vector<32x128xbf16>
    tpu.vector_store %arg8[%c192_409, %c0_410], %506 {strides = array<i32>} : memref<296x128xbf16, #tpu.memory_space<vmem>>, vector<32x128xbf16>,
    %c120_i32_411 = arith.constant 120 : i32
    %508 = tpu.dynamic_rotate %469 by %c120_i32_411 dim 1 : vector<32x128xf32>, i32 -> vector<32x128xf32>
    %c7_412 = arith.constant 7 : index
    %c0_413 = arith.constant 0 : index
    %509 = vector.load %arg4[%c7_412, %c0_413] : memref<9x128xf32, #tpu.memory_space<vmem>>, vector<1x128xf32>
    %510 = vector.broadcast %509 : vector<1x128xf32> to vector<32x128xf32>
    %511 = arith.mulf %508, %510 : vector<32x128xf32>
    %512 = arith.truncf %511 : vector<32x128xf32> to vector<32x128xbf16>
    %c224_414 = arith.constant 224 : index
    %c0_415 = arith.constant 0 : index
    %513 = vector.load %arg8[%c224_414, %c0_415] : memref<296x128xbf16, #tpu.memory_space<vmem>>, vector<32x128xbf16>
    tpu.vector_store %arg8[%c224_414, %c0_415], %512 {strides = array<i32>} : memref<296x128xbf16, #tpu.memory_space<vmem>>, vector<32x128xbf16>,
    %c120_i32_416 = arith.constant 120 : i32
    %514 = tpu.dynamic_rotate %470 by %c120_i32_416 dim 1 : vector<32x128xf32>, i32 -> vector<32x128xf32>
    %c8_417 = arith.constant 8 : index
    %c0_418 = arith.constant 0 : index
    %515 = vector.load %arg4[%c8_417, %c0_418] : memref<9x128xf32, #tpu.memory_space<vmem>>, vector<1x128xf32>
    %516 = vector.broadcast %515 : vector<1x128xf32> to vector<32x128xf32>
    %517 = arith.mulf %514, %516 : vector<32x128xf32>
    %518 = arith.truncf %517 : vector<32x128xf32> to vector<32x128xbf16>
    %c256_419 = arith.constant 256 : index
    %c0_420 = arith.constant 0 : index
    %519 = vector.load %arg8[%c256_419, %c0_420] : memref<296x128xbf16, #tpu.memory_space<vmem>>, vector<32x128xbf16>
    tpu.vector_store %arg8[%c256_419, %c0_420], %518 {strides = array<i32>} : memref<296x128xbf16, #tpu.memory_space<vmem>>, vector<32x128xbf16>,
    %c8_421 = arith.constant 8 : index
    %c0_422 = arith.constant 0 : index
    %c0_423 = arith.constant 0 : index
    %520 = vector.load %arg2[%c8_421, %c0_422, %c0_423] : memref<12x32x296xbf16, #tpu.memory_space<vmem>>, vector<1x32x296xbf16>
    %521 = vector.shape_cast %520 : vector<1x32x296xbf16> to vector<32x296xbf16>
    %c0_424 = arith.constant 0 : index
    %c0_425 = arith.constant 0 : index
    %522 = vector.load %arg8[%c0_424, %c0_425] : memref<296x128xbf16, #tpu.memory_space<vmem>>, vector<296x128xbf16>
    %cst_426 = arith.constant dense<0.000000e+00> : vector<32x128xf32>
    %523 = tpu.matmul %521, %522, %cst_426 {dimension_numbers = #tpu.dot_dimension_numbers<[1], [0], [0], [1], [0, 0, 1, 1], [], []>} : vector<32x296xbf16>, vector<296x128xbf16>, vector<32x128xf32> -> vector<32x128xf32>
    %524 = arith.addf %523, %413 : vector<32x128xf32>
    %c127_i32_427 = arith.constant 127 : i32
    %525 = tpu.dynamic_rotate %524 by %c127_i32_427 dim 1 : vector<32x128xf32>, i32 -> vector<32x128xf32>
    %c1_i32_428 = arith.constant 1 : i32
    %526 = tpu.dynamic_rotate %524 by %c1_i32_428 dim 1 : vector<32x128xf32>, i32 -> vector<32x128xf32>
    %c8_i32_429 = arith.constant 8 : i32
    %527 = tpu.dynamic_rotate %526 by %c8_i32_429 dim 1 : vector<32x128xf32>, i32 -> vector<32x128xf32>
    %c0_430 = arith.constant 0 : index
    %c0_431 = arith.constant 0 : index
    %528 = vector.load %arg4[%c0_430, %c0_431] : memref<9x128xf32, #tpu.memory_space<vmem>>, vector<1x128xf32>
    %529 = vector.broadcast %528 : vector<1x128xf32> to vector<32x128xf32>
    %530 = arith.mulf %527, %529 : vector<32x128xf32>
    %531 = arith.truncf %530 : vector<32x128xf32> to vector<32x128xbf16>
    %c0_432 = arith.constant 0 : index
    %c0_433 = arith.constant 0 : index
    %532 = vector.load %arg8[%c0_432, %c0_433] : memref<296x128xbf16, #tpu.memory_space<vmem>>, vector<32x128xbf16>
    tpu.vector_store %arg8[%c0_432, %c0_433], %531 {strides = array<i32>} : memref<296x128xbf16, #tpu.memory_space<vmem>>, vector<32x128xbf16>,
    %c8_i32_434 = arith.constant 8 : i32
    %533 = tpu.dynamic_rotate %524 by %c8_i32_434 dim 1 : vector<32x128xf32>, i32 -> vector<32x128xf32>
    %c1_435 = arith.constant 1 : index
    %c0_436 = arith.constant 0 : index
    %534 = vector.load %arg4[%c1_435, %c0_436] : memref<9x128xf32, #tpu.memory_space<vmem>>, vector<1x128xf32>
    %535 = vector.broadcast %534 : vector<1x128xf32> to vector<32x128xf32>
    %536 = arith.mulf %533, %535 : vector<32x128xf32>
    %537 = arith.truncf %536 : vector<32x128xf32> to vector<32x128xbf16>
    %c32_437 = arith.constant 32 : index
    %c0_438 = arith.constant 0 : index
    %538 = vector.load %arg8[%c32_437, %c0_438] : memref<296x128xbf16, #tpu.memory_space<vmem>>, vector<32x128xbf16>
    tpu.vector_store %arg8[%c32_437, %c0_438], %537 {strides = array<i32>} : memref<296x128xbf16, #tpu.memory_space<vmem>>, vector<32x128xbf16>,
    %c8_i32_439 = arith.constant 8 : i32
    %539 = tpu.dynamic_rotate %525 by %c8_i32_439 dim 1 : vector<32x128xf32>, i32 -> vector<32x128xf32>
    %c2_440 = arith.constant 2 : index
    %c0_441 = arith.constant 0 : index
    %540 = vector.load %arg4[%c2_440, %c0_441] : memref<9x128xf32, #tpu.memory_space<vmem>>, vector<1x128xf32>
    %541 = vector.broadcast %540 : vector<1x128xf32> to vector<32x128xf32>
    %542 = arith.mulf %539, %541 : vector<32x128xf32>
    %543 = arith.truncf %542 : vector<32x128xf32> to vector<32x128xbf16>
    %c64_442 = arith.constant 64 : index
    %c0_443 = arith.constant 0 : index
    %544 = vector.load %arg8[%c64_442, %c0_443] : memref<296x128xbf16, #tpu.memory_space<vmem>>, vector<32x128xbf16>
    tpu.vector_store %arg8[%c64_442, %c0_443], %543 {strides = array<i32>} : memref<296x128xbf16, #tpu.memory_space<vmem>>, vector<32x128xbf16>,
    %c3_444 = arith.constant 3 : index
    %c0_445 = arith.constant 0 : index
    %545 = vector.load %arg4[%c3_444, %c0_445] : memref<9x128xf32, #tpu.memory_space<vmem>>, vector<1x128xf32>
    %546 = vector.broadcast %545 : vector<1x128xf32> to vector<32x128xf32>
    %547 = arith.mulf %526, %546 : vector<32x128xf32>
    %548 = arith.truncf %547 : vector<32x128xf32> to vector<32x128xbf16>
    %c96_446 = arith.constant 96 : index
    %c0_447 = arith.constant 0 : index
    %549 = vector.load %arg8[%c96_446, %c0_447] : memref<296x128xbf16, #tpu.memory_space<vmem>>, vector<32x128xbf16>
    tpu.vector_store %arg8[%c96_446, %c0_447], %548 {strides = array<i32>} : memref<296x128xbf16, #tpu.memory_space<vmem>>, vector<32x128xbf16>,
    %550 = arith.truncf %524 : vector<32x128xf32> to vector<32x128xbf16>
    %c128_448 = arith.constant 128 : index
    %c0_449 = arith.constant 0 : index
    %551 = vector.load %arg8[%c128_448, %c0_449] : memref<296x128xbf16, #tpu.memory_space<vmem>>, vector<32x128xbf16>
    tpu.vector_store %arg8[%c128_448, %c0_449], %550 {strides = array<i32>} : memref<296x128xbf16, #tpu.memory_space<vmem>>, vector<32x128xbf16>,
    %c5_450 = arith.constant 5 : index
    %c0_451 = arith.constant 0 : index
    %552 = vector.load %arg4[%c5_450, %c0_451] : memref<9x128xf32, #tpu.memory_space<vmem>>, vector<1x128xf32>
    %553 = vector.broadcast %552 : vector<1x128xf32> to vector<32x128xf32>
    %554 = arith.mulf %525, %553 : vector<32x128xf32>
    %555 = arith.truncf %554 : vector<32x128xf32> to vector<32x128xbf16>
    %c160_452 = arith.constant 160 : index
    %c0_453 = arith.constant 0 : index
    %556 = vector.load %arg8[%c160_452, %c0_453] : memref<296x128xbf16, #tpu.memory_space<vmem>>, vector<32x128xbf16>
    tpu.vector_store %arg8[%c160_452, %c0_453], %555 {strides = array<i32>} : memref<296x128xbf16, #tpu.memory_space<vmem>>, vector<32x128xbf16>,
    %c120_i32_454 = arith.constant 120 : i32
    %557 = tpu.dynamic_rotate %526 by %c120_i32_454 dim 1 : vector<32x128xf32>, i32 -> vector<32x128xf32>
    %c6_455 = arith.constant 6 : index
    %c0_456 = arith.constant 0 : index
    %558 = vector.load %arg4[%c6_455, %c0_456] : memref<9x128xf32, #tpu.memory_space<vmem>>, vector<1x128xf32>
    %559 = vector.broadcast %558 : vector<1x128xf32> to vector<32x128xf32>
    %560 = arith.mulf %557, %559 : vector<32x128xf32>
    %561 = arith.truncf %560 : vector<32x128xf32> to vector<32x128xbf16>
    %c192_457 = arith.constant 192 : index
    %c0_458 = arith.constant 0 : index
    %562 = vector.load %arg8[%c192_457, %c0_458] : memref<296x128xbf16, #tpu.memory_space<vmem>>, vector<32x128xbf16>
    tpu.vector_store %arg8[%c192_457, %c0_458], %561 {strides = array<i32>} : memref<296x128xbf16, #tpu.memory_space<vmem>>, vector<32x128xbf16>,
    %c120_i32_459 = arith.constant 120 : i32
    %563 = tpu.dynamic_rotate %524 by %c120_i32_459 dim 1 : vector<32x128xf32>, i32 -> vector<32x128xf32>
    %c7_460 = arith.constant 7 : index
    %c0_461 = arith.constant 0 : index
    %564 = vector.load %arg4[%c7_460, %c0_461] : memref<9x128xf32, #tpu.memory_space<vmem>>, vector<1x128xf32>
    %565 = vector.broadcast %564 : vector<1x128xf32> to vector<32x128xf32>
    %566 = arith.mulf %563, %565 : vector<32x128xf32>
    %567 = arith.truncf %566 : vector<32x128xf32> to vector<32x128xbf16>
    %c224_462 = arith.constant 224 : index
    %c0_463 = arith.constant 0 : index
    %568 = vector.load %arg8[%c224_462, %c0_463] : memref<296x128xbf16, #tpu.memory_space<vmem>>, vector<32x128xbf16>
    tpu.vector_store %arg8[%c224_462, %c0_463], %567 {strides = array<i32>} : memref<296x128xbf16, #tpu.memory_space<vmem>>, vector<32x128xbf16>,
    %c120_i32_464 = arith.constant 120 : i32
    %569 = tpu.dynamic_rotate %525 by %c120_i32_464 dim 1 : vector<32x128xf32>, i32 -> vector<32x128xf32>
    %c8_465 = arith.constant 8 : index
    %c0_466 = arith.constant 0 : index
    %570 = vector.load %arg4[%c8_465, %c0_466] : memref<9x128xf32, #tpu.memory_space<vmem>>, vector<1x128xf32>
    %571 = vector.broadcast %570 : vector<1x128xf32> to vector<32x128xf32>
    %572 = arith.mulf %569, %571 : vector<32x128xf32>
    %573 = arith.truncf %572 : vector<32x128xf32> to vector<32x128xbf16>
    %c256_467 = arith.constant 256 : index
    %c0_468 = arith.constant 0 : index
    %574 = vector.load %arg8[%c256_467, %c0_468] : memref<296x128xbf16, #tpu.memory_space<vmem>>, vector<32x128xbf16>
    tpu.vector_store %arg8[%c256_467, %c0_468], %573 {strides = array<i32>} : memref<296x128xbf16, #tpu.memory_space<vmem>>, vector<32x128xbf16>,
    %c9 = arith.constant 9 : index
    %c0_469 = arith.constant 0 : index
    %c0_470 = arith.constant 0 : index
    %575 = vector.load %arg2[%c9, %c0_469, %c0_470] : memref<12x32x296xbf16, #tpu.memory_space<vmem>>, vector<1x32x296xbf16>
    %576 = vector.shape_cast %575 : vector<1x32x296xbf16> to vector<32x296xbf16>
    %c0_471 = arith.constant 0 : index
    %c0_472 = arith.constant 0 : index
    %577 = vector.load %arg8[%c0_471, %c0_472] : memref<296x128xbf16, #tpu.memory_space<vmem>>, vector<296x128xbf16>
    %cst_473 = arith.constant dense<0.000000e+00> : vector<32x128xf32>
    %578 = tpu.matmul %576, %577, %cst_473 {dimension_numbers = #tpu.dot_dimension_numbers<[1], [0], [0], [1], [0, 0, 1, 1], [], []>} : vector<32x296xbf16>, vector<296x128xbf16>, vector<32x128xf32> -> vector<32x128xf32>
    %cst_474 = arith.constant 0.000000e+00 : f32
    %579 = vector.broadcast %cst_474 : f32 to vector<32x128xf32>
    %580 = arith.maximumf %578, %579 : vector<32x128xf32>
    %c127_i32_475 = arith.constant 127 : i32
    %581 = tpu.dynamic_rotate %580 by %c127_i32_475 dim 1 : vector<32x128xf32>, i32 -> vector<32x128xf32>
    %c1_i32_476 = arith.constant 1 : i32
    %582 = tpu.dynamic_rotate %580 by %c1_i32_476 dim 1 : vector<32x128xf32>, i32 -> vector<32x128xf32>
    %c8_i32_477 = arith.constant 8 : i32
    %583 = tpu.dynamic_rotate %582 by %c8_i32_477 dim 1 : vector<32x128xf32>, i32 -> vector<32x128xf32>
    %c0_478 = arith.constant 0 : index
    %c0_479 = arith.constant 0 : index
    %584 = vector.load %arg4[%c0_478, %c0_479] : memref<9x128xf32, #tpu.memory_space<vmem>>, vector<1x128xf32>
    %585 = vector.broadcast %584 : vector<1x128xf32> to vector<32x128xf32>
    %586 = arith.mulf %583, %585 : vector<32x128xf32>
    %587 = arith.truncf %586 : vector<32x128xf32> to vector<32x128xbf16>
    %c0_480 = arith.constant 0 : index
    %c0_481 = arith.constant 0 : index
    %588 = vector.load %arg8[%c0_480, %c0_481] : memref<296x128xbf16, #tpu.memory_space<vmem>>, vector<32x128xbf16>
    tpu.vector_store %arg8[%c0_480, %c0_481], %587 {strides = array<i32>} : memref<296x128xbf16, #tpu.memory_space<vmem>>, vector<32x128xbf16>,
    %c8_i32_482 = arith.constant 8 : i32
    %589 = tpu.dynamic_rotate %580 by %c8_i32_482 dim 1 : vector<32x128xf32>, i32 -> vector<32x128xf32>
    %c1_483 = arith.constant 1 : index
    %c0_484 = arith.constant 0 : index
    %590 = vector.load %arg4[%c1_483, %c0_484] : memref<9x128xf32, #tpu.memory_space<vmem>>, vector<1x128xf32>
    %591 = vector.broadcast %590 : vector<1x128xf32> to vector<32x128xf32>
    %592 = arith.mulf %589, %591 : vector<32x128xf32>
    %593 = arith.truncf %592 : vector<32x128xf32> to vector<32x128xbf16>
    %c32_485 = arith.constant 32 : index
    %c0_486 = arith.constant 0 : index
    %594 = vector.load %arg8[%c32_485, %c0_486] : memref<296x128xbf16, #tpu.memory_space<vmem>>, vector<32x128xbf16>
    tpu.vector_store %arg8[%c32_485, %c0_486], %593 {strides = array<i32>} : memref<296x128xbf16, #tpu.memory_space<vmem>>, vector<32x128xbf16>,
    %c8_i32_487 = arith.constant 8 : i32
    %595 = tpu.dynamic_rotate %581 by %c8_i32_487 dim 1 : vector<32x128xf32>, i32 -> vector<32x128xf32>
    %c2_488 = arith.constant 2 : index
    %c0_489 = arith.constant 0 : index
    %596 = vector.load %arg4[%c2_488, %c0_489] : memref<9x128xf32, #tpu.memory_space<vmem>>, vector<1x128xf32>
    %597 = vector.broadcast %596 : vector<1x128xf32> to vector<32x128xf32>
    %598 = arith.mulf %595, %597 : vector<32x128xf32>
    %599 = arith.truncf %598 : vector<32x128xf32> to vector<32x128xbf16>
    %c64_490 = arith.constant 64 : index
    %c0_491 = arith.constant 0 : index
    %600 = vector.load %arg8[%c64_490, %c0_491] : memref<296x128xbf16, #tpu.memory_space<vmem>>, vector<32x128xbf16>
    tpu.vector_store %arg8[%c64_490, %c0_491], %599 {strides = array<i32>} : memref<296x128xbf16, #tpu.memory_space<vmem>>, vector<32x128xbf16>,
    %c3_492 = arith.constant 3 : index
    %c0_493 = arith.constant 0 : index
    %601 = vector.load %arg4[%c3_492, %c0_493] : memref<9x128xf32, #tpu.memory_space<vmem>>, vector<1x128xf32>
    %602 = vector.broadcast %601 : vector<1x128xf32> to vector<32x128xf32>
    %603 = arith.mulf %582, %602 : vector<32x128xf32>
    %604 = arith.truncf %603 : vector<32x128xf32> to vector<32x128xbf16>
    %c96_494 = arith.constant 96 : index
    %c0_495 = arith.constant 0 : index
    %605 = vector.load %arg8[%c96_494, %c0_495] : memref<296x128xbf16, #tpu.memory_space<vmem>>, vector<32x128xbf16>
    tpu.vector_store %arg8[%c96_494, %c0_495], %604 {strides = array<i32>} : memref<296x128xbf16, #tpu.memory_space<vmem>>, vector<32x128xbf16>,
    %606 = arith.truncf %580 : vector<32x128xf32> to vector<32x128xbf16>
    %c128_496 = arith.constant 128 : index
    %c0_497 = arith.constant 0 : index
    %607 = vector.load %arg8[%c128_496, %c0_497] : memref<296x128xbf16, #tpu.memory_space<vmem>>, vector<32x128xbf16>
    tpu.vector_store %arg8[%c128_496, %c0_497], %606 {strides = array<i32>} : memref<296x128xbf16, #tpu.memory_space<vmem>>, vector<32x128xbf16>,
    %c5_498 = arith.constant 5 : index
    %c0_499 = arith.constant 0 : index
    %608 = vector.load %arg4[%c5_498, %c0_499] : memref<9x128xf32, #tpu.memory_space<vmem>>, vector<1x128xf32>
    %609 = vector.broadcast %608 : vector<1x128xf32> to vector<32x128xf32>
    %610 = arith.mulf %581, %609 : vector<32x128xf32>
    %611 = arith.truncf %610 : vector<32x128xf32> to vector<32x128xbf16>
    %c160_500 = arith.constant 160 : index
    %c0_501 = arith.constant 0 : index
    %612 = vector.load %arg8[%c160_500, %c0_501] : memref<296x128xbf16, #tpu.memory_space<vmem>>, vector<32x128xbf16>
    tpu.vector_store %arg8[%c160_500, %c0_501], %611 {strides = array<i32>} : memref<296x128xbf16, #tpu.memory_space<vmem>>, vector<32x128xbf16>,
    %c120_i32_502 = arith.constant 120 : i32
    %613 = tpu.dynamic_rotate %582 by %c120_i32_502 dim 1 : vector<32x128xf32>, i32 -> vector<32x128xf32>
    %c6_503 = arith.constant 6 : index
    %c0_504 = arith.constant 0 : index
    %614 = vector.load %arg4[%c6_503, %c0_504] : memref<9x128xf32, #tpu.memory_space<vmem>>, vector<1x128xf32>
    %615 = vector.broadcast %614 : vector<1x128xf32> to vector<32x128xf32>
    %616 = arith.mulf %613, %615 : vector<32x128xf32>
    %617 = arith.truncf %616 : vector<32x128xf32> to vector<32x128xbf16>
    %c192_505 = arith.constant 192 : index
    %c0_506 = arith.constant 0 : index
    %618 = vector.load %arg8[%c192_505, %c0_506] : memref<296x128xbf16, #tpu.memory_space<vmem>>, vector<32x128xbf16>
    tpu.vector_store %arg8[%c192_505, %c0_506], %617 {strides = array<i32>} : memref<296x128xbf16, #tpu.memory_space<vmem>>, vector<32x128xbf16>,
    %c120_i32_507 = arith.constant 120 : i32
    %619 = tpu.dynamic_rotate %580 by %c120_i32_507 dim 1 : vector<32x128xf32>, i32 -> vector<32x128xf32>
    %c7_508 = arith.constant 7 : index
    %c0_509 = arith.constant 0 : index
    %620 = vector.load %arg4[%c7_508, %c0_509] : memref<9x128xf32, #tpu.memory_space<vmem>>, vector<1x128xf32>
    %621 = vector.broadcast %620 : vector<1x128xf32> to vector<32x128xf32>
    %622 = arith.mulf %619, %621 : vector<32x128xf32>
    %623 = arith.truncf %622 : vector<32x128xf32> to vector<32x128xbf16>
    %c224_510 = arith.constant 224 : index
    %c0_511 = arith.constant 0 : index
    %624 = vector.load %arg8[%c224_510, %c0_511] : memref<296x128xbf16, #tpu.memory_space<vmem>>, vector<32x128xbf16>
    tpu.vector_store %arg8[%c224_510, %c0_511], %623 {strides = array<i32>} : memref<296x128xbf16, #tpu.memory_space<vmem>>, vector<32x128xbf16>,
    %c120_i32_512 = arith.constant 120 : i32
    %625 = tpu.dynamic_rotate %581 by %c120_i32_512 dim 1 : vector<32x128xf32>, i32 -> vector<32x128xf32>
    %c8_513 = arith.constant 8 : index
    %c0_514 = arith.constant 0 : index
    %626 = vector.load %arg4[%c8_513, %c0_514] : memref<9x128xf32, #tpu.memory_space<vmem>>, vector<1x128xf32>
    %627 = vector.broadcast %626 : vector<1x128xf32> to vector<32x128xf32>
    %628 = arith.mulf %625, %627 : vector<32x128xf32>
    %629 = arith.truncf %628 : vector<32x128xf32> to vector<32x128xbf16>
    %c256_515 = arith.constant 256 : index
    %c0_516 = arith.constant 0 : index
    %630 = vector.load %arg8[%c256_515, %c0_516] : memref<296x128xbf16, #tpu.memory_space<vmem>>, vector<32x128xbf16>
    tpu.vector_store %arg8[%c256_515, %c0_516], %629 {strides = array<i32>} : memref<296x128xbf16, #tpu.memory_space<vmem>>, vector<32x128xbf16>,
    %c10 = arith.constant 10 : index
    %c0_517 = arith.constant 0 : index
    %c0_518 = arith.constant 0 : index
    %631 = vector.load %arg2[%c10, %c0_517, %c0_518] : memref<12x32x296xbf16, #tpu.memory_space<vmem>>, vector<1x32x296xbf16>
    %632 = vector.shape_cast %631 : vector<1x32x296xbf16> to vector<32x296xbf16>
    %c0_519 = arith.constant 0 : index
    %c0_520 = arith.constant 0 : index
    %633 = vector.load %arg8[%c0_519, %c0_520] : memref<296x128xbf16, #tpu.memory_space<vmem>>, vector<296x128xbf16>
    %cst_521 = arith.constant dense<0.000000e+00> : vector<32x128xf32>
    %634 = tpu.matmul %632, %633, %cst_521 {dimension_numbers = #tpu.dot_dimension_numbers<[1], [0], [0], [1], [0, 0, 1, 1], [], []>} : vector<32x296xbf16>, vector<296x128xbf16>, vector<32x128xf32> -> vector<32x128xf32>
    %635 = arith.addf %634, %524 : vector<32x128xf32>
    %c127_i32_522 = arith.constant 127 : i32
    %636 = tpu.dynamic_rotate %635 by %c127_i32_522 dim 1 : vector<32x128xf32>, i32 -> vector<32x128xf32>
    %c1_i32_523 = arith.constant 1 : i32
    %637 = tpu.dynamic_rotate %635 by %c1_i32_523 dim 1 : vector<32x128xf32>, i32 -> vector<32x128xf32>
    %c8_i32_524 = arith.constant 8 : i32
    %638 = tpu.dynamic_rotate %637 by %c8_i32_524 dim 1 : vector<32x128xf32>, i32 -> vector<32x128xf32>
    %c0_525 = arith.constant 0 : index
    %c0_526 = arith.constant 0 : index
    %639 = vector.load %arg4[%c0_525, %c0_526] : memref<9x128xf32, #tpu.memory_space<vmem>>, vector<1x128xf32>
    %640 = vector.broadcast %639 : vector<1x128xf32> to vector<32x128xf32>
    %641 = arith.mulf %638, %640 : vector<32x128xf32>
    %642 = arith.truncf %641 : vector<32x128xf32> to vector<32x128xbf16>
    %c0_527 = arith.constant 0 : index
    %c0_528 = arith.constant 0 : index
    %643 = vector.load %arg8[%c0_527, %c0_528] : memref<296x128xbf16, #tpu.memory_space<vmem>>, vector<32x128xbf16>
    tpu.vector_store %arg8[%c0_527, %c0_528], %642 {strides = array<i32>} : memref<296x128xbf16, #tpu.memory_space<vmem>>, vector<32x128xbf16>,
    %c8_i32_529 = arith.constant 8 : i32
    %644 = tpu.dynamic_rotate %635 by %c8_i32_529 dim 1 : vector<32x128xf32>, i32 -> vector<32x128xf32>
    %c1_530 = arith.constant 1 : index
    %c0_531 = arith.constant 0 : index
    %645 = vector.load %arg4[%c1_530, %c0_531] : memref<9x128xf32, #tpu.memory_space<vmem>>, vector<1x128xf32>
    %646 = vector.broadcast %645 : vector<1x128xf32> to vector<32x128xf32>
    %647 = arith.mulf %644, %646 : vector<32x128xf32>
    %648 = arith.truncf %647 : vector<32x128xf32> to vector<32x128xbf16>
    %c32_532 = arith.constant 32 : index
    %c0_533 = arith.constant 0 : index
    %649 = vector.load %arg8[%c32_532, %c0_533] : memref<296x128xbf16, #tpu.memory_space<vmem>>, vector<32x128xbf16>
    tpu.vector_store %arg8[%c32_532, %c0_533], %648 {strides = array<i32>} : memref<296x128xbf16, #tpu.memory_space<vmem>>, vector<32x128xbf16>,
    %c8_i32_534 = arith.constant 8 : i32
    %650 = tpu.dynamic_rotate %636 by %c8_i32_534 dim 1 : vector<32x128xf32>, i32 -> vector<32x128xf32>
    %c2_535 = arith.constant 2 : index
    %c0_536 = arith.constant 0 : index
    %651 = vector.load %arg4[%c2_535, %c0_536] : memref<9x128xf32, #tpu.memory_space<vmem>>, vector<1x128xf32>
    %652 = vector.broadcast %651 : vector<1x128xf32> to vector<32x128xf32>
    %653 = arith.mulf %650, %652 : vector<32x128xf32>
    %654 = arith.truncf %653 : vector<32x128xf32> to vector<32x128xbf16>
    %c64_537 = arith.constant 64 : index
    %c0_538 = arith.constant 0 : index
    %655 = vector.load %arg8[%c64_537, %c0_538] : memref<296x128xbf16, #tpu.memory_space<vmem>>, vector<32x128xbf16>
    tpu.vector_store %arg8[%c64_537, %c0_538], %654 {strides = array<i32>} : memref<296x128xbf16, #tpu.memory_space<vmem>>, vector<32x128xbf16>,
    %c3_539 = arith.constant 3 : index
    %c0_540 = arith.constant 0 : index
    %656 = vector.load %arg4[%c3_539, %c0_540] : memref<9x128xf32, #tpu.memory_space<vmem>>, vector<1x128xf32>
    %657 = vector.broadcast %656 : vector<1x128xf32> to vector<32x128xf32>
    %658 = arith.mulf %637, %657 : vector<32x128xf32>
    %659 = arith.truncf %658 : vector<32x128xf32> to vector<32x128xbf16>
    %c96_541 = arith.constant 96 : index
    %c0_542 = arith.constant 0 : index
    %660 = vector.load %arg8[%c96_541, %c0_542] : memref<296x128xbf16, #tpu.memory_space<vmem>>, vector<32x128xbf16>
    tpu.vector_store %arg8[%c96_541, %c0_542], %659 {strides = array<i32>} : memref<296x128xbf16, #tpu.memory_space<vmem>>, vector<32x128xbf16>,
    %661 = arith.truncf %635 : vector<32x128xf32> to vector<32x128xbf16>
    %c128_543 = arith.constant 128 : index
    %c0_544 = arith.constant 0 : index
    %662 = vector.load %arg8[%c128_543, %c0_544] : memref<296x128xbf16, #tpu.memory_space<vmem>>, vector<32x128xbf16>
    tpu.vector_store %arg8[%c128_543, %c0_544], %661 {strides = array<i32>} : memref<296x128xbf16, #tpu.memory_space<vmem>>, vector<32x128xbf16>,
    %c5_545 = arith.constant 5 : index
    %c0_546 = arith.constant 0 : index
    %663 = vector.load %arg4[%c5_545, %c0_546] : memref<9x128xf32, #tpu.memory_space<vmem>>, vector<1x128xf32>
    %664 = vector.broadcast %663 : vector<1x128xf32> to vector<32x128xf32>
    %665 = arith.mulf %636, %664 : vector<32x128xf32>
    %666 = arith.truncf %665 : vector<32x128xf32> to vector<32x128xbf16>
    %c160_547 = arith.constant 160 : index
    %c0_548 = arith.constant 0 : index
    %667 = vector.load %arg8[%c160_547, %c0_548] : memref<296x128xbf16, #tpu.memory_space<vmem>>, vector<32x128xbf16>
    tpu.vector_store %arg8[%c160_547, %c0_548], %666 {strides = array<i32>} : memref<296x128xbf16, #tpu.memory_space<vmem>>, vector<32x128xbf16>,
    %c120_i32_549 = arith.constant 120 : i32
    %668 = tpu.dynamic_rotate %637 by %c120_i32_549 dim 1 : vector<32x128xf32>, i32 -> vector<32x128xf32>
    %c6_550 = arith.constant 6 : index
    %c0_551 = arith.constant 0 : index
    %669 = vector.load %arg4[%c6_550, %c0_551] : memref<9x128xf32, #tpu.memory_space<vmem>>, vector<1x128xf32>
    %670 = vector.broadcast %669 : vector<1x128xf32> to vector<32x128xf32>
    %671 = arith.mulf %668, %670 : vector<32x128xf32>
    %672 = arith.truncf %671 : vector<32x128xf32> to vector<32x128xbf16>
    %c192_552 = arith.constant 192 : index
    %c0_553 = arith.constant 0 : index
    %673 = vector.load %arg8[%c192_552, %c0_553] : memref<296x128xbf16, #tpu.memory_space<vmem>>, vector<32x128xbf16>
    tpu.vector_store %arg8[%c192_552, %c0_553], %672 {strides = array<i32>} : memref<296x128xbf16, #tpu.memory_space<vmem>>, vector<32x128xbf16>,
    %c120_i32_554 = arith.constant 120 : i32
    %674 = tpu.dynamic_rotate %635 by %c120_i32_554 dim 1 : vector<32x128xf32>, i32 -> vector<32x128xf32>
    %c7_555 = arith.constant 7 : index
    %c0_556 = arith.constant 0 : index
    %675 = vector.load %arg4[%c7_555, %c0_556] : memref<9x128xf32, #tpu.memory_space<vmem>>, vector<1x128xf32>
    %676 = vector.broadcast %675 : vector<1x128xf32> to vector<32x128xf32>
    %677 = arith.mulf %674, %676 : vector<32x128xf32>
    %678 = arith.truncf %677 : vector<32x128xf32> to vector<32x128xbf16>
    %c224_557 = arith.constant 224 : index
    %c0_558 = arith.constant 0 : index
    %679 = vector.load %arg8[%c224_557, %c0_558] : memref<296x128xbf16, #tpu.memory_space<vmem>>, vector<32x128xbf16>
    tpu.vector_store %arg8[%c224_557, %c0_558], %678 {strides = array<i32>} : memref<296x128xbf16, #tpu.memory_space<vmem>>, vector<32x128xbf16>,
    %c120_i32_559 = arith.constant 120 : i32
    %680 = tpu.dynamic_rotate %636 by %c120_i32_559 dim 1 : vector<32x128xf32>, i32 -> vector<32x128xf32>
    %c8_560 = arith.constant 8 : index
    %c0_561 = arith.constant 0 : index
    %681 = vector.load %arg4[%c8_560, %c0_561] : memref<9x128xf32, #tpu.memory_space<vmem>>, vector<1x128xf32>
    %682 = vector.broadcast %681 : vector<1x128xf32> to vector<32x128xf32>
    %683 = arith.mulf %680, %682 : vector<32x128xf32>
    %684 = arith.truncf %683 : vector<32x128xf32> to vector<32x128xbf16>
    %c256_562 = arith.constant 256 : index
    %c0_563 = arith.constant 0 : index
    %685 = vector.load %arg8[%c256_562, %c0_563] : memref<296x128xbf16, #tpu.memory_space<vmem>>, vector<32x128xbf16>
    tpu.vector_store %arg8[%c256_562, %c0_563], %684 {strides = array<i32>} : memref<296x128xbf16, #tpu.memory_space<vmem>>, vector<32x128xbf16>,
    %c11 = arith.constant 11 : index
    %c0_564 = arith.constant 0 : index
    %c0_565 = arith.constant 0 : index
    %686 = vector.load %arg2[%c11, %c0_564, %c0_565] : memref<12x32x296xbf16, #tpu.memory_space<vmem>>, vector<1x32x296xbf16>
    %687 = vector.shape_cast %686 : vector<1x32x296xbf16> to vector<32x296xbf16>
    %c0_566 = arith.constant 0 : index
    %c0_567 = arith.constant 0 : index
    %688 = vector.load %arg8[%c0_566, %c0_567] : memref<296x128xbf16, #tpu.memory_space<vmem>>, vector<296x128xbf16>
    %cst_568 = arith.constant dense<0.000000e+00> : vector<32x128xf32>
    %689 = tpu.matmul %687, %688, %cst_568 {dimension_numbers = #tpu.dot_dimension_numbers<[1], [0], [0], [1], [0, 0, 1, 1], [], []>} : vector<32x296xbf16>, vector<296x128xbf16>, vector<32x128xf32> -> vector<32x128xf32>
    %c0_569 = arith.constant 0 : index
    %c0_570 = arith.constant 0 : index
    %c0_571 = arith.constant 0 : index
    %690 = vector.load %arg6[%c0_569, %c0_570, %c0_571] : memref<1x32x128xf32, #tpu.memory_space<vmem>>, vector<1x32x128xf32>
    %691 = vector.shape_cast %690 : vector<1x32x128xf32> to vector<32x128xf32>
    %692 = vector.shape_cast %689 : vector<32x128xf32> to vector<1x32x128xf32>
    tpu.vector_store %arg6[%c0_569, %c0_570, %c0_571], %692 {strides = array<i32>} : memref<1x32x128xf32, #tpu.memory_space<vmem>>, vector<1x32x128xf32>,
    return
  }
  func.func @transform_0(%arg0: i32) -> (i32, i32, i32) {
    %c0_i32 = arith.constant 0 : i32
    %c0_i32_0 = arith.constant 0 : i32
    %c0_i32_1 = arith.constant 0 : i32
    return %arg0, %c0_i32, %c0_i32_0 : i32, i32, i32
  }
  func.func @transform_1(%arg0: i32) -> (i32, i32, i32) {
    %c0_i32 = arith.constant 0 : i32
    %c0_i32_0 = arith.constant 0 : i32
    %c0_i32_1 = arith.constant 0 : i32
    %c0_i32_2 = arith.constant 0 : i32
    return %c0_i32, %c0_i32_0, %c0_i32_1 : i32, i32, i32
  }
  func.func @transform_2(%arg0: i32) -> (i32, i32) {
    %c0_i32 = arith.constant 0 : i32
    %c0_i32_0 = arith.constant 0 : i32
    %c0_i32_1 = arith.constant 0 : i32
    return %c0_i32, %c0_i32_0 : i32, i32
  }
  func.func @transform_3(%arg0: i32) -> (i32, i32) {
    %c0_i32 = arith.constant 0 : i32
    %c0_i32_0 = arith.constant 0 : i32
    %c0_i32_1 = arith.constant 0 : i32
    return %c0_i32, %c0_i32_0 : i32, i32
  }
  func.func @transform_4(%arg0: i32) -> (i32, i32) {
    %c0_i32 = arith.constant 0 : i32
    %c0_i32_0 = arith.constant 0 : i32
    %c0_i32_1 = arith.constant 0 : i32
    return %c0_i32, %c0_i32_0 : i32, i32
  }
  func.func @transform_5(%arg0: i32) -> (i32, i32, i32) {
    %c0_i32 = arith.constant 0 : i32
    %c0_i32_0 = arith.constant 0 : i32
    %c0_i32_1 = arith.constant 0 : i32
    return %arg0, %c0_i32, %c0_i32_0 : i32, i32, i32
  }
}

</mosaic_0001>

<llo_original>
// kernel: conv_mapping_forward.1
$region0: #{conv_mapping_forward.1}
  #allocation0 [shape = 'u32[]', space=smem, size = 0x4, offset = 0x4, fixed_abs, tag = 'smem constant byte address 0x4 - core index']
  #allocation1 [shape = 'u32[144,128]{1,0:T(1,128)}', space=vmem, size = 0x12000, scoped, tag = 'internal scratch']
  #allocation2 [shape = 'bf16[296,256]{1,0:T(8,128)(2,1)}', space=vmem, size = 0x25000, scoped, tag = 'scratch operand']
  #allocation3 [shape = 'bf16[296,128]{1,0:T(8,128)(2,1)}', space=vmem, size = 0x12800, scoped, tag = 'scratch operand']
  %s0 = inlined_call_operand.vmem [shape: f32[2,32,256], index: 0, kind: input, shape index: {}]
  %s1 = inlined_call_operand.vmem [shape: bf16[12,32,296], index: 1, kind: input, shape index: {}]
  %s2 = inlined_call_operand.vmem [shape: f32[9,256], index: 2, kind: input, shape index: {}]
  %s3 = inlined_call_operand.vmem [shape: f32[9,128], index: 3, kind: input, shape index: {}]
  %s4 = inlined_call_operand.vmem [shape: bf16[256,128], index: 4, kind: input, shape index: {}]
  %s5 = inlined_call_operand.vmem [shape: f32[2,32,128], index: 5, kind: output, shape index: {}]
  %s6 = sld [smem:[#allocation0]]
  $region53: #{conv_mapping_forward.1} parent=0
    _
  %s8 = ssub.s32 1, %s6
  %s9 = scalar_select 0, %s8, %s6
  loop: start=0, step=1, limit=4
  $region2: #{conv_mapping_forward.1} parent=0 // loop_pre_header
    _
  $region3: #{conv_mapping_forward.1} parent=0 // loop_header
    %s11 = sphi 0, %s15
    %p12 = scmp.ge.s32.totalorder %s11, 4
    %s21 = sphi 0, %s23
    %s24 = sphi 0, %s21
    %s25 = sphi 0, %s24
    %s41 = sphi 0, %s25
    %s45 = sphi 0, %s45
    %s47 = sphi 0, %s45
    %s48 = sphi 0, %s47
    %s62 = sphi 0, %s48
    %s66 = sphi 0, %s66
    %s68 = sphi 0, %s66
    %s69 = sphi 0, %s68
    %s83 = sphi 0, %s69
    %s87 = sphi 0, %s87
    %s89 = sphi 0, %s87
    %s90 = sphi 0, %s89
    %s104 = sphi 0, %s90
    %s108 = sphi 0, %s108
    %s110 = sphi 0, %s108
    %s111 = sphi 0, %s110
    %s125 = sphi 0, %s111
    %s131 = sphi 0, %s133
    %s134 = sphi 0, %s131
    %s135 = sphi 0, %s134
    %s151 = sphi 0, %s135
  $region4: #{conv_mapping_forward.1} parent=0 // loop_header_branch
    %14 = sbr.rel (%p12) target = $region8
  $region5: #{conv_mapping_forward.1} parent=0 // loop_body
    %s16 = ssub.s32 %s11, 1
    %s17 = ssub.s32 %s11, 2
    %s18 = sadd.s32 %s11, 1
    %s19 = ssub.s32 %s11, %s18
    %p20 = scmp.eq.s32.totalorder %s19, 0
    %s22 = sadd.s32 %s21, 1
    %s23 = scalar_select %p20, %s21, %s22
    %p26 = pneg %p20
    %p27 = scmp.eq.s32.totalorder %s11, 1
    %p28 = por %p26, %p27
    %p29 = scmp.ne.s32.totalorder %s21, %s24
    %p30 = scmp.eq.s32.totalorder %s11, 0
    %p31 = por %p29, %p30
    %p32 = scmp.ne.s32.totalorder %s21, %s24
    %p33 = scmp.eq.s32.totalorder %s16, 1
    %p34 = por %p32, %p33
    %p35 = scmp.ne.s32.totalorder %s24, %s25
    %p36 = scmp.eq.s32.totalorder %s16, 0
    %p37 = por %p35, %p36
    %p38 = scmp.ne.s32.totalorder %s24, %s25
    %p39 = scmp.eq.s32.totalorder %s17, 1
    %p40 = por %p38, %p39
    %p42 = scmp.ne.s32.totalorder %s25, %s41
    %p43 = scmp.eq.s32.totalorder %s17, 0
    %p44 = por %p42, %p43
    %s46 = sadd.s32 %s45, 1
    %p49 = scmp.eq.s32.totalorder %s11, 1
    %p50 = scmp.ne.s32.totalorder %s45, %s47
    %p51 = scmp.eq.s32.totalorder %s11, 0
    %p52 = por %p50, %p51
    %p53 = scmp.ne.s32.totalorder %s45, %s47
    %p54 = scmp.eq.s32.totalorder %s16, 1
    %p55 = por %p53, %p54
    %p56 = scmp.ne.s32.totalorder %s47, %s48
    %p57 = scmp.eq.s32.totalorder %s16, 0
    %p58 = por %p56, %p57
    %p59 = scmp.ne.s32.totalorder %s47, %s48
    %p60 = scmp.eq.s32.totalorder %s17, 1
    %p61 = por %p59, %p60
    %p63 = scmp.ne.s32.totalorder %s48, %s62
    %p64 = scmp.eq.s32.totalorder %s17, 0
    %p65 = por %p63, %p64
    %s67 = sadd.s32 %s66, 1
    %p70 = scmp.eq.s32.totalorder %s11, 1
    %p71 = scmp.ne.s32.totalorder %s66, %s68
    %p72 = scmp.eq.s32.totalorder %s11, 0
    %p73 = por %p71, %p72
    %p74 = scmp.ne.s32.totalorder %s66, %s68
    %p75 = scmp.eq.s32.totalorder %s16, 1
    %p76 = por %p74, %p75
    %p77 = scmp.ne.s32.totalorder %s68, %s69
    %p78 = scmp.eq.s32.totalorder %s16, 0
    %p79 = por %p77, %p78
    %p80 = scmp.ne.s32.totalorder %s68, %s69
    %p81 = scmp.eq.s32.totalorder %s17, 1
    %p82 = por %p80, %p81
    %p84 = scmp.ne.s32.totalorder %s69, %s83
    %p85 = scmp.eq.s32.totalorder %s17, 0
    %p86 = por %p84, %p85
    %s88 = sadd.s32 %s87, 1
    %p91 = scmp.eq.s32.totalorder %s11, 1
    %p92 = scmp.ne.s32.totalorder %s87, %s89
    %p93 = scmp.eq.s32.totalorder %s11, 0
    %p94 = por %p92, %p93
    %p95 = scmp.ne.s32.totalorder %s87, %s89
    %p96 = scmp.eq.s32.totalorder %s16, 1
    %p97 = por %p95, %p96
    %p98 = scmp.ne.s32.totalorder %s89, %s90
    %p99 = scmp.eq.s32.totalorder %s16, 0
    %p100 = por %p98, %p99
    %p101 = scmp.ne.s32.totalorder %s89, %s90
    %p102 = scmp.eq.s32.totalorder %s17, 1
    %p103 = por %p101, %p102
    %p105 = scmp.ne.s32.totalorder %s90, %s104
    %p106 = scmp.eq.s32.totalorder %s17, 0
    %p107 = por %p105, %p106
    %s109 = sadd.s32 %s108, 1
    %p112 = scmp.eq.s32.totalorder %s11, 1
    %p113 = scmp.ne.s32.totalorder %s108, %s110
    %p114 = scmp.eq.s32.totalorder %s11, 0
    %p115 = por %p113, %p114
    %p116 = scmp.ne.s32.totalorder %s108, %s110
    %p117 = scmp.eq.s32.totalorder %s16, 1
    %p118 = por %p116, %p117
    %p119 = scmp.ne.s32.totalorder %s110, %s111
    %p120 = scmp.eq.s32.totalorder %s16, 0
    %p121 = por %p119, %p120
    %p122 = scmp.ne.s32.totalorder %s110, %s111
    %p123 = scmp.eq.s32.totalorder %s17, 1
    %p124 = por %p122, %p123
    %p126 = scmp.ne.s32.totalorder %s111, %s125
    %p127 = scmp.eq.s32.totalorder %s17, 0
    %p128 = por %p126, %p127
    %s129 = ssub.s32 %s11, %s18
    %p130 = scmp.eq.s32.totalorder %s129, 0
    %s132 = sadd.s32 %s131, 1
    %s133 = scalar_select %p130, %s131, %s132
    %p136 = pneg %p130
    %p137 = scmp.eq.s32.totalorder %s11, 1
    %p138 = por %p136, %p137
    %p139 = scmp.ne.s32.totalorder %s131, %s134
    %p140 = scmp.eq.s32.totalorder %s11, 0
    %p141 = por %p139, %p140
    %p142 = scmp.ne.s32.totalorder %s131, %s134
    %p143 = scmp.eq.s32.totalorder %s16, 1
    %p144 = por %p142, %p143
    %p145 = scmp.ne.s32.totalorder %s134, %s135
    %p146 = scmp.eq.s32.totalorder %s16, 0
    %p147 = por %p145, %p146
    %p148 = scmp.ne.s32.totalorder %s134, %s135
    %p149 = scmp.eq.s32.totalorder %s17, 1
    %p150 = por %p148, %p149
    %p152 = scmp.ne.s32.totalorder %s135, %s151
    %p153 = scmp.eq.s32.totalorder %s17, 0
    %p154 = por %p152, %p153
    %p155 = scmp.le.s32.totalorder 1, %s11
    %p156 = scmp.lt.s32.totalorder %s11, 3
    %p157 = pnand %p155, %p156
    %p158 = pneg %p157
    // Predicated region
    $region9: #{conv_mapping_forward.1} parent=5 // pred_check
      _
    $region10: #{conv_mapping_forward.1} parent=5 // pred_check_branch
      %160 = sbr.rel (%p157) target = $region12
    $region11: #{conv_mapping_forward.1} parent=5 // pred_region
      %s161 = ssub.s32 %s11, 1
      // Predicated region
      $region13: #{conv_mapping_forward.1} parent=11 // pred_check
        %p162 = pneg %p58
      $region14: #{conv_mapping_forward.1} parent=11 // pred_check_branch
        %164 = sbr.rel (%p162) target = $region16
      $region15: #{conv_mapping_forward.1} parent=11 // pred_region
        _
      $region16: #{conv_mapping_forward.1} parent=11 // pred_fallthru
        _
      // Predicated region
      $region17: #{conv_mapping_forward.1} parent=11 // pred_check
        %p165 = pneg %p79
      $region18: #{conv_mapping_forward.1} parent=11 // pred_check_branch
        %167 = sbr.rel (%p165) target = $region20
      $region19: #{conv_mapping_forward.1} parent=11 // pred_region
        _
      $region20: #{conv_mapping_forward.1} parent=11 // pred_fallthru
        _
      // Predicated region
      $region21: #{conv_mapping_forward.1} parent=11 // pred_check
        %p168 = pneg %p100
      $region22: #{conv_mapping_forward.1} parent=11 // pred_check_branch
        %170 = sbr.rel (%p168) target = $region24
      $region23: #{conv_mapping_forward.1} parent=11 // pred_region
        _
      $region24: #{conv_mapping_forward.1} parent=11 // pred_fallthru
        _
      // Predicated region
      $region25: #{conv_mapping_forward.1} parent=11 // pred_check
        %p171 = pneg %p121
      $region26: #{conv_mapping_forward.1} parent=11 // pred_check_branch
        %173 = sbr.rel (%p171) target = $region28
      $region27: #{conv_mapping_forward.1} parent=11 // pred_region
        _
      $region28: #{conv_mapping_forward.1} parent=11 // pred_fallthru
        _
    $region12: #{conv_mapping_forward.1} parent=5 // pred_fallthru
      _
    %p174 = scmp.lt.s32.totalorder %s11, 2
    // Predicated region
    $region29: #{conv_mapping_forward.1} parent=5 // pred_check
      %p175 = pneg %p174
    $region30: #{conv_mapping_forward.1} parent=5 // pred_check_branch
      %177 = sbr.rel (%p175) target = $region32
    $region31: #{conv_mapping_forward.1} parent=5 // pred_region
      // Predicated region
      $region33: #{conv_mapping_forward.1} parent=31 // pred_check
        %p178 = pneg %p31
      $region34: #{conv_mapping_forward.1} parent=31 // pred_check_branch
        %180 = sbr.rel (%p178) target = $region36
      $region35: #{conv_mapping_forward.1} parent=31 // pred_region
        %p181 = scmp.lt.s32.totalorder %s11, 1
        %s182 = scalar_select %p181, %s11, 1
        %s183 = smul.addr %s182, 8
        %s184 = smul.addr %s183, 8
        %s185 = scalar_lea.vmem %s0, %s184
      $region36: #{conv_mapping_forward.1} parent=31 // pred_fallthru
        _
    $region32: #{conv_mapping_forward.1} parent=5 // pred_fallthru
      _
    %p186 = scmp.le.s32.totalorder 1, %s11
    %p187 = scmp.lt.s32.totalorder %s11, 3
    %p188 = pnand %p186, %p187
    %p189 = pneg %p188
    // Predicated region
    $region37: #{conv_mapping_forward.1} parent=5 // pred_check
      _
    $region38: #{conv_mapping_forward.1} parent=5 // pred_check_branch
      %191 = sbr.rel (%p188) target = $region40
    $region39: #{conv_mapping_forward.1} parent=5 // pred_region
      %s192 = ssub.s32 %s11, 1
      %p193 = scmp.lt.s32.totalorder %s16, 1
      %s194 = scalar_select %p193, %s16, 1
      %s195 = smul.addr %s194, 8
      %s196 = smul.addr %s195, 8
      %s197 = scalar_lea.vmem %s0, %s196
      %p198 = pneg %p37
      %p199 = pneg %p34
      %p200 = pneg %p58
      %p201 = pneg %p55
      %p202 = pneg %p79
      %p203 = pneg %p76
      %p204 = pneg %p100
      %p205 = pneg %p97
      %p206 = pneg %p121
      %p207 = pneg %p118
      %p208 = pneg %p147
      %p209 = pneg %p144
      %p210 = scmp.lt.s32.totalorder %s16, 1
      %s211 = scalar_select %p210, %s16, 1
      %s212 = smul.addr %s211, 4
      %s213 = smul.addr %s212, 8
      %s214 = scalar_lea.vmem %s5, %s213
      %p215 = scmp.lt.s32.totalorder %s16, 1
      %s216 = scalar_select %p215, %s16, 1
      %s217 = smul.addr %s216, 8
      %s218 = smul.addr %s217, 8
      %s219 = scalar_lea.vmem %s0, %s218
      %p220 = scmp.lt.s32.totalorder %s16, 1
      %s221 = scalar_select %p220, %s16, 1
      %s222 = smul.addr %s221, 4
      %s223 = smul.addr %s222, 8
      %s224 = scalar_lea.vmem %s5, %s223
      %v226 = vlaneseq
      %v227 = vshrl.u32 %v226, 7
      %vm228 = vcmp.eq.s32.totalorder %v227, 0
      %v229 = vsel %vm228, 1.0, 0.0
      %v230 = vpack.c.bf16 %v229, %v229
      %v233 = vunpack.c.l.s4 839922192
      %v234 = vunpack.c.0.s8 %v233
      %v235 = vlaneseq
      %v236 = vshrl.u32 %v235, 7
      %v237 = vsub.s32 %v234, %v236
      %v238 = vrot.slane %v230, %v237
      %240 = vst [vmem:[#allocation2 + $0x120] sm:$0xff] %v238
      %241 = vst [vmem:[#allocation3 + $0x90] sm:$0xf] %v230
      %v242 = vld [vmem:[%s219] sm:$0xff]
      %v243 = vld [vmem:[%s219 + $0x8] sm:$0xff]
      %v244 = vld [vmem:[%s219 + $0x10] sm:$0xff]
      %v245 = vld [vmem:[%s219 + $0x18] sm:$0xff]
      %v246 = vld [vmem:[%s219 + $0x20] sm:$0xff]
      %v247 = vld [vmem:[%s219 + $0x28] sm:$0xff]
      %v248 = vld [vmem:[%s219 + $0x30] sm:$0xff]
      %v249 = vld [vmem:[%s219 + $0x38] sm:$0xff]
      %250 = vrot.lane.b32.xlu0 %v242, 127
      %v251 = vpop.permute.xlu0 %250
      %252 = vrot.lane.b32.xlu0 %v244, 127
      %v253 = vpop.permute.xlu0 %252
      %254 = vrot.lane.b32.xlu0 %v246, 127
      %v255 = vpop.permute.xlu0 %254
      %256 = vrot.lane.b32.xlu0 %v248, 127
      %v257 = vpop.permute.xlu0 %256
      %258 = vrot.lane.b32.xlu0 %v243, 127
      %v259 = vpop.permute.xlu0 %258
      %260 = vrot.lane.b32.xlu0 %v245, 127
      %v261 = vpop.permute.xlu0 %260
      %262 = vrot.lane.b32.xlu0 %v247, 127
      %v263 = vpop.permute.xlu0 %262
      %264 = vrot.lane.b32.xlu0 %v249, 127
      %v265 = vpop.permute.xlu0 %264
      %v266 = vlaneseq
      %v267 = vand.u32 %v266, 127
      %vm268 = vcmp.lt.s32.totalorder %v267, 127
      %v269 = vsel %vm268, %v251, %v259
      %v270 = vsel %vm268, %v253, %v261
      %v271 = vsel %vm268, %v255, %v263
      %v272 = vsel %vm268, %v257, %v265
      %v273 = vsel %vm268, %v259, %v251
      %v274 = vsel %vm268, %v261, %v253
      %v275 = vsel %vm268, %v263, %v255
      %v276 = vsel %vm268, %v265, %v257
      %277 = vrot.lane.b32.xlu0 %v242, 1
      %v278 = vpop.permute.xlu0 %277
      %279 = vrot.lane.b32.xlu0 %v244, 1
      %v280 = vpop.permute.xlu0 %279
      %281 = vrot.lane.b32.xlu0 %v246, 1
      %v282 = vpop.permute.xlu0 %281
      %283 = vrot.lane.b32.xlu0 %v248, 1
      %v284 = vpop.permute.xlu0 %283
      %285 = vrot.lane.b32.xlu0 %v243, 1
      %v286 = vpop.permute.xlu0 %285
      %287 = vrot.lane.b32.xlu0 %v245, 1
      %v288 = vpop.permute.xlu0 %287
      %289 = vrot.lane.b32.xlu0 %v247, 1
      %v290 = vpop.permute.xlu0 %289
      %291 = vrot.lane.b32.xlu0 %v249, 1
      %v292 = vpop.permute.xlu0 %291
      %vm293 = vcmp.lt.s32.totalorder %v267, 1
      %v294 = vsel %vm293, %v278, %v286
      %v295 = vsel %vm293, %v280, %v288
      %v296 = vsel %vm293, %v282, %v290
      %v297 = vsel %vm293, %v284, %v292
      %v298 = vsel %vm293, %v286, %v278
      %v299 = vsel %vm293, %v288, %v280
      %v300 = vsel %vm293, %v290, %v282
      %v301 = vsel %vm293, %v292, %v284
      %302 = vrot.lane.b32.xlu0 %v298, 16
      %v303 = vpop.permute.xlu0 %302
      %304 = vrot.lane.b32.xlu0 %v299, 16
      %v305 = vpop.permute.xlu0 %304
      %306 = vrot.lane.b32.xlu0 %v300, 16
      %v307 = vpop.permute.xlu0 %306
      %308 = vrot.lane.b32.xlu0 %v301, 16
      %v309 = vpop.permute.xlu0 %308
      %310 = vrot.lane.b32.xlu0 %v294, 16
      %v311 = vpop.permute.xlu0 %310
      %312 = vrot.lane.b32.xlu0 %v295, 16
      %v313 = vpop.permute.xlu0 %312
      %314 = vrot.lane.b32.xlu0 %v296, 16
      %v315 = vpop.permute.xlu0 %314
      %316 = vrot.lane.b32.xlu0 %v297, 16
      %v317 = vpop.permute.xlu0 %316
      %vm318 = vcmp.lt.s32.totalorder %v267, 16
      %v319 = vsel %vm318, %v303, %v311
      %v320 = vsel %vm318, %v305, %v313
      %v321 = vsel %vm318, %v307, %v315
      %v322 = vsel %vm318, %v309, %v317
      %v323 = vsel %vm318, %v311, %v303
      %v324 = vsel %vm318, %v313, %v305
      %v325 = vsel %vm318, %v315, %v307
      %v326 = vsel %vm318, %v317, %v309
      %v327 = vld [vmem:[%s2] ss:$8 sm:$0x3]
      %v329 = vlaneseq
      %v330 = vshrl.u32 %v329, 7
      %v331 = vsub.s32 0, %v330
      %v332 = vrot.slane %v327, %v331
      %v333 = vlaneseq
      %v334 = vshrl.u32 %v333, 7
      %v335 = vsub.s32 1, %v334
      %v336 = vrot.slane %v327, %v335
      %v339 = vmul.f32 %v323, %v332
      %v340 = vmul.f32 %v319, %v336
      %v341 = vmul.f32 %v324, %v332
      %v342 = vmul.f32 %v320, %v336
      %v343 = vmul.f32 %v325, %v332
      %v344 = vmul.f32 %v321, %v336
      %v345 = vmul.f32 %v326, %v332
      %v346 = vmul.f32 %v322, %v336
      %v347 = vpack.c.bf16 %v341, %v339
      %v348 = vpack.c.bf16 %v342, %v340
      %v349 = vpack.c.bf16 %v345, %v343
      %v350 = vpack.c.bf16 %v346, %v344
      %v355 = vunpack.c.l.b16 %v347
      %v356 = vunpack.c.l.b16 %v348
      %v357 = vunpack.c.h.b16 %v347
      %v358 = vunpack.c.h.b16 %v348
      %v359 = vunpack.c.l.b16 %v349
      %v360 = vunpack.c.l.b16 %v350
      %v361 = vunpack.c.h.b16 %v349
      %v362 = vunpack.c.h.b16 %v350
      %v363 = vpack.c.b16 %v356, %v355
      %v364 = vpack.c.b16 %v358, %v357
      %v365 = vpack.c.b16 %v360, %v359
      %v366 = vpack.c.b16 %v362, %v361
      %371 = vst [vmem:[#allocation2] sm:$0xff] %v363
      %372 = vst [vmem:[#allocation2 + $0x8] sm:$0xff] %v364
      %373 = vst [vmem:[#allocation2 + $0x10] sm:$0xff] %v365
      %374 = vst [vmem:[#allocation2 + $0x18] sm:$0xff] %v366
      %375 = vrot.lane.b32.xlu0 %v242, 16
      %v376 = vpop.permute.xlu0 %375
      %377 = vrot.lane.b32.xlu0 %v244, 16
      %v378 = vpop.permute.xlu0 %377
      %379 = vrot.lane.b32.xlu0 %v246, 16
      %v380 = vpop.permute.xlu0 %379
      %381 = vrot.lane.b32.xlu0 %v248, 16
      %v382 = vpop.permute.xlu0 %381
      %383 = vrot.lane.b32.xlu0 %v243, 16
      %v384 = vpop.permute.xlu0 %383
      %385 = vrot.lane.b32.xlu0 %v245, 16
      %v386 = vpop.permute.xlu0 %385
      %387 = vrot.lane.b32.xlu0 %v247, 16
      %v388 = vpop.permute.xlu0 %387
      %389 = vrot.lane.b32.xlu0 %v249, 16
      %v390 = vpop.permute.xlu0 %389
      %v391 = vsel %vm318, %v376, %v384
      %v392 = vsel %vm318, %v378, %v386
      %v393 = vsel %vm318, %v380, %v388
      %v394 = vsel %vm318, %v382, %v390
      %v395 = vsel %vm318, %v384, %v376
      %v396 = vsel %vm318, %v386, %v378
      %v397 = vsel %vm318, %v388, %v380
      %v398 = vsel %vm318, %v390, %v382
      %s399 = scalar_lea.vmem %s2, 1
      %v400 = vld [vmem:[%s399] ss:$8 sm:$0x3]
      %v402 = vlaneseq
      %v403 = vshrl.u32 %v402, 7
      %v404 = vsub.s32 0, %v403
      %v405 = vrot.slane %v400, %v404
      %v406 = vlaneseq
      %v407 = vshrl.u32 %v406, 7
      %v408 = vsub.s32 1, %v407
      %v409 = vrot.slane %v400, %v408
      %v412 = vmul.f32 %v395, %v405
      %v413 = vmul.f32 %v391, %v409
      %v414 = vmul.f32 %v396, %v405
      %v415 = vmul.f32 %v392, %v409
      %v416 = vmul.f32 %v397, %v405
      %v417 = vmul.f32 %v393, %v409
      %v418 = vmul.f32 %v398, %v405
      %v419 = vmul.f32 %v394, %v409
      %v420 = vpack.c.bf16 %v414, %v412
      %v421 = vpack.c.bf16 %v415, %v413
      %v422 = vpack.c.bf16 %v418, %v416
      %v423 = vpack.c.bf16 %v419, %v417
      %v428 = vunpack.c.l.b16 %v420
      %v429 = vunpack.c.l.b16 %v421
      %v430 = vunpack.c.h.b16 %v420
      %v431 = vunpack.c.h.b16 %v421
      %v432 = vunpack.c.l.b16 %v422
      %v433 = vunpack.c.l.b16 %v423
      %v434 = vunpack.c.h.b16 %v422
      %v435 = vunpack.c.h.b16 %v423
      %v436 = vpack.c.b16 %v429, %v428
      %v437 = vpack.c.b16 %v431, %v430
      %v438 = vpack.c.b16 %v433, %v432
      %v439 = vpack.c.b16 %v435, %v434
      %444 = vst [vmem:[#allocation2 + $0x20] sm:$0xff] %v436
      %445 = vst [vmem:[#allocation2 + $0x28] sm:$0xff] %v437
      %446 = vst [vmem:[#allocation2 + $0x30] sm:$0xff] %v438
      %447 = vst [vmem:[#allocation2 + $0x38] sm:$0xff] %v439
      %448 = vrot.lane.b32.xlu0 %v269, 16
      %v449 = vpop.permute.xlu0 %448
      %450 = vrot.lane.b32.xlu0 %v270, 16
      %v451 = vpop.permute.xlu0 %450
      %452 = vrot.lane.b32.xlu0 %v271, 16
      %v453 = vpop.permute.xlu0 %452
      %454 = vrot.lane.b32.xlu0 %v272, 16
      %v455 = vpop.permute.xlu0 %454
      %456 = vrot.lane.b32.xlu0 %v273, 16
      %v457 = vpop.permute.xlu0 %456
      %458 = vrot.lane.b32.xlu0 %v274, 16
      %v459 = vpop.permute.xlu0 %458
      %460 = vrot.lane.b32.xlu0 %v275, 16
      %v461 = vpop.permute.xlu0 %460
      %462 = vrot.lane.b32.xlu0 %v276, 16
      %v463 = vpop.permute.xlu0 %462
      %v464 = vsel %vm318, %v449, %v457
      %v465 = vsel %vm318, %v451, %v459
      %v466 = vsel %vm318, %v453, %v461
      %v467 = vsel %vm318, %v455, %v463
      %v468 = vsel %vm318, %v457, %v449
      %v469 = vsel %vm318, %v459, %v451
      %v470 = vsel %vm318, %v461, %v453
      %v471 = vsel %vm318, %v463, %v455
      %s472 = scalar_lea.vmem %s2, 2
      %v473 = vld [vmem:[%s472] ss:$8 sm:$0x3]
      %v475 = vlaneseq
      %v476 = vshrl.u32 %v475, 7
      %v477 = vsub.s32 0, %v476
      %v478 = vrot.slane %v473, %v477
      %v479 = vlaneseq
      %v480 = vshrl.u32 %v479, 7
      %v481 = vsub.s32 1, %v480
      %v482 = vrot.slane %v473, %v481
      %v485 = vmul.f32 %v468, %v478
      %v486 = vmul.f32 %v464, %v482
      %v487 = vmul.f32 %v469, %v478
      %v488 = vmul.f32 %v465, %v482
      %v489 = vmul.f32 %v470, %v478
      %v490 = vmul.f32 %v466, %v482
      %v491 = vmul.f32 %v471, %v478
      %v492 = vmul.f32 %v467, %v482
      %v493 = vpack.c.bf16 %v487, %v485
      %v494 = vpack.c.bf16 %v488, %v486
      %v495 = vpack.c.bf16 %v491, %v489
      %v496 = vpack.c.bf16 %v492, %v490
      %v501 = vunpack.c.l.b16 %v493
      %v502 = vunpack.c.l.b16 %v494
      %v503 = vunpack.c.h.b16 %v493
      %v504 = vunpack.c.h.b16 %v494
      %v505 = vunpack.c.l.b16 %v495
      %v506 = vunpack.c.l.b16 %v496
      %v507 = vunpack.c.h.b16 %v495
      %v508 = vunpack.c.h.b16 %v496
      %v509 = vpack.c.b16 %v502, %v501
      %v510 = vpack.c.b16 %v504, %v503
      %v511 = vpack.c.b16 %v506, %v505
      %v512 = vpack.c.b16 %v508, %v507
      %517 = vst [vmem:[#allocation2 + $0x40] sm:$0xff] %v509
      %518 = vst [vmem:[#allocation2 + $0x48] sm:$0xff] %v510
      %519 = vst [vmem:[#allocation2 + $0x50] sm:$0xff] %v511
      %520 = vst [vmem:[#allocation2 + $0x58] sm:$0xff] %v512
      %s521 = scalar_lea.vmem %s2, 3
      %v522 = vld [vmem:[%s521] ss:$8 sm:$0x3]
      %v524 = vlaneseq
      %v525 = vshrl.u32 %v524, 7
      %v526 = vsub.s32 0, %v525
      %v527 = vrot.slane %v522, %v526
      %v528 = vlaneseq
      %v529 = vshrl.u32 %v528, 7
      %v530 = vsub.s32 1, %v529
      %v531 = vrot.slane %v522, %v530
      %v534 = vmul.f32 %v298, %v527
      %v535 = vmul.f32 %v294, %v531
      %v536 = vmul.f32 %v299, %v527
      %v537 = vmul.f32 %v295, %v531
      %v538 = vmul.f32 %v300, %v527
      %v539 = vmul.f32 %v296, %v531
      %v540 = vmul.f32 %v301, %v527
      %v541 = vmul.f32 %v297, %v531
      %v542 = vpack.c.bf16 %v536, %v534
      %v543 = vpack.c.bf16 %v537, %v535
      %v544 = vpack.c.bf16 %v540, %v538
      %v545 = vpack.c.bf16 %v541, %v539
      %v550 = vunpack.c.l.b16 %v542
      %v551 = vunpack.c.l.b16 %v543
      %v552 = vunpack.c.h.b16 %v542
      %v553 = vunpack.c.h.b16 %v543
      %v554 = vunpack.c.l.b16 %v544
      %v555 = vunpack.c.l.b16 %v545
      %v556 = vunpack.c.h.b16 %v544
      %v557 = vunpack.c.h.b16 %v545
      %v558 = vpack.c.b16 %v551, %v550
      %v559 = vpack.c.b16 %v553, %v552
      %v560 = vpack.c.b16 %v555, %v554
      %v561 = vpack.c.b16 %v557, %v556
      %566 = vst [vmem:[#allocation2 + $0x60] sm:$0xff] %v558
      %567 = vst [vmem:[#allocation2 + $0x68] sm:$0xff] %v559
      %568 = vst [vmem:[#allocation2 + $0x70] sm:$0xff] %v560
      %569 = vst [vmem:[#allocation2 + $0x78] sm:$0xff] %v561
      %v570 = vpack.c.bf16 %v244, %v242
      %v571 = vpack.c.bf16 %v245, %v243
      %v572 = vpack.c.bf16 %v248, %v246
      %v573 = vpack.c.bf16 %v249, %v247
      %v578 = vunpack.c.l.b16 %v570
      %v579 = vunpack.c.l.b16 %v571
      %v580 = vunpack.c.h.b16 %v570
      %v581 = vunpack.c.h.b16 %v571
      %v582 = vunpack.c.l.b16 %v572
      %v583 = vunpack.c.l.b16 %v573
      %v584 = vunpack.c.h.b16 %v572
      %v585 = vunpack.c.h.b16 %v573
      %v586 = vpack.c.b16 %v579, %v578
      %v587 = vpack.c.b16 %v581, %v580
      %v588 = vpack.c.b16 %v583, %v582
      %v589 = vpack.c.b16 %v585, %v584
      %594 = vst [vmem:[#allocation2 + $0x80] sm:$0xff] %v586
      %595 = vst [vmem:[#allocation2 + $0x88] sm:$0xff] %v587
      %596 = vst [vmem:[#allocation2 + $0x90] sm:$0xff] %v588
      %597 = vst [vmem:[#allocation2 + $0x98] sm:$0xff] %v589
      %s598 = scalar_lea.vmem %s2, 5
      %v599 = vld [vmem:[%s598] ss:$8 sm:$0x3]
      %v601 = vlaneseq
      %v602 = vshrl.u32 %v601, 7
      %v603 = vsub.s32 0, %v602
      %v604 = vrot.slane %v599, %v603
      %v605 = vlaneseq
      %v606 = vshrl.u32 %v605, 7
      %v607 = vsub.s32 1, %v606
      %v608 = vrot.slane %v599, %v607
      %v611 = vmul.f32 %v269, %v604
      %v612 = vmul.f32 %v273, %v608
      %v613 = vmul.f32 %v270, %v604
      %v614 = vmul.f32 %v274, %v608
      %v615 = vmul.f32 %v271, %v604
      %v616 = vmul.f32 %v275, %v608
      %v617 = vmul.f32 %v272, %v604
      %v618 = vmul.f32 %v276, %v608
      %v619 = vpack.c.bf16 %v613, %v611
      %v620 = vpack.c.bf16 %v614, %v612
      %v621 = vpack.c.bf16 %v617, %v615
      %v622 = vpack.c.bf16 %v618, %v616
      %v627 = vunpack.c.l.b16 %v619
      %v628 = vunpack.c.l.b16 %v620
      %v629 = vunpack.c.h.b16 %v619
      %v630 = vunpack.c.h.b16 %v620
      %v631 = vunpack.c.l.b16 %v621
      %v632 = vunpack.c.l.b16 %v622
      %v633 = vunpack.c.h.b16 %v621
      %v634 = vunpack.c.h.b16 %v622
      %v635 = vpack.c.b16 %v628, %v627
      %v636 = vpack.c.b16 %v630, %v629
      %v637 = vpack.c.b16 %v632, %v631
      %v638 = vpack.c.b16 %v634, %v633
      %643 = vst [vmem:[#allocation2 + $0xa0] sm:$0xff] %v635
      %644 = vst [vmem:[#allocation2 + $0xa8] sm:$0xff] %v636
      %645 = vst [vmem:[#allocation2 + $0xb0] sm:$0xff] %v637
      %646 = vst [vmem:[#allocation2 + $0xb8] sm:$0xff] %v638
      %647 = vrot.lane.b32.xlu0 %v298, 112
      %v648 = vpop.permute.xlu0 %647
      %649 = vrot.lane.b32.xlu0 %v299, 112
      %v650 = vpop.permute.xlu0 %649
      %651 = vrot.lane.b32.xlu0 %v300, 112
      %v652 = vpop.permute.xlu0 %651
      %653 = vrot.lane.b32.xlu0 %v301, 112
      %v654 = vpop.permute.xlu0 %653
      %655 = vrot.lane.b32.xlu0 %v294, 112
      %v656 = vpop.permute.xlu0 %655
      %657 = vrot.lane.b32.xlu0 %v295, 112
      %v658 = vpop.permute.xlu0 %657
      %659 = vrot.lane.b32.xlu0 %v296, 112
      %v660 = vpop.permute.xlu0 %659
      %661 = vrot.lane.b32.xlu0 %v297, 112
      %v662 = vpop.permute.xlu0 %661
      %vm663 = vcmp.lt.s32.totalorder %v267, 112
      %v664 = vsel %vm663, %v648, %v656
      %v665 = vsel %vm663, %v650, %v658
      %v666 = vsel %vm663, %v652, %v660
      %v667 = vsel %vm663, %v654, %v662
      %v668 = vsel %vm663, %v656, %v648
      %v669 = vsel %vm663, %v658, %v650
      %v670 = vsel %vm663, %v660, %v652
      %v671 = vsel %vm663, %v662, %v654
      %s672 = scalar_lea.vmem %s2, 6
      %v673 = vld [vmem:[%s672] ss:$8 sm:$0x3]
      %v675 = vlaneseq
      %v676 = vshrl.u32 %v675, 7
      %v677 = vsub.s32 0, %v676
      %v678 = vrot.slane %v673, %v677
      %v679 = vlaneseq
      %v680 = vshrl.u32 %v679, 7
      %v681 = vsub.s32 1, %v680
      %v682 = vrot.slane %v673, %v681
      %v685 = vmul.f32 %v664, %v678
      %v686 = vmul.f32 %v668, %v682
      %v687 = vmul.f32 %v665, %v678
      %v688 = vmul.f32 %v669, %v682
      %v689 = vmul.f32 %v666, %v678
      %v690 = vmul.f32 %v670, %v682
      %v691 = vmul.f32 %v667, %v678
      %v692 = vmul.f32 %v671, %v682
      %v693 = vpack.c.bf16 %v687, %v685
      %v694 = vpack.c.bf16 %v688, %v686
      %v695 = vpack.c.bf16 %v691, %v689
      %v696 = vpack.c.bf16 %v692, %v690
      %v701 = vunpack.c.l.b16 %v693
      %v702 = vunpack.c.l.b16 %v694
      %v703 = vunpack.c.h.b16 %v693
      %v704 = vunpack.c.h.b16 %v694
      %v705 = vunpack.c.l.b16 %v695
      %v706 = vunpack.c.l.b16 %v696
      %v707 = vunpack.c.h.b16 %v695
      %v708 = vunpack.c.h.b16 %v696
      %v709 = vpack.c.b16 %v702, %v701
      %v710 = vpack.c.b16 %v704, %v703
      %v711 = vpack.c.b16 %v706, %v705
      %v712 = vpack.c.b16 %v708, %v707
      %717 = vst [vmem:[#allocation2 + $0xc0] sm:$0xff] %v709
      %718 = vst [vmem:[#allocation2 + $0xc8] sm:$0xff] %v710
      %719 = vst [vmem:[#allocation2 + $0xd0] sm:$0xff] %v711
      %720 = vst [vmem:[#allocation2 + $0xd8] sm:$0xff] %v712
      %721 = vrot.lane.b32.xlu0 %v242, 112
      %v722 = vpop.permute.xlu0 %721
      %723 = vrot.lane.b32.xlu0 %v244, 112
      %v724 = vpop.permute.xlu0 %723
      %725 = vrot.lane.b32.xlu0 %v246, 112
      %v726 = vpop.permute.xlu0 %725
      %727 = vrot.lane.b32.xlu0 %v248, 112
      %v728 = vpop.permute.xlu0 %727
      %729 = vrot.lane.b32.xlu0 %v243, 112
      %v730 = vpop.permute.xlu0 %729
      %731 = vrot.lane.b32.xlu0 %v245, 112
      %v732 = vpop.permute.xlu0 %731
      %733 = vrot.lane.b32.xlu0 %v247, 112
      %v734 = vpop.permute.xlu0 %733
      %735 = vrot.lane.b32.xlu0 %v249, 112
      %v736 = vpop.permute.xlu0 %735
      %v737 = vsel %vm663, %v722, %v730
      %v738 = vsel %vm663, %v724, %v732
      %v739 = vsel %vm663, %v726, %v734
      %v740 = vsel %vm663, %v728, %v736
      %v741 = vsel %vm663, %v730, %v722
      %v742 = vsel %vm663, %v732, %v724
      %v743 = vsel %vm663, %v734, %v726
      %v744 = vsel %vm663, %v736, %v728
      %s745 = scalar_lea.vmem %s2, 7
      %v746 = vld [vmem:[%s745] ss:$8 sm:$0x3]
      %v748 = vlaneseq
      %v749 = vshrl.u32 %v748, 7
      %v750 = vsub.s32 0, %v749
      %v751 = vrot.slane %v746, %v750
      %v752 = vlaneseq
      %v753 = vshrl.u32 %v752, 7
      %v754 = vsub.s32 1, %v753
      %v755 = vrot.slane %v746, %v754
      %v758 = vmul.f32 %v737, %v751
      %v759 = vmul.f32 %v741, %v755
      %v760 = vmul.f32 %v738, %v751
      %v761 = vmul.f32 %v742, %v755
      %v762 = vmul.f32 %v739, %v751
      %v763 = vmul.f32 %v743, %v755
      %v764 = vmul.f32 %v740, %v751
      %v765 = vmul.f32 %v744, %v755
      %v766 = vpack.c.bf16 %v760, %v758
      %v767 = vpack.c.bf16 %v761, %v759
      %v768 = vpack.c.bf16 %v764, %v762
      %v769 = vpack.c.bf16 %v765, %v763
      %v774 = vunpack.c.l.b16 %v766
      %v775 = vunpack.c.l.b16 %v767
      %v776 = vunpack.c.h.b16 %v766
      %v777 = vunpack.c.h.b16 %v767
      %v778 = vunpack.c.l.b16 %v768
      %v779 = vunpack.c.l.b16 %v769
      %v780 = vunpack.c.h.b16 %v768
      %v781 = vunpack.c.h.b16 %v769
      %v782 = vpack.c.b16 %v775, %v774
      %v783 = vpack.c.b16 %v777, %v776
      %v784 = vpack.c.b16 %v779, %v778
      %v785 = vpack.c.b16 %v781, %v780
      %790 = vst [vmem:[#allocation2 + $0xe0] sm:$0xff] %v782
      %791 = vst [vmem:[#allocation2 + $0xe8] sm:$0xff] %v783
      %792 = vst [vmem:[#allocation2 + $0xf0] sm:$0xff] %v784
      %793 = vst [vmem:[#allocation2 + $0xf8] sm:$0xff] %v785
      %794 = vrot.lane.b32.xlu0 %v269, 112
      %v795 = vpop.permute.xlu0 %794
      %796 = vrot.lane.b32.xlu0 %v270, 112
      %v797 = vpop.permute.xlu0 %796
      %798 = vrot.lane.b32.xlu0 %v271, 112
      %v799 = vpop.permute.xlu0 %798
      %800 = vrot.lane.b32.xlu0 %v272, 112
      %v801 = vpop.permute.xlu0 %800
      %802 = vrot.lane.b32.xlu0 %v273, 112
      %v803 = vpop.permute.xlu0 %802
      %804 = vrot.lane.b32.xlu0 %v274, 112
      %v805 = vpop.permute.xlu0 %804
      %806 = vrot.lane.b32.xlu0 %v275, 112
      %v807 = vpop.permute.xlu0 %806
      %808 = vrot.lane.b32.xlu0 %v276, 112
      %v809 = vpop.permute.xlu0 %808
      %v810 = vsel %vm663, %v795, %v803
      %v811 = vsel %vm663, %v797, %v805
      %v812 = vsel %vm663, %v799, %v807
      %v813 = vsel %vm663, %v801, %v809
      %v814 = vsel %vm663, %v803, %v795
      %v815 = vsel %vm663, %v805, %v797
      %v816 = vsel %vm663, %v807, %v799
      %v817 = vsel %vm663, %v809, %v801
      %s818 = scalar_lea.vmem %s2, 16
      %v819 = vld [vmem:[%s818] ss:$8 sm:$0x3]
      %v821 = vlaneseq
      %v822 = vshrl.u32 %v821, 7
      %v823 = vsub.s32 0, %v822
      %v824 = vrot.slane %v819, %v823
      %v825 = vlaneseq
      %v826 = vshrl.u32 %v825, 7
      %v827 = vsub.s32 1, %v826
      %v828 = vrot.slane %v819, %v827
      %v831 = vmul.f32 %v810, %v824
      %v832 = vmul.f32 %v814, %v828
      %v833 = vmul.f32 %v811, %v824
      %v834 = vmul.f32 %v815, %v828
      %v835 = vmul.f32 %v812, %v824
      %v836 = vmul.f32 %v816, %v828
      %v837 = vmul.f32 %v813, %v824
      %v838 = vmul.f32 %v817, %v828
      %v839 = vpack.c.bf16 %v833, %v831
      %v840 = vpack.c.bf16 %v834, %v832
      %v841 = vpack.c.bf16 %v837, %v835
      %v842 = vpack.c.bf16 %v838, %v836
      %v847 = vunpack.c.l.b16 %v839
      %v848 = vunpack.c.l.b16 %v840
      %v849 = vunpack.c.h.b16 %v839
      %v850 = vunpack.c.h.b16 %v840
      %v851 = vunpack.c.l.b16 %v841
      %v852 = vunpack.c.l.b16 %v842
      %v853 = vunpack.c.h.b16 %v841
      %v854 = vunpack.c.h.b16 %v842
      %v855 = vpack.c.b16 %v848, %v847
      %v856 = vpack.c.b16 %v850, %v849
      %v857 = vpack.c.b16 %v852, %v851
      %v858 = vpack.c.b16 %v854, %v853
      %863 = vst [vmem:[#allocation2 + $0x100] sm:$0xff] %v855
      %864 = vst [vmem:[#allocation2 + $0x108] sm:$0xff] %v856
      %865 = vst [vmem:[#allocation2 + $0x110] sm:$0xff] %v857
      %866 = vst [vmem:[#allocation2 + $0x118] sm:$0xff] %v858
      %v867 = vld [vmem:[%s1] sm:$0xff]
      %v868 = vld [vmem:[%s1 + $0x8] sm:$0xf]
      %v869 = vld [vmem:[%s1 + $0xc] sm:$0xff]
      %v870 = vld [vmem:[%s1 + $0x14] sm:$0xf]
      %v871 = vld [vmem:[%s1 + $0x18] sm:$0xff]
      %v872 = vld [vmem:[%s1 + $0x20] sm:$0xf]
      %v873 = vld [vmem:[%s1 + $0x24] sm:$0xff]
      %v874 = vld [vmem:[%s1 + $0x2c] sm:$0xf]
      %v875 = vld [vmem:[#allocation2] sm:$0xff]
      %v876 = vld [vmem:[#allocation2 + $0x8] sm:$0xff]
      %v877 = vld [vmem:[#allocation2 + $0x10] sm:$0xff]
      %v878 = vld [vmem:[#allocation2 + $0x18] sm:$0xff]
      %v879 = vld [vmem:[#allocation2 + $0x20] sm:$0xff]
      %v880 = vld [vmem:[#allocation2 + $0x28] sm:$0xff]
      %v881 = vld [vmem:[#allocation2 + $0x30] sm:$0xff]
      %v882 = vld [vmem:[#allocation2 + $0x38] sm:$0xff]
      %v883 = vld [vmem:[#allocation2 + $0x40] sm:$0xff]
      %v884 = vld [vmem:[#allocation2 + $0x48] sm:$0xff]
      %v885 = vld [vmem:[#allocation2 + $0x50] sm:$0xff]
      %v886 = vld [vmem:[#allocation2 + $0x58] sm:$0xff]
      %v887 = vld [vmem:[#allocation2 + $0x60] sm:$0xff]
      %v888 = vld [vmem:[#allocation2 + $0x68] sm:$0xff]
      %v889 = vld [vmem:[#allocation2 + $0x70] sm:$0xff]
      %v890 = vld [vmem:[#allocation2 + $0x78] sm:$0xff]
      %v891 = vld [vmem:[#allocation2 + $0x80] sm:$0xff]
      %v892 = vld [vmem:[#allocation2 + $0x88] sm:$0xff]
      %v893 = vld [vmem:[#allocation2 + $0x90] sm:$0xff]
      %v894 = vld [vmem:[#allocation2 + $0x98] sm:$0xff]
      %v895 = vld [vmem:[#allocation2 + $0xa0] sm:$0xff]
      %v896 = vld [vmem:[#allocation2 + $0xa8] sm:$0xff]
      %v897 = vld [vmem:[#allocation2 + $0xb0] sm:$0xff]
      %v898 = vld [vmem:[#allocation2 + $0xb8] sm:$0xff]
      %v899 = vld [vmem:[#allocation2 + $0xc0] sm:$0xff]
      %v900 = vld [vmem:[#allocation2 + $0xc8] sm:$0xff]
      %v901 = vld [vmem:[#allocation2 + $0xd0] sm:$0xff]
      %v902 = vld [vmem:[#allocation2 + $0xd8] sm:$0xff]
      %v903 = vld [vmem:[#allocation2 + $0xe0] sm:$0xff]
      %v904 = vld [vmem:[#allocation2 + $0xe8] sm:$0xff]
      %v905 = vld [vmem:[#allocation2 + $0xf0] sm:$0xff]
      %v906 = vld [vmem:[#allocation2 + $0xf8] sm:$0xff]
      %v907 = vld [vmem:[#allocation2 + $0x100] sm:$0xff]
      %v908 = vld [vmem:[#allocation2 + $0x108] sm:$0xff]
      %v909 = vld [vmem:[#allocation2 + $0x110] sm:$0xff]
      %v910 = vld [vmem:[#allocation2 + $0x118] sm:$0xff]
      %v911 = vld [vmem:[#allocation2 + $0x120] sm:$0xff]
      %v920 = vunpack.c.l.b16 %v867
      %v921 = vunpack.c.h.b16 %v867
      %v922 = vunpack.c.l.b16 %v868
      %v923 = vunpack.c.l.b16 %v869
      %v924 = vunpack.c.h.b16 %v869
      %v925 = vunpack.c.l.b16 %v870
      %v926 = vunpack.c.l.b16 %v871
      %v927 = vunpack.c.h.b16 %v871
      %v928 = vunpack.c.l.b16 %v872
      %v929 = vunpack.c.l.b16 %v873
      %v930 = vunpack.c.h.b16 %v873
      %v931 = vunpack.c.l.b16 %v874
      %v932 = vpack.c.b16 %v923, %v920
      %v933 = vpack.c.b16 %v924, %v921
      %v934 = vpack.c.b16 %v925, %v922
      %v935 = vpack.c.b16 %v929, %v926
      %v936 = vpack.c.b16 %v930, %v927
      %v937 = vpack.c.b16 %v931, %v928
      %v979 = vunpack.c.l.b16 %v875
      %v980 = vunpack.c.h.b16 %v875
      %v981 = vunpack.c.l.b16 %v876
      %v982 = vunpack.c.h.b16 %v876
      %v983 = vunpack.c.l.b16 %v877
      %v984 = vunpack.c.h.b16 %v877
      %v985 = vunpack.c.l.b16 %v878
      %v986 = vunpack.c.h.b16 %v878
      %v987 = vunpack.c.l.b16 %v879
      %v988 = vunpack.c.h.b16 %v879
      %v989 = vunpack.c.l.b16 %v880
      %v990 = vunpack.c.h.b16 %v880
      %v991 = vunpack.c.l.b16 %v881
      %v992 = vunpack.c.h.b16 %v881
      %v993 = vunpack.c.l.b16 %v882
      %v994 = vunpack.c.h.b16 %v882
      %v995 = vunpack.c.l.b16 %v883
      %v996 = vunpack.c.h.b16 %v883
      %v997 = vunpack.c.l.b16 %v884
      %v998 = vunpack.c.h.b16 %v884
      %v999 = vunpack.c.l.b16 %v885
      %v1000 = vunpack.c.h.b16 %v885
      %v1001 = vunpack.c.l.b16 %v886
      %v1002 = vunpack.c.h.b16 %v886
      %v1003 = vunpack.c.l.b16 %v887
      %v1004 = vunpack.c.h.b16 %v887
      %v1005 = vunpack.c.l.b16 %v888
      %v1006 = vunpack.c.h.b16 %v888
      %v1007 = vunpack.c.l.b16 %v889
      %v1008 = vunpack.c.h.b16 %v889
      %v1009 = vunpack.c.l.b16 %v890
      %v1010 = vunpack.c.h.b16 %v890
      %v1011 = vunpack.c.l.b16 %v891
      %v1012 = vunpack.c.h.b16 %v891
      %v1013 = vunpack.c.l.b16 %v892
      %v1014 = vunpack.c.h.b16 %v892
      %v1015 = vunpack.c.l.b16 %v893
      %v1016 = vunpack.c.h.b16 %v893
      %v1017 = vunpack.c.l.b16 %v894
      %v1018 = vunpack.c.h.b16 %v894
      %v1019 = vunpack.c.l.b16 %v895
      %v1020 = vunpack.c.h.b16 %v895
      %v1021 = vunpack.c.l.b16 %v896
      %v1022 = vunpack.c.h.b16 %v896
      %v1023 = vunpack.c.l.b16 %v897
      %v1024 = vunpack.c.h.b16 %v897
      %v1025 = vunpack.c.l.b16 %v898
      %v1026 = vunpack.c.h.b16 %v898
      %v1027 = vunpack.c.l.b16 %v899
      %v1028 = vunpack.c.h.b16 %v899
      %v1029 = vunpack.c.l.b16 %v900
      %v1030 = vunpack.c.h.b16 %v900
      %v1031 = vunpack.c.l.b16 %v901
      %v1032 = vunpack.c.h.b16 %v901
      %v1033 = vunpack.c.l.b16 %v902
      %v1034 = vunpack.c.h.b16 %v902
      %v1035 = vunpack.c.l.b16 %v903
      %v1036 = vunpack.c.h.b16 %v903
      %v1037 = vunpack.c.l.b16 %v904
      %v1038 = vunpack.c.h.b16 %v904
      %v1039 = vunpack.c.l.b16 %v905
      %v1040 = vunpack.c.h.b16 %v905
      %v1041 = vunpack.c.l.b16 %v906
      %v1042 = vunpack.c.h.b16 %v906
      %v1043 = vunpack.c.l.b16 %v907
      %v1044 = vunpack.c.h.b16 %v907
      %v1045 = vunpack.c.l.b16 %v908
      %v1046 = vunpack.c.h.b16 %v908
      %v1047 = vunpack.c.l.b16 %v909
      %v1048 = vunpack.c.h.b16 %v909
      %v1049 = vunpack.c.l.b16 %v910
      %v1050 = vunpack.c.h.b16 %v910
      %v1051 = vunpack.c.l.b16 %v911
      %v1052 = vunpack.c.h.b16 %v911
      %v1053 = vpack.c.b16 %v981, %v979
      %v1054 = vpack.c.b16 %v982, %v980
      %v1055 = vpack.c.b16 %v985, %v983
      %v1056 = vpack.c.b16 %v986, %v984
      %v1057 = vpack.c.b16 %v989, %v987
      %v1058 = vpack.c.b16 %v990, %v988
      %v1059 = vpack.c.b16 %v993, %v991
      %v1060 = vpack.c.b16 %v994, %v992
      %v1061 = vpack.c.b16 %v997, %v995
      %v1062 = vpack.c.b16 %v998, %v996
      %v1063 = vpack.c.b16 %v1001, %v999
      %v1064 = vpack.c.b16 %v1002, %v1000
      %v1065 = vpack.c.b16 %v1005, %v1003
      %v1066 = vpack.c.b16 %v1006, %v1004
      %v1067 = vpack.c.b16 %v1009, %v1007
      %v1068 = vpack.c.b16 %v1010, %v1008
      %v1069 = vpack.c.b16 %v1013, %v1011
      %v1070 = vpack.c.b16 %v1014, %v1012
      %v1071 = vpack.c.b16 %v1017, %v1015
      %v1072 = vpack.c.b16 %v1018, %v1016
      %v1073 = vpack.c.b16 %v1021, %v1019
      %v1074 = vpack.c.b16 %v1022, %v1020
      %v1075 = vpack.c.b16 %v1025, %v1023
      %v1076 = vpack.c.b16 %v1026, %v1024
      %v1077 = vpack.c.b16 %v1029, %v1027
      %v1078 = vpack.c.b16 %v1030, %v1028
      %v1079 = vpack.c.b16 %v1033, %v1031
      %v1080 = vpack.c.b16 %v1034, %v1032
      %v1081 = vpack.c.b16 %v1037, %v1035
      %v1082 = vpack.c.b16 %v1038, %v1036
      %v1083 = vpack.c.b16 %v1041, %v1039
      %v1084 = vpack.c.b16 %v1042, %v1040
      %v1085 = vpack.c.b16 %v1045, %v1043
      %v1086 = vpack.c.b16 %v1046, %v1044
      %v1087 = vpack.c.b16 %v1049, %v1047
      %v1088 = vpack.c.b16 %v1050, %v1048
      %v1089 = vpack.c.b16 %v1051, %v1051
      %v1090 = vpack.c.b16 %v1052, %v1052
      %vm1127 = vcmask 326656
      %v1129 = vsel %vm1127, %v934, 0
      %v1132 = vsel %vm1127, %v937, 0
      %vm1134 = vcmask 1043456
      %v1136 = vsel %vm1134, %v1089, 0
      %v1139 = vsel %vm1134, %v1090, 0
      %1141 = vmatprep.subr.bf16.mxu0 %v1054
      %1142 = vmatpush1.bf16.msra.mxu0 %v1053
      %1143 = vmatprep.subr.bf16.mxu0 %v1056
      %1144 = vmatpush1.bf16.msra.mxu0 %v1055
      %1145 = vmatprep.subr.bf16.mxu0 %v1058
      %1146 = vmatpush1.bf16.msra.mxu0 %v1057
      %1147 = vmatprep.subr.bf16.mxu0 %v1060
      %1148 = vmatpush1.bf16.msra.mxu0 %v1059
      %1149 = vmatprep.subr.bf16.mxu0 %v1062
      %1150 = vmatpush1.bf16.msra.mxu0 %v1061
      %1151 = vmatprep.subr.bf16.mxu0 %v1064
      %1152 = vmatpush1.bf16.msra.mxu0 %v1063
      %1153 = vmatprep.subr.bf16.mxu0 %v1066
      %1154 = vmatpush1.bf16.msra.mxu0 %v1065
      %1155 = vmatprep.subr.bf16.mxu0 %v1068
      %1156 = vmatpush1.bf16.msra.mxu0 %v1067
      %1157 = vmatprep.subr.bf16.mxu0 %v1070
      %1158 = vmatpush1.bf16.msra.mxu0 %v1069
      %1159 = vmatprep.subr.bf16.mxu0 %v1072
      %1160 = vmatpush1.bf16.msra.mxu0 %v1071
      %1161 = vmatprep.subr.bf16.mxu0 %v1074
      %1162 = vmatpush1.bf16.msra.mxu0 %v1073
      %1163 = vmatprep.subr.bf16.mxu0 %v1076
      %1164 = vmatpush1.bf16.msra.mxu0 %v1075
      %1165 = vmatprep.subr.bf16.mxu0 %v1078
      %1166 = vmatpush1.bf16.msra.mxu0 %v1077
      %1167 = vmatprep.subr.bf16.mxu0 %v1080
      %1168 = vmatpush1.bf16.msra.mxu0 %v1079
      %1169 = vmatprep.subr.bf16.mxu0 %v1082
      %1170 = vmatpush1.bf16.msra.mxu0 %v1081
      %1171 = vmatprep.subr.bf16.mxu0 %v1084
      %1172 = vmatpush1.bf16.msra.mxu0 %v1083
      %1173 = vmatprep.mubr.bf16.mxu0 %v933
      %1174 = vmatmul.mubr.bf16.gmra.mrb[0].mxu0 %v932
      %v1175 = vpop.f32.mrb[0].mxu0
      %v1176 = vadd.f32 0.0, %v1175
      %v1177 = vpop.f32.mrb[0].mxu0
      %v1178 = vadd.f32 0.0, %v1177
      %v1179 = vpop.f32.mrb[0].mxu0
      %v1180 = vadd.f32 0.0, %v1179
      %v1181 = vpop.f32.mrb[0].mxu0
      %v1182 = vadd.f32 0.0, %v1181
      %1183 = vmatprep.mubr.bf16.mxu0 %v936
      %1184 = vmatmul.mubr.bf16.gmra.mrb[0].mxu0 %v935
      %v1185 = vpop.f32.mrb[0].mxu0
      %v1186 = vadd.f32 0.0, %v1185
      %v1187 = vpop.f32.mrb[0].mxu0
      %v1188 = vadd.f32 0.0, %v1187
      %v1189 = vpop.f32.mrb[0].mxu0
      %v1190 = vadd.f32 0.0, %v1189
      %v1191 = vpop.f32.mrb[0].mxu0
      %v1192 = vadd.f32 0.0, %v1191
      %1193 = vdwg.mxu0
      %1194 = vmatprep.subr.bf16.mxu0 %v1086
      %1195 = vmatpush1.bf16.msra.mxu0 %v1085
      %1196 = vmatprep.subr.bf16.mxu0 %v1088
      %1197 = vmatpush1.bf16.msra.mxu0 %v1087
      %1198 = vmatprep.subr.bf16.mxu0 %v1139
      %1199 = vmatpush1.bf16.msra.mxu0 %v1136
      %1200 = vmatprep.subr.bf16.mxu0 0
      %1201 = vmatpush1.bf16.msra.mxu0 0
      %1202 = vmatprep.subr.bf16.mxu0 0
      %1203 = vmatpush1.bf16.msra.mxu0 0
      %1204 = vmatprep.subr.bf16.mxu0 0
      %1205 = vmatpush1.bf16.msra.mxu0 0
      %1206 = vmatprep.subr.bf16.mxu0 0
      %1207 = vmatpush1.bf16.msra.mxu0 0
      %1208 = vmatprep.subr.bf16.mxu0 0
      %1209 = vmatpush1.bf16.msra.mxu0 0
      %1210 = vmatprep.subr.bf16.mxu0 0
      %1211 = vmatpush1.bf16.msra.mxu0 0
      %1212 = vmatprep.subr.bf16.mxu0 0
      %1213 = vmatpush1.bf16.msra.mxu0 0
      %1214 = vmatprep.subr.bf16.mxu0 0
      %1215 = vmatpush1.bf16.msra.mxu0 0
      %1216 = vmatprep.subr.bf16.mxu0 0
      %1217 = vmatpush1.bf16.msra.mxu0 0
      %1218 = vmatprep.subr.bf16.mxu0 0
      %1219 = vmatpush1.bf16.msra.mxu0 0
      %1220 = vmatprep.subr.bf16.mxu0 0
      %1221 = vmatpush1.bf16.msra.mxu0 0
      %1222 = vmatprep.subr.bf16.mxu0 0
      %1223 = vmatpush1.bf16.msra.mxu0 0
      %1224 = vmatprep.subr.bf16.mxu0 0
      %1225 = vmatpush1.bf16.msra.mxu0 0
      %1226 = vmatprep.mubr.bf16.mxu0 0
      %1227 = vmatmul.mubr.bf16.gmra.mrb[0].mxu0 %v1129
      %v1228 = vpop.f32.mrb[0].mxu0
      %v1229 = vadd.f32 %v1176, %v1228
      %v1230 = vpop.f32.mrb[0].mxu0
      %v1231 = vadd.f32 %v1178, %v1230
      %v1232 = vpop.f32.mrb[0].mxu0
      %v1233 = vadd.f32 %v1180, %v1232
      %v1234 = vpop.f32.mrb[0].mxu0
      %v1235 = vadd.f32 %v1182, %v1234
      %1236 = vmatprep.mubr.bf16.mxu0 0
      %1237 = vmatmul.mubr.bf16.gmra.mrb[0].mxu0 %v1132
      %v1238 = vpop.f32.mrb[0].mxu0
      %v1239 = vadd.f32 %v1186, %v1238
      %v1240 = vpop.f32.mrb[0].mxu0
      %v1241 = vadd.f32 %v1188, %v1240
      %v1242 = vpop.f32.mrb[0].mxu0
      %v1243 = vadd.f32 %v1190, %v1242
      %v1244 = vpop.f32.mrb[0].mxu0
      %v1245 = vadd.f32 %v1192, %v1244
      %1246 = vdwg.mxu0
      %1247 = vrot.lane.b32.xlu0 %v1229, 127
      %v1248 = vpop.permute.xlu0 %1247
      %1249 = vrot.lane.b32.xlu0 %v1233, 127
      %v1250 = vpop.permute.xlu0 %1249
      %1251 = vrot.lane.b32.xlu0 %v1239, 127
      %v1252 = vpop.permute.xlu0 %1251
      %1253 = vrot.lane.b32.xlu0 %v1243, 127
      %v1254 = vpop.permute.xlu0 %1253
      %1255 = vrot.lane.b32.xlu0 %v1231, 127
      %v1256 = vpop.permute.xlu0 %1255
      %1257 = vrot.lane.b32.xlu0 %v1235, 127
      %v1258 = vpop.permute.xlu0 %1257
      %1259 = vrot.lane.b32.xlu0 %v1241, 127
      %v1260 = vpop.permute.xlu0 %1259
      %1261 = vrot.lane.b32.xlu0 %v1245, 127
      %v1262 = vpop.permute.xlu0 %1261
      %v1263 = vsel %vm268, %v1248, %v1256
      %v1264 = vsel %vm268, %v1250, %v1258
      %v1265 = vsel %vm268, %v1252, %v1260
      %v1266 = vsel %vm268, %v1254, %v1262
      %v1267 = vsel %vm268, %v1256, %v1248
      %v1268 = vsel %vm268, %v1258, %v1250
      %v1269 = vsel %vm268, %v1260, %v1252
      %v1270 = vsel %vm268, %v1262, %v1254
      %v1271 = vmax.f32 %v1229, %v1263
      %v1272 = vmax.f32 %v1231, %v1267
      %v1273 = vmax.f32 %v1233, %v1264
      %v1274 = vmax.f32 %v1235, %v1268
      %v1275 = vmax.f32 %v1239, %v1265
      %v1276 = vmax.f32 %v1241, %v1269
      %v1277 = vmax.f32 %v1243, %v1266
      %v1278 = vmax.f32 %v1245, %v1270
      %1279 = vrot.lane.b32.xlu0 %v1229, 112
      %v1280 = vpop.permute.xlu0 %1279
      %1281 = vrot.lane.b32.xlu0 %v1233, 112
      %v1282 = vpop.permute.xlu0 %1281
      %1283 = vrot.lane.b32.xlu0 %v1239, 112
      %v1284 = vpop.permute.xlu0 %1283
      %1285 = vrot.lane.b32.xlu0 %v1243, 112
      %v1286 = vpop.permute.xlu0 %1285
      %1287 = vrot.lane.b32.xlu0 %v1231, 112
      %v1288 = vpop.permute.xlu0 %1287
      %1289 = vrot.lane.b32.xlu0 %v1235, 112
      %v1290 = vpop.permute.xlu0 %1289
      %1291 = vrot.lane.b32.xlu0 %v1241, 112
      %v1292 = vpop.permute.xlu0 %1291
      %1293 = vrot.lane.b32.xlu0 %v1245, 112
      %v1294 = vpop.permute.xlu0 %1293
      %v1295 = vsel %vm663, %v1280, %v1288
      %v1296 = vsel %vm663, %v1282, %v1290
      %v1297 = vsel %vm663, %v1284, %v1292
      %v1298 = vsel %vm663, %v1286, %v1294
      %v1299 = vsel %vm663, %v1288, %v1280
      %v1300 = vsel %vm663, %v1290, %v1282
      %v1301 = vsel %vm663, %v1292, %v1284
      %v1302 = vsel %vm663, %v1294, %v1286
      %v1303 = vmax.f32 %v1271, %v1295
      %v1304 = vmax.f32 %v1272, %v1299
      %v1305 = vmax.f32 %v1273, %v1296
      %v1306 = vmax.f32 %v1274, %v1300
      %v1307 = vmax.f32 %v1275, %v1297
      %v1308 = vmax.f32 %v1276, %v1301
      %v1309 = vmax.f32 %v1277, %v1298
      %v1310 = vmax.f32 %v1278, %v1302
      %1311 = vrot.lane.b32.xlu0 %v1229, 111
      %v1312 = vpop.permute.xlu0 %1311
      %1313 = vrot.lane.b32.xlu0 %v1233, 111
      %v1314 = vpop.permute.xlu0 %1313
      %1315 = vrot.lane.b32.xlu0 %v1239, 111
      %v1316 = vpop.permute.xlu0 %1315
      %1317 = vrot.lane.b32.xlu0 %v1243, 111
      %v1318 = vpop.permute.xlu0 %1317
      %1319 = vrot.lane.b32.xlu0 %v1231, 111
      %v1320 = vpop.permute.xlu0 %1319
      %1321 = vrot.lane.b32.xlu0 %v1235, 111
      %v1322 = vpop.permute.xlu0 %1321
      %1323 = vrot.lane.b32.xlu0 %v1241, 111
      %v1324 = vpop.permute.xlu0 %1323
      %1325 = vrot.lane.b32.xlu0 %v1245, 111
      %v1326 = vpop.permute.xlu0 %1325
      %vm1327 = vcmp.lt.s32.totalorder %v267, 111
      %v1328 = vsel %vm1327, %v1312, %v1320
      %v1329 = vsel %vm1327, %v1314, %v1322
      %v1330 = vsel %vm1327, %v1316, %v1324
      %v1331 = vsel %vm1327, %v1318, %v1326
      %v1332 = vsel %vm1327, %v1320, %v1312
      %v1333 = vsel %vm1327, %v1322, %v1314
      %v1334 = vsel %vm1327, %v1324, %v1316
      %v1335 = vsel %vm1327, %v1326, %v1318
      %v1336 = vmax.f32 %v1303, %v1328
      %v1337 = vmax.f32 %v1304, %v1332
      %v1338 = vmax.f32 %v1305, %v1329
      %v1339 = vmax.f32 %v1306, %v1333
      %v1340 = vmax.f32 %v1307, %v1330
      %v1341 = vmax.f32 %v1308, %v1334
      %v1342 = vmax.f32 %v1309, %v1331
      %v1343 = vmax.f32 %v1310, %v1335
      %v1344 = vpack.c.bf16 %v1338, %v1336
      %v1345 = vpack.c.bf16 %v1339, %v1337
      %v1346 = vpack.c.bf16 %v1342, %v1340
      %v1347 = vpack.c.bf16 %v1343, %v1341
      %v1348 = vld [vmem:[%s4] sm:$0xf]
      %v1349 = vld [vmem:[%s4 + $0x4] sm:$0xf]
      %v1350 = vld [vmem:[%s4 + $0x8] sm:$0xf]
      %v1351 = vld [vmem:[%s4 + $0xc] sm:$0xf]
      %v1352 = vld [vmem:[%s4 + $0x10] sm:$0xf]
      %v1353 = vld [vmem:[%s4 + $0x14] sm:$0xf]
      %v1354 = vld [vmem:[%s4 + $0x18] sm:$0xf]
      %v1355 = vld [vmem:[%s4 + $0x1c] sm:$0xf]
      %v1356 = vld [vmem:[%s4 + $0x20] sm:$0xf]
      %v1357 = vld [vmem:[%s4 + $0x24] sm:$0xf]
      %v1358 = vld [vmem:[%s4 + $0x28] sm:$0xf]
      %v1359 = vld [vmem:[%s4 + $0x2c] sm:$0xf]
      %v1360 = vld [vmem:[%s4 + $0x30] sm:$0xf]
      %v1361 = vld [vmem:[%s4 + $0x34] sm:$0xf]
      %v1362 = vld [vmem:[%s4 + $0x38] sm:$0xf]
      %v1363 = vld [vmem:[%s4 + $0x3c] sm:$0xf]
      %v1364 = vld [vmem:[%s4 + $0x40] sm:$0xf]
      %v1365 = vld [vmem:[%s4 + $0x44] sm:$0xf]
      %v1366 = vld [vmem:[%s4 + $0x48] sm:$0xf]
      %v1367 = vld [vmem:[%s4 + $0x4c] sm:$0xf]
      %v1368 = vld [vmem:[%s4 + $0x50] sm:$0xf]
      %v1369 = vld [vmem:[%s4 + $0x54] sm:$0xf]
      %v1370 = vld [vmem:[%s4 + $0x58] sm:$0xf]
      %v1371 = vld [vmem:[%s4 + $0x5c] sm:$0xf]
      %v1372 = vld [vmem:[%s4 + $0x60] sm:$0xf]
      %v1373 = vld [vmem:[%s4 + $0x64] sm:$0xf]
      %v1374 = vld [vmem:[%s4 + $0x68] sm:$0xf]
      %v1375 = vld [vmem:[%s4 + $0x6c] sm:$0xf]
      %v1376 = vld [vmem:[%s4 + $0x70] sm:$0xf]
      %v1377 = vld [vmem:[%s4 + $0x74] sm:$0xf]
      %v1378 = vld [vmem:[%s4 + $0x78] sm:$0xf]
      %v1379 = vld [vmem:[%s4 + $0x7c] sm:$0xf]
      %v1412 = vunpack.c.l.b16 %v1348
      %v1413 = vunpack.c.l.b16 %v1349
      %v1414 = vunpack.c.l.b16 %v1350
      %v1415 = vunpack.c.l.b16 %v1351
      %v1416 = vunpack.c.l.b16 %v1352
      %v1417 = vunpack.c.l.b16 %v1353
      %v1418 = vunpack.c.l.b16 %v1354
      %v1419 = vunpack.c.l.b16 %v1355
      %v1420 = vunpack.c.l.b16 %v1356
      %v1421 = vunpack.c.l.b16 %v1357
      %v1422 = vunpack.c.l.b16 %v1358
      %v1423 = vunpack.c.l.b16 %v1359
      %v1424 = vunpack.c.l.b16 %v1360
      %v1425 = vunpack.c.l.b16 %v1361
      %v1426 = vunpack.c.l.b16 %v1362
      %v1427 = vunpack.c.l.b16 %v1363
      %v1428 = vunpack.c.l.b16 %v1364
      %v1429 = vunpack.c.l.b16 %v1365
      %v1430 = vunpack.c.l.b16 %v1366
      %v1431 = vunpack.c.l.b16 %v1367
      %v1432 = vunpack.c.l.b16 %v1368
      %v1433 = vunpack.c.l.b16 %v1369
      %v1434 = vunpack.c.l.b16 %v1370
      %v1435 = vunpack.c.l.b16 %v1371
      %v1436 = vunpack.c.l.b16 %v1372
      %v1437 = vunpack.c.l.b16 %v1373
      %v1438 = vunpack.c.l.b16 %v1374
      %v1439 = vunpack.c.l.b16 %v1375
      %v1440 = vunpack.c.l.b16 %v1376
      %v1441 = vunpack.c.l.b16 %v1377
      %v1442 = vunpack.c.l.b16 %v1378
      %v1443 = vunpack.c.l.b16 %v1379
      %v1444 = vpack.c.b16 %v1413, %v1412
      %v1445 = vpack.c.b16 %v1415, %v1414
      %v1446 = vpack.c.b16 %v1417, %v1416
      %v1447 = vpack.c.b16 %v1419, %v1418
      %v1448 = vpack.c.b16 %v1421, %v1420
      %v1449 = vpack.c.b16 %v1423, %v1422
      %v1450 = vpack.c.b16 %v1425, %v1424
      %v1451 = vpack.c.b16 %v1427, %v1426
      %v1452 = vpack.c.b16 %v1429, %v1428
      %v1453 = vpack.c.b16 %v1431, %v1430
      %v1454 = vpack.c.b16 %v1433, %v1432
      %v1455 = vpack.c.b16 %v1435, %v1434
      %v1456 = vpack.c.b16 %v1437, %v1436
      %v1457 = vpack.c.b16 %v1439, %v1438
      %v1458 = vpack.c.b16 %v1441, %v1440
      %v1459 = vpack.c.b16 %v1443, %v1442
      %1476 = vmatprep.subr.bf16.mxu0 0
      %1477 = vmatpush1.bf16.msra.mxu0 %v1444
      %1478 = vmatprep.subr.bf16.mxu0 0
      %1479 = vmatpush1.bf16.msra.mxu0 %v1445
      %1480 = vmatprep.subr.bf16.mxu0 0
      %1481 = vmatpush1.bf16.msra.mxu0 %v1446
      %1482 = vmatprep.subr.bf16.mxu0 0
      %1483 = vmatpush1.bf16.msra.mxu0 %v1447
      %1484 = vmatprep.subr.bf16.mxu0 0
      %1485 = vmatpush1.bf16.msra.mxu0 %v1448
      %1486 = vmatprep.subr.bf16.mxu0 0
      %1487 = vmatpush1.bf16.msra.mxu0 %v1449
      %1488 = vmatprep.subr.bf16.mxu0 0
      %1489 = vmatpush1.bf16.msra.mxu0 %v1450
      %1490 = vmatprep.subr.bf16.mxu0 0
      %1491 = vmatpush1.bf16.msra.mxu0 %v1451
      %1492 = vmatprep.subr.bf16.mxu0 0
      %1493 = vmatpush1.bf16.msra.mxu0 %v1452
      %1494 = vmatprep.subr.bf16.mxu0 0
      %1495 = vmatpush1.bf16.msra.mxu0 %v1453
      %1496 = vmatprep.subr.bf16.mxu0 0
      %1497 = vmatpush1.bf16.msra.mxu0 %v1454
      %1498 = vmatprep.subr.bf16.mxu0 0
      %1499 = vmatpush1.bf16.msra.mxu0 %v1455
      %1500 = vmatprep.subr.bf16.mxu0 0
      %1501 = vmatpush1.bf16.msra.mxu0 %v1456
      %1502 = vmatprep.subr.bf16.mxu0 0
      %1503 = vmatpush1.bf16.msra.mxu0 %v1457
      %1504 = vmatprep.subr.bf16.mxu0 0
      %1505 = vmatpush1.bf16.msra.mxu0 %v1458
      %1506 = vmatprep.subr.bf16.mxu0 0
      %1507 = vmatpush1.bf16.msra.mxu0 %v1459
      %1508 = vmatprep.mubr.bf16.mxu0 %v1345
      %1509 = vmatmul.mubr.bf16.gmra.mrb[0].mxu0 %v1344
      %v1510 = vpop.f32.mrb[0].mxu0
      %v1511 = vadd.f32 0.0, %v1510
      %v1512 = vpop.f32.mrb[0].mxu0
      %v1513 = vpop.f32.mrb[0].mxu0
      %v1514 = vadd.f32 0.0, %v1513
      %v1515 = vpop.f32.mrb[0].mxu0
      %1516 = vmatprep.mubr.bf16.mxu0 %v1347
      %1517 = vmatmul.mubr.bf16.gmra.mrb[0].mxu0 %v1346
      %v1518 = vpop.f32.mrb[0].mxu0
      %v1519 = vadd.f32 0.0, %v1518
      %v1520 = vpop.f32.mrb[0].mxu0
      %v1521 = vpop.f32.mrb[0].mxu0
      %v1522 = vadd.f32 0.0, %v1521
      %v1523 = vpop.f32.mrb[0].mxu0
      %1524 = vdwg.mxu0
      %1525 = vrot.lane.b32.xlu0 %v1511, 127
      %v1526 = vpop.permute.xlu0 %1525
      %1527 = vrot.lane.b32.xlu0 %v1514, 127
      %v1528 = vpop.permute.xlu0 %1527
      %1529 = vrot.lane.b32.xlu0 %v1519, 127
      %v1530 = vpop.permute.xlu0 %1529
      %1531 = vrot.lane.b32.xlu0 %v1522, 127
      %v1532 = vpop.permute.xlu0 %1531
      %1533 = vrot.lane.b32.xlu0 %v1511, 1
      %v1534 = vpop.permute.xlu0 %1533
      %1535 = vrot.lane.b32.xlu0 %v1514, 1
      %v1536 = vpop.permute.xlu0 %1535
      %1537 = vrot.lane.b32.xlu0 %v1519, 1
      %v1538 = vpop.permute.xlu0 %1537
      %1539 = vrot.lane.b32.xlu0 %v1522, 1
      %v1540 = vpop.permute.xlu0 %1539
      %1541 = vrot.lane.b32.xlu0 %v1534, 8
      %v1542 = vpop.permute.xlu0 %1541
      %1543 = vrot.lane.b32.xlu0 %v1536, 8
      %v1544 = vpop.permute.xlu0 %1543
      %1545 = vrot.lane.b32.xlu0 %v1538, 8
      %v1546 = vpop.permute.xlu0 %1545
      %1547 = vrot.lane.b32.xlu0 %v1540, 8
      %v1548 = vpop.permute.xlu0 %1547
      %v1549 = vld [vmem:[%s3] sm:$0x1]
      %v1550 = vlaneseq
      %v1551 = vshrl.u32 %v1550, 7
      %v1552 = vsub.s32 0, %v1551
      %v1553 = vrot.slane %v1549, %v1552
      %v1554 = vmul.f32 %v1542, %v1553
      %v1555 = vmul.f32 %v1544, %v1553
      %v1556 = vmul.f32 %v1546, %v1553
      %v1557 = vmul.f32 %v1548, %v1553
      %v1558 = vpack.c.bf16 %v1555, %v1554
      %v1559 = vpack.c.bf16 %v1557, %v1556
      %v1562 = vunpack.c.l.b16 %v1558
      %v1563 = vunpack.c.h.b16 %v1558
      %v1564 = vunpack.c.l.b16 %v1559
      %v1565 = vunpack.c.h.b16 %v1559
      %v1566 = vpack.c.b16 %v1562, %v1562
      %v1567 = vpack.c.b16 %v1563, %v1563
      %v1568 = vpack.c.b16 %v1564, %v1564
      %v1569 = vpack.c.b16 %v1565, %v1565
      %1574 = vst [vmem:[#allocation3] sm:$0xf] %v1566
      %1575 = vst [vmem:[#allocation3 + $0x4] sm:$0xf] %v1567
      %1576 = vst [vmem:[#allocation3 + $0x8] sm:$0xf] %v1568
      %1577 = vst [vmem:[#allocation3 + $0xc] sm:$0xf] %v1569
      %1578 = vrot.lane.b32.xlu0 %v1511, 8
      %v1579 = vpop.permute.xlu0 %1578
      %1580 = vrot.lane.b32.xlu0 %v1514, 8
      %v1581 = vpop.permute.xlu0 %1580
      %1582 = vrot.lane.b32.xlu0 %v1519, 8
      %v1583 = vpop.permute.xlu0 %1582
      %1584 = vrot.lane.b32.xlu0 %v1522, 8
      %v1585 = vpop.permute.xlu0 %1584
      %v1586 = vld [vmem:[%s3 + $0x1] sm:$0x1]
      %v1587 = vlaneseq
      %v1588 = vshrl.u32 %v1587, 7
      %v1589 = vsub.s32 0, %v1588
      %v1590 = vrot.slane %v1586, %v1589
      %v1591 = vmul.f32 %v1579, %v1590
      %v1592 = vmul.f32 %v1581, %v1590
      %v1593 = vmul.f32 %v1583, %v1590
      %v1594 = vmul.f32 %v1585, %v1590
      %v1595 = vpack.c.bf16 %v1592, %v1591
      %v1596 = vpack.c.bf16 %v1594, %v1593
      %v1599 = vunpack.c.l.b16 %v1595
      %v1600 = vunpack.c.h.b16 %v1595
      %v1601 = vunpack.c.l.b16 %v1596
      %v1602 = vunpack.c.h.b16 %v1596
      %v1603 = vpack.c.b16 %v1599, %v1599
      %v1604 = vpack.c.b16 %v1600, %v1600
      %v1605 = vpack.c.b16 %v1601, %v1601
      %v1606 = vpack.c.b16 %v1602, %v1602
      %1611 = vst [vmem:[#allocation3 + $0x10] sm:$0xf] %v1603
      %1612 = vst [vmem:[#allocation3 + $0x14] sm:$0xf] %v1604
      %1613 = vst [vmem:[#allocation3 + $0x18] sm:$0xf] %v1605
      %1614 = vst [vmem:[#allocation3 + $0x1c] sm:$0xf] %v1606
      %1615 = vrot.lane.b32.xlu0 %v1526, 8
      %v1616 = vpop.permute.xlu0 %1615
      %1617 = vrot.lane.b32.xlu0 %v1528, 8
      %v1618 = vpop.permute.xlu0 %1617
      %1619 = vrot.lane.b32.xlu0 %v1530, 8
      %v1620 = vpop.permute.xlu0 %1619
      %1621 = vrot.lane.b32.xlu0 %v1532, 8
      %v1622 = vpop.permute.xlu0 %1621
      %v1623 = vld [vmem:[%s3 + $0x2] sm:$0x1]
      %v1624 = vlaneseq
      %v1625 = vshrl.u32 %v1624, 7
      %v1626 = vsub.s32 0, %v1625
      %v1627 = vrot.slane %v1623, %v1626
      %v1628 = vmul.f32 %v1616, %v1627
      %v1629 = vmul.f32 %v1618, %v1627
      %v1630 = vmul.f32 %v1620, %v1627
      %v1631 = vmul.f32 %v1622, %v1627
      %v1632 = vpack.c.bf16 %v1629, %v1628
      %v1633 = vpack.c.bf16 %v1631, %v1630
      %v1636 = vunpack.c.l.b16 %v1632
      %v1637 = vunpack.c.h.b16 %v1632
      %v1638 = vunpack.c.l.b16 %v1633
      %v1639 = vunpack.c.h.b16 %v1633
      %v1640 = vpack.c.b16 %v1636, %v1636
      %v1641 = vpack.c.b16 %v1637, %v1637
      %v1642 = vpack.c.b16 %v1638, %v1638
      %v1643 = vpack.c.b16 %v1639, %v1639
      %1648 = vst [vmem:[#allocation3 + $0x20] sm:$0xf] %v1640
      %1649 = vst [vmem:[#allocation3 + $0x24] sm:$0xf] %v1641
      %1650 = vst [vmem:[#allocation3 + $0x28] sm:$0xf] %v1642
      %1651 = vst [vmem:[#allocation3 + $0x2c] sm:$0xf] %v1643
      %v1652 = vld [vmem:[%s3 + $0x3] sm:$0x1]
      %v1653 = vlaneseq
      %v1654 = vshrl.u32 %v1653, 7
      %v1655 = vsub.s32 0, %v1654
      %v1656 = vrot.slane %v1652, %v1655
      %v1657 = vmul.f32 %v1534, %v1656
      %v1658 = vmul.f32 %v1536, %v1656
      %v1659 = vmul.f32 %v1538, %v1656
      %v1660 = vmul.f32 %v1540, %v1656
      %v1661 = vpack.c.bf16 %v1658, %v1657
      %v1662 = vpack.c.bf16 %v1660, %v1659
      %v1665 = vunpack.c.l.b16 %v1661
      %v1666 = vunpack.c.h.b16 %v1661
      %v1667 = vunpack.c.l.b16 %v1662
      %v1668 = vunpack.c.h.b16 %v1662
      %v1669 = vpack.c.b16 %v1665, %v1665
      %v1670 = vpack.c.b16 %v1666, %v1666
      %v1671 = vpack.c.b16 %v1667, %v1667
      %v1672 = vpack.c.b16 %v1668, %v1668
      %1677 = vst [vmem:[#allocation3 + $0x30] sm:$0xf] %v1669
      %1678 = vst [vmem:[#allocation3 + $0x34] sm:$0xf] %v1670
      %1679 = vst [vmem:[#allocation3 + $0x38] sm:$0xf] %v1671
      %1680 = vst [vmem:[#allocation3 + $0x3c] sm:$0xf] %v1672
      %v1681 = vpack.c.bf16 %v1514, %v1511
      %v1682 = vpack.c.bf16 %v1522, %v1519
      %v1685 = vunpack.c.l.b16 %v1681
      %v1686 = vunpack.c.h.b16 %v1681
      %v1687 = vunpack.c.l.b16 %v1682
      %v1688 = vunpack.c.h.b16 %v1682
      %v1689 = vpack.c.b16 %v1685, %v1685
      %v1690 = vpack.c.b16 %v1686, %v1686
      %v1691 = vpack.c.b16 %v1687, %v1687
      %v1692 = vpack.c.b16 %v1688, %v1688
      %1697 = vst [vmem:[#allocation3 + $0x40] sm:$0xf] %v1689
      %1698 = vst [vmem:[#allocation3 + $0x44] sm:$0xf] %v1690
      %1699 = vst [vmem:[#allocation3 + $0x48] sm:$0xf] %v1691
      %1700 = vst [vmem:[#allocation3 + $0x4c] sm:$0xf] %v1692
      %v1701 = vld [vmem:[%s3 + $0x5] sm:$0x1]
      %v1702 = vlaneseq
      %v1703 = vshrl.u32 %v1702, 7
      %v1704 = vsub.s32 0, %v1703
      %v1705 = vrot.slane %v1701, %v1704
      %v1706 = vmul.f32 %v1526, %v1705
      %v1707 = vmul.f32 %v1528, %v1705
      %v1708 = vmul.f32 %v1530, %v1705
      %v1709 = vmul.f32 %v1532, %v1705
      %v1710 = vpack.c.bf16 %v1707, %v1706
      %v1711 = vpack.c.bf16 %v1709, %v1708
      %v1714 = vunpack.c.l.b16 %v1710
      %v1715 = vunpack.c.h.b16 %v1710
      %v1716 = vunpack.c.l.b16 %v1711
      %v1717 = vunpack.c.h.b16 %v1711
      %v1718 = vpack.c.b16 %v1714, %v1714
      %v1719 = vpack.c.b16 %v1715, %v1715
      %v1720 = vpack.c.b16 %v1716, %v1716
      %v1721 = vpack.c.b16 %v1717, %v1717
      %1726 = vst [vmem:[#allocation3 + $0x50] sm:$0xf] %v1718
      %1727 = vst [vmem:[#allocation3 + $0x54] sm:$0xf] %v1719
      %1728 = vst [vmem:[#allocation3 + $0x58] sm:$0xf] %v1720
      %1729 = vst [vmem:[#allocation3 + $0x5c] sm:$0xf] %v1721
      %1730 = vrot.lane.b32.xlu0 %v1534, 120
      %v1731 = vpop.permute.xlu0 %1730
      %1732 = vrot.lane.b32.xlu0 %v1536, 120
      %v1733 = vpop.permute.xlu0 %1732
      %1734 = vrot.lane.b32.xlu0 %v1538, 120
      %v1735 = vpop.permute.xlu0 %1734
      %1736 = vrot.lane.b32.xlu0 %v1540, 120
      %v1737 = vpop.permute.xlu0 %1736
      %v1738 = vld [vmem:[%s3 + $0x6] sm:$0x1]
      %v1739 = vlaneseq
      %v1740 = vshrl.u32 %v1739, 7
      %v1741 = vsub.s32 0, %v1740
      %v1742 = vrot.slane %v1738, %v1741
      %v1743 = vmul.f32 %v1731, %v1742
      %v1744 = vmul.f32 %v1733, %v1742
      %v1745 = vmul.f32 %v1735, %v1742
      %v1746 = vmul.f32 %v1737, %v1742
      %v1747 = vpack.c.bf16 %v1744, %v1743
      %v1748 = vpack.c.bf16 %v1746, %v1745
      %v1751 = vunpack.c.l.b16 %v1747
      %v1752 = vunpack.c.h.b16 %v1747
      %v1753 = vunpack.c.l.b16 %v1748
      %v1754 = vunpack.c.h.b16 %v1748
      %v1755 = vpack.c.b16 %v1751, %v1751
      %v1756 = vpack.c.b16 %v1752, %v1752
      %v1757 = vpack.c.b16 %v1753, %v1753
      %v1758 = vpack.c.b16 %v1754, %v1754
      %1763 = vst [vmem:[#allocation3 + $0x60] sm:$0xf] %v1755
      %1764 = vst [vmem:[#allocation3 + $0x64] sm:$0xf] %v1756
      %1765 = vst [vmem:[#allocation3 + $0x68] sm:$0xf] %v1757
      %1766 = vst [vmem:[#allocation3 + $0x6c] sm:$0xf] %v1758
      %1767 = vrot.lane.b32.xlu0 %v1511, 120
      %v1768 = vpop.permute.xlu0 %1767
      %1769 = vrot.lane.b32.xlu0 %v1514, 120
      %v1770 = vpop.permute.xlu0 %1769
      %1771 = vrot.lane.b32.xlu0 %v1519, 120
      %v1772 = vpop.permute.xlu0 %1771
      %1773 = vrot.lane.b32.xlu0 %v1522, 120
      %v1774 = vpop.permute.xlu0 %1773
      %v1775 = vld [vmem:[%s3 + $0x7] sm:$0x1]
      %v1776 = vlaneseq
      %v1777 = vshrl.u32 %v1776, 7
      %v1778 = vsub.s32 0, %v1777
      %v1779 = vrot.slane %v1775, %v1778
      %v1780 = vmul.f32 %v1768, %v1779
      %v1781 = vmul.f32 %v1770, %v1779
      %v1782 = vmul.f32 %v1772, %v1779
      %v1783 = vmul.f32 %v1774, %v1779
      %v1784 = vpack.c.bf16 %v1781, %v1780
      %v1785 = vpack.c.bf16 %v1783, %v1782
      %v1788 = vunpack.c.l.b16 %v1784
      %v1789 = vunpack.c.h.b16 %v1784
      %v1790 = vunpack.c.l.b16 %v1785
      %v1791 = vunpack.c.h.b16 %v1785
      %v1792 = vpack.c.b16 %v1788, %v1788
      %v1793 = vpack.c.b16 %v1789, %v1789
      %v1794 = vpack.c.b16 %v1790, %v1790
      %v1795 = vpack.c.b16 %v1791, %v1791
      %1800 = vst [vmem:[#allocation3 + $0x70] sm:$0xf] %v1792
      %1801 = vst [vmem:[#allocation3 + $0x74] sm:$0xf] %v1793
      %1802 = vst [vmem:[#allocation3 + $0x78] sm:$0xf] %v1794
      %1803 = vst [vmem:[#allocation3 + $0x7c] sm:$0xf] %v1795
      %1804 = vrot.lane.b32.xlu0 %v1526, 120
      %v1805 = vpop.permute.xlu0 %1804
      %1806 = vrot.lane.b32.xlu0 %v1528, 120
      %v1807 = vpop.permute.xlu0 %1806
      %1808 = vrot.lane.b32.xlu0 %v1530, 120
      %v1809 = vpop.permute.xlu0 %1808
      %1810 = vrot.lane.b32.xlu0 %v1532, 120
      %v1811 = vpop.permute.xlu0 %1810
      %v1812 = vld [vmem:[%s3 + $0x8] sm:$0x1]
      %v1813 = vlaneseq
      %v1814 = vshrl.u32 %v1813, 7
      %v1815 = vsub.s32 0, %v1814
      %v1816 = vrot.slane %v1812, %v1815
      %v1817 = vmul.f32 %v1805, %v1816
      %v1818 = vmul.f32 %v1807, %v1816
      %v1819 = vmul.f32 %v1809, %v1816
      %v1820 = vmul.f32 %v1811, %v1816
      %v1821 = vpack.c.bf16 %v1818, %v1817
      %v1822 = vpack.c.bf16 %v1820, %v1819
      %v1825 = vunpack.c.l.b16 %v1821
      %v1826 = vunpack.c.h.b16 %v1821
      %v1827 = vunpack.c.l.b16 %v1822
      %v1828 = vunpack.c.h.b16 %v1822
      %v1829 = vpack.c.b16 %v1825, %v1825
      %v1830 = vpack.c.b16 %v1826, %v1826
      %v1831 = vpack.c.b16 %v1827, %v1827
      %v1832 = vpack.c.b16 %v1828, %v1828
      %1837 = vst [vmem:[#allocation3 + $0x80] sm:$0xf] %v1829
      %1838 = vst [vmem:[#allocation3 + $0x84] sm:$0xf] %v1830
      %1839 = vst [vmem:[#allocation3 + $0x88] sm:$0xf] %v1831
      %1840 = vst [vmem:[#allocation3 + $0x8c] sm:$0xf] %v1832
      %s1841 = scalar_lea.vmem %s1, 48
      %v1842 = vld [vmem:[%s1841] sm:$0xff]
      %v1843 = vld [vmem:[%s1841 + $0x8] sm:$0xf]
      %v1844 = vld [vmem:[%s1841 + $0xc] sm:$0xff]
      %v1845 = vld [vmem:[%s1841 + $0x14] sm:$0xf]
      %v1846 = vld [vmem:[%s1841 + $0x18] sm:$0xff]
      %v1847 = vld [vmem:[%s1841 + $0x20] sm:$0xf]
      %v1848 = vld [vmem:[%s1841 + $0x24] sm:$0xff]
      %v1849 = vld [vmem:[%s1841 + $0x2c] sm:$0xf]
      %v1850 = vld [vmem:[#allocation3] sm:$0xf]
      %v1851 = vld [vmem:[#allocation3 + $0x4] sm:$0xf]
      %v1852 = vld [vmem:[#allocation3 + $0x8] sm:$0xf]
      %v1853 = vld [vmem:[#allocation3 + $0xc] sm:$0xf]
      %v1854 = vld [vmem:[#allocation3 + $0x10] sm:$0xf]
      %v1855 = vld [vmem:[#allocation3 + $0x14] sm:$0xf]
      %v1856 = vld [vmem:[#allocation3 + $0x18] sm:$0xf]
      %v1857 = vld [vmem:[#allocation3 + $0x1c] sm:$0xf]
      %v1858 = vld [vmem:[#allocation3 + $0x20] sm:$0xf]
      %v1859 = vld [vmem:[#allocation3 + $0x24] sm:$0xf]
      %v1860 = vld [vmem:[#allocation3 + $0x28] sm:$0xf]
      %v1861 = vld [vmem:[#allocation3 + $0x2c] sm:$0xf]
      %v1862 = vld [vmem:[#allocation3 + $0x30] sm:$0xf]
      %v1863 = vld [vmem:[#allocation3 + $0x34] sm:$0xf]
      %v1864 = vld [vmem:[#allocation3 + $0x38] sm:$0xf]
      %v1865 = vld [vmem:[#allocation3 + $0x3c] sm:$0xf]
      %v1866 = vld [vmem:[#allocation3 + $0x40] sm:$0xf]
      %v1867 = vld [vmem:[#allocation3 + $0x44] sm:$0xf]
      %v1868 = vld [vmem:[#allocation3 + $0x48] sm:$0xf]
      %v1869 = vld [vmem:[#allocation3 + $0x4c] sm:$0xf]
      %v1870 = vld [vmem:[#allocation3 + $0x50] sm:$0xf]
      %v1871 = vld [vmem:[#allocation3 + $0x54] sm:$0xf]
      %v1872 = vld [vmem:[#allocation3 + $0x58] sm:$0xf]
      %v1873 = vld [vmem:[#allocation3 + $0x5c] sm:$0xf]
      %v1874 = vld [vmem:[#allocation3 + $0x60] sm:$0xf]
      %v1875 = vld [vmem:[#allocation3 + $0x64] sm:$0xf]
      %v1876 = vld [vmem:[#allocation3 + $0x68] sm:$0xf]
      %v1877 = vld [vmem:[#allocation3 + $0x6c] sm:$0xf]
      %v1878 = vld [vmem:[#allocation3 + $0x70] sm:$0xf]
      %v1879 = vld [vmem:[#allocation3 + $0x74] sm:$0xf]
      %v1880 = vld [vmem:[#allocation3 + $0x78] sm:$0xf]
      %v1881 = vld [vmem:[#allocation3 + $0x7c] sm:$0xf]
      %v1882 = vld [vmem:[#allocation3 + $0x80] sm:$0xf]
      %v1883 = vld [vmem:[#allocation3 + $0x84] sm:$0xf]
      %v1884 = vld [vmem:[#allocation3 + $0x88] sm:$0xf]
      %v1885 = vld [vmem:[#allocation3 + $0x8c] sm:$0xf]
      %v1886 = vld [vmem:[#allocation3 + $0x90] sm:$0xf]
      %v1895 = vunpack.c.l.b16 %v1842
      %v1896 = vunpack.c.h.b16 %v1842
      %v1897 = vunpack.c.l.b16 %v1843
      %v1898 = vunpack.c.l.b16 %v1844
      %v1899 = vunpack.c.h.b16 %v1844
      %v1900 = vunpack.c.l.b16 %v1845
      %v1901 = vunpack.c.l.b16 %v1846
      %v1902 = vunpack.c.h.b16 %v1846
      %v1903 = vunpack.c.l.b16 %v1847
      %v1904 = vunpack.c.l.b16 %v1848
      %v1905 = vunpack.c.h.b16 %v1848
      %v1906 = vunpack.c.l.b16 %v1849
      %v1907 = vpack.c.b16 %v1898, %v1895
      %v1908 = vpack.c.b16 %v1899, %v1896
      %v1909 = vpack.c.b16 %v1900, %v1897
      %v1910 = vpack.c.b16 %v1904, %v1901
      %v1911 = vpack.c.b16 %v1905, %v1902
      %v1912 = vpack.c.b16 %v1906, %v1903
      %v1954 = vunpack.c.l.b16 %v1850
      %v1955 = vunpack.c.l.b16 %v1851
      %v1956 = vunpack.c.l.b16 %v1852
      %v1957 = vunpack.c.l.b16 %v1853
      %v1958 = vunpack.c.l.b16 %v1854
      %v1959 = vunpack.c.l.b16 %v1855
      %v1960 = vunpack.c.l.b16 %v1856
      %v1961 = vunpack.c.l.b16 %v1857
      %v1962 = vunpack.c.l.b16 %v1858
      %v1963 = vunpack.c.l.b16 %v1859
      %v1964 = vunpack.c.l.b16 %v1860
      %v1965 = vunpack.c.l.b16 %v1861
      %v1966 = vunpack.c.l.b16 %v1862
      %v1967 = vunpack.c.l.b16 %v1863
      %v1968 = vunpack.c.l.b16 %v1864
      %v1969 = vunpack.c.l.b16 %v1865
      %v1970 = vunpack.c.l.b16 %v1866
      %v1971 = vunpack.c.l.b16 %v1867
      %v1972 = vunpack.c.l.b16 %v1868
      %v1973 = vunpack.c.l.b16 %v1869
      %v1974 = vunpack.c.l.b16 %v1870
      %v1975 = vunpack.c.l.b16 %v1871
      %v1976 = vunpack.c.l.b16 %v1872
      %v1977 = vunpack.c.l.b16 %v1873
      %v1978 = vunpack.c.l.b16 %v1874
      %v1979 = vunpack.c.l.b16 %v1875
      %v1980 = vunpack.c.l.b16 %v1876
      %v1981 = vunpack.c.l.b16 %v1877
      %v1982 = vunpack.c.l.b16 %v1878
      %v1983 = vunpack.c.l.b16 %v1879
      %v1984 = vunpack.c.l.b16 %v1880
      %v1985 = vunpack.c.l.b16 %v1881
      %v1986 = vunpack.c.l.b16 %v1882
      %v1987 = vunpack.c.l.b16 %v1883
      %v1988 = vunpack.c.l.b16 %v1884
      %v1989 = vunpack.c.l.b16 %v1885
      %v1990 = vunpack.c.l.b16 %v1886
      %v1991 = vpack.c.b16 %v1955, %v1954
      %v1992 = vpack.c.b16 %v1957, %v1956
      %v1993 = vpack.c.b16 %v1959, %v1958
      %v1994 = vpack.c.b16 %v1961, %v1960
      %v1995 = vpack.c.b16 %v1963, %v1962
      %v1996 = vpack.c.b16 %v1965, %v1964
      %v1997 = vpack.c.b16 %v1967, %v1966
      %v1998 = vpack.c.b16 %v1969, %v1968
      %v1999 = vpack.c.b16 %v1971, %v1970
      %v2000 = vpack.c.b16 %v1973, %v1972
      %v2001 = vpack.c.b16 %v1975, %v1974
      %v2002 = vpack.c.b16 %v1977, %v1976
      %v2003 = vpack.c.b16 %v1979, %v1978
      %v2004 = vpack.c.b16 %v1981, %v1980
      %v2005 = vpack.c.b16 %v1983, %v1982
      %v2006 = vpack.c.b16 %v1985, %v1984
      %v2007 = vpack.c.b16 %v1987, %v1986
      %v2008 = vpack.c.b16 %v1989, %v1988
      %v2009 = vpack.c.b16 %v1990, %v1990
      %v2029 = vsel %vm1127, %v1909, 0
      %v2032 = vsel %vm1127, %v1912, 0
      %v2035 = vsel %vm1134, %v2009, 0
      %2037 = vmatprep.subr.bf16.mxu0 0
      %2038 = vmatpush1.bf16.msra.mxu0 %v1991
      %2039 = vmatprep.subr.bf16.mxu0 0
      %2040 = vmatpush1.bf16.msra.mxu0 %v1992
      %2041 = vmatprep.subr.bf16.mxu0 0
      %2042 = vmatpush1.bf16.msra.mxu0 %v1993
      %2043 = vmatprep.subr.bf16.mxu0 0
      %2044 = vmatpush1.bf16.msra.mxu0 %v1994
      %2045 = vmatprep.subr.bf16.mxu0 0
      %2046 = vmatpush1.bf16.msra.mxu0 %v1995
      %2047 = vmatprep.subr.bf16.mxu0 0
      %2048 = vmatpush1.bf16.msra.mxu0 %v1996
      %2049 = vmatprep.subr.bf16.mxu0 0
      %2050 = vmatpush1.bf16.msra.mxu0 %v1997
      %2051 = vmatprep.subr.bf16.mxu0 0
      %2052 = vmatpush1.bf16.msra.mxu0 %v1998
      %2053 = vmatprep.subr.bf16.mxu0 0
      %2054 = vmatpush1.bf16.msra.mxu0 %v1999
      %2055 = vmatprep.subr.bf16.mxu0 0
      %2056 = vmatpush1.bf16.msra.mxu0 %v2000
      %2057 = vmatprep.subr.bf16.mxu0 0
      %2058 = vmatpush1.bf16.msra.mxu0 %v2001
      %2059 = vmatprep.subr.bf16.mxu0 0
      %2060 = vmatpush1.bf16.msra.mxu0 %v2002
      %2061 = vmatprep.subr.bf16.mxu0 0
      %2062 = vmatpush1.bf16.msra.mxu0 %v2003
      %2063 = vmatprep.subr.bf16.mxu0 0
      %2064 = vmatpush1.bf16.msra.mxu0 %v2004
      %2065 = vmatprep.subr.bf16.mxu0 0
      %2066 = vmatpush1.bf16.msra.mxu0 %v2005
      %2067 = vmatprep.subr.bf16.mxu0 0
      %2068 = vmatpush1.bf16.msra.mxu0 %v2006
      %2069 = vmatprep.mubr.bf16.mxu0 %v1908
      %2070 = vmatmul.mubr.bf16.gmra.mrb[0].mxu0 %v1907
      %v2071 = vpop.f32.mrb[0].mxu0
      %v2072 = vadd.f32 0.0, %v2071
      %v2073 = vpop.f32.mrb[0].mxu0
      %v2074 = vpop.f32.mrb[0].mxu0
      %v2075 = vadd.f32 0.0, %v2074
      %v2076 = vpop.f32.mrb[0].mxu0
      %2077 = vmatprep.mubr.bf16.mxu0 %v1911
      %2078 = vmatmul.mubr.bf16.gmra.mrb[0].mxu0 %v1910
      %v2079 = vpop.f32.mrb[0].mxu0
      %v2080 = vadd.f32 0.0, %v2079
      %v2081 = vpop.f32.mrb[0].mxu0
      %v2082 = vpop.f32.mrb[0].mxu0
      %v2083 = vadd.f32 0.0, %v2082
      %v2084 = vpop.f32.mrb[0].mxu0
      %2085 = vdwg.mxu0
      %2086 = vmatprep.subr.bf16.mxu0 0
      %2087 = vmatpush1.bf16.msra.mxu0 %v2007
      %2088 = vmatprep.subr.bf16.mxu0 0
      %2089 = vmatpush1.bf16.msra.mxu0 %v2008
      %2090 = vmatprep.subr.bf16.mxu0 0
      %2091 = vmatpush1.bf16.msra.mxu0 %v2035
      %2092 = vmatprep.subr.bf16.mxu0 0
      %2093 = vmatpush1.bf16.msra.mxu0 0
      %2094 = vmatprep.subr.bf16.mxu0 0
      %2095 = vmatpush1.bf16.msra.mxu0 0
      %2096 = vmatprep.subr.bf16.mxu0 0
      %2097 = vmatpush1.bf16.msra.mxu0 0
      %2098 = vmatprep.subr.bf16.mxu0 0
      %2099 = vmatpush1.bf16.msra.mxu0 0
      %2100 = vmatprep.subr.bf16.mxu0 0
      %2101 = vmatpush1.bf16.msra.mxu0 0
      %2102 = vmatprep.subr.bf16.mxu0 0
      %2103 = vmatpush1.bf16.msra.mxu0 0
      %2104 = vmatprep.subr.bf16.mxu0 0
      %2105 = vmatpush1.bf16.msra.mxu0 0
      %2106 = vmatprep.subr.bf16.mxu0 0
      %2107 = vmatpush1.bf16.msra.mxu0 0
      %2108 = vmatprep.subr.bf16.mxu0 0
      %2109 = vmatpush1.bf16.msra.mxu0 0
      %2110 = vmatprep.subr.bf16.mxu0 0
      %2111 = vmatpush1.bf16.msra.mxu0 0
      %2112 = vmatprep.subr.bf16.mxu0 0
      %2113 = vmatpush1.bf16.msra.mxu0 0
      %2114 = vmatprep.subr.bf16.mxu0 0
      %2115 = vmatpush1.bf16.msra.mxu0 0
      %2116 = vmatprep.subr.bf16.mxu0 0
      %2117 = vmatpush1.bf16.msra.mxu0 0
      %2118 = vmatprep.mubr.bf16.mxu0 0
      %2119 = vmatmul.mubr.bf16.gmra.mrb[0].mxu0 %v2029
      %v2120 = vpop.f32.mrb[0].mxu0
      %v2121 = vadd.f32 %v2072, %v2120
      %v2122 = vpop.f32.mrb[0].mxu0
      %v2123 = vpop.f32.mrb[0].mxu0
      %v2124 = vadd.f32 %v2075, %v2123
      %v2125 = vpop.f32.mrb[0].mxu0
      %2126 = vmatprep.mubr.bf16.mxu0 0
      %2127 = vmatmul.mubr.bf16.gmra.mrb[0].mxu0 %v2032
      %v2128 = vpop.f32.mrb[0].mxu0
      %v2129 = vadd.f32 %v2080, %v2128
      %v2130 = vpop.f32.mrb[0].mxu0
      %v2131 = vpop.f32.mrb[0].mxu0
      %v2132 = vadd.f32 %v2083, %v2131
      %v2133 = vpop.f32.mrb[0].mxu0
      %2134 = vdwg.mxu0
      %v2135 = vmax.f32 %v2121, 0.0
      %v2136 = vmax.f32 %v2124, 0.0
      %v2137 = vmax.f32 %v2129, 0.0
      %v2138 = vmax.f32 %v2132, 0.0
      %2139 = vrot.lane.b32.xlu0 %v2135, 127
      %v2140 = vpop.permute.xlu0 %2139
      %2141 = vrot.lane.b32.xlu0 %v2136, 127
      %v2142 = vpop.permute.xlu0 %2141
      %2143 = vrot.lane.b32.xlu0 %v2137, 127
      %v2144 = vpop.permute.xlu0 %2143
      %2145 = vrot.lane.b32.xlu0 %v2138, 127
      %v2146 = vpop.permute.xlu0 %2145
      %2147 = vrot.lane.b32.xlu0 %v2135, 1
      %v2148 = vpop.permute.xlu0 %2147
      %2149 = vrot.lane.b32.xlu0 %v2136, 1
      %v2150 = vpop.permute.xlu0 %2149
      %2151 = vrot.lane.b32.xlu0 %v2137, 1
      %v2152 = vpop.permute.xlu0 %2151
      %2153 = vrot.lane.b32.xlu0 %v2138, 1
      %v2154 = vpop.permute.xlu0 %2153
      %2155 = vrot.lane.b32.xlu0 %v2148, 8
      %v2156 = vpop.permute.xlu0 %2155
      %2157 = vrot.lane.b32.xlu0 %v2150, 8
      %v2158 = vpop.permute.xlu0 %2157
      %2159 = vrot.lane.b32.xlu0 %v2152, 8
      %v2160 = vpop.permute.xlu0 %2159
      %2161 = vrot.lane.b32.xlu0 %v2154, 8
      %v2162 = vpop.permute.xlu0 %2161
      %v2163 = vld [vmem:[%s3] sm:$0x1]
      %v2164 = vlaneseq
      %v2165 = vshrl.u32 %v2164, 7
      %v2166 = vsub.s32 0, %v2165
      %v2167 = vrot.slane %v2163, %v2166
      %v2168 = vmul.f32 %v2156, %v2167
      %v2169 = vmul.f32 %v2158, %v2167
      %v2170 = vmul.f32 %v2160, %v2167
      %v2171 = vmul.f32 %v2162, %v2167
      %v2172 = vpack.c.bf16 %v2169, %v2168
      %v2173 = vpack.c.bf16 %v2171, %v2170
      %v2176 = vunpack.c.l.b16 %v2172
      %v2177 = vunpack.c.h.b16 %v2172
      %v2178 = vunpack.c.l.b16 %v2173
      %v2179 = vunpack.c.h.b16 %v2173
      %v2180 = vpack.c.b16 %v2176, %v2176
      %v2181 = vpack.c.b16 %v2177, %v2177
      %v2182 = vpack.c.b16 %v2178, %v2178
      %v2183 = vpack.c.b16 %v2179, %v2179
      %2188 = vst [vmem:[#allocation3] sm:$0xf] %v2180
      %2189 = vst [vmem:[#allocation3 + $0x4] sm:$0xf] %v2181
      %2190 = vst [vmem:[#allocation3 + $0x8] sm:$0xf] %v2182
      %2191 = vst [vmem:[#allocation3 + $0xc] sm:$0xf] %v2183
      %2192 = vrot.lane.b32.xlu0 %v2135, 8
      %v2193 = vpop.permute.xlu0 %2192
      %2194 = vrot.lane.b32.xlu0 %v2136, 8
      %v2195 = vpop.permute.xlu0 %2194
      %2196 = vrot.lane.b32.xlu0 %v2137, 8
      %v2197 = vpop.permute.xlu0 %2196
      %2198 = vrot.lane.b32.xlu0 %v2138, 8
      %v2199 = vpop.permute.xlu0 %2198
      %v2200 = vld [vmem:[%s3 + $0x1] sm:$0x1]
      %v2201 = vlaneseq
      %v2202 = vshrl.u32 %v2201, 7
      %v2203 = vsub.s32 0, %v2202
      %v2204 = vrot.slane %v2200, %v2203
      %v2205 = vmul.f32 %v2193, %v2204
      %v2206 = vmul.f32 %v2195, %v2204
      %v2207 = vmul.f32 %v2197, %v2204
      %v2208 = vmul.f32 %v2199, %v2204
      %v2209 = vpack.c.bf16 %v2206, %v2205
      %v2210 = vpack.c.bf16 %v2208, %v2207
      %v2213 = vunpack.c.l.b16 %v2209
      %v2214 = vunpack.c.h.b16 %v2209
      %v2215 = vunpack.c.l.b16 %v2210
      %v2216 = vunpack.c.h.b16 %v2210
      %v2217 = vpack.c.b16 %v2213, %v2213
      %v2218 = vpack.c.b16 %v2214, %v2214
      %v2219 = vpack.c.b16 %v2215, %v2215
      %v2220 = vpack.c.b16 %v2216, %v2216
      %2225 = vst [vmem:[#allocation3 + $0x10] sm:$0xf] %v2217
      %2226 = vst [vmem:[#allocation3 + $0x14] sm:$0xf] %v2218
      %2227 = vst [vmem:[#allocation3 + $0x18] sm:$0xf] %v2219
      %2228 = vst [vmem:[#allocation3 + $0x1c] sm:$0xf] %v2220
      %2229 = vrot.lane.b32.xlu0 %v2140, 8
      %v2230 = vpop.permute.xlu0 %2229
      %2231 = vrot.lane.b32.xlu0 %v2142, 8
      %v2232 = vpop.permute.xlu0 %2231
      %2233 = vrot.lane.b32.xlu0 %v2144, 8
      %v2234 = vpop.permute.xlu0 %2233
      %2235 = vrot.lane.b32.xlu0 %v2146, 8
      %v2236 = vpop.permute.xlu0 %2235
      %v2237 = vld [vmem:[%s3 + $0x2] sm:$0x1]
      %v2238 = vlaneseq
      %v2239 = vshrl.u32 %v2238, 7
      %v2240 = vsub.s32 0, %v2239
      %v2241 = vrot.slane %v2237, %v2240
      %v2242 = vmul.f32 %v2230, %v2241
      %v2243 = vmul.f32 %v2232, %v2241
      %v2244 = vmul.f32 %v2234, %v2241
      %v2245 = vmul.f32 %v2236, %v2241
      %v2246 = vpack.c.bf16 %v2243, %v2242
      %v2247 = vpack.c.bf16 %v2245, %v2244
      %v2250 = vunpack.c.l.b16 %v2246
      %v2251 = vunpack.c.h.b16 %v2246
      %v2252 = vunpack.c.l.b16 %v2247
      %v2253 = vunpack.c.h.b16 %v2247
      %v2254 = vpack.c.b16 %v2250, %v2250
      %v2255 = vpack.c.b16 %v2251, %v2251
      %v2256 = vpack.c.b16 %v2252, %v2252
      %v2257 = vpack.c.b16 %v2253, %v2253
      %2262 = vst [vmem:[#allocation3 + $0x20] sm:$0xf] %v2254
      %2263 = vst [vmem:[#allocation3 + $0x24] sm:$0xf] %v2255
      %2264 = vst [vmem:[#allocation3 + $0x28] sm:$0xf] %v2256
      %2265 = vst [vmem:[#allocation3 + $0x2c] sm:$0xf] %v2257
      %v2266 = vld [vmem:[%s3 + $0x3] sm:$0x1]
      %v2267 = vlaneseq
      %v2268 = vshrl.u32 %v2267, 7
      %v2269 = vsub.s32 0, %v2268
      %v2270 = vrot.slane %v2266, %v2269
      %v2271 = vmul.f32 %v2148, %v2270
      %v2272 = vmul.f32 %v2150, %v2270
      %v2273 = vmul.f32 %v2152, %v2270
      %v2274 = vmul.f32 %v2154, %v2270
      %v2275 = vpack.c.bf16 %v2272, %v2271
      %v2276 = vpack.c.bf16 %v2274, %v2273
      %v2279 = vunpack.c.l.b16 %v2275
      %v2280 = vunpack.c.h.b16 %v2275
      %v2281 = vunpack.c.l.b16 %v2276
      %v2282 = vunpack.c.h.b16 %v2276
      %v2283 = vpack.c.b16 %v2279, %v2279
      %v2284 = vpack.c.b16 %v2280, %v2280
      %v2285 = vpack.c.b16 %v2281, %v2281
      %v2286 = vpack.c.b16 %v2282, %v2282
      %2291 = vst [vmem:[#allocation3 + $0x30] sm:$0xf] %v2283
      %2292 = vst [vmem:[#allocation3 + $0x34] sm:$0xf] %v2284
      %2293 = vst [vmem:[#allocation3 + $0x38] sm:$0xf] %v2285
      %2294 = vst [vmem:[#allocation3 + $0x3c] sm:$0xf] %v2286
      %v2295 = vpack.c.bf16 %v2136, %v2135
      %v2296 = vpack.c.bf16 %v2138, %v2137
      %v2299 = vunpack.c.l.b16 %v2295
      %v2300 = vunpack.c.h.b16 %v2295
      %v2301 = vunpack.c.l.b16 %v2296
      %v2302 = vunpack.c.h.b16 %v2296
      %v2303 = vpack.c.b16 %v2299, %v2299
      %v2304 = vpack.c.b16 %v2300, %v2300
      %v2305 = vpack.c.b16 %v2301, %v2301
      %v2306 = vpack.c.b16 %v2302, %v2302
      %2311 = vst [vmem:[#allocation3 + $0x40] sm:$0xf] %v2303
      %2312 = vst [vmem:[#allocation3 + $0x44] sm:$0xf] %v2304
      %2313 = vst [vmem:[#allocation3 + $0x48] sm:$0xf] %v2305
      %2314 = vst [vmem:[#allocation3 + $0x4c] sm:$0xf] %v2306
      %v2315 = vld [vmem:[%s3 + $0x5] sm:$0x1]
      %v2316 = vlaneseq
      %v2317 = vshrl.u32 %v2316, 7
      %v2318 = vsub.s32 0, %v2317
      %v2319 = vrot.slane %v2315, %v2318
      %v2320 = vmul.f32 %v2140, %v2319
      %v2321 = vmul.f32 %v2142, %v2319
      %v2322 = vmul.f32 %v2144, %v2319
      %v2323 = vmul.f32 %v2146, %v2319
      %v2324 = vpack.c.bf16 %v2321, %v2320
      %v2325 = vpack.c.bf16 %v2323, %v2322
      %v2328 = vunpack.c.l.b16 %v2324
      %v2329 = vunpack.c.h.b16 %v2324
      %v2330 = vunpack.c.l.b16 %v2325
      %v2331 = vunpack.c.h.b16 %v2325
      %v2332 = vpack.c.b16 %v2328, %v2328
      %v2333 = vpack.c.b16 %v2329, %v2329
      %v2334 = vpack.c.b16 %v2330, %v2330
      %v2335 = vpack.c.b16 %v2331, %v2331
      %2340 = vst [vmem:[#allocation3 + $0x50] sm:$0xf] %v2332
      %2341 = vst [vmem:[#allocation3 + $0x54] sm:$0xf] %v2333
      %2342 = vst [vmem:[#allocation3 + $0x58] sm:$0xf] %v2334
      %2343 = vst [vmem:[#allocation3 + $0x5c] sm:$0xf] %v2335
      %2344 = vrot.lane.b32.xlu0 %v2148, 120
      %v2345 = vpop.permute.xlu0 %2344
      %2346 = vrot.lane.b32.xlu0 %v2150, 120
      %v2347 = vpop.permute.xlu0 %2346
      %2348 = vrot.lane.b32.xlu0 %v2152, 120
      %v2349 = vpop.permute.xlu0 %2348
      %2350 = vrot.lane.b32.xlu0 %v2154, 120
      %v2351 = vpop.permute.xlu0 %2350
      %v2352 = vld [vmem:[%s3 + $0x6] sm:$0x1]
      %v2353 = vlaneseq
      %v2354 = vshrl.u32 %v2353, 7
      %v2355 = vsub.s32 0, %v2354
      %v2356 = vrot.slane %v2352, %v2355
      %v2357 = vmul.f32 %v2345, %v2356
      %v2358 = vmul.f32 %v2347, %v2356
      %v2359 = vmul.f32 %v2349, %v2356
      %v2360 = vmul.f32 %v2351, %v2356
      %v2361 = vpack.c.bf16 %v2358, %v2357
      %v2362 = vpack.c.bf16 %v2360, %v2359
      %v2365 = vunpack.c.l.b16 %v2361
      %v2366 = vunpack.c.h.b16 %v2361
      %v2367 = vunpack.c.l.b16 %v2362
      %v2368 = vunpack.c.h.b16 %v2362
      %v2369 = vpack.c.b16 %v2365, %v2365
      %v2370 = vpack.c.b16 %v2366, %v2366
      %v2371 = vpack.c.b16 %v2367, %v2367
      %v2372 = vpack.c.b16 %v2368, %v2368
      %2377 = vst [vmem:[#allocation3 + $0x60] sm:$0xf] %v2369
      %2378 = vst [vmem:[#allocation3 + $0x64] sm:$0xf] %v2370
      %2379 = vst [vmem:[#allocation3 + $0x68] sm:$0xf] %v2371
      %2380 = vst [vmem:[#allocation3 + $0x6c] sm:$0xf] %v2372
      %2381 = vrot.lane.b32.xlu0 %v2135, 120
      %v2382 = vpop.permute.xlu0 %2381
      %2383 = vrot.lane.b32.xlu0 %v2136, 120
      %v2384 = vpop.permute.xlu0 %2383
      %2385 = vrot.lane.b32.xlu0 %v2137, 120
      %v2386 = vpop.permute.xlu0 %2385
      %2387 = vrot.lane.b32.xlu0 %v2138, 120
      %v2388 = vpop.permute.xlu0 %2387
      %v2389 = vld [vmem:[%s3 + $0x7] sm:$0x1]
      %v2390 = vlaneseq
      %v2391 = vshrl.u32 %v2390, 7
      %v2392 = vsub.s32 0, %v2391
      %v2393 = vrot.slane %v2389, %v2392
      %v2394 = vmul.f32 %v2382, %v2393
      %v2395 = vmul.f32 %v2384, %v2393
      %v2396 = vmul.f32 %v2386, %v2393
      %v2397 = vmul.f32 %v2388, %v2393
      %v2398 = vpack.c.bf16 %v2395, %v2394
      %v2399 = vpack.c.bf16 %v2397, %v2396
      %v2402 = vunpack.c.l.b16 %v2398
      %v2403 = vunpack.c.h.b16 %v2398
      %v2404 = vunpack.c.l.b16 %v2399
      %v2405 = vunpack.c.h.b16 %v2399
      %v2406 = vpack.c.b16 %v2402, %v2402
      %v2407 = vpack.c.b16 %v2403, %v2403
      %v2408 = vpack.c.b16 %v2404, %v2404
      %v2409 = vpack.c.b16 %v2405, %v2405
      %2414 = vst [vmem:[#allocation3 + $0x70] sm:$0xf] %v2406
      %2415 = vst [vmem:[#allocation3 + $0x74] sm:$0xf] %v2407
      %2416 = vst [vmem:[#allocation3 + $0x78] sm:$0xf] %v2408
      %2417 = vst [vmem:[#allocation3 + $0x7c] sm:$0xf] %v2409
      %2418 = vrot.lane.b32.xlu0 %v2140, 120
      %v2419 = vpop.permute.xlu0 %2418
      %2420 = vrot.lane.b32.xlu0 %v2142, 120
      %v2421 = vpop.permute.xlu0 %2420
      %2422 = vrot.lane.b32.xlu0 %v2144, 120
      %v2423 = vpop.permute.xlu0 %2422
      %2424 = vrot.lane.b32.xlu0 %v2146, 120
      %v2425 = vpop.permute.xlu0 %2424
      %v2426 = vld [vmem:[%s3 + $0x8] sm:$0x1]
      %v2427 = vlaneseq
      %v2428 = vshrl.u32 %v2427, 7
      %v2429 = vsub.s32 0, %v2428
      %v2430 = vrot.slane %v2426, %v2429
      %v2431 = vmul.f32 %v2419, %v2430
      %v2432 = vmul.f32 %v2421, %v2430
      %v2433 = vmul.f32 %v2423, %v2430
      %v2434 = vmul.f32 %v2425, %v2430
      %v2435 = vpack.c.bf16 %v2432, %v2431
      %v2436 = vpack.c.bf16 %v2434, %v2433
      %v2439 = vunpack.c.l.b16 %v2435
      %v2440 = vunpack.c.h.b16 %v2435
      %v2441 = vunpack.c.l.b16 %v2436
      %v2442 = vunpack.c.h.b16 %v2436
      %v2443 = vpack.c.b16 %v2439, %v2439
      %v2444 = vpack.c.b16 %v2440, %v2440
      %v2445 = vpack.c.b16 %v2441, %v2441
      %v2446 = vpack.c.b16 %v2442, %v2442
      %2451 = vst [vmem:[#allocation3 + $0x80] sm:$0xf] %v2443
      %2452 = vst [vmem:[#allocation3 + $0x84] sm:$0xf] %v2444
      %2453 = vst [vmem:[#allocation3 + $0x88] sm:$0xf] %v2445
      %2454 = vst [vmem:[#allocation3 + $0x8c] sm:$0xf] %v2446
      %s2455 = scalar_lea.vmem %s1, 96
      %v2456 = vld [vmem:[%s2455] sm:$0xff]
      %v2457 = vld [vmem:[%s2455 + $0x8] sm:$0xf]
      %v2458 = vld [vmem:[%s2455 + $0xc] sm:$0xff]
      %v2459 = vld [vmem:[%s2455 + $0x14] sm:$0xf]
      %v2460 = vld [vmem:[%s2455 + $0x18] sm:$0xff]
      %v2461 = vld [vmem:[%s2455 + $0x20] sm:$0xf]
      %v2462 = vld [vmem:[%s2455 + $0x24] sm:$0xff]
      %v2463 = vld [vmem:[%s2455 + $0x2c] sm:$0xf]
      %v2464 = vld [vmem:[#allocation3] sm:$0xf]
      %v2465 = vld [vmem:[#allocation3 + $0x4] sm:$0xf]
      %v2466 = vld [vmem:[#allocation3 + $0x8] sm:$0xf]
      %v2467 = vld [vmem:[#allocation3 + $0xc] sm:$0xf]
      %v2468 = vld [vmem:[#allocation3 + $0x10] sm:$0xf]
      %v2469 = vld [vmem:[#allocation3 + $0x14] sm:$0xf]
      %v2470 = vld [vmem:[#allocation3 + $0x18] sm:$0xf]
      %v2471 = vld [vmem:[#allocation3 + $0x1c] sm:$0xf]
      %v2472 = vld [vmem:[#allocation3 + $0x20] sm:$0xf]
      %v2473 = vld [vmem:[#allocation3 + $0x24] sm:$0xf]
      %v2474 = vld [vmem:[#allocation3 + $0x28] sm:$0xf]
      %v2475 = vld [vmem:[#allocation3 + $0x2c] sm:$0xf]
      %v2476 = vld [vmem:[#allocation3 + $0x30] sm:$0xf]
      %v2477 = vld [vmem:[#allocation3 + $0x34] sm:$0xf]
      %v2478 = vld [vmem:[#allocation3 + $0x38] sm:$0xf]
      %v2479 = vld [vmem:[#allocation3 + $0x3c] sm:$0xf]
      %v2480 = vld [vmem:[#allocation3 + $0x40] sm:$0xf]
      %v2481 = vld [vmem:[#allocation3 + $0x44] sm:$0xf]
      %v2482 = vld [vmem:[#allocation3 + $0x48] sm:$0xf]
      %v2483 = vld [vmem:[#allocation3 + $0x4c] sm:$0xf]
      %v2484 = vld [vmem:[#allocation3 + $0x50] sm:$0xf]
      %v2485 = vld [vmem:[#allocation3 + $0x54] sm:$0xf]
      %v2486 = vld [vmem:[#allocation3 + $0x58] sm:$0xf]
      %v2487 = vld [vmem:[#allocation3 + $0x5c] sm:$0xf]
      %v2488 = vld [vmem:[#allocation3 + $0x60] sm:$0xf]
      %v2489 = vld [vmem:[#allocation3 + $0x64] sm:$0xf]
      %v2490 = vld [vmem:[#allocation3 + $0x68] sm:$0xf]
      %v2491 = vld [vmem:[#allocation3 + $0x6c] sm:$0xf]
      %v2492 = vld [vmem:[#allocation3 + $0x70] sm:$0xf]
      %v2493 = vld [vmem:[#allocation3 + $0x74] sm:$0xf]
      %v2494 = vld [vmem:[#allocation3 + $0x78] sm:$0xf]
      %v2495 = vld [vmem:[#allocation3 + $0x7c] sm:$0xf]
      %v2496 = vld [vmem:[#allocation3 + $0x80] sm:$0xf]
      %v2497 = vld [vmem:[#allocation3 + $0x84] sm:$0xf]
      %v2498 = vld [vmem:[#allocation3 + $0x88] sm:$0xf]
      %v2499 = vld [vmem:[#allocation3 + $0x8c] sm:$0xf]
      %v2500 = vld [vmem:[#allocation3 + $0x90] sm:$0xf]
      %v2509 = vunpack.c.l.b16 %v2456
      %v2510 = vunpack.c.h.b16 %v2456
      %v2511 = vunpack.c.l.b16 %v2457
      %v2512 = vunpack.c.l.b16 %v2458
      %v2513 = vunpack.c.h.b16 %v2458
      %v2514 = vunpack.c.l.b16 %v2459
      %v2515 = vunpack.c.l.b16 %v2460
      %v2516 = vunpack.c.h.b16 %v2460
      %v2517 = vunpack.c.l.b16 %v2461
      %v2518 = vunpack.c.l.b16 %v2462
      %v2519 = vunpack.c.h.b16 %v2462
      %v2520 = vunpack.c.l.b16 %v2463
      %v2521 = vpack.c.b16 %v2512, %v2509
      %v2522 = vpack.c.b16 %v2513, %v2510
      %v2523 = vpack.c.b16 %v2514, %v2511
      %v2524 = vpack.c.b16 %v2518, %v2515
      %v2525 = vpack.c.b16 %v2519, %v2516
      %v2526 = vpack.c.b16 %v2520, %v2517
      %v2568 = vunpack.c.l.b16 %v2464
      %v2569 = vunpack.c.l.b16 %v2465
      %v2570 = vunpack.c.l.b16 %v2466
      %v2571 = vunpack.c.l.b16 %v2467
      %v2572 = vunpack.c.l.b16 %v2468
      %v2573 = vunpack.c.l.b16 %v2469
      %v2574 = vunpack.c.l.b16 %v2470
      %v2575 = vunpack.c.l.b16 %v2471
      %v2576 = vunpack.c.l.b16 %v2472
      %v2577 = vunpack.c.l.b16 %v2473
      %v2578 = vunpack.c.l.b16 %v2474
      %v2579 = vunpack.c.l.b16 %v2475
      %v2580 = vunpack.c.l.b16 %v2476
      %v2581 = vunpack.c.l.b16 %v2477
      %v2582 = vunpack.c.l.b16 %v2478
      %v2583 = vunpack.c.l.b16 %v2479
      %v2584 = vunpack.c.l.b16 %v2480
      %v2585 = vunpack.c.l.b16 %v2481
      %v2586 = vunpack.c.l.b16 %v2482
      %v2587 = vunpack.c.l.b16 %v2483
      %v2588 = vunpack.c.l.b16 %v2484
      %v2589 = vunpack.c.l.b16 %v2485
      %v2590 = vunpack.c.l.b16 %v2486
      %v2591 = vunpack.c.l.b16 %v2487
      %v2592 = vunpack.c.l.b16 %v2488
      %v2593 = vunpack.c.l.b16 %v2489
      %v2594 = vunpack.c.l.b16 %v2490
      %v2595 = vunpack.c.l.b16 %v2491
      %v2596 = vunpack.c.l.b16 %v2492
      %v2597 = vunpack.c.l.b16 %v2493
      %v2598 = vunpack.c.l.b16 %v2494
      %v2599 = vunpack.c.l.b16 %v2495
      %v2600 = vunpack.c.l.b16 %v2496
      %v2601 = vunpack.c.l.b16 %v2497
      %v2602 = vunpack.c.l.b16 %v2498
      %v2603 = vunpack.c.l.b16 %v2499
      %v2604 = vunpack.c.l.b16 %v2500
      %v2605 = vpack.c.b16 %v2569, %v2568
      %v2606 = vpack.c.b16 %v2571, %v2570
      %v2607 = vpack.c.b16 %v2573, %v2572
      %v2608 = vpack.c.b16 %v2575, %v2574
      %v2609 = vpack.c.b16 %v2577, %v2576
      %v2610 = vpack.c.b16 %v2579, %v2578
      %v2611 = vpack.c.b16 %v2581, %v2580
      %v2612 = vpack.c.b16 %v2583, %v2582
      %v2613 = vpack.c.b16 %v2585, %v2584
      %v2614 = vpack.c.b16 %v2587, %v2586
      %v2615 = vpack.c.b16 %v2589, %v2588
      %v2616 = vpack.c.b16 %v2591, %v2590
      %v2617 = vpack.c.b16 %v2593, %v2592
      %v2618 = vpack.c.b16 %v2595, %v2594
      %v2619 = vpack.c.b16 %v2597, %v2596
      %v2620 = vpack.c.b16 %v2599, %v2598
      %v2621 = vpack.c.b16 %v2601, %v2600
      %v2622 = vpack.c.b16 %v2603, %v2602
      %v2623 = vpack.c.b16 %v2604, %v2604
      %v2643 = vsel %vm1127, %v2523, 0
      %v2646 = vsel %vm1127, %v2526, 0
      %v2649 = vsel %vm1134, %v2623, 0
      %2651 = vmatprep.subr.bf16.mxu0 0
      %2652 = vmatpush1.bf16.msra.mxu0 %v2605
      %2653 = vmatprep.subr.bf16.mxu0 0
      %2654 = vmatpush1.bf16.msra.mxu0 %v2606
      %2655 = vmatprep.subr.bf16.mxu0 0
      %2656 = vmatpush1.bf16.msra.mxu0 %v2607
      %2657 = vmatprep.subr.bf16.mxu0 0
      %2658 = vmatpush1.bf16.msra.mxu0 %v2608
      %2659 = vmatprep.subr.bf16.mxu0 0
      %2660 = vmatpush1.bf16.msra.mxu0 %v2609
      %2661 = vmatprep.subr.bf16.mxu0 0
      %2662 = vmatpush1.bf16.msra.mxu0 %v2610
      %2663 = vmatprep.subr.bf16.mxu0 0
      %2664 = vmatpush1.bf16.msra.mxu0 %v2611
      %2665 = vmatprep.subr.bf16.mxu0 0
      %2666 = vmatpush1.bf16.msra.mxu0 %v2612
      %2667 = vmatprep.subr.bf16.mxu0 0
      %2668 = vmatpush1.bf16.msra.mxu0 %v2613
      %2669 = vmatprep.subr.bf16.mxu0 0
      %2670 = vmatpush1.bf16.msra.mxu0 %v2614
      %2671 = vmatprep.subr.bf16.mxu0 0
      %2672 = vmatpush1.bf16.msra.mxu0 %v2615
      %2673 = vmatprep.subr.bf16.mxu0 0
      %2674 = vmatpush1.bf16.msra.mxu0 %v2616
      %2675 = vmatprep.subr.bf16.mxu0 0
      %2676 = vmatpush1.bf16.msra.mxu0 %v2617
      %2677 = vmatprep.subr.bf16.mxu0 0
      %2678 = vmatpush1.bf16.msra.mxu0 %v2618
      %2679 = vmatprep.subr.bf16.mxu0 0
      %2680 = vmatpush1.bf16.msra.mxu0 %v2619
      %2681 = vmatprep.subr.bf16.mxu0 0
      %2682 = vmatpush1.bf16.msra.mxu0 %v2620
      %2683 = vmatprep.mubr.bf16.mxu0 %v2522
      %2684 = vmatmul.mubr.bf16.gmra.mrb[0].mxu0 %v2521
      %v2685 = vpop.f32.mrb[0].mxu0
      %v2686 = vadd.f32 %v1511, %v2685
      %v2687 = vpop.f32.mrb[0].mxu0
      %v2688 = vpop.f32.mrb[0].mxu0
      %v2689 = vadd.f32 %v1514, %v2688
      %v2690 = vpop.f32.mrb[0].mxu0
      %2691 = vmatprep.mubr.bf16.mxu0 %v2525
      %2692 = vmatmul.mubr.bf16.gmra.mrb[0].mxu0 %v2524
      %v2693 = vpop.f32.mrb[0].mxu0
      %v2694 = vadd.f32 %v1519, %v2693
      %v2695 = vpop.f32.mrb[0].mxu0
      %v2696 = vpop.f32.mrb[0].mxu0
      %v2697 = vadd.f32 %v1522, %v2696
      %v2698 = vpop.f32.mrb[0].mxu0
      %2699 = vdwg.mxu0
      %2700 = vmatprep.subr.bf16.mxu0 0
      %2701 = vmatpush1.bf16.msra.mxu0 %v2621
      %2702 = vmatprep.subr.bf16.mxu0 0
      %2703 = vmatpush1.bf16.msra.mxu0 %v2622
      %2704 = vmatprep.subr.bf16.mxu0 0
      %2705 = vmatpush1.bf16.msra.mxu0 %v2649
      %2706 = vmatprep.subr.bf16.mxu0 0
      %2707 = vmatpush1.bf16.msra.mxu0 0
      %2708 = vmatprep.subr.bf16.mxu0 0
      %2709 = vmatpush1.bf16.msra.mxu0 0
      %2710 = vmatprep.subr.bf16.mxu0 0
      %2711 = vmatpush1.bf16.msra.mxu0 0
      %2712 = vmatprep.subr.bf16.mxu0 0
      %2713 = vmatpush1.bf16.msra.mxu0 0
      %2714 = vmatprep.subr.bf16.mxu0 0
      %2715 = vmatpush1.bf16.msra.mxu0 0
      %2716 = vmatprep.subr.bf16.mxu0 0
      %2717 = vmatpush1.bf16.msra.mxu0 0
      %2718 = vmatprep.subr.bf16.mxu0 0
      %2719 = vmatpush1.bf16.msra.mxu0 0
      %2720 = vmatprep.subr.bf16.mxu0 0
      %2721 = vmatpush1.bf16.msra.mxu0 0
      %2722 = vmatprep.subr.bf16.mxu0 0
      %2723 = vmatpush1.bf16.msra.mxu0 0
      %2724 = vmatprep.subr.bf16.mxu0 0
      %2725 = vmatpush1.bf16.msra.mxu0 0
      %2726 = vmatprep.subr.bf16.mxu0 0
      %2727 = vmatpush1.bf16.msra.mxu0 0
      %2728 = vmatprep.subr.bf16.mxu0 0
      %2729 = vmatpush1.bf16.msra.mxu0 0
      %2730 = vmatprep.subr.bf16.mxu0 0
      %2731 = vmatpush1.bf16.msra.mxu0 0
      %2732 = vmatprep.mubr.bf16.mxu0 0
      %2733 = vmatmul.mubr.bf16.gmra.mrb[0].mxu0 %v2643
      %v2734 = vpop.f32.mrb[0].mxu0
      %v2735 = vadd.f32 %v2686, %v2734
      %v2736 = vpop.f32.mrb[0].mxu0
      %v2737 = vpop.f32.mrb[0].mxu0
      %v2738 = vadd.f32 %v2689, %v2737
      %v2739 = vpop.f32.mrb[0].mxu0
      %2740 = vmatprep.mubr.bf16.mxu0 0
      %2741 = vmatmul.mubr.bf16.gmra.mrb[0].mxu0 %v2646
      %v2742 = vpop.f32.mrb[0].mxu0
      %v2743 = vadd.f32 %v2694, %v2742
      %v2744 = vpop.f32.mrb[0].mxu0
      %v2745 = vpop.f32.mrb[0].mxu0
      %v2746 = vadd.f32 %v2697, %v2745
      %v2747 = vpop.f32.mrb[0].mxu0
      %2748 = vdwg.mxu0
      %2749 = vrot.lane.b32.xlu0 %v2735, 127
      %v2750 = vpop.permute.xlu0 %2749
      %2751 = vrot.lane.b32.xlu0 %v2738, 127
      %v2752 = vpop.permute.xlu0 %2751
      %2753 = vrot.lane.b32.xlu0 %v2743, 127
      %v2754 = vpop.permute.xlu0 %2753
      %2755 = vrot.lane.b32.xlu0 %v2746, 127
      %v2756 = vpop.permute.xlu0 %2755
      %2757 = vrot.lane.b32.xlu0 %v2735, 1
      %v2758 = vpop.permute.xlu0 %2757
      %2759 = vrot.lane.b32.xlu0 %v2738, 1
      %v2760 = vpop.permute.xlu0 %2759
      %2761 = vrot.lane.b32.xlu0 %v2743, 1
      %v2762 = vpop.permute.xlu0 %2761
      %2763 = vrot.lane.b32.xlu0 %v2746, 1
      %v2764 = vpop.permute.xlu0 %2763
      %2765 = vrot.lane.b32.xlu0 %v2758, 8
      %v2766 = vpop.permute.xlu0 %2765
      %2767 = vrot.lane.b32.xlu0 %v2760, 8
      %v2768 = vpop.permute.xlu0 %2767
      %2769 = vrot.lane.b32.xlu0 %v2762, 8
      %v2770 = vpop.permute.xlu0 %2769
      %2771 = vrot.lane.b32.xlu0 %v2764, 8
      %v2772 = vpop.permute.xlu0 %2771
      %v2773 = vld [vmem:[%s3] sm:$0x1]
      %v2774 = vlaneseq
      %v2775 = vshrl.u32 %v2774, 7
      %v2776 = vsub.s32 0, %v2775
      %v2777 = vrot.slane %v2773, %v2776
      %v2778 = vmul.f32 %v2766, %v2777
      %v2779 = vmul.f32 %v2768, %v2777
      %v2780 = vmul.f32 %v2770, %v2777
      %v2781 = vmul.f32 %v2772, %v2777
      %v2782 = vpack.c.bf16 %v2779, %v2778
      %v2783 = vpack.c.bf16 %v2781, %v2780
      %v2786 = vunpack.c.l.b16 %v2782
      %v2787 = vunpack.c.h.b16 %v2782
      %v2788 = vunpack.c.l.b16 %v2783
      %v2789 = vunpack.c.h.b16 %v2783
      %v2790 = vpack.c.b16 %v2786, %v2786
      %v2791 = vpack.c.b16 %v2787, %v2787
      %v2792 = vpack.c.b16 %v2788, %v2788
      %v2793 = vpack.c.b16 %v2789, %v2789
      %2798 = vst [vmem:[#allocation3] sm:$0xf] %v2790
      %2799 = vst [vmem:[#allocation3 + $0x4] sm:$0xf] %v2791
      %2800 = vst [vmem:[#allocation3 + $0x8] sm:$0xf] %v2792
      %2801 = vst [vmem:[#allocation3 + $0xc] sm:$0xf] %v2793
      %2802 = vrot.lane.b32.xlu0 %v2735, 8
      %v2803 = vpop.permute.xlu0 %2802
      %2804 = vrot.lane.b32.xlu0 %v2738, 8
      %v2805 = vpop.permute.xlu0 %2804
      %2806 = vrot.lane.b32.xlu0 %v2743, 8
      %v2807 = vpop.permute.xlu0 %2806
      %2808 = vrot.lane.b32.xlu0 %v2746, 8
      %v2809 = vpop.permute.xlu0 %2808
      %v2810 = vld [vmem:[%s3 + $0x1] sm:$0x1]
      %v2811 = vlaneseq
      %v2812 = vshrl.u32 %v2811, 7
      %v2813 = vsub.s32 0, %v2812
      %v2814 = vrot.slane %v2810, %v2813
      %v2815 = vmul.f32 %v2803, %v2814
      %v2816 = vmul.f32 %v2805, %v2814
      %v2817 = vmul.f32 %v2807, %v2814
      %v2818 = vmul.f32 %v2809, %v2814
      %v2819 = vpack.c.bf16 %v2816, %v2815
      %v2820 = vpack.c.bf16 %v2818, %v2817
      %v2823 = vunpack.c.l.b16 %v2819
      %v2824 = vunpack.c.h.b16 %v2819
      %v2825 = vunpack.c.l.b16 %v2820
      %v2826 = vunpack.c.h.b16 %v2820
      %v2827 = vpack.c.b16 %v2823, %v2823
      %v2828 = vpack.c.b16 %v2824, %v2824
      %v2829 = vpack.c.b16 %v2825, %v2825
      %v2830 = vpack.c.b16 %v2826, %v2826
      %2835 = vst [vmem:[#allocation3 + $0x10] sm:$0xf] %v2827
      %2836 = vst [vmem:[#allocation3 + $0x14] sm:$0xf] %v2828
      %2837 = vst [vmem:[#allocation3 + $0x18] sm:$0xf] %v2829
      %2838 = vst [vmem:[#allocation3 + $0x1c] sm:$0xf] %v2830
      %2839 = vrot.lane.b32.xlu0 %v2750, 8
      %v2840 = vpop.permute.xlu0 %2839
      %2841 = vrot.lane.b32.xlu0 %v2752, 8
      %v2842 = vpop.permute.xlu0 %2841
      %2843 = vrot.lane.b32.xlu0 %v2754, 8
      %v2844 = vpop.permute.xlu0 %2843
      %2845 = vrot.lane.b32.xlu0 %v2756, 8
      %v2846 = vpop.permute.xlu0 %2845
      %v2847 = vld [vmem:[%s3 + $0x2] sm:$0x1]
      %v2848 = vlaneseq
      %v2849 = vshrl.u32 %v2848, 7
      %v2850 = vsub.s32 0, %v2849
      %v2851 = vrot.slane %v2847, %v2850
      %v2852 = vmul.f32 %v2840, %v2851
      %v2853 = vmul.f32 %v2842, %v2851
      %v2854 = vmul.f32 %v2844, %v2851
      %v2855 = vmul.f32 %v2846, %v2851
      %v2856 = vpack.c.bf16 %v2853, %v2852
      %v2857 = vpack.c.bf16 %v2855, %v2854
      %v2860 = vunpack.c.l.b16 %v2856
      %v2861 = vunpack.c.h.b16 %v2856
      %v2862 = vunpack.c.l.b16 %v2857
      %v2863 = vunpack.c.h.b16 %v2857
      %v2864 = vpack.c.b16 %v2860, %v2860
      %v2865 = vpack.c.b16 %v2861, %v2861
      %v2866 = vpack.c.b16 %v2862, %v2862
      %v2867 = vpack.c.b16 %v2863, %v2863
      %2872 = vst [vmem:[#allocation3 + $0x20] sm:$0xf] %v2864
      %2873 = vst [vmem:[#allocation3 + $0x24] sm:$0xf] %v2865
      %2874 = vst [vmem:[#allocation3 + $0x28] sm:$0xf] %v2866
      %2875 = vst [vmem:[#allocation3 + $0x2c] sm:$0xf] %v2867
      %v2876 = vld [vmem:[%s3 + $0x3] sm:$0x1]
      %v2877 = vlaneseq
      %v2878 = vshrl.u32 %v2877, 7
      %v2879 = vsub.s32 0, %v2878
      %v2880 = vrot.slane %v2876, %v2879
      %v2881 = vmul.f32 %v2758, %v2880
      %v2882 = vmul.f32 %v2760, %v2880
      %v2883 = vmul.f32 %v2762, %v2880
      %v2884 = vmul.f32 %v2764, %v2880
      %v2885 = vpack.c.bf16 %v2882, %v2881
      %v2886 = vpack.c.bf16 %v2884, %v2883
      %v2889 = vunpack.c.l.b16 %v2885
      %v2890 = vunpack.c.h.b16 %v2885
      %v2891 = vunpack.c.l.b16 %v2886
      %v2892 = vunpack.c.h.b16 %v2886
      %v2893 = vpack.c.b16 %v2889, %v2889
      %v2894 = vpack.c.b16 %v2890, %v2890
      %v2895 = vpack.c.b16 %v2891, %v2891
      %v2896 = vpack.c.b16 %v2892, %v2892
      %2901 = vst [vmem:[#allocation3 + $0x30] sm:$0xf] %v2893
      %2902 = vst [vmem:[#allocation3 + $0x34] sm:$0xf] %v2894
      %2903 = vst [vmem:[#allocation3 + $0x38] sm:$0xf] %v2895
      %2904 = vst [vmem:[#allocation3 + $0x3c] sm:$0xf] %v2896
      %v2905 = vpack.c.bf16 %v2738, %v2735
      %v2906 = vpack.c.bf16 %v2746, %v2743
      %v2909 = vunpack.c.l.b16 %v2905
      %v2910 = vunpack.c.h.b16 %v2905
      %v2911 = vunpack.c.l.b16 %v2906
      %v2912 = vunpack.c.h.b16 %v2906
      %v2913 = vpack.c.b16 %v2909, %v2909
      %v2914 = vpack.c.b16 %v2910, %v2910
      %v2915 = vpack.c.b16 %v2911, %v2911
      %v2916 = vpack.c.b16 %v2912, %v2912
      %2921 = vst [vmem:[#allocation3 + $0x40] sm:$0xf] %v2913
      %2922 = vst [vmem:[#allocation3 + $0x44] sm:$0xf] %v2914
      %2923 = vst [vmem:[#allocation3 + $0x48] sm:$0xf] %v2915
      %2924 = vst [vmem:[#allocation3 + $0x4c] sm:$0xf] %v2916
      %v2925 = vld [vmem:[%s3 + $0x5] sm:$0x1]
      %v2926 = vlaneseq
      %v2927 = vshrl.u32 %v2926, 7
      %v2928 = vsub.s32 0, %v2927
      %v2929 = vrot.slane %v2925, %v2928
      %v2930 = vmul.f32 %v2750, %v2929
      %v2931 = vmul.f32 %v2752, %v2929
      %v2932 = vmul.f32 %v2754, %v2929
      %v2933 = vmul.f32 %v2756, %v2929
      %v2934 = vpack.c.bf16 %v2931, %v2930
      %v2935 = vpack.c.bf16 %v2933, %v2932
      %v2938 = vunpack.c.l.b16 %v2934
      %v2939 = vunpack.c.h.b16 %v2934
      %v2940 = vunpack.c.l.b16 %v2935
      %v2941 = vunpack.c.h.b16 %v2935
      %v2942 = vpack.c.b16 %v2938, %v2938
      %v2943 = vpack.c.b16 %v2939, %v2939
      %v2944 = vpack.c.b16 %v2940, %v2940
      %v2945 = vpack.c.b16 %v2941, %v2941
      %2950 = vst [vmem:[#allocation3 + $0x50] sm:$0xf] %v2942
      %2951 = vst [vmem:[#allocation3 + $0x54] sm:$0xf] %v2943
      %2952 = vst [vmem:[#allocation3 + $0x58] sm:$0xf] %v2944
      %2953 = vst [vmem:[#allocation3 + $0x5c] sm:$0xf] %v2945
      %2954 = vrot.lane.b32.xlu0 %v2758, 120
      %v2955 = vpop.permute.xlu0 %2954
      %2956 = vrot.lane.b32.xlu0 %v2760, 120
      %v2957 = vpop.permute.xlu0 %2956
      %2958 = vrot.lane.b32.xlu0 %v2762, 120
      %v2959 = vpop.permute.xlu0 %2958
      %2960 = vrot.lane.b32.xlu0 %v2764, 120
      %v2961 = vpop.permute.xlu0 %2960
      %v2962 = vld [vmem:[%s3 + $0x6] sm:$0x1]
      %v2963 = vlaneseq
      %v2964 = vshrl.u32 %v2963, 7
      %v2965 = vsub.s32 0, %v2964
      %v2966 = vrot.slane %v2962, %v2965
      %v2967 = vmul.f32 %v2955, %v2966
      %v2968 = vmul.f32 %v2957, %v2966
      %v2969 = vmul.f32 %v2959, %v2966
      %v2970 = vmul.f32 %v2961, %v2966
      %v2971 = vpack.c.bf16 %v2968, %v2967
      %v2972 = vpack.c.bf16 %v2970, %v2969
      %v2975 = vunpack.c.l.b16 %v2971
      %v2976 = vunpack.c.h.b16 %v2971
      %v2977 = vunpack.c.l.b16 %v2972
      %v2978 = vunpack.c.h.b16 %v2972
      %v2979 = vpack.c.b16 %v2975, %v2975
      %v2980 = vpack.c.b16 %v2976, %v2976
      %v2981 = vpack.c.b16 %v2977, %v2977
      %v2982 = vpack.c.b16 %v2978, %v2978
      %2987 = vst [vmem:[#allocation3 + $0x60] sm:$0xf] %v2979
      %2988 = vst [vmem:[#allocation3 + $0x64] sm:$0xf] %v2980
      %2989 = vst [vmem:[#allocation3 + $0x68] sm:$0xf] %v2981
      %2990 = vst [vmem:[#allocation3 + $0x6c] sm:$0xf] %v2982
      %2991 = vrot.lane.b32.xlu0 %v2735, 120
      %v2992 = vpop.permute.xlu0 %2991
      %2993 = vrot.lane.b32.xlu0 %v2738, 120
      %v2994 = vpop.permute.xlu0 %2993
      %2995 = vrot.lane.b32.xlu0 %v2743, 120
      %v2996 = vpop.permute.xlu0 %2995
      %2997 = vrot.lane.b32.xlu0 %v2746, 120
      %v2998 = vpop.permute.xlu0 %2997
      %v2999 = vld [vmem:[%s3 + $0x7] sm:$0x1]
      %v3000 = vlaneseq
      %v3001 = vshrl.u32 %v3000, 7
      %v3002 = vsub.s32 0, %v3001
      %v3003 = vrot.slane %v2999, %v3002
      %v3004 = vmul.f32 %v2992, %v3003
      %v3005 = vmul.f32 %v2994, %v3003
      %v3006 = vmul.f32 %v2996, %v3003
      %v3007 = vmul.f32 %v2998, %v3003
      %v3008 = vpack.c.bf16 %v3005, %v3004
      %v3009 = vpack.c.bf16 %v3007, %v3006
      %v3012 = vunpack.c.l.b16 %v3008
      %v3013 = vunpack.c.h.b16 %v3008
      %v3014 = vunpack.c.l.b16 %v3009
      %v3015 = vunpack.c.h.b16 %v3009
      %v3016 = vpack.c.b16 %v3012, %v3012
      %v3017 = vpack.c.b16 %v3013, %v3013
      %v3018 = vpack.c.b16 %v3014, %v3014
      %v3019 = vpack.c.b16 %v3015, %v3015
      %3024 = vst [vmem:[#allocation3 + $0x70] sm:$0xf] %v3016
      %3025 = vst [vmem:[#allocation3 + $0x74] sm:$0xf] %v3017
      %3026 = vst [vmem:[#allocation3 + $0x78] sm:$0xf] %v3018
      %3027 = vst [vmem:[#allocation3 + $0x7c] sm:$0xf] %v3019
      %3028 = vrot.lane.b32.xlu0 %v2750, 120
      %v3029 = vpop.permute.xlu0 %3028
      %3030 = vrot.lane.b32.xlu0 %v2752, 120
      %v3031 = vpop.permute.xlu0 %3030
      %3032 = vrot.lane.b32.xlu0 %v2754, 120
      %v3033 = vpop.permute.xlu0 %3032
      %3034 = vrot.lane.b32.xlu0 %v2756, 120
      %v3035 = vpop.permute.xlu0 %3034
      %v3036 = vld [vmem:[%s3 + $0x8] sm:$0x1]
      %v3037 = vlaneseq
      %v3038 = vshrl.u32 %v3037, 7
      %v3039 = vsub.s32 0, %v3038
      %v3040 = vrot.slane %v3036, %v3039
      %v3041 = vmul.f32 %v3029, %v3040
      %v3042 = vmul.f32 %v3031, %v3040
      %v3043 = vmul.f32 %v3033, %v3040
      %v3044 = vmul.f32 %v3035, %v3040
      %v3045 = vpack.c.bf16 %v3042, %v3041
      %v3046 = vpack.c.bf16 %v3044, %v3043
      %v3049 = vunpack.c.l.b16 %v3045
      %v3050 = vunpack.c.h.b16 %v3045
      %v3051 = vunpack.c.l.b16 %v3046
      %v3052 = vunpack.c.h.b16 %v3046
      %v3053 = vpack.c.b16 %v3049, %v3049
      %v3054 = vpack.c.b16 %v3050, %v3050
      %v3055 = vpack.c.b16 %v3051, %v3051
      %v3056 = vpack.c.b16 %v3052, %v3052
      %3061 = vst [vmem:[#allocation3 + $0x80] sm:$0xf] %v3053
      %3062 = vst [vmem:[#allocation3 + $0x84] sm:$0xf] %v3054
      %3063 = vst [vmem:[#allocation3 + $0x88] sm:$0xf] %v3055
      %3064 = vst [vmem:[#allocation3 + $0x8c] sm:$0xf] %v3056
      %s3065 = scalar_lea.vmem %s1, 144
      %v3066 = vld [vmem:[%s3065] sm:$0xff]
      %v3067 = vld [vmem:[%s3065 + $0x8] sm:$0xf]
      %v3068 = vld [vmem:[%s3065 + $0xc] sm:$0xff]
      %v3069 = vld [vmem:[%s3065 + $0x14] sm:$0xf]
      %v3070 = vld [vmem:[%s3065 + $0x18] sm:$0xff]
      %v3071 = vld [vmem:[%s3065 + $0x20] sm:$0xf]
      %v3072 = vld [vmem:[%s3065 + $0x24] sm:$0xff]
      %v3073 = vld [vmem:[%s3065 + $0x2c] sm:$0xf]
      %v3074 = vld [vmem:[#allocation3] sm:$0xf]
      %v3075 = vld [vmem:[#allocation3 + $0x4] sm:$0xf]
      %v3076 = vld [vmem:[#allocation3 + $0x8] sm:$0xf]
      %v3077 = vld [vmem:[#allocation3 + $0xc] sm:$0xf]
      %v3078 = vld [vmem:[#allocation3 + $0x10] sm:$0xf]
      %v3079 = vld [vmem:[#allocation3 + $0x14] sm:$0xf]
      %v3080 = vld [vmem:[#allocation3 + $0x18] sm:$0xf]
      %v3081 = vld [vmem:[#allocation3 + $0x1c] sm:$0xf]
      %v3082 = vld [vmem:[#allocation3 + $0x20] sm:$0xf]
      %v3083 = vld [vmem:[#allocation3 + $0x24] sm:$0xf]
      %v3084 = vld [vmem:[#allocation3 + $0x28] sm:$0xf]
      %v3085 = vld [vmem:[#allocation3 + $0x2c] sm:$0xf]
      %v3086 = vld [vmem:[#allocation3 + $0x30] sm:$0xf]
      %v3087 = vld [vmem:[#allocation3 + $0x34] sm:$0xf]
      %v3088 = vld [vmem:[#allocation3 + $0x38] sm:$0xf]
      %v3089 = vld [vmem:[#allocation3 + $0x3c] sm:$0xf]
      %v3090 = vld [vmem:[#allocation3 + $0x40] sm:$0xf]
      %v3091 = vld [vmem:[#allocation3 + $0x44] sm:$0xf]
      %v3092 = vld [vmem:[#allocation3 + $0x48] sm:$0xf]
      %v3093 = vld [vmem:[#allocation3 + $0x4c] sm:$0xf]
      %v3094 = vld [vmem:[#allocation3 + $0x50] sm:$0xf]
      %v3095 = vld [vmem:[#allocation3 + $0x54] sm:$0xf]
      %v3096 = vld [vmem:[#allocation3 + $0x58] sm:$0xf]
      %v3097 = vld [vmem:[#allocation3 + $0x5c] sm:$0xf]
      %v3098 = vld [vmem:[#allocation3 + $0x60] sm:$0xf]
      %v3099 = vld [vmem:[#allocation3 + $0x64] sm:$0xf]
      %v3100 = vld [vmem:[#allocation3 + $0x68] sm:$0xf]
      %v3101 = vld [vmem:[#allocation3 + $0x6c] sm:$0xf]
      %v3102 = vld [vmem:[#allocation3 + $0x70] sm:$0xf]
      %v3103 = vld [vmem:[#allocation3 + $0x74] sm:$0xf]
      %v3104 = vld [vmem:[#allocation3 + $0x78] sm:$0xf]
      %v3105 = vld [vmem:[#allocation3 + $0x7c] sm:$0xf]
      %v3106 = vld [vmem:[#allocation3 + $0x80] sm:$0xf]
      %v3107 = vld [vmem:[#allocation3 + $0x84] sm:$0xf]
      %v3108 = vld [vmem:[#allocation3 + $0x88] sm:$0xf]
      %v3109 = vld [vmem:[#allocation3 + $0x8c] sm:$0xf]
      %v3110 = vld [vmem:[#allocation3 + $0x90] sm:$0xf]
      %v3119 = vunpack.c.l.b16 %v3066
      %v3120 = vunpack.c.h.b16 %v3066
      %v3121 = vunpack.c.l.b16 %v3067
      %v3122 = vunpack.c.l.b16 %v3068
      %v3123 = vunpack.c.h.b16 %v3068
      %v3124 = vunpack.c.l.b16 %v3069
      %v3125 = vunpack.c.l.b16 %v3070
      %v3126 = vunpack.c.h.b16 %v3070
      %v3127 = vunpack.c.l.b16 %v3071
      %v3128 = vunpack.c.l.b16 %v3072
      %v3129 = vunpack.c.h.b16 %v3072
      %v3130 = vunpack.c.l.b16 %v3073
      %v3131 = vpack.c.b16 %v3122, %v3119
      %v3132 = vpack.c.b16 %v3123, %v3120
      %v3133 = vpack.c.b16 %v3124, %v3121
      %v3134 = vpack.c.b16 %v3128, %v3125
      %v3135 = vpack.c.b16 %v3129, %v3126
      %v3136 = vpack.c.b16 %v3130, %v3127
      %v3178 = vunpack.c.l.b16 %v3074
      %v3179 = vunpack.c.l.b16 %v3075
      %v3180 = vunpack.c.l.b16 %v3076
      %v3181 = vunpack.c.l.b16 %v3077
      %v3182 = vunpack.c.l.b16 %v3078
      %v3183 = vunpack.c.l.b16 %v3079
      %v3184 = vunpack.c.l.b16 %v3080
      %v3185 = vunpack.c.l.b16 %v3081
      %v3186 = vunpack.c.l.b16 %v3082
      %v3187 = vunpack.c.l.b16 %v3083
      %v3188 = vunpack.c.l.b16 %v3084
      %v3189 = vunpack.c.l.b16 %v3085
      %v3190 = vunpack.c.l.b16 %v3086
      %v3191 = vunpack.c.l.b16 %v3087
      %v3192 = vunpack.c.l.b16 %v3088
      %v3193 = vunpack.c.l.b16 %v3089
      %v3194 = vunpack.c.l.b16 %v3090
      %v3195 = vunpack.c.l.b16 %v3091
      %v3196 = vunpack.c.l.b16 %v3092
      %v3197 = vunpack.c.l.b16 %v3093
      %v3198 = vunpack.c.l.b16 %v3094
      %v3199 = vunpack.c.l.b16 %v3095
      %v3200 = vunpack.c.l.b16 %v3096
      %v3201 = vunpack.c.l.b16 %v3097
      %v3202 = vunpack.c.l.b16 %v3098
      %v3203 = vunpack.c.l.b16 %v3099
      %v3204 = vunpack.c.l.b16 %v3100
      %v3205 = vunpack.c.l.b16 %v3101
      %v3206 = vunpack.c.l.b16 %v3102
      %v3207 = vunpack.c.l.b16 %v3103
      %v3208 = vunpack.c.l.b16 %v3104
      %v3209 = vunpack.c.l.b16 %v3105
      %v3210 = vunpack.c.l.b16 %v3106
      %v3211 = vunpack.c.l.b16 %v3107
      %v3212 = vunpack.c.l.b16 %v3108
      %v3213 = vunpack.c.l.b16 %v3109
      %v3214 = vunpack.c.l.b16 %v3110
      %v3215 = vpack.c.b16 %v3179, %v3178
      %v3216 = vpack.c.b16 %v3181, %v3180
      %v3217 = vpack.c.b16 %v3183, %v3182
      %v3218 = vpack.c.b16 %v3185, %v3184
      %v3219 = vpack.c.b16 %v3187, %v3186
      %v3220 = vpack.c.b16 %v3189, %v3188
      %v3221 = vpack.c.b16 %v3191, %v3190
      %v3222 = vpack.c.b16 %v3193, %v3192
      %v3223 = vpack.c.b16 %v3195, %v3194
      %v3224 = vpack.c.b16 %v3197, %v3196
      %v3225 = vpack.c.b16 %v3199, %v3198
      %v3226 = vpack.c.b16 %v3201, %v3200
      %v3227 = vpack.c.b16 %v3203, %v3202
      %v3228 = vpack.c.b16 %v3205, %v3204
      %v3229 = vpack.c.b16 %v3207, %v3206
      %v3230 = vpack.c.b16 %v3209, %v3208
      %v3231 = vpack.c.b16 %v3211, %v3210
      %v3232 = vpack.c.b16 %v3213, %v3212
      %v3233 = vpack.c.b16 %v3214, %v3214
      %v3253 = vsel %vm1127, %v3133, 0
      %v3256 = vsel %vm1127, %v3136, 0
      %v3259 = vsel %vm1134, %v3233, 0
      %3261 = vmatprep.subr.bf16.mxu0 0
      %3262 = vmatpush1.bf16.msra.mxu0 %v3215
      %3263 = vmatprep.subr.bf16.mxu0 0
      %3264 = vmatpush1.bf16.msra.mxu0 %v3216
      %3265 = vmatprep.subr.bf16.mxu0 0
      %3266 = vmatpush1.bf16.msra.mxu0 %v3217
      %3267 = vmatprep.subr.bf16.mxu0 0
      %3268 = vmatpush1.bf16.msra.mxu0 %v3218
      %3269 = vmatprep.subr.bf16.mxu0 0
      %3270 = vmatpush1.bf16.msra.mxu0 %v3219
      %3271 = vmatprep.subr.bf16.mxu0 0
      %3272 = vmatpush1.bf16.msra.mxu0 %v3220
      %3273 = vmatprep.subr.bf16.mxu0 0
      %3274 = vmatpush1.bf16.msra.mxu0 %v3221
      %3275 = vmatprep.subr.bf16.mxu0 0
      %3276 = vmatpush1.bf16.msra.mxu0 %v3222
      %3277 = vmatprep.subr.bf16.mxu0 0
      %3278 = vmatpush1.bf16.msra.mxu0 %v3223
      %3279 = vmatprep.subr.bf16.mxu0 0
      %3280 = vmatpush1.bf16.msra.mxu0 %v3224
      %3281 = vmatprep.subr.bf16.mxu0 0
      %3282 = vmatpush1.bf16.msra.mxu0 %v3225
      %3283 = vmatprep.subr.bf16.mxu0 0
      %3284 = vmatpush1.bf16.msra.mxu0 %v3226
      %3285 = vmatprep.subr.bf16.mxu0 0
      %3286 = vmatpush1.bf16.msra.mxu0 %v3227
      %3287 = vmatprep.subr.bf16.mxu0 0
      %3288 = vmatpush1.bf16.msra.mxu0 %v3228
      %3289 = vmatprep.subr.bf16.mxu0 0
      %3290 = vmatpush1.bf16.msra.mxu0 %v3229
      %3291 = vmatprep.subr.bf16.mxu0 0
      %3292 = vmatpush1.bf16.msra.mxu0 %v3230
      %3293 = vmatprep.mubr.bf16.mxu0 %v3132
      %3294 = vmatmul.mubr.bf16.gmra.mrb[0].mxu0 %v3131
      %v3295 = vpop.f32.mrb[0].mxu0
      %v3296 = vadd.f32 0.0, %v3295
      %v3297 = vpop.f32.mrb[0].mxu0
      %v3298 = vpop.f32.mrb[0].mxu0
      %v3299 = vadd.f32 0.0, %v3298
      %v3300 = vpop.f32.mrb[0].mxu0
      %3301 = vmatprep.mubr.bf16.mxu0 %v3135
      %3302 = vmatmul.mubr.bf16.gmra.mrb[0].mxu0 %v3134
      %v3303 = vpop.f32.mrb[0].mxu0
      %v3304 = vadd.f32 0.0, %v3303
      %v3305 = vpop.f32.mrb[0].mxu0
      %v3306 = vpop.f32.mrb[0].mxu0
      %v3307 = vadd.f32 0.0, %v3306
      %v3308 = vpop.f32.mrb[0].mxu0
      %3309 = vdwg.mxu0
      %3310 = vmatprep.subr.bf16.mxu0 0
      %3311 = vmatpush1.bf16.msra.mxu0 %v3231
      %3312 = vmatprep.subr.bf16.mxu0 0
      %3313 = vmatpush1.bf16.msra.mxu0 %v3232
      %3314 = vmatprep.subr.bf16.mxu0 0
      %3315 = vmatpush1.bf16.msra.mxu0 %v3259
      %3316 = vmatprep.subr.bf16.mxu0 0
      %3317 = vmatpush1.bf16.msra.mxu0 0
      %3318 = vmatprep.subr.bf16.mxu0 0
      %3319 = vmatpush1.bf16.msra.mxu0 0
      %3320 = vmatprep.subr.bf16.mxu0 0
      %3321 = vmatpush1.bf16.msra.mxu0 0
      %3322 = vmatprep.subr.bf16.mxu0 0
      %3323 = vmatpush1.bf16.msra.mxu0 0
      %3324 = vmatprep.subr.bf16.mxu0 0
      %3325 = vmatpush1.bf16.msra.mxu0 0
      %3326 = vmatprep.subr.bf16.mxu0 0
      %3327 = vmatpush1.bf16.msra.mxu0 0
      %3328 = vmatprep.subr.bf16.mxu0 0
      %3329 = vmatpush1.bf16.msra.mxu0 0
      %3330 = vmatprep.subr.bf16.mxu0 0
      %3331 = vmatpush1.bf16.msra.mxu0 0
      %3332 = vmatprep.subr.bf16.mxu0 0
      %3333 = vmatpush1.bf16.msra.mxu0 0
      %3334 = vmatprep.subr.bf16.mxu0 0
      %3335 = vmatpush1.bf16.msra.mxu0 0
      %3336 = vmatprep.subr.bf16.mxu0 0
      %3337 = vmatpush1.bf16.msra.mxu0 0
      %3338 = vmatprep.subr.bf16.mxu0 0
      %3339 = vmatpush1.bf16.msra.mxu0 0
      %3340 = vmatprep.subr.bf16.mxu0 0
      %3341 = vmatpush1.bf16.msra.mxu0 0
      %3342 = vmatprep.mubr.bf16.mxu0 0
      %3343 = vmatmul.mubr.bf16.gmra.mrb[0].mxu0 %v3253
      %v3344 = vpop.f32.mrb[0].mxu0
      %v3345 = vadd.f32 %v3296, %v3344
      %v3346 = vpop.f32.mrb[0].mxu0
      %v3347 = vpop.f32.mrb[0].mxu0
      %v3348 = vadd.f32 %v3299, %v3347
      %v3349 = vpop.f32.mrb[0].mxu0
      %3350 = vmatprep.mubr.bf16.mxu0 0
      %3351 = vmatmul.mubr.bf16.gmra.mrb[0].mxu0 %v3256
      %v3352 = vpop.f32.mrb[0].mxu0
      %v3353 = vadd.f32 %v3304, %v3352
      %v3354 = vpop.f32.mrb[0].mxu0
      %v3355 = vpop.f32.mrb[0].mxu0
      %v3356 = vadd.f32 %v3307, %v3355
      %v3357 = vpop.f32.mrb[0].mxu0
      %3358 = vdwg.mxu0
      %v3359 = vmax.f32 %v3345, 0.0
      %v3360 = vmax.f32 %v3348, 0.0
      %v3361 = vmax.f32 %v3353, 0.0
      %v3362 = vmax.f32 %v3356, 0.0
      %3363 = vrot.lane.b32.xlu0 %v3359, 127
      %v3364 = vpop.permute.xlu0 %3363
      %3365 = vrot.lane.b32.xlu0 %v3360, 127
      %v3366 = vpop.permute.xlu0 %3365
      %3367 = vrot.lane.b32.xlu0 %v3361, 127
      %v3368 = vpop.permute.xlu0 %3367
      %3369 = vrot.lane.b32.xlu0 %v3362, 127
      %v3370 = vpop.permute.xlu0 %3369
      %3371 = vrot.lane.b32.xlu0 %v3359, 1
      %v3372 = vpop.permute.xlu0 %3371
      %3373 = vrot.lane.b32.xlu0 %v3360, 1
      %v3374 = vpop.permute.xlu0 %3373
      %3375 = vrot.lane.b32.xlu0 %v3361, 1
      %v3376 = vpop.permute.xlu0 %3375
      %3377 = vrot.lane.b32.xlu0 %v3362, 1
      %v3378 = vpop.permute.xlu0 %3377
      %3379 = vrot.lane.b32.xlu0 %v3372, 8
      %v3380 = vpop.permute.xlu0 %3379
      %3381 = vrot.lane.b32.xlu0 %v3374, 8
      %v3382 = vpop.permute.xlu0 %3381
      %3383 = vrot.lane.b32.xlu0 %v3376, 8
      %v3384 = vpop.permute.xlu0 %3383
      %3385 = vrot.lane.b32.xlu0 %v3378, 8
      %v3386 = vpop.permute.xlu0 %3385
      %v3387 = vld [vmem:[%s3] sm:$0x1]
      %v3388 = vlaneseq
      %v3389 = vshrl.u32 %v3388, 7
      %v3390 = vsub.s32 0, %v3389
      %v3391 = vrot.slane %v3387, %v3390
      %v3392 = vmul.f32 %v3380, %v3391
      %v3393 = vmul.f32 %v3382, %v3391
      %v3394 = vmul.f32 %v3384, %v3391
      %v3395 = vmul.f32 %v3386, %v3391
      %v3396 = vpack.c.bf16 %v3393, %v3392
      %v3397 = vpack.c.bf16 %v3395, %v3394
      %v3400 = vunpack.c.l.b16 %v3396
      %v3401 = vunpack.c.h.b16 %v3396
      %v3402 = vunpack.c.l.b16 %v3397
      %v3403 = vunpack.c.h.b16 %v3397
      %v3404 = vpack.c.b16 %v3400, %v3400
      %v3405 = vpack.c.b16 %v3401, %v3401
      %v3406 = vpack.c.b16 %v3402, %v3402
      %v3407 = vpack.c.b16 %v3403, %v3403
      %3412 = vst [vmem:[#allocation3] sm:$0xf] %v3404
      %3413 = vst [vmem:[#allocation3 + $0x4] sm:$0xf] %v3405
      %3414 = vst [vmem:[#allocation3 + $0x8] sm:$0xf] %v3406
      %3415 = vst [vmem:[#allocation3 + $0xc] sm:$0xf] %v3407
      %3416 = vrot.lane.b32.xlu0 %v3359, 8
      %v3417 = vpop.permute.xlu0 %3416
      %3418 = vrot.lane.b32.xlu0 %v3360, 8
      %v3419 = vpop.permute.xlu0 %3418
      %3420 = vrot.lane.b32.xlu0 %v3361, 8
      %v3421 = vpop.permute.xlu0 %3420
      %3422 = vrot.lane.b32.xlu0 %v3362, 8
      %v3423 = vpop.permute.xlu0 %3422
      %v3424 = vld [vmem:[%s3 + $0x1] sm:$0x1]
      %v3425 = vlaneseq
      %v3426 = vshrl.u32 %v3425, 7
      %v3427 = vsub.s32 0, %v3426
      %v3428 = vrot.slane %v3424, %v3427
      %v3429 = vmul.f32 %v3417, %v3428
      %v3430 = vmul.f32 %v3419, %v3428
      %v3431 = vmul.f32 %v3421, %v3428
      %v3432 = vmul.f32 %v3423, %v3428
      %v3433 = vpack.c.bf16 %v3430, %v3429
      %v3434 = vpack.c.bf16 %v3432, %v3431
      %v3437 = vunpack.c.l.b16 %v3433
      %v3438 = vunpack.c.h.b16 %v3433
      %v3439 = vunpack.c.l.b16 %v3434
      %v3440 = vunpack.c.h.b16 %v3434
      %v3441 = vpack.c.b16 %v3437, %v3437
      %v3442 = vpack.c.b16 %v3438, %v3438
      %v3443 = vpack.c.b16 %v3439, %v3439
      %v3444 = vpack.c.b16 %v3440, %v3440
      %3449 = vst [vmem:[#allocation3 + $0x10] sm:$0xf] %v3441
      %3450 = vst [vmem:[#allocation3 + $0x14] sm:$0xf] %v3442
      %3451 = vst [vmem:[#allocation3 + $0x18] sm:$0xf] %v3443
      %3452 = vst [vmem:[#allocation3 + $0x1c] sm:$0xf] %v3444
      %3453 = vrot.lane.b32.xlu0 %v3364, 8
      %v3454 = vpop.permute.xlu0 %3453
      %3455 = vrot.lane.b32.xlu0 %v3366, 8
      %v3456 = vpop.permute.xlu0 %3455
      %3457 = vrot.lane.b32.xlu0 %v3368, 8
      %v3458 = vpop.permute.xlu0 %3457
      %3459 = vrot.lane.b32.xlu0 %v3370, 8
      %v3460 = vpop.permute.xlu0 %3459
      %v3461 = vld [vmem:[%s3 + $0x2] sm:$0x1]
      %v3462 = vlaneseq
      %v3463 = vshrl.u32 %v3462, 7
      %v3464 = vsub.s32 0, %v3463
      %v3465 = vrot.slane %v3461, %v3464
      %v3466 = vmul.f32 %v3454, %v3465
      %v3467 = vmul.f32 %v3456, %v3465
      %v3468 = vmul.f32 %v3458, %v3465
      %v3469 = vmul.f32 %v3460, %v3465
      %v3470 = vpack.c.bf16 %v3467, %v3466
      %v3471 = vpack.c.bf16 %v3469, %v3468
      %v3474 = vunpack.c.l.b16 %v3470
      %v3475 = vunpack.c.h.b16 %v3470
      %v3476 = vunpack.c.l.b16 %v3471
      %v3477 = vunpack.c.h.b16 %v3471
      %v3478 = vpack.c.b16 %v3474, %v3474
      %v3479 = vpack.c.b16 %v3475, %v3475
      %v3480 = vpack.c.b16 %v3476, %v3476
      %v3481 = vpack.c.b16 %v3477, %v3477
      %3486 = vst [vmem:[#allocation3 + $0x20] sm:$0xf] %v3478
      %3487 = vst [vmem:[#allocation3 + $0x24] sm:$0xf] %v3479
      %3488 = vst [vmem:[#allocation3 + $0x28] sm:$0xf] %v3480
      %3489 = vst [vmem:[#allocation3 + $0x2c] sm:$0xf] %v3481
      %v3490 = vld [vmem:[%s3 + $0x3] sm:$0x1]
      %v3491 = vlaneseq
      %v3492 = vshrl.u32 %v3491, 7
      %v3493 = vsub.s32 0, %v3492
      %v3494 = vrot.slane %v3490, %v3493
      %v3495 = vmul.f32 %v3372, %v3494
      %v3496 = vmul.f32 %v3374, %v3494
      %v3497 = vmul.f32 %v3376, %v3494
      %v3498 = vmul.f32 %v3378, %v3494
      %v3499 = vpack.c.bf16 %v3496, %v3495
      %v3500 = vpack.c.bf16 %v3498, %v3497
      %v3503 = vunpack.c.l.b16 %v3499
      %v3504 = vunpack.c.h.b16 %v3499
      %v3505 = vunpack.c.l.b16 %v3500
      %v3506 = vunpack.c.h.b16 %v3500
      %v3507 = vpack.c.b16 %v3503, %v3503
      %v3508 = vpack.c.b16 %v3504, %v3504
      %v3509 = vpack.c.b16 %v3505, %v3505
      %v3510 = vpack.c.b16 %v3506, %v3506
      %3515 = vst [vmem:[#allocation3 + $0x30] sm:$0xf] %v3507
      %3516 = vst [vmem:[#allocation3 + $0x34] sm:$0xf] %v3508
      %3517 = vst [vmem:[#allocation3 + $0x38] sm:$0xf] %v3509
      %3518 = vst [vmem:[#allocation3 + $0x3c] sm:$0xf] %v3510
      %v3519 = vpack.c.bf16 %v3360, %v3359
      %v3520 = vpack.c.bf16 %v3362, %v3361
      %v3523 = vunpack.c.l.b16 %v3519
      %v3524 = vunpack.c.h.b16 %v3519
      %v3525 = vunpack.c.l.b16 %v3520
      %v3526 = vunpack.c.h.b16 %v3520
      %v3527 = vpack.c.b16 %v3523, %v3523
      %v3528 = vpack.c.b16 %v3524, %v3524
      %v3529 = vpack.c.b16 %v3525, %v3525
      %v3530 = vpack.c.b16 %v3526, %v3526
      %3535 = vst [vmem:[#allocation3 + $0x40] sm:$0xf] %v3527
      %3536 = vst [vmem:[#allocation3 + $0x44] sm:$0xf] %v3528
      %3537 = vst [vmem:[#allocation3 + $0x48] sm:$0xf] %v3529
      %3538 = vst [vmem:[#allocation3 + $0x4c] sm:$0xf] %v3530
      %v3539 = vld [vmem:[%s3 + $0x5] sm:$0x1]
      %v3540 = vlaneseq
      %v3541 = vshrl.u32 %v3540, 7
      %v3542 = vsub.s32 0, %v3541
      %v3543 = vrot.slane %v3539, %v3542
      %v3544 = vmul.f32 %v3364, %v3543
      %v3545 = vmul.f32 %v3366, %v3543
      %v3546 = vmul.f32 %v3368, %v3543
      %v3547 = vmul.f32 %v3370, %v3543
      %v3548 = vpack.c.bf16 %v3545, %v3544
      %v3549 = vpack.c.bf16 %v3547, %v3546
      %v3552 = vunpack.c.l.b16 %v3548
      %v3553 = vunpack.c.h.b16 %v3548
      %v3554 = vunpack.c.l.b16 %v3549
      %v3555 = vunpack.c.h.b16 %v3549
      %v3556 = vpack.c.b16 %v3552, %v3552
      %v3557 = vpack.c.b16 %v3553, %v3553
      %v3558 = vpack.c.b16 %v3554, %v3554
      %v3559 = vpack.c.b16 %v3555, %v3555
      %3564 = vst [vmem:[#allocation3 + $0x50] sm:$0xf] %v3556
      %3565 = vst [vmem:[#allocation3 + $0x54] sm:$0xf] %v3557
      %3566 = vst [vmem:[#allocation3 + $0x58] sm:$0xf] %v3558
      %3567 = vst [vmem:[#allocation3 + $0x5c] sm:$0xf] %v3559
      %3568 = vrot.lane.b32.xlu0 %v3372, 120
      %v3569 = vpop.permute.xlu0 %3568
      %3570 = vrot.lane.b32.xlu0 %v3374, 120
      %v3571 = vpop.permute.xlu0 %3570
      %3572 = vrot.lane.b32.xlu0 %v3376, 120
      %v3573 = vpop.permute.xlu0 %3572
      %3574 = vrot.lane.b32.xlu0 %v3378, 120
      %v3575 = vpop.permute.xlu0 %3574
      %v3576 = vld [vmem:[%s3 + $0x6] sm:$0x1]
      %v3577 = vlaneseq
      %v3578 = vshrl.u32 %v3577, 7
      %v3579 = vsub.s32 0, %v3578
      %v3580 = vrot.slane %v3576, %v3579
      %v3581 = vmul.f32 %v3569, %v3580
      %v3582 = vmul.f32 %v3571, %v3580
      %v3583 = vmul.f32 %v3573, %v3580
      %v3584 = vmul.f32 %v3575, %v3580
      %v3585 = vpack.c.bf16 %v3582, %v3581
      %v3586 = vpack.c.bf16 %v3584, %v3583
      %v3589 = vunpack.c.l.b16 %v3585
      %v3590 = vunpack.c.h.b16 %v3585
      %v3591 = vunpack.c.l.b16 %v3586
      %v3592 = vunpack.c.h.b16 %v3586
      %v3593 = vpack.c.b16 %v3589, %v3589
      %v3594 = vpack.c.b16 %v3590, %v3590
      %v3595 = vpack.c.b16 %v3591, %v3591
      %v3596 = vpack.c.b16 %v3592, %v3592
      %3601 = vst [vmem:[#allocation3 + $0x60] sm:$0xf] %v3593
      %3602 = vst [vmem:[#allocation3 + $0x64] sm:$0xf] %v3594
      %3603 = vst [vmem:[#allocation3 + $0x68] sm:$0xf] %v3595
      %3604 = vst [vmem:[#allocation3 + $0x6c] sm:$0xf] %v3596
      %3605 = vrot.lane.b32.xlu0 %v3359, 120
      %v3606 = vpop.permute.xlu0 %3605
      %3607 = vrot.lane.b32.xlu0 %v3360, 120
      %v3608 = vpop.permute.xlu0 %3607
      %3609 = vrot.lane.b32.xlu0 %v3361, 120
      %v3610 = vpop.permute.xlu0 %3609
      %3611 = vrot.lane.b32.xlu0 %v3362, 120
      %v3612 = vpop.permute.xlu0 %3611
      %v3613 = vld [vmem:[%s3 + $0x7] sm:$0x1]
      %v3614 = vlaneseq
      %v3615 = vshrl.u32 %v3614, 7
      %v3616 = vsub.s32 0, %v3615
      %v3617 = vrot.slane %v3613, %v3616
      %v3618 = vmul.f32 %v3606, %v3617
      %v3619 = vmul.f32 %v3608, %v3617
      %v3620 = vmul.f32 %v3610, %v3617
      %v3621 = vmul.f32 %v3612, %v3617
      %v3622 = vpack.c.bf16 %v3619, %v3618
      %v3623 = vpack.c.bf16 %v3621, %v3620
      %v3626 = vunpack.c.l.b16 %v3622
      %v3627 = vunpack.c.h.b16 %v3622
      %v3628 = vunpack.c.l.b16 %v3623
      %v3629 = vunpack.c.h.b16 %v3623
      %v3630 = vpack.c.b16 %v3626, %v3626
      %v3631 = vpack.c.b16 %v3627, %v3627
      %v3632 = vpack.c.b16 %v3628, %v3628
      %v3633 = vpack.c.b16 %v3629, %v3629
      %3638 = vst [vmem:[#allocation3 + $0x70] sm:$0xf] %v3630
      %3639 = vst [vmem:[#allocation3 + $0x74] sm:$0xf] %v3631
      %3640 = vst [vmem:[#allocation3 + $0x78] sm:$0xf] %v3632
      %3641 = vst [vmem:[#allocation3 + $0x7c] sm:$0xf] %v3633
      %3642 = vrot.lane.b32.xlu0 %v3364, 120
      %v3643 = vpop.permute.xlu0 %3642
      %3644 = vrot.lane.b32.xlu0 %v3366, 120
      %v3645 = vpop.permute.xlu0 %3644
      %3646 = vrot.lane.b32.xlu0 %v3368, 120
      %v3647 = vpop.permute.xlu0 %3646
      %3648 = vrot.lane.b32.xlu0 %v3370, 120
      %v3649 = vpop.permute.xlu0 %3648
      %v3650 = vld [vmem:[%s3 + $0x8] sm:$0x1]
      %v3651 = vlaneseq
      %v3652 = vshrl.u32 %v3651, 7
      %v3653 = vsub.s32 0, %v3652
      %v3654 = vrot.slane %v3650, %v3653
      %v3655 = vmul.f32 %v3643, %v3654
      %v3656 = vmul.f32 %v3645, %v3654
      %v3657 = vmul.f32 %v3647, %v3654
      %v3658 = vmul.f32 %v3649, %v3654
      %v3659 = vpack.c.bf16 %v3656, %v3655
      %v3660 = vpack.c.bf16 %v3658, %v3657
      %v3663 = vunpack.c.l.b16 %v3659
      %v3664 = vunpack.c.h.b16 %v3659
      %v3665 = vunpack.c.l.b16 %v3660
      %v3666 = vunpack.c.h.b16 %v3660
      %v3667 = vpack.c.b16 %v3663, %v3663
      %v3668 = vpack.c.b16 %v3664, %v3664
      %v3669 = vpack.c.b16 %v3665, %v3665
      %v3670 = vpack.c.b16 %v3666, %v3666
      %3675 = vst [vmem:[#allocation3 + $0x80] sm:$0xf] %v3667
      %3676 = vst [vmem:[#allocation3 + $0x84] sm:$0xf] %v3668
      %3677 = vst [vmem:[#allocation3 + $0x88] sm:$0xf] %v3669
      %3678 = vst [vmem:[#allocation3 + $0x8c] sm:$0xf] %v3670
      %s3679 = scalar_lea.vmem %s1, 192
      %v3680 = vld [vmem:[%s3679] sm:$0xff]
      %v3681 = vld [vmem:[%s3679 + $0x8] sm:$0xf]
      %v3682 = vld [vmem:[%s3679 + $0xc] sm:$0xff]
      %v3683 = vld [vmem:[%s3679 + $0x14] sm:$0xf]
      %v3684 = vld [vmem:[%s3679 + $0x18] sm:$0xff]
      %v3685 = vld [vmem:[%s3679 + $0x20] sm:$0xf]
      %v3686 = vld [vmem:[%s3679 + $0x24] sm:$0xff]
      %v3687 = vld [vmem:[%s3679 + $0x2c] sm:$0xf]
      %v3688 = vld [vmem:[#allocation3] sm:$0xf]
      %v3689 = vld [vmem:[#allocation3 + $0x4] sm:$0xf]
      %v3690 = vld [vmem:[#allocation3 + $0x8] sm:$0xf]
      %v3691 = vld [vmem:[#allocation3 + $0xc] sm:$0xf]
      %v3692 = vld [vmem:[#allocation3 + $0x10] sm:$0xf]
      %v3693 = vld [vmem:[#allocation3 + $0x14] sm:$0xf]
      %v3694 = vld [vmem:[#allocation3 + $0x18] sm:$0xf]
      %v3695 = vld [vmem:[#allocation3 + $0x1c] sm:$0xf]
      %v3696 = vld [vmem:[#allocation3 + $0x20] sm:$0xf]
      %v3697 = vld [vmem:[#allocation3 + $0x24] sm:$0xf]
      %v3698 = vld [vmem:[#allocation3 + $0x28] sm:$0xf]
      %v3699 = vld [vmem:[#allocation3 + $0x2c] sm:$0xf]
      %v3700 = vld [vmem:[#allocation3 + $0x30] sm:$0xf]
      %v3701 = vld [vmem:[#allocation3 + $0x34] sm:$0xf]
      %v3702 = vld [vmem:[#allocation3 + $0x38] sm:$0xf]
      %v3703 = vld [vmem:[#allocation3 + $0x3c] sm:$0xf]
      %v3704 = vld [vmem:[#allocation3 + $0x40] sm:$0xf]
      %v3705 = vld [vmem:[#allocation3 + $0x44] sm:$0xf]
      %v3706 = vld [vmem:[#allocation3 + $0x48] sm:$0xf]
      %v3707 = vld [vmem:[#allocation3 + $0x4c] sm:$0xf]
      %v3708 = vld [vmem:[#allocation3 + $0x50] sm:$0xf]
      %v3709 = vld [vmem:[#allocation3 + $0x54] sm:$0xf]
      %v3710 = vld [vmem:[#allocation3 + $0x58] sm:$0xf]
      %v3711 = vld [vmem:[#allocation3 + $0x5c] sm:$0xf]
      %v3712 = vld [vmem:[#allocation3 + $0x60] sm:$0xf]
      %v3713 = vld [vmem:[#allocation3 + $0x64] sm:$0xf]
      %v3714 = vld [vmem:[#allocation3 + $0x68] sm:$0xf]
      %v3715 = vld [vmem:[#allocation3 + $0x6c] sm:$0xf]
      %v3716 = vld [vmem:[#allocation3 + $0x70] sm:$0xf]
      %v3717 = vld [vmem:[#allocation3 + $0x74] sm:$0xf]
      %v3718 = vld [vmem:[#allocation3 + $0x78] sm:$0xf]
      %v3719 = vld [vmem:[#allocation3 + $0x7c] sm:$0xf]
      %v3720 = vld [vmem:[#allocation3 + $0x80] sm:$0xf]
      %v3721 = vld [vmem:[#allocation3 + $0x84] sm:$0xf]
      %v3722 = vld [vmem:[#allocation3 + $0x88] sm:$0xf]
      %v3723 = vld [vmem:[#allocation3 + $0x8c] sm:$0xf]
      %v3724 = vld [vmem:[#allocation3 + $0x90] sm:$0xf]
      %v3733 = vunpack.c.l.b16 %v3680
      %v3734 = vunpack.c.h.b16 %v3680
      %v3735 = vunpack.c.l.b16 %v3681
      %v3736 = vunpack.c.l.b16 %v3682
      %v3737 = vunpack.c.h.b16 %v3682
      %v3738 = vunpack.c.l.b16 %v3683
      %v3739 = vunpack.c.l.b16 %v3684
      %v3740 = vunpack.c.h.b16 %v3684
      %v3741 = vunpack.c.l.b16 %v3685
      %v3742 = vunpack.c.l.b16 %v3686
      %v3743 = vunpack.c.h.b16 %v3686
      %v3744 = vunpack.c.l.b16 %v3687
      %v3745 = vpack.c.b16 %v3736, %v3733
      %v3746 = vpack.c.b16 %v3737, %v3734
      %v3747 = vpack.c.b16 %v3738, %v3735
      %v3748 = vpack.c.b16 %v3742, %v3739
      %v3749 = vpack.c.b16 %v3743, %v3740
      %v3750 = vpack.c.b16 %v3744, %v3741
      %v3792 = vunpack.c.l.b16 %v3688
      %v3793 = vunpack.c.l.b16 %v3689
      %v3794 = vunpack.c.l.b16 %v3690
      %v3795 = vunpack.c.l.b16 %v3691
      %v3796 = vunpack.c.l.b16 %v3692
      %v3797 = vunpack.c.l.b16 %v3693
      %v3798 = vunpack.c.l.b16 %v3694
      %v3799 = vunpack.c.l.b16 %v3695
      %v3800 = vunpack.c.l.b16 %v3696
      %v3801 = vunpack.c.l.b16 %v3697
      %v3802 = vunpack.c.l.b16 %v3698
      %v3803 = vunpack.c.l.b16 %v3699
      %v3804 = vunpack.c.l.b16 %v3700
      %v3805 = vunpack.c.l.b16 %v3701
      %v3806 = vunpack.c.l.b16 %v3702
      %v3807 = vunpack.c.l.b16 %v3703
      %v3808 = vunpack.c.l.b16 %v3704
      %v3809 = vunpack.c.l.b16 %v3705
      %v3810 = vunpack.c.l.b16 %v3706
      %v3811 = vunpack.c.l.b16 %v3707
      %v3812 = vunpack.c.l.b16 %v3708
      %v3813 = vunpack.c.l.b16 %v3709
      %v3814 = vunpack.c.l.b16 %v3710
      %v3815 = vunpack.c.l.b16 %v3711
      %v3816 = vunpack.c.l.b16 %v3712
      %v3817 = vunpack.c.l.b16 %v3713
      %v3818 = vunpack.c.l.b16 %v3714
      %v3819 = vunpack.c.l.b16 %v3715
      %v3820 = vunpack.c.l.b16 %v3716
      %v3821 = vunpack.c.l.b16 %v3717
      %v3822 = vunpack.c.l.b16 %v3718
      %v3823 = vunpack.c.l.b16 %v3719
      %v3824 = vunpack.c.l.b16 %v3720
      %v3825 = vunpack.c.l.b16 %v3721
      %v3826 = vunpack.c.l.b16 %v3722
      %v3827 = vunpack.c.l.b16 %v3723
      %v3828 = vunpack.c.l.b16 %v3724
      %v3829 = vpack.c.b16 %v3793, %v3792
      %v3830 = vpack.c.b16 %v3795, %v3794
      %v3831 = vpack.c.b16 %v3797, %v3796
      %v3832 = vpack.c.b16 %v3799, %v3798
      %v3833 = vpack.c.b16 %v3801, %v3800
      %v3834 = vpack.c.b16 %v3803, %v3802
      %v3835 = vpack.c.b16 %v3805, %v3804
      %v3836 = vpack.c.b16 %v3807, %v3806
      %v3837 = vpack.c.b16 %v3809, %v3808
      %v3838 = vpack.c.b16 %v3811, %v3810
      %v3839 = vpack.c.b16 %v3813, %v3812
      %v3840 = vpack.c.b16 %v3815, %v3814
      %v3841 = vpack.c.b16 %v3817, %v3816
      %v3842 = vpack.c.b16 %v3819, %v3818
      %v3843 = vpack.c.b16 %v3821, %v3820
      %v3844 = vpack.c.b16 %v3823, %v3822
      %v3845 = vpack.c.b16 %v3825, %v3824
      %v3846 = vpack.c.b16 %v3827, %v3826
      %v3847 = vpack.c.b16 %v3828, %v3828
      %v3867 = vsel %vm1127, %v3747, 0
      %v3870 = vsel %vm1127, %v3750, 0
      %v3873 = vsel %vm1134, %v3847, 0
      %3875 = vmatprep.subr.bf16.mxu0 0
      %3876 = vmatpush1.bf16.msra.mxu0 %v3829
      %3877 = vmatprep.subr.bf16.mxu0 0
      %3878 = vmatpush1.bf16.msra.mxu0 %v3830
      %3879 = vmatprep.subr.bf16.mxu0 0
      %3880 = vmatpush1.bf16.msra.mxu0 %v3831
      %3881 = vmatprep.subr.bf16.mxu0 0
      %3882 = vmatpush1.bf16.msra.mxu0 %v3832
      %3883 = vmatprep.subr.bf16.mxu0 0
      %3884 = vmatpush1.bf16.msra.mxu0 %v3833
      %3885 = vmatprep.subr.bf16.mxu0 0
      %3886 = vmatpush1.bf16.msra.mxu0 %v3834
      %3887 = vmatprep.subr.bf16.mxu0 0
      %3888 = vmatpush1.bf16.msra.mxu0 %v3835
      %3889 = vmatprep.subr.bf16.mxu0 0
      %3890 = vmatpush1.bf16.msra.mxu0 %v3836
      %3891 = vmatprep.subr.bf16.mxu0 0
      %3892 = vmatpush1.bf16.msra.mxu0 %v3837
      %3893 = vmatprep.subr.bf16.mxu0 0
      %3894 = vmatpush1.bf16.msra.mxu0 %v3838
      %3895 = vmatprep.subr.bf16.mxu0 0
      %3896 = vmatpush1.bf16.msra.mxu0 %v3839
      %3897 = vmatprep.subr.bf16.mxu0 0
      %3898 = vmatpush1.bf16.msra.mxu0 %v3840
      %3899 = vmatprep.subr.bf16.mxu0 0
      %3900 = vmatpush1.bf16.msra.mxu0 %v3841
      %3901 = vmatprep.subr.bf16.mxu0 0
      %3902 = vmatpush1.bf16.msra.mxu0 %v3842
      %3903 = vmatprep.subr.bf16.mxu0 0
      %3904 = vmatpush1.bf16.msra.mxu0 %v3843
      %3905 = vmatprep.subr.bf16.mxu0 0
      %3906 = vmatpush1.bf16.msra.mxu0 %v3844
      %3907 = vmatprep.mubr.bf16.mxu0 %v3746
      %3908 = vmatmul.mubr.bf16.gmra.mrb[0].mxu0 %v3745
      %v3909 = vpop.f32.mrb[0].mxu0
      %v3910 = vadd.f32 %v2735, %v3909
      %v3911 = vpop.f32.mrb[0].mxu0
      %v3912 = vpop.f32.mrb[0].mxu0
      %v3913 = vadd.f32 %v2738, %v3912
      %v3914 = vpop.f32.mrb[0].mxu0
      %3915 = vmatprep.mubr.bf16.mxu0 %v3749
      %3916 = vmatmul.mubr.bf16.gmra.mrb[0].mxu0 %v3748
      %v3917 = vpop.f32.mrb[0].mxu0
      %v3918 = vadd.f32 %v2743, %v3917
      %v3919 = vpop.f32.mrb[0].mxu0
      %v3920 = vpop.f32.mrb[0].mxu0
      %v3921 = vadd.f32 %v2746, %v3920
      %v3922 = vpop.f32.mrb[0].mxu0
      %3923 = vdwg.mxu0
      %3924 = vmatprep.subr.bf16.mxu0 0
      %3925 = vmatpush1.bf16.msra.mxu0 %v3845
      %3926 = vmatprep.subr.bf16.mxu0 0
      %3927 = vmatpush1.bf16.msra.mxu0 %v3846
      %3928 = vmatprep.subr.bf16.mxu0 0
      %3929 = vmatpush1.bf16.msra.mxu0 %v3873
      %3930 = vmatprep.subr.bf16.mxu0 0
      %3931 = vmatpush1.bf16.msra.mxu0 0
      %3932 = vmatprep.subr.bf16.mxu0 0
      %3933 = vmatpush1.bf16.msra.mxu0 0
      %3934 = vmatprep.subr.bf16.mxu0 0
      %3935 = vmatpush1.bf16.msra.mxu0 0
      %3936 = vmatprep.subr.bf16.mxu0 0
      %3937 = vmatpush1.bf16.msra.mxu0 0
      %3938 = vmatprep.subr.bf16.mxu0 0
      %3939 = vmatpush1.bf16.msra.mxu0 0
      %3940 = vmatprep.subr.bf16.mxu0 0
      %3941 = vmatpush1.bf16.msra.mxu0 0
      %3942 = vmatprep.subr.bf16.mxu0 0
      %3943 = vmatpush1.bf16.msra.mxu0 0
      %3944 = vmatprep.subr.bf16.mxu0 0
      %3945 = vmatpush1.bf16.msra.mxu0 0
      %3946 = vmatprep.subr.bf16.mxu0 0
      %3947 = vmatpush1.bf16.msra.mxu0 0
      %3948 = vmatprep.subr.bf16.mxu0 0
      %3949 = vmatpush1.bf16.msra.mxu0 0
      %3950 = vmatprep.subr.bf16.mxu0 0
      %3951 = vmatpush1.bf16.msra.mxu0 0
      %3952 = vmatprep.subr.bf16.mxu0 0
      %3953 = vmatpush1.bf16.msra.mxu0 0
      %3954 = vmatprep.subr.bf16.mxu0 0
      %3955 = vmatpush1.bf16.msra.mxu0 0
      %3956 = vmatprep.mubr.bf16.mxu0 0
      %3957 = vmatmul.mubr.bf16.gmra.mrb[0].mxu0 %v3867
      %v3958 = vpop.f32.mrb[0].mxu0
      %v3959 = vadd.f32 %v3910, %v3958
      %v3960 = vpop.f32.mrb[0].mxu0
      %v3961 = vpop.f32.mrb[0].mxu0
      %v3962 = vadd.f32 %v3913, %v3961
      %v3963 = vpop.f32.mrb[0].mxu0
      %3964 = vmatprep.mubr.bf16.mxu0 0
      %3965 = vmatmul.mubr.bf16.gmra.mrb[0].mxu0 %v3870
      %v3966 = vpop.f32.mrb[0].mxu0
      %v3967 = vadd.f32 %v3918, %v3966
      %v3968 = vpop.f32.mrb[0].mxu0
      %v3969 = vpop.f32.mrb[0].mxu0
      %v3970 = vadd.f32 %v3921, %v3969
      %v3971 = vpop.f32.mrb[0].mxu0
      %3972 = vdwg.mxu0
      %3973 = vrot.lane.b32.xlu0 %v3959, 127
      %v3974 = vpop.permute.xlu0 %3973
      %3975 = vrot.lane.b32.xlu0 %v3962, 127
      %v3976 = vpop.permute.xlu0 %3975
      %3977 = vrot.lane.b32.xlu0 %v3967, 127
      %v3978 = vpop.permute.xlu0 %3977
      %3979 = vrot.lane.b32.xlu0 %v3970, 127
      %v3980 = vpop.permute.xlu0 %3979
      %3981 = vrot.lane.b32.xlu0 %v3959, 1
      %v3982 = vpop.permute.xlu0 %3981
      %3983 = vrot.lane.b32.xlu0 %v3962, 1
      %v3984 = vpop.permute.xlu0 %3983
      %3985 = vrot.lane.b32.xlu0 %v3967, 1
      %v3986 = vpop.permute.xlu0 %3985
      %3987 = vrot.lane.b32.xlu0 %v3970, 1
      %v3988 = vpop.permute.xlu0 %3987
      %3989 = vrot.lane.b32.xlu0 %v3982, 8
      %v3990 = vpop.permute.xlu0 %3989
      %3991 = vrot.lane.b32.xlu0 %v3984, 8
      %v3992 = vpop.permute.xlu0 %3991
      %3993 = vrot.lane.b32.xlu0 %v3986, 8
      %v3994 = vpop.permute.xlu0 %3993
      %3995 = vrot.lane.b32.xlu0 %v3988, 8
      %v3996 = vpop.permute.xlu0 %3995
      %v3997 = vld [vmem:[%s3] sm:$0x1]
      %v3998 = vlaneseq
      %v3999 = vshrl.u32 %v3998, 7
      %v4000 = vsub.s32 0, %v3999
      %v4001 = vrot.slane %v3997, %v4000
      %v4002 = vmul.f32 %v3990, %v4001
      %v4003 = vmul.f32 %v3992, %v4001
      %v4004 = vmul.f32 %v3994, %v4001
      %v4005 = vmul.f32 %v3996, %v4001
      %v4006 = vpack.c.bf16 %v4003, %v4002
      %v4007 = vpack.c.bf16 %v4005, %v4004
      %v4010 = vunpack.c.l.b16 %v4006
      %v4011 = vunpack.c.h.b16 %v4006
      %v4012 = vunpack.c.l.b16 %v4007
      %v4013 = vunpack.c.h.b16 %v4007
      %v4014 = vpack.c.b16 %v4010, %v4010
      %v4015 = vpack.c.b16 %v4011, %v4011
      %v4016 = vpack.c.b16 %v4012, %v4012
      %v4017 = vpack.c.b16 %v4013, %v4013
      %4022 = vst [vmem:[#allocation3] sm:$0xf] %v4014
      %4023 = vst [vmem:[#allocation3 + $0x4] sm:$0xf] %v4015
      %4024 = vst [vmem:[#allocation3 + $0x8] sm:$0xf] %v4016
      %4025 = vst [vmem:[#allocation3 + $0xc] sm:$0xf] %v4017
      %4026 = vrot.lane.b32.xlu0 %v3959, 8
      %v4027 = vpop.permute.xlu0 %4026
      %4028 = vrot.lane.b32.xlu0 %v3962, 8
      %v4029 = vpop.permute.xlu0 %4028
      %4030 = vrot.lane.b32.xlu0 %v3967, 8
      %v4031 = vpop.permute.xlu0 %4030
      %4032 = vrot.lane.b32.xlu0 %v3970, 8
      %v4033 = vpop.permute.xlu0 %4032
      %v4034 = vld [vmem:[%s3 + $0x1] sm:$0x1]
      %v4035 = vlaneseq
      %v4036 = vshrl.u32 %v4035, 7
      %v4037 = vsub.s32 0, %v4036
      %v4038 = vrot.slane %v4034, %v4037
      %v4039 = vmul.f32 %v4027, %v4038
      %v4040 = vmul.f32 %v4029, %v4038
      %v4041 = vmul.f32 %v4031, %v4038
      %v4042 = vmul.f32 %v4033, %v4038
      %v4043 = vpack.c.bf16 %v4040, %v4039
      %v4044 = vpack.c.bf16 %v4042, %v4041
      %v4047 = vunpack.c.l.b16 %v4043
      %v4048 = vunpack.c.h.b16 %v4043
      %v4049 = vunpack.c.l.b16 %v4044
      %v4050 = vunpack.c.h.b16 %v4044
      %v4051 = vpack.c.b16 %v4047, %v4047
      %v4052 = vpack.c.b16 %v4048, %v4048
      %v4053 = vpack.c.b16 %v4049, %v4049
      %v4054 = vpack.c.b16 %v4050, %v4050
      %4059 = vst [vmem:[#allocation3 + $0x10] sm:$0xf] %v4051
      %4060 = vst [vmem:[#allocation3 + $0x14] sm:$0xf] %v4052
      %4061 = vst [vmem:[#allocation3 + $0x18] sm:$0xf] %v4053
      %4062 = vst [vmem:[#allocation3 + $0x1c] sm:$0xf] %v4054
      %4063 = vrot.lane.b32.xlu0 %v3974, 8
      %v4064 = vpop.permute.xlu0 %4063
      %4065 = vrot.lane.b32.xlu0 %v3976, 8
      %v4066 = vpop.permute.xlu0 %4065
      %4067 = vrot.lane.b32.xlu0 %v3978, 8
      %v4068 = vpop.permute.xlu0 %4067
      %4069 = vrot.lane.b32.xlu0 %v3980, 8
      %v4070 = vpop.permute.xlu0 %4069
      %v4071 = vld [vmem:[%s3 + $0x2] sm:$0x1]
      %v4072 = vlaneseq
      %v4073 = vshrl.u32 %v4072, 7
      %v4074 = vsub.s32 0, %v4073
      %v4075 = vrot.slane %v4071, %v4074
      %v4076 = vmul.f32 %v4064, %v4075
      %v4077 = vmul.f32 %v4066, %v4075
      %v4078 = vmul.f32 %v4068, %v4075
      %v4079 = vmul.f32 %v4070, %v4075
      %v4080 = vpack.c.bf16 %v4077, %v4076
      %v4081 = vpack.c.bf16 %v4079, %v4078
      %v4084 = vunpack.c.l.b16 %v4080
      %v4085 = vunpack.c.h.b16 %v4080
      %v4086 = vunpack.c.l.b16 %v4081
      %v4087 = vunpack.c.h.b16 %v4081
      %v4088 = vpack.c.b16 %v4084, %v4084
      %v4089 = vpack.c.b16 %v4085, %v4085
      %v4090 = vpack.c.b16 %v4086, %v4086
      %v4091 = vpack.c.b16 %v4087, %v4087
      %4096 = vst [vmem:[#allocation3 + $0x20] sm:$0xf] %v4088
      %4097 = vst [vmem:[#allocation3 + $0x24] sm:$0xf] %v4089
      %4098 = vst [vmem:[#allocation3 + $0x28] sm:$0xf] %v4090
      %4099 = vst [vmem:[#allocation3 + $0x2c] sm:$0xf] %v4091
      %v4100 = vld [vmem:[%s3 + $0x3] sm:$0x1]
      %v4101 = vlaneseq
      %v4102 = vshrl.u32 %v4101, 7
      %v4103 = vsub.s32 0, %v4102
      %v4104 = vrot.slane %v4100, %v4103
      %v4105 = vmul.f32 %v3982, %v4104
      %v4106 = vmul.f32 %v3984, %v4104
      %v4107 = vmul.f32 %v3986, %v4104
      %v4108 = vmul.f32 %v3988, %v4104
      %v4109 = vpack.c.bf16 %v4106, %v4105
      %v4110 = vpack.c.bf16 %v4108, %v4107
      %v4113 = vunpack.c.l.b16 %v4109
      %v4114 = vunpack.c.h.b16 %v4109
      %v4115 = vunpack.c.l.b16 %v4110
      %v4116 = vunpack.c.h.b16 %v4110
      %v4117 = vpack.c.b16 %v4113, %v4113
      %v4118 = vpack.c.b16 %v4114, %v4114
      %v4119 = vpack.c.b16 %v4115, %v4115
      %v4120 = vpack.c.b16 %v4116, %v4116
      %4125 = vst [vmem:[#allocation3 + $0x30] sm:$0xf] %v4117
      %4126 = vst [vmem:[#allocation3 + $0x34] sm:$0xf] %v4118
      %4127 = vst [vmem:[#allocation3 + $0x38] sm:$0xf] %v4119
      %4128 = vst [vmem:[#allocation3 + $0x3c] sm:$0xf] %v4120
      %v4129 = vpack.c.bf16 %v3962, %v3959
      %v4130 = vpack.c.bf16 %v3970, %v3967
      %v4133 = vunpack.c.l.b16 %v4129
      %v4134 = vunpack.c.h.b16 %v4129
      %v4135 = vunpack.c.l.b16 %v4130
      %v4136 = vunpack.c.h.b16 %v4130
      %v4137 = vpack.c.b16 %v4133, %v4133
      %v4138 = vpack.c.b16 %v4134, %v4134
      %v4139 = vpack.c.b16 %v4135, %v4135
      %v4140 = vpack.c.b16 %v4136, %v4136
      %4145 = vst [vmem:[#allocation3 + $0x40] sm:$0xf] %v4137
      %4146 = vst [vmem:[#allocation3 + $0x44] sm:$0xf] %v4138
      %4147 = vst [vmem:[#allocation3 + $0x48] sm:$0xf] %v4139
      %4148 = vst [vmem:[#allocation3 + $0x4c] sm:$0xf] %v4140
      %v4149 = vld [vmem:[%s3 + $0x5] sm:$0x1]
      %v4150 = vlaneseq
      %v4151 = vshrl.u32 %v4150, 7
      %v4152 = vsub.s32 0, %v4151
      %v4153 = vrot.slane %v4149, %v4152
      %v4154 = vmul.f32 %v3974, %v4153
      %v4155 = vmul.f32 %v3976, %v4153
      %v4156 = vmul.f32 %v3978, %v4153
      %v4157 = vmul.f32 %v3980, %v4153
      %v4158 = vpack.c.bf16 %v4155, %v4154
      %v4159 = vpack.c.bf16 %v4157, %v4156
      %v4162 = vunpack.c.l.b16 %v4158
      %v4163 = vunpack.c.h.b16 %v4158
      %v4164 = vunpack.c.l.b16 %v4159
      %v4165 = vunpack.c.h.b16 %v4159
      %v4166 = vpack.c.b16 %v4162, %v4162
      %v4167 = vpack.c.b16 %v4163, %v4163
      %v4168 = vpack.c.b16 %v4164, %v4164
      %v4169 = vpack.c.b16 %v4165, %v4165
      %4174 = vst [vmem:[#allocation3 + $0x50] sm:$0xf] %v4166
      %4175 = vst [vmem:[#allocation3 + $0x54] sm:$0xf] %v4167
      %4176 = vst [vmem:[#allocation3 + $0x58] sm:$0xf] %v4168
      %4177 = vst [vmem:[#allocation3 + $0x5c] sm:$0xf] %v4169
      %4178 = vrot.lane.b32.xlu0 %v3982, 120
      %v4179 = vpop.permute.xlu0 %4178
      %4180 = vrot.lane.b32.xlu0 %v3984, 120
      %v4181 = vpop.permute.xlu0 %4180
      %4182 = vrot.lane.b32.xlu0 %v3986, 120
      %v4183 = vpop.permute.xlu0 %4182
      %4184 = vrot.lane.b32.xlu0 %v3988, 120
      %v4185 = vpop.permute.xlu0 %4184
      %v4186 = vld [vmem:[%s3 + $0x6] sm:$0x1]
      %v4187 = vlaneseq
      %v4188 = vshrl.u32 %v4187, 7
      %v4189 = vsub.s32 0, %v4188
      %v4190 = vrot.slane %v4186, %v4189
      %v4191 = vmul.f32 %v4179, %v4190
      %v4192 = vmul.f32 %v4181, %v4190
      %v4193 = vmul.f32 %v4183, %v4190
      %v4194 = vmul.f32 %v4185, %v4190
      %v4195 = vpack.c.bf16 %v4192, %v4191
      %v4196 = vpack.c.bf16 %v4194, %v4193
      %v4199 = vunpack.c.l.b16 %v4195
      %v4200 = vunpack.c.h.b16 %v4195
      %v4201 = vunpack.c.l.b16 %v4196
      %v4202 = vunpack.c.h.b16 %v4196
      %v4203 = vpack.c.b16 %v4199, %v4199
      %v4204 = vpack.c.b16 %v4200, %v4200
      %v4205 = vpack.c.b16 %v4201, %v4201
      %v4206 = vpack.c.b16 %v4202, %v4202
      %4211 = vst [vmem:[#allocation3 + $0x60] sm:$0xf] %v4203
      %4212 = vst [vmem:[#allocation3 + $0x64] sm:$0xf] %v4204
      %4213 = vst [vmem:[#allocation3 + $0x68] sm:$0xf] %v4205
      %4214 = vst [vmem:[#allocation3 + $0x6c] sm:$0xf] %v4206
      %4215 = vrot.lane.b32.xlu0 %v3959, 120
      %v4216 = vpop.permute.xlu0 %4215
      %4217 = vrot.lane.b32.xlu0 %v3962, 120
      %v4218 = vpop.permute.xlu0 %4217
      %4219 = vrot.lane.b32.xlu0 %v3967, 120
      %v4220 = vpop.permute.xlu0 %4219
      %4221 = vrot.lane.b32.xlu0 %v3970, 120
      %v4222 = vpop.permute.xlu0 %4221
      %v4223 = vld [vmem:[%s3 + $0x7] sm:$0x1]
      %v4224 = vlaneseq
      %v4225 = vshrl.u32 %v4224, 7
      %v4226 = vsub.s32 0, %v4225
      %v4227 = vrot.slane %v4223, %v4226
      %v4228 = vmul.f32 %v4216, %v4227
      %v4229 = vmul.f32 %v4218, %v4227
      %v4230 = vmul.f32 %v4220, %v4227
      %v4231 = vmul.f32 %v4222, %v4227
      %v4232 = vpack.c.bf16 %v4229, %v4228
      %v4233 = vpack.c.bf16 %v4231, %v4230
      %v4236 = vunpack.c.l.b16 %v4232
      %v4237 = vunpack.c.h.b16 %v4232
      %v4238 = vunpack.c.l.b16 %v4233
      %v4239 = vunpack.c.h.b16 %v4233
      %v4240 = vpack.c.b16 %v4236, %v4236
      %v4241 = vpack.c.b16 %v4237, %v4237
      %v4242 = vpack.c.b16 %v4238, %v4238
      %v4243 = vpack.c.b16 %v4239, %v4239
      %4248 = vst [vmem:[#allocation3 + $0x70] sm:$0xf] %v4240
      %4249 = vst [vmem:[#allocation3 + $0x74] sm:$0xf] %v4241
      %4250 = vst [vmem:[#allocation3 + $0x78] sm:$0xf] %v4242
      %4251 = vst [vmem:[#allocation3 + $0x7c] sm:$0xf] %v4243
      %4252 = vrot.lane.b32.xlu0 %v3974, 120
      %v4253 = vpop.permute.xlu0 %4252
      %4254 = vrot.lane.b32.xlu0 %v3976, 120
      %v4255 = vpop.permute.xlu0 %4254
      %4256 = vrot.lane.b32.xlu0 %v3978, 120
      %v4257 = vpop.permute.xlu0 %4256
      %4258 = vrot.lane.b32.xlu0 %v3980, 120
      %v4259 = vpop.permute.xlu0 %4258
      %v4260 = vld [vmem:[%s3 + $0x8] sm:$0x1]
      %v4261 = vlaneseq
      %v4262 = vshrl.u32 %v4261, 7
      %v4263 = vsub.s32 0, %v4262
      %v4264 = vrot.slane %v4260, %v4263
      %v4265 = vmul.f32 %v4253, %v4264
      %v4266 = vmul.f32 %v4255, %v4264
      %v4267 = vmul.f32 %v4257, %v4264
      %v4268 = vmul.f32 %v4259, %v4264
      %v4269 = vpack.c.bf16 %v4266, %v4265
      %v4270 = vpack.c.bf16 %v4268, %v4267
      %v4273 = vunpack.c.l.b16 %v4269
      %v4274 = vunpack.c.h.b16 %v4269
      %v4275 = vunpack.c.l.b16 %v4270
      %v4276 = vunpack.c.h.b16 %v4270
      %v4277 = vpack.c.b16 %v4273, %v4273
      %v4278 = vpack.c.b16 %v4274, %v4274
      %v4279 = vpack.c.b16 %v4275, %v4275
      %v4280 = vpack.c.b16 %v4276, %v4276
      %4285 = vst [vmem:[#allocation3 + $0x80] sm:$0xf] %v4277
      %4286 = vst [vmem:[#allocation3 + $0x84] sm:$0xf] %v4278
      %4287 = vst [vmem:[#allocation3 + $0x88] sm:$0xf] %v4279
      %4288 = vst [vmem:[#allocation3 + $0x8c] sm:$0xf] %v4280
      %s4289 = scalar_lea.vmem %s1, 240
      %v4290 = vld [vmem:[%s4289] sm:$0xff]
      %v4291 = vld [vmem:[%s4289 + $0x8] sm:$0xf]
      %v4292 = vld [vmem:[%s4289 + $0xc] sm:$0xff]
      %v4293 = vld [vmem:[%s4289 + $0x14] sm:$0xf]
      %v4294 = vld [vmem:[%s4289 + $0x18] sm:$0xff]
      %v4295 = vld [vmem:[%s4289 + $0x20] sm:$0xf]
      %v4296 = vld [vmem:[%s4289 + $0x24] sm:$0xff]
      %v4297 = vld [vmem:[%s4289 + $0x2c] sm:$0xf]
      %v4298 = vld [vmem:[#allocation3] sm:$0xf]
      %v4299 = vld [vmem:[#allocation3 + $0x4] sm:$0xf]
      %v4300 = vld [vmem:[#allocation3 + $0x8] sm:$0xf]
      %v4301 = vld [vmem:[#allocation3 + $0xc] sm:$0xf]
      %v4302 = vld [vmem:[#allocation3 + $0x10] sm:$0xf]
      %v4303 = vld [vmem:[#allocation3 + $0x14] sm:$0xf]
      %v4304 = vld [vmem:[#allocation3 + $0x18] sm:$0xf]
      %v4305 = vld [vmem:[#allocation3 + $0x1c] sm:$0xf]
      %v4306 = vld [vmem:[#allocation3 + $0x20] sm:$0xf]
      %v4307 = vld [vmem:[#allocation3 + $0x24] sm:$0xf]
      %v4308 = vld [vmem:[#allocation3 + $0x28] sm:$0xf]
      %v4309 = vld [vmem:[#allocation3 + $0x2c] sm:$0xf]
      %v4310 = vld [vmem:[#allocation3 + $0x30] sm:$0xf]
      %v4311 = vld [vmem:[#allocation3 + $0x34] sm:$0xf]
      %v4312 = vld [vmem:[#allocation3 + $0x38] sm:$0xf]
      %v4313 = vld [vmem:[#allocation3 + $0x3c] sm:$0xf]
      %v4314 = vld [vmem:[#allocation3 + $0x40] sm:$0xf]
      %v4315 = vld [vmem:[#allocation3 + $0x44] sm:$0xf]
      %v4316 = vld [vmem:[#allocation3 + $0x48] sm:$0xf]
      %v4317 = vld [vmem:[#allocation3 + $0x4c] sm:$0xf]
      %v4318 = vld [vmem:[#allocation3 + $0x50] sm:$0xf]
      %v4319 = vld [vmem:[#allocation3 + $0x54] sm:$0xf]
      %v4320 = vld [vmem:[#allocation3 + $0x58] sm:$0xf]
      %v4321 = vld [vmem:[#allocation3 + $0x5c] sm:$0xf]
      %v4322 = vld [vmem:[#allocation3 + $0x60] sm:$0xf]
      %v4323 = vld [vmem:[#allocation3 + $0x64] sm:$0xf]
      %v4324 = vld [vmem:[#allocation3 + $0x68] sm:$0xf]
      %v4325 = vld [vmem:[#allocation3 + $0x6c] sm:$0xf]
      %v4326 = vld [vmem:[#allocation3 + $0x70] sm:$0xf]
      %v4327 = vld [vmem:[#allocation3 + $0x74] sm:$0xf]
      %v4328 = vld [vmem:[#allocation3 + $0x78] sm:$0xf]
      %v4329 = vld [vmem:[#allocation3 + $0x7c] sm:$0xf]
      %v4330 = vld [vmem:[#allocation3 + $0x80] sm:$0xf]
      %v4331 = vld [vmem:[#allocation3 + $0x84] sm:$0xf]
      %v4332 = vld [vmem:[#allocation3 + $0x88] sm:$0xf]
      %v4333 = vld [vmem:[#allocation3 + $0x8c] sm:$0xf]
      %v4334 = vld [vmem:[#allocation3 + $0x90] sm:$0xf]
      %v4343 = vunpack.c.l.b16 %v4290
      %v4344 = vunpack.c.h.b16 %v4290
      %v4345 = vunpack.c.l.b16 %v4291
      %v4346 = vunpack.c.l.b16 %v4292
      %v4347 = vunpack.c.h.b16 %v4292
      %v4348 = vunpack.c.l.b16 %v4293
      %v4349 = vunpack.c.l.b16 %v4294
      %v4350 = vunpack.c.h.b16 %v4294
      %v4351 = vunpack.c.l.b16 %v4295
      %v4352 = vunpack.c.l.b16 %v4296
      %v4353 = vunpack.c.h.b16 %v4296
      %v4354 = vunpack.c.l.b16 %v4297
      %v4355 = vpack.c.b16 %v4346, %v4343
      %v4356 = vpack.c.b16 %v4347, %v4344
      %v4357 = vpack.c.b16 %v4348, %v4345
      %v4358 = vpack.c.b16 %v4352, %v4349
      %v4359 = vpack.c.b16 %v4353, %v4350
      %v4360 = vpack.c.b16 %v4354, %v4351
      %v4402 = vunpack.c.l.b16 %v4298
      %v4403 = vunpack.c.l.b16 %v4299
      %v4404 = vunpack.c.l.b16 %v4300
      %v4405 = vunpack.c.l.b16 %v4301
      %v4406 = vunpack.c.l.b16 %v4302
      %v4407 = vunpack.c.l.b16 %v4303
      %v4408 = vunpack.c.l.b16 %v4304
      %v4409 = vunpack.c.l.b16 %v4305
      %v4410 = vunpack.c.l.b16 %v4306
      %v4411 = vunpack.c.l.b16 %v4307
      %v4412 = vunpack.c.l.b16 %v4308
      %v4413 = vunpack.c.l.b16 %v4309
      %v4414 = vunpack.c.l.b16 %v4310
      %v4415 = vunpack.c.l.b16 %v4311
      %v4416 = vunpack.c.l.b16 %v4312
      %v4417 = vunpack.c.l.b16 %v4313
      %v4418 = vunpack.c.l.b16 %v4314
      %v4419 = vunpack.c.l.b16 %v4315
      %v4420 = vunpack.c.l.b16 %v4316
      %v4421 = vunpack.c.l.b16 %v4317
      %v4422 = vunpack.c.l.b16 %v4318
      %v4423 = vunpack.c.l.b16 %v4319
      %v4424 = vunpack.c.l.b16 %v4320
      %v4425 = vunpack.c.l.b16 %v4321
      %v4426 = vunpack.c.l.b16 %v4322
      %v4427 = vunpack.c.l.b16 %v4323
      %v4428 = vunpack.c.l.b16 %v4324
      %v4429 = vunpack.c.l.b16 %v4325
      %v4430 = vunpack.c.l.b16 %v4326
      %v4431 = vunpack.c.l.b16 %v4327
      %v4432 = vunpack.c.l.b16 %v4328
      %v4433 = vunpack.c.l.b16 %v4329
      %v4434 = vunpack.c.l.b16 %v4330
      %v4435 = vunpack.c.l.b16 %v4331
      %v4436 = vunpack.c.l.b16 %v4332
      %v4437 = vunpack.c.l.b16 %v4333
      %v4438 = vunpack.c.l.b16 %v4334
      %v4439 = vpack.c.b16 %v4403, %v4402
      %v4440 = vpack.c.b16 %v4405, %v4404
      %v4441 = vpack.c.b16 %v4407, %v4406
      %v4442 = vpack.c.b16 %v4409, %v4408
      %v4443 = vpack.c.b16 %v4411, %v4410
      %v4444 = vpack.c.b16 %v4413, %v4412
      %v4445 = vpack.c.b16 %v4415, %v4414
      %v4446 = vpack.c.b16 %v4417, %v4416
      %v4447 = vpack.c.b16 %v4419, %v4418
      %v4448 = vpack.c.b16 %v4421, %v4420
      %v4449 = vpack.c.b16 %v4423, %v4422
      %v4450 = vpack.c.b16 %v4425, %v4424
      %v4451 = vpack.c.b16 %v4427, %v4426
      %v4452 = vpack.c.b16 %v4429, %v4428
      %v4453 = vpack.c.b16 %v4431, %v4430
      %v4454 = vpack.c.b16 %v4433, %v4432
      %v4455 = vpack.c.b16 %v4435, %v4434
      %v4456 = vpack.c.b16 %v4437, %v4436
      %v4457 = vpack.c.b16 %v4438, %v4438
      %v4477 = vsel %vm1127, %v4357, 0
      %v4480 = vsel %vm1127, %v4360, 0
      %v4483 = vsel %vm1134, %v4457, 0
      %4485 = vmatprep.subr.bf16.mxu0 0
      %4486 = vmatpush1.bf16.msra.mxu0 %v4439
      %4487 = vmatprep.subr.bf16.mxu0 0
      %4488 = vmatpush1.bf16.msra.mxu0 %v4440
      %4489 = vmatprep.subr.bf16.mxu0 0
      %4490 = vmatpush1.bf16.msra.mxu0 %v4441
      %4491 = vmatprep.subr.bf16.mxu0 0
      %4492 = vmatpush1.bf16.msra.mxu0 %v4442
      %4493 = vmatprep.subr.bf16.mxu0 0
      %4494 = vmatpush1.bf16.msra.mxu0 %v4443
      %4495 = vmatprep.subr.bf16.mxu0 0
      %4496 = vmatpush1.bf16.msra.mxu0 %v4444
      %4497 = vmatprep.subr.bf16.mxu0 0
      %4498 = vmatpush1.bf16.msra.mxu0 %v4445
      %4499 = vmatprep.subr.bf16.mxu0 0
      %4500 = vmatpush1.bf16.msra.mxu0 %v4446
      %4501 = vmatprep.subr.bf16.mxu0 0
      %4502 = vmatpush1.bf16.msra.mxu0 %v4447
      %4503 = vmatprep.subr.bf16.mxu0 0
      %4504 = vmatpush1.bf16.msra.mxu0 %v4448
      %4505 = vmatprep.subr.bf16.mxu0 0
      %4506 = vmatpush1.bf16.msra.mxu0 %v4449
      %4507 = vmatprep.subr.bf16.mxu0 0
      %4508 = vmatpush1.bf16.msra.mxu0 %v4450
      %4509 = vmatprep.subr.bf16.mxu0 0
      %4510 = vmatpush1.bf16.msra.mxu0 %v4451
      %4511 = vmatprep.subr.bf16.mxu0 0
      %4512 = vmatpush1.bf16.msra.mxu0 %v4452
      %4513 = vmatprep.subr.bf16.mxu0 0
      %4514 = vmatpush1.bf16.msra.mxu0 %v4453
      %4515 = vmatprep.subr.bf16.mxu0 0
      %4516 = vmatpush1.bf16.msra.mxu0 %v4454
      %4517 = vmatprep.mubr.bf16.mxu0 %v4356
      %4518 = vmatmul.mubr.bf16.gmra.mrb[0].mxu0 %v4355
      %v4519 = vpop.f32.mrb[0].mxu0
      %v4520 = vadd.f32 0.0, %v4519
      %v4521 = vpop.f32.mrb[0].mxu0
      %v4522 = vpop.f32.mrb[0].mxu0
      %v4523 = vadd.f32 0.0, %v4522
      %v4524 = vpop.f32.mrb[0].mxu0
      %4525 = vmatprep.mubr.bf16.mxu0 %v4359
      %4526 = vmatmul.mubr.bf16.gmra.mrb[0].mxu0 %v4358
      %v4527 = vpop.f32.mrb[0].mxu0
      %v4528 = vadd.f32 0.0, %v4527
      %v4529 = vpop.f32.mrb[0].mxu0
      %v4530 = vpop.f32.mrb[0].mxu0
      %v4531 = vadd.f32 0.0, %v4530
      %v4532 = vpop.f32.mrb[0].mxu0
      %4533 = vdwg.mxu0
      %4534 = vmatprep.subr.bf16.mxu0 0
      %4535 = vmatpush1.bf16.msra.mxu0 %v4455
      %4536 = vmatprep.subr.bf16.mxu0 0
      %4537 = vmatpush1.bf16.msra.mxu0 %v4456
      %4538 = vmatprep.subr.bf16.mxu0 0
      %4539 = vmatpush1.bf16.msra.mxu0 %v4483
      %4540 = vmatprep.subr.bf16.mxu0 0
      %4541 = vmatpush1.bf16.msra.mxu0 0
      %4542 = vmatprep.subr.bf16.mxu0 0
      %4543 = vmatpush1.bf16.msra.mxu0 0
      %4544 = vmatprep.subr.bf16.mxu0 0
      %4545 = vmatpush1.bf16.msra.mxu0 0
      %4546 = vmatprep.subr.bf16.mxu0 0
      %4547 = vmatpush1.bf16.msra.mxu0 0
      %4548 = vmatprep.subr.bf16.mxu0 0
      %4549 = vmatpush1.bf16.msra.mxu0 0
      %4550 = vmatprep.subr.bf16.mxu0 0
      %4551 = vmatpush1.bf16.msra.mxu0 0
      %4552 = vmatprep.subr.bf16.mxu0 0
      %4553 = vmatpush1.bf16.msra.mxu0 0
      %4554 = vmatprep.subr.bf16.mxu0 0
      %4555 = vmatpush1.bf16.msra.mxu0 0
      %4556 = vmatprep.subr.bf16.mxu0 0
      %4557 = vmatpush1.bf16.msra.mxu0 0
      %4558 = vmatprep.subr.bf16.mxu0 0
      %4559 = vmatpush1.bf16.msra.mxu0 0
      %4560 = vmatprep.subr.bf16.mxu0 0
      %4561 = vmatpush1.bf16.msra.mxu0 0
      %4562 = vmatprep.subr.bf16.mxu0 0
      %4563 = vmatpush1.bf16.msra.mxu0 0
      %4564 = vmatprep.subr.bf16.mxu0 0
      %4565 = vmatpush1.bf16.msra.mxu0 0
      %4566 = vmatprep.mubr.bf16.mxu0 0
      %4567 = vmatmul.mubr.bf16.gmra.mrb[0].mxu0 %v4477
      %v4568 = vpop.f32.mrb[0].mxu0
      %v4569 = vadd.f32 %v4520, %v4568
      %v4570 = vpop.f32.mrb[0].mxu0
      %v4571 = vpop.f32.mrb[0].mxu0
      %v4572 = vadd.f32 %v4523, %v4571
      %v4573 = vpop.f32.mrb[0].mxu0
      %4574 = vmatprep.mubr.bf16.mxu0 0
      %4575 = vmatmul.mubr.bf16.gmra.mrb[0].mxu0 %v4480
      %v4576 = vpop.f32.mrb[0].mxu0
      %v4577 = vadd.f32 %v4528, %v4576
      %v4578 = vpop.f32.mrb[0].mxu0
      %v4579 = vpop.f32.mrb[0].mxu0
      %v4580 = vadd.f32 %v4531, %v4579
      %v4581 = vpop.f32.mrb[0].mxu0
      %4582 = vdwg.mxu0
      %v4583 = vmax.f32 %v4569, 0.0
      %v4584 = vmax.f32 %v4572, 0.0
      %v4585 = vmax.f32 %v4577, 0.0
      %v4586 = vmax.f32 %v4580, 0.0
      %4587 = vrot.lane.b32.xlu0 %v4583, 127
      %v4588 = vpop.permute.xlu0 %4587
      %4589 = vrot.lane.b32.xlu0 %v4584, 127
      %v4590 = vpop.permute.xlu0 %4589
      %4591 = vrot.lane.b32.xlu0 %v4585, 127
      %v4592 = vpop.permute.xlu0 %4591
      %4593 = vrot.lane.b32.xlu0 %v4586, 127
      %v4594 = vpop.permute.xlu0 %4593
      %4595 = vrot.lane.b32.xlu0 %v4583, 1
      %v4596 = vpop.permute.xlu0 %4595
      %4597 = vrot.lane.b32.xlu0 %v4584, 1
      %v4598 = vpop.permute.xlu0 %4597
      %4599 = vrot.lane.b32.xlu0 %v4585, 1
      %v4600 = vpop.permute.xlu0 %4599
      %4601 = vrot.lane.b32.xlu0 %v4586, 1
      %v4602 = vpop.permute.xlu0 %4601
      %4603 = vrot.lane.b32.xlu0 %v4596, 8
      %v4604 = vpop.permute.xlu0 %4603
      %4605 = vrot.lane.b32.xlu0 %v4598, 8
      %v4606 = vpop.permute.xlu0 %4605
      %4607 = vrot.lane.b32.xlu0 %v4600, 8
      %v4608 = vpop.permute.xlu0 %4607
      %4609 = vrot.lane.b32.xlu0 %v4602, 8
      %v4610 = vpop.permute.xlu0 %4609
      %v4611 = vld [vmem:[%s3] sm:$0x1]
      %v4612 = vlaneseq
      %v4613 = vshrl.u32 %v4612, 7
      %v4614 = vsub.s32 0, %v4613
      %v4615 = vrot.slane %v4611, %v4614
      %v4616 = vmul.f32 %v4604, %v4615
      %v4617 = vmul.f32 %v4606, %v4615
      %v4618 = vmul.f32 %v4608, %v4615
      %v4619 = vmul.f32 %v4610, %v4615
      %v4620 = vpack.c.bf16 %v4617, %v4616
      %v4621 = vpack.c.bf16 %v4619, %v4618
      %v4624 = vunpack.c.l.b16 %v4620
      %v4625 = vunpack.c.h.b16 %v4620
      %v4626 = vunpack.c.l.b16 %v4621
      %v4627 = vunpack.c.h.b16 %v4621
      %v4628 = vpack.c.b16 %v4624, %v4624
      %v4629 = vpack.c.b16 %v4625, %v4625
      %v4630 = vpack.c.b16 %v4626, %v4626
      %v4631 = vpack.c.b16 %v4627, %v4627
      %4636 = vst [vmem:[#allocation3] sm:$0xf] %v4628
      %4637 = vst [vmem:[#allocation3 + $0x4] sm:$0xf] %v4629
      %4638 = vst [vmem:[#allocation3 + $0x8] sm:$0xf] %v4630
      %4639 = vst [vmem:[#allocation3 + $0xc] sm:$0xf] %v4631
      %4640 = vrot.lane.b32.xlu0 %v4583, 8
      %v4641 = vpop.permute.xlu0 %4640
      %4642 = vrot.lane.b32.xlu0 %v4584, 8
      %v4643 = vpop.permute.xlu0 %4642
      %4644 = vrot.lane.b32.xlu0 %v4585, 8
      %v4645 = vpop.permute.xlu0 %4644
      %4646 = vrot.lane.b32.xlu0 %v4586, 8
      %v4647 = vpop.permute.xlu0 %4646
      %v4648 = vld [vmem:[%s3 + $0x1] sm:$0x1]
      %v4649 = vlaneseq
      %v4650 = vshrl.u32 %v4649, 7
      %v4651 = vsub.s32 0, %v4650
      %v4652 = vrot.slane %v4648, %v4651
      %v4653 = vmul.f32 %v4641, %v4652
      %v4654 = vmul.f32 %v4643, %v4652
      %v4655 = vmul.f32 %v4645, %v4652
      %v4656 = vmul.f32 %v4647, %v4652
      %v4657 = vpack.c.bf16 %v4654, %v4653
      %v4658 = vpack.c.bf16 %v4656, %v4655
      %v4661 = vunpack.c.l.b16 %v4657
      %v4662 = vunpack.c.h.b16 %v4657
      %v4663 = vunpack.c.l.b16 %v4658
      %v4664 = vunpack.c.h.b16 %v4658
      %v4665 = vpack.c.b16 %v4661, %v4661
      %v4666 = vpack.c.b16 %v4662, %v4662
      %v4667 = vpack.c.b16 %v4663, %v4663
      %v4668 = vpack.c.b16 %v4664, %v4664
      %4673 = vst [vmem:[#allocation3 + $0x10] sm:$0xf] %v4665
      %4674 = vst [vmem:[#allocation3 + $0x14] sm:$0xf] %v4666
      %4675 = vst [vmem:[#allocation3 + $0x18] sm:$0xf] %v4667
      %4676 = vst [vmem:[#allocation3 + $0x1c] sm:$0xf] %v4668
      %4677 = vrot.lane.b32.xlu0 %v4588, 8
      %v4678 = vpop.permute.xlu0 %4677
      %4679 = vrot.lane.b32.xlu0 %v4590, 8
      %v4680 = vpop.permute.xlu0 %4679
      %4681 = vrot.lane.b32.xlu0 %v4592, 8
      %v4682 = vpop.permute.xlu0 %4681
      %4683 = vrot.lane.b32.xlu0 %v4594, 8
      %v4684 = vpop.permute.xlu0 %4683
      %v4685 = vld [vmem:[%s3 + $0x2] sm:$0x1]
      %v4686 = vlaneseq
      %v4687 = vshrl.u32 %v4686, 7
      %v4688 = vsub.s32 0, %v4687
      %v4689 = vrot.slane %v4685, %v4688
      %v4690 = vmul.f32 %v4678, %v4689
      %v4691 = vmul.f32 %v4680, %v4689
      %v4692 = vmul.f32 %v4682, %v4689
      %v4693 = vmul.f32 %v4684, %v4689
      %v4694 = vpack.c.bf16 %v4691, %v4690
      %v4695 = vpack.c.bf16 %v4693, %v4692
      %v4698 = vunpack.c.l.b16 %v4694
      %v4699 = vunpack.c.h.b16 %v4694
      %v4700 = vunpack.c.l.b16 %v4695
      %v4701 = vunpack.c.h.b16 %v4695
      %v4702 = vpack.c.b16 %v4698, %v4698
      %v4703 = vpack.c.b16 %v4699, %v4699
      %v4704 = vpack.c.b16 %v4700, %v4700
      %v4705 = vpack.c.b16 %v4701, %v4701
      %4710 = vst [vmem:[#allocation3 + $0x20] sm:$0xf] %v4702
      %4711 = vst [vmem:[#allocation3 + $0x24] sm:$0xf] %v4703
      %4712 = vst [vmem:[#allocation3 + $0x28] sm:$0xf] %v4704
      %4713 = vst [vmem:[#allocation3 + $0x2c] sm:$0xf] %v4705
      %v4714 = vld [vmem:[%s3 + $0x3] sm:$0x1]
      %v4715 = vlaneseq
      %v4716 = vshrl.u32 %v4715, 7
      %v4717 = vsub.s32 0, %v4716
      %v4718 = vrot.slane %v4714, %v4717
      %v4719 = vmul.f32 %v4596, %v4718
      %v4720 = vmul.f32 %v4598, %v4718
      %v4721 = vmul.f32 %v4600, %v4718
      %v4722 = vmul.f32 %v4602, %v4718
      %v4723 = vpack.c.bf16 %v4720, %v4719
      %v4724 = vpack.c.bf16 %v4722, %v4721
      %v4727 = vunpack.c.l.b16 %v4723
      %v4728 = vunpack.c.h.b16 %v4723
      %v4729 = vunpack.c.l.b16 %v4724
      %v4730 = vunpack.c.h.b16 %v4724
      %v4731 = vpack.c.b16 %v4727, %v4727
      %v4732 = vpack.c.b16 %v4728, %v4728
      %v4733 = vpack.c.b16 %v4729, %v4729
      %v4734 = vpack.c.b16 %v4730, %v4730
      %4739 = vst [vmem:[#allocation3 + $0x30] sm:$0xf] %v4731
      %4740 = vst [vmem:[#allocation3 + $0x34] sm:$0xf] %v4732
      %4741 = vst [vmem:[#allocation3 + $0x38] sm:$0xf] %v4733
      %4742 = vst [vmem:[#allocation3 + $0x3c] sm:$0xf] %v4734
      %v4743 = vpack.c.bf16 %v4584, %v4583
      %v4744 = vpack.c.bf16 %v4586, %v4585
      %v4747 = vunpack.c.l.b16 %v4743
      %v4748 = vunpack.c.h.b16 %v4743
      %v4749 = vunpack.c.l.b16 %v4744
      %v4750 = vunpack.c.h.b16 %v4744
      %v4751 = vpack.c.b16 %v4747, %v4747
      %v4752 = vpack.c.b16 %v4748, %v4748
      %v4753 = vpack.c.b16 %v4749, %v4749
      %v4754 = vpack.c.b16 %v4750, %v4750
      %4759 = vst [vmem:[#allocation3 + $0x40] sm:$0xf] %v4751
      %4760 = vst [vmem:[#allocation3 + $0x44] sm:$0xf] %v4752
      %4761 = vst [vmem:[#allocation3 + $0x48] sm:$0xf] %v4753
      %4762 = vst [vmem:[#allocation3 + $0x4c] sm:$0xf] %v4754
      %v4763 = vld [vmem:[%s3 + $0x5] sm:$0x1]
      %v4764 = vlaneseq
      %v4765 = vshrl.u32 %v4764, 7
      %v4766 = vsub.s32 0, %v4765
      %v4767 = vrot.slane %v4763, %v4766
      %v4768 = vmul.f32 %v4588, %v4767
      %v4769 = vmul.f32 %v4590, %v4767
      %v4770 = vmul.f32 %v4592, %v4767
      %v4771 = vmul.f32 %v4594, %v4767
      %v4772 = vpack.c.bf16 %v4769, %v4768
      %v4773 = vpack.c.bf16 %v4771, %v4770
      %v4776 = vunpack.c.l.b16 %v4772
      %v4777 = vunpack.c.h.b16 %v4772
      %v4778 = vunpack.c.l.b16 %v4773
      %v4779 = vunpack.c.h.b16 %v4773
      %v4780 = vpack.c.b16 %v4776, %v4776
      %v4781 = vpack.c.b16 %v4777, %v4777
      %v4782 = vpack.c.b16 %v4778, %v4778
      %v4783 = vpack.c.b16 %v4779, %v4779
      %4788 = vst [vmem:[#allocation3 + $0x50] sm:$0xf] %v4780
      %4789 = vst [vmem:[#allocation3 + $0x54] sm:$0xf] %v4781
      %4790 = vst [vmem:[#allocation3 + $0x58] sm:$0xf] %v4782
      %4791 = vst [vmem:[#allocation3 + $0x5c] sm:$0xf] %v4783
      %4792 = vrot.lane.b32.xlu0 %v4596, 120
      %v4793 = vpop.permute.xlu0 %4792
      %4794 = vrot.lane.b32.xlu0 %v4598, 120
      %v4795 = vpop.permute.xlu0 %4794
      %4796 = vrot.lane.b32.xlu0 %v4600, 120
      %v4797 = vpop.permute.xlu0 %4796
      %4798 = vrot.lane.b32.xlu0 %v4602, 120
      %v4799 = vpop.permute.xlu0 %4798
      %v4800 = vld [vmem:[%s3 + $0x6] sm:$0x1]
      %v4801 = vlaneseq
      %v4802 = vshrl.u32 %v4801, 7
      %v4803 = vsub.s32 0, %v4802
      %v4804 = vrot.slane %v4800, %v4803
      %v4805 = vmul.f32 %v4793, %v4804
      %v4806 = vmul.f32 %v4795, %v4804
      %v4807 = vmul.f32 %v4797, %v4804
      %v4808 = vmul.f32 %v4799, %v4804
      %v4809 = vpack.c.bf16 %v4806, %v4805
      %v4810 = vpack.c.bf16 %v4808, %v4807
      %v4813 = vunpack.c.l.b16 %v4809
      %v4814 = vunpack.c.h.b16 %v4809
      %v4815 = vunpack.c.l.b16 %v4810
      %v4816 = vunpack.c.h.b16 %v4810
      %v4817 = vpack.c.b16 %v4813, %v4813
      %v4818 = vpack.c.b16 %v4814, %v4814
      %v4819 = vpack.c.b16 %v4815, %v4815
      %v4820 = vpack.c.b16 %v4816, %v4816
      %4825 = vst [vmem:[#allocation3 + $0x60] sm:$0xf] %v4817
      %4826 = vst [vmem:[#allocation3 + $0x64] sm:$0xf] %v4818
      %4827 = vst [vmem:[#allocation3 + $0x68] sm:$0xf] %v4819
      %4828 = vst [vmem:[#allocation3 + $0x6c] sm:$0xf] %v4820
      %4829 = vrot.lane.b32.xlu0 %v4583, 120
      %v4830 = vpop.permute.xlu0 %4829
      %4831 = vrot.lane.b32.xlu0 %v4584, 120
      %v4832 = vpop.permute.xlu0 %4831
      %4833 = vrot.lane.b32.xlu0 %v4585, 120
      %v4834 = vpop.permute.xlu0 %4833
      %4835 = vrot.lane.b32.xlu0 %v4586, 120
      %v4836 = vpop.permute.xlu0 %4835
      %v4837 = vld [vmem:[%s3 + $0x7] sm:$0x1]
      %v4838 = vlaneseq
      %v4839 = vshrl.u32 %v4838, 7
      %v4840 = vsub.s32 0, %v4839
      %v4841 = vrot.slane %v4837, %v4840
      %v4842 = vmul.f32 %v4830, %v4841
      %v4843 = vmul.f32 %v4832, %v4841
      %v4844 = vmul.f32 %v4834, %v4841
      %v4845 = vmul.f32 %v4836, %v4841
      %v4846 = vpack.c.bf16 %v4843, %v4842
      %v4847 = vpack.c.bf16 %v4845, %v4844
      %v4850 = vunpack.c.l.b16 %v4846
      %v4851 = vunpack.c.h.b16 %v4846
      %v4852 = vunpack.c.l.b16 %v4847
      %v4853 = vunpack.c.h.b16 %v4847
      %v4854 = vpack.c.b16 %v4850, %v4850
      %v4855 = vpack.c.b16 %v4851, %v4851
      %v4856 = vpack.c.b16 %v4852, %v4852
      %v4857 = vpack.c.b16 %v4853, %v4853
      %4862 = vst [vmem:[#allocation3 + $0x70] sm:$0xf] %v4854
      %4863 = vst [vmem:[#allocation3 + $0x74] sm:$0xf] %v4855
      %4864 = vst [vmem:[#allocation3 + $0x78] sm:$0xf] %v4856
      %4865 = vst [vmem:[#allocation3 + $0x7c] sm:$0xf] %v4857
      %4866 = vrot.lane.b32.xlu0 %v4588, 120
      %v4867 = vpop.permute.xlu0 %4866
      %4868 = vrot.lane.b32.xlu0 %v4590, 120
      %v4869 = vpop.permute.xlu0 %4868
      %4870 = vrot.lane.b32.xlu0 %v4592, 120
      %v4871 = vpop.permute.xlu0 %4870
      %4872 = vrot.lane.b32.xlu0 %v4594, 120
      %v4873 = vpop.permute.xlu0 %4872
      %v4874 = vld [vmem:[%s3 + $0x8] sm:$0x1]
      %v4875 = vlaneseq
      %v4876 = vshrl.u32 %v4875, 7
      %v4877 = vsub.s32 0, %v4876
      %v4878 = vrot.slane %v4874, %v4877
      %v4879 = vmul.f32 %v4867, %v4878
      %v4880 = vmul.f32 %v4869, %v4878
      %v4881 = vmul.f32 %v4871, %v4878
      %v4882 = vmul.f32 %v4873, %v4878
      %v4883 = vpack.c.bf16 %v4880, %v4879
      %v4884 = vpack.c.bf16 %v4882, %v4881
      %v4887 = vunpack.c.l.b16 %v4883
      %v4888 = vunpack.c.h.b16 %v4883
      %v4889 = vunpack.c.l.b16 %v4884
      %v4890 = vunpack.c.h.b16 %v4884
      %v4891 = vpack.c.b16 %v4887, %v4887
      %v4892 = vpack.c.b16 %v4888, %v4888
      %v4893 = vpack.c.b16 %v4889, %v4889
      %v4894 = vpack.c.b16 %v4890, %v4890
      %4899 = vst [vmem:[#allocation3 + $0x80] sm:$0xf] %v4891
      %4900 = vst [vmem:[#allocation3 + $0x84] sm:$0xf] %v4892
      %4901 = vst [vmem:[#allocation3 + $0x88] sm:$0xf] %v4893
      %4902 = vst [vmem:[#allocation3 + $0x8c] sm:$0xf] %v4894
      %s4903 = scalar_lea.vmem %s1, 288
      %v4904 = vld [vmem:[%s4903] sm:$0xff]
      %v4905 = vld [vmem:[%s4903 + $0x8] sm:$0xf]
      %v4906 = vld [vmem:[%s4903 + $0xc] sm:$0xff]
      %v4907 = vld [vmem:[%s4903 + $0x14] sm:$0xf]
      %v4908 = vld [vmem:[%s4903 + $0x18] sm:$0xff]
      %v4909 = vld [vmem:[%s4903 + $0x20] sm:$0xf]
      %v4910 = vld [vmem:[%s4903 + $0x24] sm:$0xff]
      %v4911 = vld [vmem:[%s4903 + $0x2c] sm:$0xf]
      %v4912 = vld [vmem:[#allocation3] sm:$0xf]
      %v4913 = vld [vmem:[#allocation3 + $0x4] sm:$0xf]
      %v4914 = vld [vmem:[#allocation3 + $0x8] sm:$0xf]
      %v4915 = vld [vmem:[#allocation3 + $0xc] sm:$0xf]
      %v4916 = vld [vmem:[#allocation3 + $0x10] sm:$0xf]
      %v4917 = vld [vmem:[#allocation3 + $0x14] sm:$0xf]
      %v4918 = vld [vmem:[#allocation3 + $0x18] sm:$0xf]
      %v4919 = vld [vmem:[#allocation3 + $0x1c] sm:$0xf]
      %v4920 = vld [vmem:[#allocation3 + $0x20] sm:$0xf]
      %v4921 = vld [vmem:[#allocation3 + $0x24] sm:$0xf]
      %v4922 = vld [vmem:[#allocation3 + $0x28] sm:$0xf]
      %v4923 = vld [vmem:[#allocation3 + $0x2c] sm:$0xf]
      %v4924 = vld [vmem:[#allocation3 + $0x30] sm:$0xf]
      %v4925 = vld [vmem:[#allocation3 + $0x34] sm:$0xf]
      %v4926 = vld [vmem:[#allocation3 + $0x38] sm:$0xf]
      %v4927 = vld [vmem:[#allocation3 + $0x3c] sm:$0xf]
      %v4928 = vld [vmem:[#allocation3 + $0x40] sm:$0xf]
      %v4929 = vld [vmem:[#allocation3 + $0x44] sm:$0xf]
      %v4930 = vld [vmem:[#allocation3 + $0x48] sm:$0xf]
      %v4931 = vld [vmem:[#allocation3 + $0x4c] sm:$0xf]
      %v4932 = vld [vmem:[#allocation3 + $0x50] sm:$0xf]
      %v4933 = vld [vmem:[#allocation3 + $0x54] sm:$0xf]
      %v4934 = vld [vmem:[#allocation3 + $0x58] sm:$0xf]
      %v4935 = vld [vmem:[#allocation3 + $0x5c] sm:$0xf]
      %v4936 = vld [vmem:[#allocation3 + $0x60] sm:$0xf]
      %v4937 = vld [vmem:[#allocation3 + $0x64] sm:$0xf]
      %v4938 = vld [vmem:[#allocation3 + $0x68] sm:$0xf]
      %v4939 = vld [vmem:[#allocation3 + $0x6c] sm:$0xf]
      %v4940 = vld [vmem:[#allocation3 + $0x70] sm:$0xf]
      %v4941 = vld [vmem:[#allocation3 + $0x74] sm:$0xf]
      %v4942 = vld [vmem:[#allocation3 + $0x78] sm:$0xf]
      %v4943 = vld [vmem:[#allocation3 + $0x7c] sm:$0xf]
      %v4944 = vld [vmem:[#allocation3 + $0x80] sm:$0xf]
      %v4945 = vld [vmem:[#allocation3 + $0x84] sm:$0xf]
      %v4946 = vld [vmem:[#allocation3 + $0x88] sm:$0xf]
      %v4947 = vld [vmem:[#allocation3 + $0x8c] sm:$0xf]
      %v4948 = vld [vmem:[#allocation3 + $0x90] sm:$0xf]
      %v4957 = vunpack.c.l.b16 %v4904
      %v4958 = vunpack.c.h.b16 %v4904
      %v4959 = vunpack.c.l.b16 %v4905
      %v4960 = vunpack.c.l.b16 %v4906
      %v4961 = vunpack.c.h.b16 %v4906
      %v4962 = vunpack.c.l.b16 %v4907
      %v4963 = vunpack.c.l.b16 %v4908
      %v4964 = vunpack.c.h.b16 %v4908
      %v4965 = vunpack.c.l.b16 %v4909
      %v4966 = vunpack.c.l.b16 %v4910
      %v4967 = vunpack.c.h.b16 %v4910
      %v4968 = vunpack.c.l.b16 %v4911
      %v4969 = vpack.c.b16 %v4960, %v4957
      %v4970 = vpack.c.b16 %v4961, %v4958
      %v4971 = vpack.c.b16 %v4962, %v4959
      %v4972 = vpack.c.b16 %v4966, %v4963
      %v4973 = vpack.c.b16 %v4967, %v4964
      %v4974 = vpack.c.b16 %v4968, %v4965
      %v5016 = vunpack.c.l.b16 %v4912
      %v5017 = vunpack.c.l.b16 %v4913
      %v5018 = vunpack.c.l.b16 %v4914
      %v5019 = vunpack.c.l.b16 %v4915
      %v5020 = vunpack.c.l.b16 %v4916
      %v5021 = vunpack.c.l.b16 %v4917
      %v5022 = vunpack.c.l.b16 %v4918
      %v5023 = vunpack.c.l.b16 %v4919
      %v5024 = vunpack.c.l.b16 %v4920
      %v5025 = vunpack.c.l.b16 %v4921
      %v5026 = vunpack.c.l.b16 %v4922
      %v5027 = vunpack.c.l.b16 %v4923
      %v5028 = vunpack.c.l.b16 %v4924
      %v5029 = vunpack.c.l.b16 %v4925
      %v5030 = vunpack.c.l.b16 %v4926
      %v5031 = vunpack.c.l.b16 %v4927
      %v5032 = vunpack.c.l.b16 %v4928
      %v5033 = vunpack.c.l.b16 %v4929
      %v5034 = vunpack.c.l.b16 %v4930
      %v5035 = vunpack.c.l.b16 %v4931
      %v5036 = vunpack.c.l.b16 %v4932
      %v5037 = vunpack.c.l.b16 %v4933
      %v5038 = vunpack.c.l.b16 %v4934
      %v5039 = vunpack.c.l.b16 %v4935
      %v5040 = vunpack.c.l.b16 %v4936
      %v5041 = vunpack.c.l.b16 %v4937
      %v5042 = vunpack.c.l.b16 %v4938
      %v5043 = vunpack.c.l.b16 %v4939
      %v5044 = vunpack.c.l.b16 %v4940
      %v5045 = vunpack.c.l.b16 %v4941
      %v5046 = vunpack.c.l.b16 %v4942
      %v5047 = vunpack.c.l.b16 %v4943
      %v5048 = vunpack.c.l.b16 %v4944
      %v5049 = vunpack.c.l.b16 %v4945
      %v5050 = vunpack.c.l.b16 %v4946
      %v5051 = vunpack.c.l.b16 %v4947
      %v5052 = vunpack.c.l.b16 %v4948
      %v5053 = vpack.c.b16 %v5017, %v5016
      %v5054 = vpack.c.b16 %v5019, %v5018
      %v5055 = vpack.c.b16 %v5021, %v5020
      %v5056 = vpack.c.b16 %v5023, %v5022
      %v5057 = vpack.c.b16 %v5025, %v5024
      %v5058 = vpack.c.b16 %v5027, %v5026
      %v5059 = vpack.c.b16 %v5029, %v5028
      %v5060 = vpack.c.b16 %v5031, %v5030
      %v5061 = vpack.c.b16 %v5033, %v5032
      %v5062 = vpack.c.b16 %v5035, %v5034
      %v5063 = vpack.c.b16 %v5037, %v5036
      %v5064 = vpack.c.b16 %v5039, %v5038
      %v5065 = vpack.c.b16 %v5041, %v5040
      %v5066 = vpack.c.b16 %v5043, %v5042
      %v5067 = vpack.c.b16 %v5045, %v5044
      %v5068 = vpack.c.b16 %v5047, %v5046
      %v5069 = vpack.c.b16 %v5049, %v5048
      %v5070 = vpack.c.b16 %v5051, %v5050
      %v5071 = vpack.c.b16 %v5052, %v5052
      %v5091 = vsel %vm1127, %v4971, 0
      %v5094 = vsel %vm1127, %v4974, 0
      %v5097 = vsel %vm1134, %v5071, 0
      %5099 = vmatprep.subr.bf16.mxu0 0
      %5100 = vmatpush1.bf16.msra.mxu0 %v5053
      %5101 = vmatprep.subr.bf16.mxu0 0
      %5102 = vmatpush1.bf16.msra.mxu0 %v5054
      %5103 = vmatprep.subr.bf16.mxu0 0
      %5104 = vmatpush1.bf16.msra.mxu0 %v5055
      %5105 = vmatprep.subr.bf16.mxu0 0
      %5106 = vmatpush1.bf16.msra.mxu0 %v5056
      %5107 = vmatprep.subr.bf16.mxu0 0
      %5108 = vmatpush1.bf16.msra.mxu0 %v5057
      %5109 = vmatprep.subr.bf16.mxu0 0
      %5110 = vmatpush1.bf16.msra.mxu0 %v5058
      %5111 = vmatprep.subr.bf16.mxu0 0
      %5112 = vmatpush1.bf16.msra.mxu0 %v5059
      %5113 = vmatprep.subr.bf16.mxu0 0
      %5114 = vmatpush1.bf16.msra.mxu0 %v5060
      %5115 = vmatprep.subr.bf16.mxu0 0
      %5116 = vmatpush1.bf16.msra.mxu0 %v5061
      %5117 = vmatprep.subr.bf16.mxu0 0
      %5118 = vmatpush1.bf16.msra.mxu0 %v5062
      %5119 = vmatprep.subr.bf16.mxu0 0
      %5120 = vmatpush1.bf16.msra.mxu0 %v5063
      %5121 = vmatprep.subr.bf16.mxu0 0
      %5122 = vmatpush1.bf16.msra.mxu0 %v5064
      %5123 = vmatprep.subr.bf16.mxu0 0
      %5124 = vmatpush1.bf16.msra.mxu0 %v5065
      %5125 = vmatprep.subr.bf16.mxu0 0
      %5126 = vmatpush1.bf16.msra.mxu0 %v5066
      %5127 = vmatprep.subr.bf16.mxu0 0
      %5128 = vmatpush1.bf16.msra.mxu0 %v5067
      %5129 = vmatprep.subr.bf16.mxu0 0
      %5130 = vmatpush1.bf16.msra.mxu0 %v5068
      %5131 = vmatprep.mubr.bf16.mxu0 %v4970
      %5132 = vmatmul.mubr.bf16.gmra.mrb[0].mxu0 %v4969
      %v5133 = vpop.f32.mrb[0].mxu0
      %v5134 = vadd.f32 %v3959, %v5133
      %v5135 = vpop.f32.mrb[0].mxu0
      %v5136 = vpop.f32.mrb[0].mxu0
      %v5137 = vadd.f32 %v3962, %v5136
      %v5138 = vpop.f32.mrb[0].mxu0
      %5139 = vmatprep.mubr.bf16.mxu0 %v4973
      %5140 = vmatmul.mubr.bf16.gmra.mrb[0].mxu0 %v4972
      %v5141 = vpop.f32.mrb[0].mxu0
      %v5142 = vadd.f32 %v3967, %v5141
      %v5143 = vpop.f32.mrb[0].mxu0
      %v5144 = vpop.f32.mrb[0].mxu0
      %v5145 = vadd.f32 %v3970, %v5144
      %v5146 = vpop.f32.mrb[0].mxu0
      %5147 = vdwg.mxu0
      %5148 = vmatprep.subr.bf16.mxu0 0
      %5149 = vmatpush1.bf16.msra.mxu0 %v5069
      %5150 = vmatprep.subr.bf16.mxu0 0
      %5151 = vmatpush1.bf16.msra.mxu0 %v5070
      %5152 = vmatprep.subr.bf16.mxu0 0
      %5153 = vmatpush1.bf16.msra.mxu0 %v5097
      %5154 = vmatprep.subr.bf16.mxu0 0
      %5155 = vmatpush1.bf16.msra.mxu0 0
      %5156 = vmatprep.subr.bf16.mxu0 0
      %5157 = vmatpush1.bf16.msra.mxu0 0
      %5158 = vmatprep.subr.bf16.mxu0 0
      %5159 = vmatpush1.bf16.msra.mxu0 0
      %5160 = vmatprep.subr.bf16.mxu0 0
      %5161 = vmatpush1.bf16.msra.mxu0 0
      %5162 = vmatprep.subr.bf16.mxu0 0
      %5163 = vmatpush1.bf16.msra.mxu0 0
      %5164 = vmatprep.subr.bf16.mxu0 0
      %5165 = vmatpush1.bf16.msra.mxu0 0
      %5166 = vmatprep.subr.bf16.mxu0 0
      %5167 = vmatpush1.bf16.msra.mxu0 0
      %5168 = vmatprep.subr.bf16.mxu0 0
      %5169 = vmatpush1.bf16.msra.mxu0 0
      %5170 = vmatprep.subr.bf16.mxu0 0
      %5171 = vmatpush1.bf16.msra.mxu0 0
      %5172 = vmatprep.subr.bf16.mxu0 0
      %5173 = vmatpush1.bf16.msra.mxu0 0
      %5174 = vmatprep.subr.bf16.mxu0 0
      %5175 = vmatpush1.bf16.msra.mxu0 0
      %5176 = vmatprep.subr.bf16.mxu0 0
      %5177 = vmatpush1.bf16.msra.mxu0 0
      %5178 = vmatprep.subr.bf16.mxu0 0
      %5179 = vmatpush1.bf16.msra.mxu0 0
      %5180 = vmatprep.mubr.bf16.mxu0 0
      %5181 = vmatmul.mubr.bf16.gmra.mrb[0].mxu0 %v5091
      %v5182 = vpop.f32.mrb[0].mxu0
      %v5183 = vadd.f32 %v5134, %v5182
      %v5184 = vpop.f32.mrb[0].mxu0
      %v5185 = vpop.f32.mrb[0].mxu0
      %v5186 = vadd.f32 %v5137, %v5185
      %v5187 = vpop.f32.mrb[0].mxu0
      %5188 = vmatprep.mubr.bf16.mxu0 0
      %5189 = vmatmul.mubr.bf16.gmra.mrb[0].mxu0 %v5094
      %v5190 = vpop.f32.mrb[0].mxu0
      %v5191 = vadd.f32 %v5142, %v5190
      %v5192 = vpop.f32.mrb[0].mxu0
      %v5193 = vpop.f32.mrb[0].mxu0
      %v5194 = vadd.f32 %v5145, %v5193
      %v5195 = vpop.f32.mrb[0].mxu0
      %5196 = vdwg.mxu0
      %5197 = vrot.lane.b32.xlu0 %v5183, 127
      %v5198 = vpop.permute.xlu0 %5197
      %5199 = vrot.lane.b32.xlu0 %v5186, 127
      %v5200 = vpop.permute.xlu0 %5199
      %5201 = vrot.lane.b32.xlu0 %v5191, 127
      %v5202 = vpop.permute.xlu0 %5201
      %5203 = vrot.lane.b32.xlu0 %v5194, 127
      %v5204 = vpop.permute.xlu0 %5203
      %5205 = vrot.lane.b32.xlu0 %v5183, 1
      %v5206 = vpop.permute.xlu0 %5205
      %5207 = vrot.lane.b32.xlu0 %v5186, 1
      %v5208 = vpop.permute.xlu0 %5207
      %5209 = vrot.lane.b32.xlu0 %v5191, 1
      %v5210 = vpop.permute.xlu0 %5209
      %5211 = vrot.lane.b32.xlu0 %v5194, 1
      %v5212 = vpop.permute.xlu0 %5211
      %5213 = vrot.lane.b32.xlu0 %v5206, 8
      %v5214 = vpop.permute.xlu0 %5213
      %5215 = vrot.lane.b32.xlu0 %v5208, 8
      %v5216 = vpop.permute.xlu0 %5215
      %5217 = vrot.lane.b32.xlu0 %v5210, 8
      %v5218 = vpop.permute.xlu0 %5217
      %5219 = vrot.lane.b32.xlu0 %v5212, 8
      %v5220 = vpop.permute.xlu0 %5219
      %v5221 = vld [vmem:[%s3] sm:$0x1]
      %v5222 = vlaneseq
      %v5223 = vshrl.u32 %v5222, 7
      %v5224 = vsub.s32 0, %v5223
      %v5225 = vrot.slane %v5221, %v5224
      %v5226 = vmul.f32 %v5214, %v5225
      %v5227 = vmul.f32 %v5216, %v5225
      %v5228 = vmul.f32 %v5218, %v5225
      %v5229 = vmul.f32 %v5220, %v5225
      %v5230 = vpack.c.bf16 %v5227, %v5226
      %v5231 = vpack.c.bf16 %v5229, %v5228
      %v5234 = vunpack.c.l.b16 %v5230
      %v5235 = vunpack.c.h.b16 %v5230
      %v5236 = vunpack.c.l.b16 %v5231
      %v5237 = vunpack.c.h.b16 %v5231
      %v5238 = vpack.c.b16 %v5234, %v5234
      %v5239 = vpack.c.b16 %v5235, %v5235
      %v5240 = vpack.c.b16 %v5236, %v5236
      %v5241 = vpack.c.b16 %v5237, %v5237
      %5246 = vst [vmem:[#allocation3] sm:$0xf] %v5238
      %5247 = vst [vmem:[#allocation3 + $0x4] sm:$0xf] %v5239
      %5248 = vst [vmem:[#allocation3 + $0x8] sm:$0xf] %v5240
      %5249 = vst [vmem:[#allocation3 + $0xc] sm:$0xf] %v5241
      %5250 = vrot.lane.b32.xlu0 %v5183, 8
      %v5251 = vpop.permute.xlu0 %5250
      %5252 = vrot.lane.b32.xlu0 %v5186, 8
      %v5253 = vpop.permute.xlu0 %5252
      %5254 = vrot.lane.b32.xlu0 %v5191, 8
      %v5255 = vpop.permute.xlu0 %5254
      %5256 = vrot.lane.b32.xlu0 %v5194, 8
      %v5257 = vpop.permute.xlu0 %5256
      %v5258 = vld [vmem:[%s3 + $0x1] sm:$0x1]
      %v5259 = vlaneseq
      %v5260 = vshrl.u32 %v5259, 7
      %v5261 = vsub.s32 0, %v5260
      %v5262 = vrot.slane %v5258, %v5261
      %v5263 = vmul.f32 %v5251, %v5262
      %v5264 = vmul.f32 %v5253, %v5262
      %v5265 = vmul.f32 %v5255, %v5262
      %v5266 = vmul.f32 %v5257, %v5262
      %v5267 = vpack.c.bf16 %v5264, %v5263
      %v5268 = vpack.c.bf16 %v5266, %v5265
      %v5271 = vunpack.c.l.b16 %v5267
      %v5272 = vunpack.c.h.b16 %v5267
      %v5273 = vunpack.c.l.b16 %v5268
      %v5274 = vunpack.c.h.b16 %v5268
      %v5275 = vpack.c.b16 %v5271, %v5271
      %v5276 = vpack.c.b16 %v5272, %v5272
      %v5277 = vpack.c.b16 %v5273, %v5273
      %v5278 = vpack.c.b16 %v5274, %v5274
      %5283 = vst [vmem:[#allocation3 + $0x10] sm:$0xf] %v5275
      %5284 = vst [vmem:[#allocation3 + $0x14] sm:$0xf] %v5276
      %5285 = vst [vmem:[#allocation3 + $0x18] sm:$0xf] %v5277
      %5286 = vst [vmem:[#allocation3 + $0x1c] sm:$0xf] %v5278
      %5287 = vrot.lane.b32.xlu0 %v5198, 8
      %v5288 = vpop.permute.xlu0 %5287
      %5289 = vrot.lane.b32.xlu0 %v5200, 8
      %v5290 = vpop.permute.xlu0 %5289
      %5291 = vrot.lane.b32.xlu0 %v5202, 8
      %v5292 = vpop.permute.xlu0 %5291
      %5293 = vrot.lane.b32.xlu0 %v5204, 8
      %v5294 = vpop.permute.xlu0 %5293
      %v5295 = vld [vmem:[%s3 + $0x2] sm:$0x1]
      %v5296 = vlaneseq
      %v5297 = vshrl.u32 %v5296, 7
      %v5298 = vsub.s32 0, %v5297
      %v5299 = vrot.slane %v5295, %v5298
      %v5300 = vmul.f32 %v5288, %v5299
      %v5301 = vmul.f32 %v5290, %v5299
      %v5302 = vmul.f32 %v5292, %v5299
      %v5303 = vmul.f32 %v5294, %v5299
      %v5304 = vpack.c.bf16 %v5301, %v5300
      %v5305 = vpack.c.bf16 %v5303, %v5302
      %v5308 = vunpack.c.l.b16 %v5304
      %v5309 = vunpack.c.h.b16 %v5304
      %v5310 = vunpack.c.l.b16 %v5305
      %v5311 = vunpack.c.h.b16 %v5305
      %v5312 = vpack.c.b16 %v5308, %v5308
      %v5313 = vpack.c.b16 %v5309, %v5309
      %v5314 = vpack.c.b16 %v5310, %v5310
      %v5315 = vpack.c.b16 %v5311, %v5311
      %5320 = vst [vmem:[#allocation3 + $0x20] sm:$0xf] %v5312
      %5321 = vst [vmem:[#allocation3 + $0x24] sm:$0xf] %v5313
      %5322 = vst [vmem:[#allocation3 + $0x28] sm:$0xf] %v5314
      %5323 = vst [vmem:[#allocation3 + $0x2c] sm:$0xf] %v5315
      %v5324 = vld [vmem:[%s3 + $0x3] sm:$0x1]
      %v5325 = vlaneseq
      %v5326 = vshrl.u32 %v5325, 7
      %v5327 = vsub.s32 0, %v5326
      %v5328 = vrot.slane %v5324, %v5327
      %v5329 = vmul.f32 %v5206, %v5328
      %v5330 = vmul.f32 %v5208, %v5328
      %v5331 = vmul.f32 %v5210, %v5328
      %v5332 = vmul.f32 %v5212, %v5328
      %v5333 = vpack.c.bf16 %v5330, %v5329
      %v5334 = vpack.c.bf16 %v5332, %v5331
      %v5337 = vunpack.c.l.b16 %v5333
      %v5338 = vunpack.c.h.b16 %v5333
      %v5339 = vunpack.c.l.b16 %v5334
      %v5340 = vunpack.c.h.b16 %v5334
      %v5341 = vpack.c.b16 %v5337, %v5337
      %v5342 = vpack.c.b16 %v5338, %v5338
      %v5343 = vpack.c.b16 %v5339, %v5339
      %v5344 = vpack.c.b16 %v5340, %v5340
      %5349 = vst [vmem:[#allocation3 + $0x30] sm:$0xf] %v5341
      %5350 = vst [vmem:[#allocation3 + $0x34] sm:$0xf] %v5342
      %5351 = vst [vmem:[#allocation3 + $0x38] sm:$0xf] %v5343
      %5352 = vst [vmem:[#allocation3 + $0x3c] sm:$0xf] %v5344
      %v5353 = vpack.c.bf16 %v5186, %v5183
      %v5354 = vpack.c.bf16 %v5194, %v5191
      %v5357 = vunpack.c.l.b16 %v5353
      %v5358 = vunpack.c.h.b16 %v5353
      %v5359 = vunpack.c.l.b16 %v5354
      %v5360 = vunpack.c.h.b16 %v5354
      %v5361 = vpack.c.b16 %v5357, %v5357
      %v5362 = vpack.c.b16 %v5358, %v5358
      %v5363 = vpack.c.b16 %v5359, %v5359
      %v5364 = vpack.c.b16 %v5360, %v5360
      %5369 = vst [vmem:[#allocation3 + $0x40] sm:$0xf] %v5361
      %5370 = vst [vmem:[#allocation3 + $0x44] sm:$0xf] %v5362
      %5371 = vst [vmem:[#allocation3 + $0x48] sm:$0xf] %v5363
      %5372 = vst [vmem:[#allocation3 + $0x4c] sm:$0xf] %v5364
      %v5373 = vld [vmem:[%s3 + $0x5] sm:$0x1]
      %v5374 = vlaneseq
      %v5375 = vshrl.u32 %v5374, 7
      %v5376 = vsub.s32 0, %v5375
      %v5377 = vrot.slane %v5373, %v5376
      %v5378 = vmul.f32 %v5198, %v5377
      %v5379 = vmul.f32 %v5200, %v5377
      %v5380 = vmul.f32 %v5202, %v5377
      %v5381 = vmul.f32 %v5204, %v5377
      %v5382 = vpack.c.bf16 %v5379, %v5378
      %v5383 = vpack.c.bf16 %v5381, %v5380
      %v5386 = vunpack.c.l.b16 %v5382
      %v5387 = vunpack.c.h.b16 %v5382
      %v5388 = vunpack.c.l.b16 %v5383
      %v5389 = vunpack.c.h.b16 %v5383
      %v5390 = vpack.c.b16 %v5386, %v5386
      %v5391 = vpack.c.b16 %v5387, %v5387
      %v5392 = vpack.c.b16 %v5388, %v5388
      %v5393 = vpack.c.b16 %v5389, %v5389
      %5398 = vst [vmem:[#allocation3 + $0x50] sm:$0xf] %v5390
      %5399 = vst [vmem:[#allocation3 + $0x54] sm:$0xf] %v5391
      %5400 = vst [vmem:[#allocation3 + $0x58] sm:$0xf] %v5392
      %5401 = vst [vmem:[#allocation3 + $0x5c] sm:$0xf] %v5393
      %5402 = vrot.lane.b32.xlu0 %v5206, 120
      %v5403 = vpop.permute.xlu0 %5402
      %5404 = vrot.lane.b32.xlu0 %v5208, 120
      %v5405 = vpop.permute.xlu0 %5404
      %5406 = vrot.lane.b32.xlu0 %v5210, 120
      %v5407 = vpop.permute.xlu0 %5406
      %5408 = vrot.lane.b32.xlu0 %v5212, 120
      %v5409 = vpop.permute.xlu0 %5408
      %v5410 = vld [vmem:[%s3 + $0x6] sm:$0x1]
      %v5411 = vlaneseq
      %v5412 = vshrl.u32 %v5411, 7
      %v5413 = vsub.s32 0, %v5412
      %v5414 = vrot.slane %v5410, %v5413
      %v5415 = vmul.f32 %v5403, %v5414
      %v5416 = vmul.f32 %v5405, %v5414
      %v5417 = vmul.f32 %v5407, %v5414
      %v5418 = vmul.f32 %v5409, %v5414
      %v5419 = vpack.c.bf16 %v5416, %v5415
      %v5420 = vpack.c.bf16 %v5418, %v5417
      %v5423 = vunpack.c.l.b16 %v5419
      %v5424 = vunpack.c.h.b16 %v5419
      %v5425 = vunpack.c.l.b16 %v5420
      %v5426 = vunpack.c.h.b16 %v5420
      %v5427 = vpack.c.b16 %v5423, %v5423
      %v5428 = vpack.c.b16 %v5424, %v5424
      %v5429 = vpack.c.b16 %v5425, %v5425
      %v5430 = vpack.c.b16 %v5426, %v5426
      %5435 = vst [vmem:[#allocation3 + $0x60] sm:$0xf] %v5427
      %5436 = vst [vmem:[#allocation3 + $0x64] sm:$0xf] %v5428
      %5437 = vst [vmem:[#allocation3 + $0x68] sm:$0xf] %v5429
      %5438 = vst [vmem:[#allocation3 + $0x6c] sm:$0xf] %v5430
      %5439 = vrot.lane.b32.xlu0 %v5183, 120
      %v5440 = vpop.permute.xlu0 %5439
      %5441 = vrot.lane.b32.xlu0 %v5186, 120
      %v5442 = vpop.permute.xlu0 %5441
      %5443 = vrot.lane.b32.xlu0 %v5191, 120
      %v5444 = vpop.permute.xlu0 %5443
      %5445 = vrot.lane.b32.xlu0 %v5194, 120
      %v5446 = vpop.permute.xlu0 %5445
      %v5447 = vld [vmem:[%s3 + $0x7] sm:$0x1]
      %v5448 = vlaneseq
      %v5449 = vshrl.u32 %v5448, 7
      %v5450 = vsub.s32 0, %v5449
      %v5451 = vrot.slane %v5447, %v5450
      %v5452 = vmul.f32 %v5440, %v5451
      %v5453 = vmul.f32 %v5442, %v5451
      %v5454 = vmul.f32 %v5444, %v5451
      %v5455 = vmul.f32 %v5446, %v5451
      %v5456 = vpack.c.bf16 %v5453, %v5452
      %v5457 = vpack.c.bf16 %v5455, %v5454
      %v5460 = vunpack.c.l.b16 %v5456
      %v5461 = vunpack.c.h.b16 %v5456
      %v5462 = vunpack.c.l.b16 %v5457
      %v5463 = vunpack.c.h.b16 %v5457
      %v5464 = vpack.c.b16 %v5460, %v5460
      %v5465 = vpack.c.b16 %v5461, %v5461
      %v5466 = vpack.c.b16 %v5462, %v5462
      %v5467 = vpack.c.b16 %v5463, %v5463
      %5472 = vst [vmem:[#allocation3 + $0x70] sm:$0xf] %v5464
      %5473 = vst [vmem:[#allocation3 + $0x74] sm:$0xf] %v5465
      %5474 = vst [vmem:[#allocation3 + $0x78] sm:$0xf] %v5466
      %5475 = vst [vmem:[#allocation3 + $0x7c] sm:$0xf] %v5467
      %5476 = vrot.lane.b32.xlu0 %v5198, 120
      %v5477 = vpop.permute.xlu0 %5476
      %5478 = vrot.lane.b32.xlu0 %v5200, 120
      %v5479 = vpop.permute.xlu0 %5478
      %5480 = vrot.lane.b32.xlu0 %v5202, 120
      %v5481 = vpop.permute.xlu0 %5480
      %5482 = vrot.lane.b32.xlu0 %v5204, 120
      %v5483 = vpop.permute.xlu0 %5482
      %v5484 = vld [vmem:[%s3 + $0x8] sm:$0x1]
      %v5485 = vlaneseq
      %v5486 = vshrl.u32 %v5485, 7
      %v5487 = vsub.s32 0, %v5486
      %v5488 = vrot.slane %v5484, %v5487
      %v5489 = vmul.f32 %v5477, %v5488
      %v5490 = vmul.f32 %v5479, %v5488
      %v5491 = vmul.f32 %v5481, %v5488
      %v5492 = vmul.f32 %v5483, %v5488
      %v5493 = vpack.c.bf16 %v5490, %v5489
      %v5494 = vpack.c.bf16 %v5492, %v5491
      %v5497 = vunpack.c.l.b16 %v5493
      %v5498 = vunpack.c.h.b16 %v5493
      %v5499 = vunpack.c.l.b16 %v5494
      %v5500 = vunpack.c.h.b16 %v5494
      %v5501 = vpack.c.b16 %v5497, %v5497
      %v5502 = vpack.c.b16 %v5498, %v5498
      %v5503 = vpack.c.b16 %v5499, %v5499
      %v5504 = vpack.c.b16 %v5500, %v5500
      %5509 = vst [vmem:[#allocation3 + $0x80] sm:$0xf] %v5501
      %5510 = vst [vmem:[#allocation3 + $0x84] sm:$0xf] %v5502
      %5511 = vst [vmem:[#allocation3 + $0x88] sm:$0xf] %v5503
      %5512 = vst [vmem:[#allocation3 + $0x8c] sm:$0xf] %v5504
      %s5513 = scalar_lea.vmem %s1, 336
      %v5514 = vld [vmem:[%s5513] sm:$0xff]
      %v5515 = vld [vmem:[%s5513 + $0x8] sm:$0xf]
      %v5516 = vld [vmem:[%s5513 + $0xc] sm:$0xff]
      %v5517 = vld [vmem:[%s5513 + $0x14] sm:$0xf]
      %v5518 = vld [vmem:[%s5513 + $0x18] sm:$0xff]
      %v5519 = vld [vmem:[%s5513 + $0x20] sm:$0xf]
      %v5520 = vld [vmem:[%s5513 + $0x24] sm:$0xff]
      %v5521 = vld [vmem:[%s5513 + $0x2c] sm:$0xf]
      %v5522 = vld [vmem:[#allocation3] sm:$0xf]
      %v5523 = vld [vmem:[#allocation3 + $0x4] sm:$0xf]
      %v5524 = vld [vmem:[#allocation3 + $0x8] sm:$0xf]
      %v5525 = vld [vmem:[#allocation3 + $0xc] sm:$0xf]
      %v5526 = vld [vmem:[#allocation3 + $0x10] sm:$0xf]
      %v5527 = vld [vmem:[#allocation3 + $0x14] sm:$0xf]
      %v5528 = vld [vmem:[#allocation3 + $0x18] sm:$0xf]
      %v5529 = vld [vmem:[#allocation3 + $0x1c] sm:$0xf]
      %v5530 = vld [vmem:[#allocation3 + $0x20] sm:$0xf]
      %v5531 = vld [vmem:[#allocation3 + $0x24] sm:$0xf]
      %v5532 = vld [vmem:[#allocation3 + $0x28] sm:$0xf]
      %v5533 = vld [vmem:[#allocation3 + $0x2c] sm:$0xf]
      %v5534 = vld [vmem:[#allocation3 + $0x30] sm:$0xf]
      %v5535 = vld [vmem:[#allocation3 + $0x34] sm:$0xf]
      %v5536 = vld [vmem:[#allocation3 + $0x38] sm:$0xf]
      %v5537 = vld [vmem:[#allocation3 + $0x3c] sm:$0xf]
      %v5538 = vld [vmem:[#allocation3 + $0x40] sm:$0xf]
      %v5539 = vld [vmem:[#allocation3 + $0x44] sm:$0xf]
      %v5540 = vld [vmem:[#allocation3 + $0x48] sm:$0xf]
      %v5541 = vld [vmem:[#allocation3 + $0x4c] sm:$0xf]
      %v5542 = vld [vmem:[#allocation3 + $0x50] sm:$0xf]
      %v5543 = vld [vmem:[#allocation3 + $0x54] sm:$0xf]
      %v5544 = vld [vmem:[#allocation3 + $0x58] sm:$0xf]
      %v5545 = vld [vmem:[#allocation3 + $0x5c] sm:$0xf]
      %v5546 = vld [vmem:[#allocation3 + $0x60] sm:$0xf]
      %v5547 = vld [vmem:[#allocation3 + $0x64] sm:$0xf]
      %v5548 = vld [vmem:[#allocation3 + $0x68] sm:$0xf]
      %v5549 = vld [vmem:[#allocation3 + $0x6c] sm:$0xf]
      %v5550 = vld [vmem:[#allocation3 + $0x70] sm:$0xf]
      %v5551 = vld [vmem:[#allocation3 + $0x74] sm:$0xf]
      %v5552 = vld [vmem:[#allocation3 + $0x78] sm:$0xf]
      %v5553 = vld [vmem:[#allocation3 + $0x7c] sm:$0xf]
      %v5554 = vld [vmem:[#allocation3 + $0x80] sm:$0xf]
      %v5555 = vld [vmem:[#allocation3 + $0x84] sm:$0xf]
      %v5556 = vld [vmem:[#allocation3 + $0x88] sm:$0xf]
      %v5557 = vld [vmem:[#allocation3 + $0x8c] sm:$0xf]
      %v5558 = vld [vmem:[#allocation3 + $0x90] sm:$0xf]
      %v5567 = vunpack.c.l.b16 %v5514
      %v5568 = vunpack.c.h.b16 %v5514
      %v5569 = vunpack.c.l.b16 %v5515
      %v5570 = vunpack.c.l.b16 %v5516
      %v5571 = vunpack.c.h.b16 %v5516
      %v5572 = vunpack.c.l.b16 %v5517
      %v5573 = vunpack.c.l.b16 %v5518
      %v5574 = vunpack.c.h.b16 %v5518
      %v5575 = vunpack.c.l.b16 %v5519
      %v5576 = vunpack.c.l.b16 %v5520
      %v5577 = vunpack.c.h.b16 %v5520
      %v5578 = vunpack.c.l.b16 %v5521
      %v5579 = vpack.c.b16 %v5570, %v5567
      %v5580 = vpack.c.b16 %v5571, %v5568
      %v5581 = vpack.c.b16 %v5572, %v5569
      %v5582 = vpack.c.b16 %v5576, %v5573
      %v5583 = vpack.c.b16 %v5577, %v5574
      %v5584 = vpack.c.b16 %v5578, %v5575
      %v5626 = vunpack.c.l.b16 %v5522
      %v5627 = vunpack.c.l.b16 %v5523
      %v5628 = vunpack.c.l.b16 %v5524
      %v5629 = vunpack.c.l.b16 %v5525
      %v5630 = vunpack.c.l.b16 %v5526
      %v5631 = vunpack.c.l.b16 %v5527
      %v5632 = vunpack.c.l.b16 %v5528
      %v5633 = vunpack.c.l.b16 %v5529
      %v5634 = vunpack.c.l.b16 %v5530
      %v5635 = vunpack.c.l.b16 %v5531
      %v5636 = vunpack.c.l.b16 %v5532
      %v5637 = vunpack.c.l.b16 %v5533
      %v5638 = vunpack.c.l.b16 %v5534
      %v5639 = vunpack.c.l.b16 %v5535
      %v5640 = vunpack.c.l.b16 %v5536
      %v5641 = vunpack.c.l.b16 %v5537
      %v5642 = vunpack.c.l.b16 %v5538
      %v5643 = vunpack.c.l.b16 %v5539
      %v5644 = vunpack.c.l.b16 %v5540
      %v5645 = vunpack.c.l.b16 %v5541
      %v5646 = vunpack.c.l.b16 %v5542
      %v5647 = vunpack.c.l.b16 %v5543
      %v5648 = vunpack.c.l.b16 %v5544
      %v5649 = vunpack.c.l.b16 %v5545
      %v5650 = vunpack.c.l.b16 %v5546
      %v5651 = vunpack.c.l.b16 %v5547
      %v5652 = vunpack.c.l.b16 %v5548
      %v5653 = vunpack.c.l.b16 %v5549
      %v5654 = vunpack.c.l.b16 %v5550
      %v5655 = vunpack.c.l.b16 %v5551
      %v5656 = vunpack.c.l.b16 %v5552
      %v5657 = vunpack.c.l.b16 %v5553
      %v5658 = vunpack.c.l.b16 %v5554
      %v5659 = vunpack.c.l.b16 %v5555
      %v5660 = vunpack.c.l.b16 %v5556
      %v5661 = vunpack.c.l.b16 %v5557
      %v5662 = vunpack.c.l.b16 %v5558
      %v5663 = vpack.c.b16 %v5627, %v5626
      %v5664 = vpack.c.b16 %v5629, %v5628
      %v5665 = vpack.c.b16 %v5631, %v5630
      %v5666 = vpack.c.b16 %v5633, %v5632
      %v5667 = vpack.c.b16 %v5635, %v5634
      %v5668 = vpack.c.b16 %v5637, %v5636
      %v5669 = vpack.c.b16 %v5639, %v5638
      %v5670 = vpack.c.b16 %v5641, %v5640
      %v5671 = vpack.c.b16 %v5643, %v5642
      %v5672 = vpack.c.b16 %v5645, %v5644
      %v5673 = vpack.c.b16 %v5647, %v5646
      %v5674 = vpack.c.b16 %v5649, %v5648
      %v5675 = vpack.c.b16 %v5651, %v5650
      %v5676 = vpack.c.b16 %v5653, %v5652
      %v5677 = vpack.c.b16 %v5655, %v5654
      %v5678 = vpack.c.b16 %v5657, %v5656
      %v5679 = vpack.c.b16 %v5659, %v5658
      %v5680 = vpack.c.b16 %v5661, %v5660
      %v5681 = vpack.c.b16 %v5662, %v5662
      %v5701 = vsel %vm1127, %v5581, 0
      %v5704 = vsel %vm1127, %v5584, 0
      %v5707 = vsel %vm1134, %v5681, 0
      %5709 = vmatprep.subr.bf16.mxu0 0
      %5710 = vmatpush1.bf16.msra.mxu0 %v5663
      %5711 = vmatprep.subr.bf16.mxu0 0
      %5712 = vmatpush1.bf16.msra.mxu0 %v5664
      %5713 = vmatprep.subr.bf16.mxu0 0
      %5714 = vmatpush1.bf16.msra.mxu0 %v5665
      %5715 = vmatprep.subr.bf16.mxu0 0
      %5716 = vmatpush1.bf16.msra.mxu0 %v5666
      %5717 = vmatprep.subr.bf16.mxu0 0
      %5718 = vmatpush1.bf16.msra.mxu0 %v5667
      %5719 = vmatprep.subr.bf16.mxu0 0
      %5720 = vmatpush1.bf16.msra.mxu0 %v5668
      %5721 = vmatprep.subr.bf16.mxu0 0
      %5722 = vmatpush1.bf16.msra.mxu0 %v5669
      %5723 = vmatprep.subr.bf16.mxu0 0
      %5724 = vmatpush1.bf16.msra.mxu0 %v5670
      %5725 = vmatprep.subr.bf16.mxu0 0
      %5726 = vmatpush1.bf16.msra.mxu0 %v5671
      %5727 = vmatprep.subr.bf16.mxu0 0
      %5728 = vmatpush1.bf16.msra.mxu0 %v5672
      %5729 = vmatprep.subr.bf16.mxu0 0
      %5730 = vmatpush1.bf16.msra.mxu0 %v5673
      %5731 = vmatprep.subr.bf16.mxu0 0
      %5732 = vmatpush1.bf16.msra.mxu0 %v5674
      %5733 = vmatprep.subr.bf16.mxu0 0
      %5734 = vmatpush1.bf16.msra.mxu0 %v5675
      %5735 = vmatprep.subr.bf16.mxu0 0
      %5736 = vmatpush1.bf16.msra.mxu0 %v5676
      %5737 = vmatprep.subr.bf16.mxu0 0
      %5738 = vmatpush1.bf16.msra.mxu0 %v5677
      %5739 = vmatprep.subr.bf16.mxu0 0
      %5740 = vmatpush1.bf16.msra.mxu0 %v5678
      %5741 = vmatprep.mubr.bf16.mxu0 %v5580
      %5742 = vmatmul.mubr.bf16.gmra.mrb[0].mxu0 %v5579
      %v5743 = vpop.f32.mrb[0].mxu0
      %v5744 = vadd.f32 0.0, %v5743
      %v5745 = vpop.f32.mrb[0].mxu0
      %v5746 = vpop.f32.mrb[0].mxu0
      %v5747 = vadd.f32 0.0, %v5746
      %v5748 = vpop.f32.mrb[0].mxu0
      %5749 = vmatprep.mubr.bf16.mxu0 %v5583
      %5750 = vmatmul.mubr.bf16.gmra.mrb[0].mxu0 %v5582
      %v5751 = vpop.f32.mrb[0].mxu0
      %v5752 = vadd.f32 0.0, %v5751
      %v5753 = vpop.f32.mrb[0].mxu0
      %v5754 = vpop.f32.mrb[0].mxu0
      %v5755 = vadd.f32 0.0, %v5754
      %v5756 = vpop.f32.mrb[0].mxu0
      %5757 = vdwg.mxu0
      %5758 = vmatprep.subr.bf16.mxu0 0
      %5759 = vmatpush1.bf16.msra.mxu0 %v5679
      %5760 = vmatprep.subr.bf16.mxu0 0
      %5761 = vmatpush1.bf16.msra.mxu0 %v5680
      %5762 = vmatprep.subr.bf16.mxu0 0
      %5763 = vmatpush1.bf16.msra.mxu0 %v5707
      %5764 = vmatprep.subr.bf16.mxu0 0
      %5765 = vmatpush1.bf16.msra.mxu0 0
      %5766 = vmatprep.subr.bf16.mxu0 0
      %5767 = vmatpush1.bf16.msra.mxu0 0
      %5768 = vmatprep.subr.bf16.mxu0 0
      %5769 = vmatpush1.bf16.msra.mxu0 0
      %5770 = vmatprep.subr.bf16.mxu0 0
      %5771 = vmatpush1.bf16.msra.mxu0 0
      %5772 = vmatprep.subr.bf16.mxu0 0
      %5773 = vmatpush1.bf16.msra.mxu0 0
      %5774 = vmatprep.subr.bf16.mxu0 0
      %5775 = vmatpush1.bf16.msra.mxu0 0
      %5776 = vmatprep.subr.bf16.mxu0 0
      %5777 = vmatpush1.bf16.msra.mxu0 0
      %5778 = vmatprep.subr.bf16.mxu0 0
      %5779 = vmatpush1.bf16.msra.mxu0 0
      %5780 = vmatprep.subr.bf16.mxu0 0
      %5781 = vmatpush1.bf16.msra.mxu0 0
      %5782 = vmatprep.subr.bf16.mxu0 0
      %5783 = vmatpush1.bf16.msra.mxu0 0
      %5784 = vmatprep.subr.bf16.mxu0 0
      %5785 = vmatpush1.bf16.msra.mxu0 0
      %5786 = vmatprep.subr.bf16.mxu0 0
      %5787 = vmatpush1.bf16.msra.mxu0 0
      %5788 = vmatprep.subr.bf16.mxu0 0
      %5789 = vmatpush1.bf16.msra.mxu0 0
      %5790 = vmatprep.mubr.bf16.mxu0 0
      %5791 = vmatmul.mubr.bf16.gmra.mrb[0].mxu0 %v5701
      %v5792 = vpop.f32.mrb[0].mxu0
      %v5793 = vadd.f32 %v5744, %v5792
      %v5794 = vpop.f32.mrb[0].mxu0
      %v5795 = vpop.f32.mrb[0].mxu0
      %v5796 = vadd.f32 %v5747, %v5795
      %v5797 = vpop.f32.mrb[0].mxu0
      %5798 = vmatprep.mubr.bf16.mxu0 0
      %5799 = vmatmul.mubr.bf16.gmra.mrb[0].mxu0 %v5704
      %v5800 = vpop.f32.mrb[0].mxu0
      %v5801 = vadd.f32 %v5752, %v5800
      %v5802 = vpop.f32.mrb[0].mxu0
      %v5803 = vpop.f32.mrb[0].mxu0
      %v5804 = vadd.f32 %v5755, %v5803
      %v5805 = vpop.f32.mrb[0].mxu0
      %5806 = vdwg.mxu0
      %v5807 = vmax.f32 %v5793, 0.0
      %v5808 = vmax.f32 %v5796, 0.0
      %v5809 = vmax.f32 %v5801, 0.0
      %v5810 = vmax.f32 %v5804, 0.0
      %5811 = vrot.lane.b32.xlu0 %v5807, 127
      %v5812 = vpop.permute.xlu0 %5811
      %5813 = vrot.lane.b32.xlu0 %v5808, 127
      %v5814 = vpop.permute.xlu0 %5813
      %5815 = vrot.lane.b32.xlu0 %v5809, 127
      %v5816 = vpop.permute.xlu0 %5815
      %5817 = vrot.lane.b32.xlu0 %v5810, 127
      %v5818 = vpop.permute.xlu0 %5817
      %5819 = vrot.lane.b32.xlu0 %v5807, 1
      %v5820 = vpop.permute.xlu0 %5819
      %5821 = vrot.lane.b32.xlu0 %v5808, 1
      %v5822 = vpop.permute.xlu0 %5821
      %5823 = vrot.lane.b32.xlu0 %v5809, 1
      %v5824 = vpop.permute.xlu0 %5823
      %5825 = vrot.lane.b32.xlu0 %v5810, 1
      %v5826 = vpop.permute.xlu0 %5825
      %5827 = vrot.lane.b32.xlu0 %v5820, 8
      %v5828 = vpop.permute.xlu0 %5827
      %5829 = vrot.lane.b32.xlu0 %v5822, 8
      %v5830 = vpop.permute.xlu0 %5829
      %5831 = vrot.lane.b32.xlu0 %v5824, 8
      %v5832 = vpop.permute.xlu0 %5831
      %5833 = vrot.lane.b32.xlu0 %v5826, 8
      %v5834 = vpop.permute.xlu0 %5833
      %v5835 = vld [vmem:[%s3] sm:$0x1]
      %v5836 = vlaneseq
      %v5837 = vshrl.u32 %v5836, 7
      %v5838 = vsub.s32 0, %v5837
      %v5839 = vrot.slane %v5835, %v5838
      %v5840 = vmul.f32 %v5828, %v5839
      %v5841 = vmul.f32 %v5830, %v5839
      %v5842 = vmul.f32 %v5832, %v5839
      %v5843 = vmul.f32 %v5834, %v5839
      %v5844 = vpack.c.bf16 %v5841, %v5840
      %v5845 = vpack.c.bf16 %v5843, %v5842
      %v5848 = vunpack.c.l.b16 %v5844
      %v5849 = vunpack.c.h.b16 %v5844
      %v5850 = vunpack.c.l.b16 %v5845
      %v5851 = vunpack.c.h.b16 %v5845
      %v5852 = vpack.c.b16 %v5848, %v5848
      %v5853 = vpack.c.b16 %v5849, %v5849
      %v5854 = vpack.c.b16 %v5850, %v5850
      %v5855 = vpack.c.b16 %v5851, %v5851
      %5860 = vst [vmem:[#allocation3] sm:$0xf] %v5852
      %5861 = vst [vmem:[#allocation3 + $0x4] sm:$0xf] %v5853
      %5862 = vst [vmem:[#allocation3 + $0x8] sm:$0xf] %v5854
      %5863 = vst [vmem:[#allocation3 + $0xc] sm:$0xf] %v5855
      %5864 = vrot.lane.b32.xlu0 %v5807, 8
      %v5865 = vpop.permute.xlu0 %5864
      %5866 = vrot.lane.b32.xlu0 %v5808, 8
      %v5867 = vpop.permute.xlu0 %5866
      %5868 = vrot.lane.b32.xlu0 %v5809, 8
      %v5869 = vpop.permute.xlu0 %5868
      %5870 = vrot.lane.b32.xlu0 %v5810, 8
      %v5871 = vpop.permute.xlu0 %5870
      %v5872 = vld [vmem:[%s3 + $0x1] sm:$0x1]
      %v5873 = vlaneseq
      %v5874 = vshrl.u32 %v5873, 7
      %v5875 = vsub.s32 0, %v5874
      %v5876 = vrot.slane %v5872, %v5875
      %v5877 = vmul.f32 %v5865, %v5876
      %v5878 = vmul.f32 %v5867, %v5876
      %v5879 = vmul.f32 %v5869, %v5876
      %v5880 = vmul.f32 %v5871, %v5876
      %v5881 = vpack.c.bf16 %v5878, %v5877
      %v5882 = vpack.c.bf16 %v5880, %v5879
      %v5885 = vunpack.c.l.b16 %v5881
      %v5886 = vunpack.c.h.b16 %v5881
      %v5887 = vunpack.c.l.b16 %v5882
      %v5888 = vunpack.c.h.b16 %v5882
      %v5889 = vpack.c.b16 %v5885, %v5885
      %v5890 = vpack.c.b16 %v5886, %v5886
      %v5891 = vpack.c.b16 %v5887, %v5887
      %v5892 = vpack.c.b16 %v5888, %v5888
      %5897 = vst [vmem:[#allocation3 + $0x10] sm:$0xf] %v5889
      %5898 = vst [vmem:[#allocation3 + $0x14] sm:$0xf] %v5890
      %5899 = vst [vmem:[#allocation3 + $0x18] sm:$0xf] %v5891
      %5900 = vst [vmem:[#allocation3 + $0x1c] sm:$0xf] %v5892
      %5901 = vrot.lane.b32.xlu0 %v5812, 8
      %v5902 = vpop.permute.xlu0 %5901
      %5903 = vrot.lane.b32.xlu0 %v5814, 8
      %v5904 = vpop.permute.xlu0 %5903
      %5905 = vrot.lane.b32.xlu0 %v5816, 8
      %v5906 = vpop.permute.xlu0 %5905
      %5907 = vrot.lane.b32.xlu0 %v5818, 8
      %v5908 = vpop.permute.xlu0 %5907
      %v5909 = vld [vmem:[%s3 + $0x2] sm:$0x1]
      %v5910 = vlaneseq
      %v5911 = vshrl.u32 %v5910, 7
      %v5912 = vsub.s32 0, %v5911
      %v5913 = vrot.slane %v5909, %v5912
      %v5914 = vmul.f32 %v5902, %v5913
      %v5915 = vmul.f32 %v5904, %v5913
      %v5916 = vmul.f32 %v5906, %v5913
      %v5917 = vmul.f32 %v5908, %v5913
      %v5918 = vpack.c.bf16 %v5915, %v5914
      %v5919 = vpack.c.bf16 %v5917, %v5916
      %v5922 = vunpack.c.l.b16 %v5918
      %v5923 = vunpack.c.h.b16 %v5918
      %v5924 = vunpack.c.l.b16 %v5919
      %v5925 = vunpack.c.h.b16 %v5919
      %v5926 = vpack.c.b16 %v5922, %v5922
      %v5927 = vpack.c.b16 %v5923, %v5923
      %v5928 = vpack.c.b16 %v5924, %v5924
      %v5929 = vpack.c.b16 %v5925, %v5925
      %5934 = vst [vmem:[#allocation3 + $0x20] sm:$0xf] %v5926
      %5935 = vst [vmem:[#allocation3 + $0x24] sm:$0xf] %v5927
      %5936 = vst [vmem:[#allocation3 + $0x28] sm:$0xf] %v5928
      %5937 = vst [vmem:[#allocation3 + $0x2c] sm:$0xf] %v5929
      %v5938 = vld [vmem:[%s3 + $0x3] sm:$0x1]
      %v5939 = vlaneseq
      %v5940 = vshrl.u32 %v5939, 7
      %v5941 = vsub.s32 0, %v5940
      %v5942 = vrot.slane %v5938, %v5941
      %v5943 = vmul.f32 %v5820, %v5942
      %v5944 = vmul.f32 %v5822, %v5942
      %v5945 = vmul.f32 %v5824, %v5942
      %v5946 = vmul.f32 %v5826, %v5942
      %v5947 = vpack.c.bf16 %v5944, %v5943
      %v5948 = vpack.c.bf16 %v5946, %v5945
      %v5951 = vunpack.c.l.b16 %v5947
      %v5952 = vunpack.c.h.b16 %v5947
      %v5953 = vunpack.c.l.b16 %v5948
      %v5954 = vunpack.c.h.b16 %v5948
      %v5955 = vpack.c.b16 %v5951, %v5951
      %v5956 = vpack.c.b16 %v5952, %v5952
      %v5957 = vpack.c.b16 %v5953, %v5953
      %v5958 = vpack.c.b16 %v5954, %v5954
      %5963 = vst [vmem:[#allocation3 + $0x30] sm:$0xf] %v5955
      %5964 = vst [vmem:[#allocation3 + $0x34] sm:$0xf] %v5956
      %5965 = vst [vmem:[#allocation3 + $0x38] sm:$0xf] %v5957
      %5966 = vst [vmem:[#allocation3 + $0x3c] sm:$0xf] %v5958
      %v5967 = vpack.c.bf16 %v5808, %v5807
      %v5968 = vpack.c.bf16 %v5810, %v5809
      %v5971 = vunpack.c.l.b16 %v5967
      %v5972 = vunpack.c.h.b16 %v5967
      %v5973 = vunpack.c.l.b16 %v5968
      %v5974 = vunpack.c.h.b16 %v5968
      %v5975 = vpack.c.b16 %v5971, %v5971
      %v5976 = vpack.c.b16 %v5972, %v5972
      %v5977 = vpack.c.b16 %v5973, %v5973
      %v5978 = vpack.c.b16 %v5974, %v5974
      %5983 = vst [vmem:[#allocation3 + $0x40] sm:$0xf] %v5975
      %5984 = vst [vmem:[#allocation3 + $0x44] sm:$0xf] %v5976
      %5985 = vst [vmem:[#allocation3 + $0x48] sm:$0xf] %v5977
      %5986 = vst [vmem:[#allocation3 + $0x4c] sm:$0xf] %v5978
      %v5987 = vld [vmem:[%s3 + $0x5] sm:$0x1]
      %v5988 = vlaneseq
      %v5989 = vshrl.u32 %v5988, 7
      %v5990 = vsub.s32 0, %v5989
      %v5991 = vrot.slane %v5987, %v5990
      %v5992 = vmul.f32 %v5812, %v5991
      %v5993 = vmul.f32 %v5814, %v5991
      %v5994 = vmul.f32 %v5816, %v5991
      %v5995 = vmul.f32 %v5818, %v5991
      %v5996 = vpack.c.bf16 %v5993, %v5992
      %v5997 = vpack.c.bf16 %v5995, %v5994
      %v6000 = vunpack.c.l.b16 %v5996
      %v6001 = vunpack.c.h.b16 %v5996
      %v6002 = vunpack.c.l.b16 %v5997
      %v6003 = vunpack.c.h.b16 %v5997
      %v6004 = vpack.c.b16 %v6000, %v6000
      %v6005 = vpack.c.b16 %v6001, %v6001
      %v6006 = vpack.c.b16 %v6002, %v6002
      %v6007 = vpack.c.b16 %v6003, %v6003
      %6012 = vst [vmem:[#allocation3 + $0x50] sm:$0xf] %v6004
      %6013 = vst [vmem:[#allocation3 + $0x54] sm:$0xf] %v6005
      %6014 = vst [vmem:[#allocation3 + $0x58] sm:$0xf] %v6006
      %6015 = vst [vmem:[#allocation3 + $0x5c] sm:$0xf] %v6007
      %6016 = vrot.lane.b32.xlu0 %v5820, 120
      %v6017 = vpop.permute.xlu0 %6016
      %6018 = vrot.lane.b32.xlu0 %v5822, 120
      %v6019 = vpop.permute.xlu0 %6018
      %6020 = vrot.lane.b32.xlu0 %v5824, 120
      %v6021 = vpop.permute.xlu0 %6020
      %6022 = vrot.lane.b32.xlu0 %v5826, 120
      %v6023 = vpop.permute.xlu0 %6022
      %v6024 = vld [vmem:[%s3 + $0x6] sm:$0x1]
      %v6025 = vlaneseq
      %v6026 = vshrl.u32 %v6025, 7
      %v6027 = vsub.s32 0, %v6026
      %v6028 = vrot.slane %v6024, %v6027
      %v6029 = vmul.f32 %v6017, %v6028
      %v6030 = vmul.f32 %v6019, %v6028
      %v6031 = vmul.f32 %v6021, %v6028
      %v6032 = vmul.f32 %v6023, %v6028
      %v6033 = vpack.c.bf16 %v6030, %v6029
      %v6034 = vpack.c.bf16 %v6032, %v6031
      %v6037 = vunpack.c.l.b16 %v6033
      %v6038 = vunpack.c.h.b16 %v6033
      %v6039 = vunpack.c.l.b16 %v6034
      %v6040 = vunpack.c.h.b16 %v6034
      %v6041 = vpack.c.b16 %v6037, %v6037
      %v6042 = vpack.c.b16 %v6038, %v6038
      %v6043 = vpack.c.b16 %v6039, %v6039
      %v6044 = vpack.c.b16 %v6040, %v6040
      %6049 = vst [vmem:[#allocation3 + $0x60] sm:$0xf] %v6041
      %6050 = vst [vmem:[#allocation3 + $0x64] sm:$0xf] %v6042
      %6051 = vst [vmem:[#allocation3 + $0x68] sm:$0xf] %v6043
      %6052 = vst [vmem:[#allocation3 + $0x6c] sm:$0xf] %v6044
      %6053 = vrot.lane.b32.xlu0 %v5807, 120
      %v6054 = vpop.permute.xlu0 %6053
      %6055 = vrot.lane.b32.xlu0 %v5808, 120
      %v6056 = vpop.permute.xlu0 %6055
      %6057 = vrot.lane.b32.xlu0 %v5809, 120
      %v6058 = vpop.permute.xlu0 %6057
      %6059 = vrot.lane.b32.xlu0 %v5810, 120
      %v6060 = vpop.permute.xlu0 %6059
      %v6061 = vld [vmem:[%s3 + $0x7] sm:$0x1]
      %v6062 = vlaneseq
      %v6063 = vshrl.u32 %v6062, 7
      %v6064 = vsub.s32 0, %v6063
      %v6065 = vrot.slane %v6061, %v6064
      %v6066 = vmul.f32 %v6054, %v6065
      %v6067 = vmul.f32 %v6056, %v6065
      %v6068 = vmul.f32 %v6058, %v6065
      %v6069 = vmul.f32 %v6060, %v6065
      %v6070 = vpack.c.bf16 %v6067, %v6066
      %v6071 = vpack.c.bf16 %v6069, %v6068
      %v6074 = vunpack.c.l.b16 %v6070
      %v6075 = vunpack.c.h.b16 %v6070
      %v6076 = vunpack.c.l.b16 %v6071
      %v6077 = vunpack.c.h.b16 %v6071
      %v6078 = vpack.c.b16 %v6074, %v6074
      %v6079 = vpack.c.b16 %v6075, %v6075
      %v6080 = vpack.c.b16 %v6076, %v6076
      %v6081 = vpack.c.b16 %v6077, %v6077
      %6086 = vst [vmem:[#allocation3 + $0x70] sm:$0xf] %v6078
      %6087 = vst [vmem:[#allocation3 + $0x74] sm:$0xf] %v6079
      %6088 = vst [vmem:[#allocation3 + $0x78] sm:$0xf] %v6080
      %6089 = vst [vmem:[#allocation3 + $0x7c] sm:$0xf] %v6081
      %6090 = vrot.lane.b32.xlu0 %v5812, 120
      %v6091 = vpop.permute.xlu0 %6090
      %6092 = vrot.lane.b32.xlu0 %v5814, 120
      %v6093 = vpop.permute.xlu0 %6092
      %6094 = vrot.lane.b32.xlu0 %v5816, 120
      %v6095 = vpop.permute.xlu0 %6094
      %6096 = vrot.lane.b32.xlu0 %v5818, 120
      %v6097 = vpop.permute.xlu0 %6096
      %v6098 = vld [vmem:[%s3 + $0x8] sm:$0x1]
      %v6099 = vlaneseq
      %v6100 = vshrl.u32 %v6099, 7
      %v6101 = vsub.s32 0, %v6100
      %v6102 = vrot.slane %v6098, %v6101
      %v6103 = vmul.f32 %v6091, %v6102
      %v6104 = vmul.f32 %v6093, %v6102
      %v6105 = vmul.f32 %v6095, %v6102
      %v6106 = vmul.f32 %v6097, %v6102
      %v6107 = vpack.c.bf16 %v6104, %v6103
      %v6108 = vpack.c.bf16 %v6106, %v6105
      %v6111 = vunpack.c.l.b16 %v6107
      %v6112 = vunpack.c.h.b16 %v6107
      %v6113 = vunpack.c.l.b16 %v6108
      %v6114 = vunpack.c.h.b16 %v6108
      %v6115 = vpack.c.b16 %v6111, %v6111
      %v6116 = vpack.c.b16 %v6112, %v6112
      %v6117 = vpack.c.b16 %v6113, %v6113
      %v6118 = vpack.c.b16 %v6114, %v6114
      %6123 = vst [vmem:[#allocation3 + $0x80] sm:$0xf] %v6115
      %6124 = vst [vmem:[#allocation3 + $0x84] sm:$0xf] %v6116
      %6125 = vst [vmem:[#allocation3 + $0x88] sm:$0xf] %v6117
      %6126 = vst [vmem:[#allocation3 + $0x8c] sm:$0xf] %v6118
      %s6127 = scalar_lea.vmem %s1, 384
      %v6128 = vld [vmem:[%s6127] sm:$0xff]
      %v6129 = vld [vmem:[%s6127 + $0x8] sm:$0xf]
      %v6130 = vld [vmem:[%s6127 + $0xc] sm:$0xff]
      %v6131 = vld [vmem:[%s6127 + $0x14] sm:$0xf]
      %v6132 = vld [vmem:[%s6127 + $0x18] sm:$0xff]
      %v6133 = vld [vmem:[%s6127 + $0x20] sm:$0xf]
      %v6134 = vld [vmem:[%s6127 + $0x24] sm:$0xff]
      %v6135 = vld [vmem:[%s6127 + $0x2c] sm:$0xf]
      %v6136 = vld [vmem:[#allocation3] sm:$0xf]
      %v6137 = vld [vmem:[#allocation3 + $0x4] sm:$0xf]
      %v6138 = vld [vmem:[#allocation3 + $0x8] sm:$0xf]
      %v6139 = vld [vmem:[#allocation3 + $0xc] sm:$0xf]
      %v6140 = vld [vmem:[#allocation3 + $0x10] sm:$0xf]
      %v6141 = vld [vmem:[#allocation3 + $0x14] sm:$0xf]
      %v6142 = vld [vmem:[#allocation3 + $0x18] sm:$0xf]
      %v6143 = vld [vmem:[#allocation3 + $0x1c] sm:$0xf]
      %v6144 = vld [vmem:[#allocation3 + $0x20] sm:$0xf]
      %v6145 = vld [vmem:[#allocation3 + $0x24] sm:$0xf]
      %v6146 = vld [vmem:[#allocation3 + $0x28] sm:$0xf]
      %v6147 = vld [vmem:[#allocation3 + $0x2c] sm:$0xf]
      %v6148 = vld [vmem:[#allocation3 + $0x30] sm:$0xf]
      %v6149 = vld [vmem:[#allocation3 + $0x34] sm:$0xf]
      %v6150 = vld [vmem:[#allocation3 + $0x38] sm:$0xf]
      %v6151 = vld [vmem:[#allocation3 + $0x3c] sm:$0xf]
      %v6152 = vld [vmem:[#allocation3 + $0x40] sm:$0xf]
      %v6153 = vld [vmem:[#allocation3 + $0x44] sm:$0xf]
      %v6154 = vld [vmem:[#allocation3 + $0x48] sm:$0xf]
      %v6155 = vld [vmem:[#allocation3 + $0x4c] sm:$0xf]
      %v6156 = vld [vmem:[#allocation3 + $0x50] sm:$0xf]
      %v6157 = vld [vmem:[#allocation3 + $0x54] sm:$0xf]
      %v6158 = vld [vmem:[#allocation3 + $0x58] sm:$0xf]
      %v6159 = vld [vmem:[#allocation3 + $0x5c] sm:$0xf]
      %v6160 = vld [vmem:[#allocation3 + $0x60] sm:$0xf]
      %v6161 = vld [vmem:[#allocation3 + $0x64] sm:$0xf]
      %v6162 = vld [vmem:[#allocation3 + $0x68] sm:$0xf]
      %v6163 = vld [vmem:[#allocation3 + $0x6c] sm:$0xf]
      %v6164 = vld [vmem:[#allocation3 + $0x70] sm:$0xf]
      %v6165 = vld [vmem:[#allocation3 + $0x74] sm:$0xf]
      %v6166 = vld [vmem:[#allocation3 + $0x78] sm:$0xf]
      %v6167 = vld [vmem:[#allocation3 + $0x7c] sm:$0xf]
      %v6168 = vld [vmem:[#allocation3 + $0x80] sm:$0xf]
      %v6169 = vld [vmem:[#allocation3 + $0x84] sm:$0xf]
      %v6170 = vld [vmem:[#allocation3 + $0x88] sm:$0xf]
      %v6171 = vld [vmem:[#allocation3 + $0x8c] sm:$0xf]
      %v6172 = vld [vmem:[#allocation3 + $0x90] sm:$0xf]
      %v6181 = vunpack.c.l.b16 %v6128
      %v6182 = vunpack.c.h.b16 %v6128
      %v6183 = vunpack.c.l.b16 %v6129
      %v6184 = vunpack.c.l.b16 %v6130
      %v6185 = vunpack.c.h.b16 %v6130
      %v6186 = vunpack.c.l.b16 %v6131
      %v6187 = vunpack.c.l.b16 %v6132
      %v6188 = vunpack.c.h.b16 %v6132
      %v6189 = vunpack.c.l.b16 %v6133
      %v6190 = vunpack.c.l.b16 %v6134
      %v6191 = vunpack.c.h.b16 %v6134
      %v6192 = vunpack.c.l.b16 %v6135
      %v6193 = vpack.c.b16 %v6184, %v6181
      %v6194 = vpack.c.b16 %v6185, %v6182
      %v6195 = vpack.c.b16 %v6186, %v6183
      %v6196 = vpack.c.b16 %v6190, %v6187
      %v6197 = vpack.c.b16 %v6191, %v6188
      %v6198 = vpack.c.b16 %v6192, %v6189
      %v6240 = vunpack.c.l.b16 %v6136
      %v6241 = vunpack.c.l.b16 %v6137
      %v6242 = vunpack.c.l.b16 %v6138
      %v6243 = vunpack.c.l.b16 %v6139
      %v6244 = vunpack.c.l.b16 %v6140
      %v6245 = vunpack.c.l.b16 %v6141
      %v6246 = vunpack.c.l.b16 %v6142
      %v6247 = vunpack.c.l.b16 %v6143
      %v6248 = vunpack.c.l.b16 %v6144
      %v6249 = vunpack.c.l.b16 %v6145
      %v6250 = vunpack.c.l.b16 %v6146
      %v6251 = vunpack.c.l.b16 %v6147
      %v6252 = vunpack.c.l.b16 %v6148
      %v6253 = vunpack.c.l.b16 %v6149
      %v6254 = vunpack.c.l.b16 %v6150
      %v6255 = vunpack.c.l.b16 %v6151
      %v6256 = vunpack.c.l.b16 %v6152
      %v6257 = vunpack.c.l.b16 %v6153
      %v6258 = vunpack.c.l.b16 %v6154
      %v6259 = vunpack.c.l.b16 %v6155
      %v6260 = vunpack.c.l.b16 %v6156
      %v6261 = vunpack.c.l.b16 %v6157
      %v6262 = vunpack.c.l.b16 %v6158
      %v6263 = vunpack.c.l.b16 %v6159
      %v6264 = vunpack.c.l.b16 %v6160
      %v6265 = vunpack.c.l.b16 %v6161
      %v6266 = vunpack.c.l.b16 %v6162
      %v6267 = vunpack.c.l.b16 %v6163
      %v6268 = vunpack.c.l.b16 %v6164
      %v6269 = vunpack.c.l.b16 %v6165
      %v6270 = vunpack.c.l.b16 %v6166
      %v6271 = vunpack.c.l.b16 %v6167
      %v6272 = vunpack.c.l.b16 %v6168
      %v6273 = vunpack.c.l.b16 %v6169
      %v6274 = vunpack.c.l.b16 %v6170
      %v6275 = vunpack.c.l.b16 %v6171
      %v6276 = vunpack.c.l.b16 %v6172
      %v6277 = vpack.c.b16 %v6241, %v6240
      %v6278 = vpack.c.b16 %v6243, %v6242
      %v6279 = vpack.c.b16 %v6245, %v6244
      %v6280 = vpack.c.b16 %v6247, %v6246
      %v6281 = vpack.c.b16 %v6249, %v6248
      %v6282 = vpack.c.b16 %v6251, %v6250
      %v6283 = vpack.c.b16 %v6253, %v6252
      %v6284 = vpack.c.b16 %v6255, %v6254
      %v6285 = vpack.c.b16 %v6257, %v6256
      %v6286 = vpack.c.b16 %v6259, %v6258
      %v6287 = vpack.c.b16 %v6261, %v6260
      %v6288 = vpack.c.b16 %v6263, %v6262
      %v6289 = vpack.c.b16 %v6265, %v6264
      %v6290 = vpack.c.b16 %v6267, %v6266
      %v6291 = vpack.c.b16 %v6269, %v6268
      %v6292 = vpack.c.b16 %v6271, %v6270
      %v6293 = vpack.c.b16 %v6273, %v6272
      %v6294 = vpack.c.b16 %v6275, %v6274
      %v6295 = vpack.c.b16 %v6276, %v6276
      %v6315 = vsel %vm1127, %v6195, 0
      %v6318 = vsel %vm1127, %v6198, 0
      %v6321 = vsel %vm1134, %v6295, 0
      %6323 = vmatprep.subr.bf16.mxu0 0
      %6324 = vmatpush1.bf16.msra.mxu0 %v6277
      %6325 = vmatprep.subr.bf16.mxu0 0
      %6326 = vmatpush1.bf16.msra.mxu0 %v6278
      %6327 = vmatprep.subr.bf16.mxu0 0
      %6328 = vmatpush1.bf16.msra.mxu0 %v6279
      %6329 = vmatprep.subr.bf16.mxu0 0
      %6330 = vmatpush1.bf16.msra.mxu0 %v6280
      %6331 = vmatprep.subr.bf16.mxu0 0
      %6332 = vmatpush1.bf16.msra.mxu0 %v6281
      %6333 = vmatprep.subr.bf16.mxu0 0
      %6334 = vmatpush1.bf16.msra.mxu0 %v6282
      %6335 = vmatprep.subr.bf16.mxu0 0
      %6336 = vmatpush1.bf16.msra.mxu0 %v6283
      %6337 = vmatprep.subr.bf16.mxu0 0
      %6338 = vmatpush1.bf16.msra.mxu0 %v6284
      %6339 = vmatprep.subr.bf16.mxu0 0
      %6340 = vmatpush1.bf16.msra.mxu0 %v6285
      %6341 = vmatprep.subr.bf16.mxu0 0
      %6342 = vmatpush1.bf16.msra.mxu0 %v6286
      %6343 = vmatprep.subr.bf16.mxu0 0
      %6344 = vmatpush1.bf16.msra.mxu0 %v6287
      %6345 = vmatprep.subr.bf16.mxu0 0
      %6346 = vmatpush1.bf16.msra.mxu0 %v6288
      %6347 = vmatprep.subr.bf16.mxu0 0
      %6348 = vmatpush1.bf16.msra.mxu0 %v6289
      %6349 = vmatprep.subr.bf16.mxu0 0
      %6350 = vmatpush1.bf16.msra.mxu0 %v6290
      %6351 = vmatprep.subr.bf16.mxu0 0
      %6352 = vmatpush1.bf16.msra.mxu0 %v6291
      %6353 = vmatprep.subr.bf16.mxu0 0
      %6354 = vmatpush1.bf16.msra.mxu0 %v6292
      %6355 = vmatprep.mubr.bf16.mxu0 %v6194
      %6356 = vmatmul.mubr.bf16.gmra.mrb[0].mxu0 %v6193
      %v6357 = vpop.f32.mrb[0].mxu0
      %v6358 = vadd.f32 %v5183, %v6357
      %v6359 = vpop.f32.mrb[0].mxu0
      %v6360 = vpop.f32.mrb[0].mxu0
      %v6361 = vadd.f32 %v5186, %v6360
      %v6362 = vpop.f32.mrb[0].mxu0
      %6363 = vmatprep.mubr.bf16.mxu0 %v6197
      %6364 = vmatmul.mubr.bf16.gmra.mrb[0].mxu0 %v6196
      %v6365 = vpop.f32.mrb[0].mxu0
      %v6366 = vadd.f32 %v5191, %v6365
      %v6367 = vpop.f32.mrb[0].mxu0
      %v6368 = vpop.f32.mrb[0].mxu0
      %v6369 = vadd.f32 %v5194, %v6368
      %v6370 = vpop.f32.mrb[0].mxu0
      %6371 = vdwg.mxu0
      %6372 = vmatprep.subr.bf16.mxu0 0
      %6373 = vmatpush1.bf16.msra.mxu0 %v6293
      %6374 = vmatprep.subr.bf16.mxu0 0
      %6375 = vmatpush1.bf16.msra.mxu0 %v6294
      %6376 = vmatprep.subr.bf16.mxu0 0
      %6377 = vmatpush1.bf16.msra.mxu0 %v6321
      %6378 = vmatprep.subr.bf16.mxu0 0
      %6379 = vmatpush1.bf16.msra.mxu0 0
      %6380 = vmatprep.subr.bf16.mxu0 0
      %6381 = vmatpush1.bf16.msra.mxu0 0
      %6382 = vmatprep.subr.bf16.mxu0 0
      %6383 = vmatpush1.bf16.msra.mxu0 0
      %6384 = vmatprep.subr.bf16.mxu0 0
      %6385 = vmatpush1.bf16.msra.mxu0 0
      %6386 = vmatprep.subr.bf16.mxu0 0
      %6387 = vmatpush1.bf16.msra.mxu0 0
      %6388 = vmatprep.subr.bf16.mxu0 0
      %6389 = vmatpush1.bf16.msra.mxu0 0
      %6390 = vmatprep.subr.bf16.mxu0 0
      %6391 = vmatpush1.bf16.msra.mxu0 0
      %6392 = vmatprep.subr.bf16.mxu0 0
      %6393 = vmatpush1.bf16.msra.mxu0 0
      %6394 = vmatprep.subr.bf16.mxu0 0
      %6395 = vmatpush1.bf16.msra.mxu0 0
      %6396 = vmatprep.subr.bf16.mxu0 0
      %6397 = vmatpush1.bf16.msra.mxu0 0
      %6398 = vmatprep.subr.bf16.mxu0 0
      %6399 = vmatpush1.bf16.msra.mxu0 0
      %6400 = vmatprep.subr.bf16.mxu0 0
      %6401 = vmatpush1.bf16.msra.mxu0 0
      %6402 = vmatprep.subr.bf16.mxu0 0
      %6403 = vmatpush1.bf16.msra.mxu0 0
      %6404 = vmatprep.mubr.bf16.mxu0 0
      %6405 = vmatmul.mubr.bf16.gmra.mrb[0].mxu0 %v6315
      %v6406 = vpop.f32.mrb[0].mxu0
      %v6407 = vadd.f32 %v6358, %v6406
      %v6408 = vpop.f32.mrb[0].mxu0
      %v6409 = vpop.f32.mrb[0].mxu0
      %v6410 = vadd.f32 %v6361, %v6409
      %v6411 = vpop.f32.mrb[0].mxu0
      %6412 = vmatprep.mubr.bf16.mxu0 0
      %6413 = vmatmul.mubr.bf16.gmra.mrb[0].mxu0 %v6318
      %v6414 = vpop.f32.mrb[0].mxu0
      %v6415 = vadd.f32 %v6366, %v6414
      %v6416 = vpop.f32.mrb[0].mxu0
      %v6417 = vpop.f32.mrb[0].mxu0
      %v6418 = vadd.f32 %v6369, %v6417
      %v6419 = vpop.f32.mrb[0].mxu0
      %6420 = vdwg.mxu0
      %6421 = vrot.lane.b32.xlu0 %v6407, 127
      %v6422 = vpop.permute.xlu0 %6421
      %6423 = vrot.lane.b32.xlu0 %v6410, 127
      %v6424 = vpop.permute.xlu0 %6423
      %6425 = vrot.lane.b32.xlu0 %v6415, 127
      %v6426 = vpop.permute.xlu0 %6425
      %6427 = vrot.lane.b32.xlu0 %v6418, 127
      %v6428 = vpop.permute.xlu0 %6427
      %6429 = vrot.lane.b32.xlu0 %v6407, 1
      %v6430 = vpop.permute.xlu0 %6429
      %6431 = vrot.lane.b32.xlu0 %v6410, 1
      %v6432 = vpop.permute.xlu0 %6431
      %6433 = vrot.lane.b32.xlu0 %v6415, 1
      %v6434 = vpop.permute.xlu0 %6433
      %6435 = vrot.lane.b32.xlu0 %v6418, 1
      %v6436 = vpop.permute.xlu0 %6435
      %6437 = vrot.lane.b32.xlu0 %v6430, 8
      %v6438 = vpop.permute.xlu0 %6437
      %6439 = vrot.lane.b32.xlu0 %v6432, 8
      %v6440 = vpop.permute.xlu0 %6439
      %6441 = vrot.lane.b32.xlu0 %v6434, 8
      %v6442 = vpop.permute.xlu0 %6441
      %6443 = vrot.lane.b32.xlu0 %v6436, 8
      %v6444 = vpop.permute.xlu0 %6443
      %v6445 = vld [vmem:[%s3] sm:$0x1]
      %v6446 = vlaneseq
      %v6447 = vshrl.u32 %v6446, 7
      %v6448 = vsub.s32 0, %v6447
      %v6449 = vrot.slane %v6445, %v6448
      %v6450 = vmul.f32 %v6438, %v6449
      %v6451 = vmul.f32 %v6440, %v6449
      %v6452 = vmul.f32 %v6442, %v6449
      %v6453 = vmul.f32 %v6444, %v6449
      %v6454 = vpack.c.bf16 %v6451, %v6450
      %v6455 = vpack.c.bf16 %v6453, %v6452
      %v6458 = vunpack.c.l.b16 %v6454
      %v6459 = vunpack.c.h.b16 %v6454
      %v6460 = vunpack.c.l.b16 %v6455
      %v6461 = vunpack.c.h.b16 %v6455
      %v6462 = vpack.c.b16 %v6458, %v6458
      %v6463 = vpack.c.b16 %v6459, %v6459
      %v6464 = vpack.c.b16 %v6460, %v6460
      %v6465 = vpack.c.b16 %v6461, %v6461
      %6470 = vst [vmem:[#allocation3] sm:$0xf] %v6462
      %6471 = vst [vmem:[#allocation3 + $0x4] sm:$0xf] %v6463
      %6472 = vst [vmem:[#allocation3 + $0x8] sm:$0xf] %v6464
      %6473 = vst [vmem:[#allocation3 + $0xc] sm:$0xf] %v6465
      %6474 = vrot.lane.b32.xlu0 %v6407, 8
      %v6475 = vpop.permute.xlu0 %6474
      %6476 = vrot.lane.b32.xlu0 %v6410, 8
      %v6477 = vpop.permute.xlu0 %6476
      %6478 = vrot.lane.b32.xlu0 %v6415, 8
      %v6479 = vpop.permute.xlu0 %6478
      %6480 = vrot.lane.b32.xlu0 %v6418, 8
      %v6481 = vpop.permute.xlu0 %6480
      %v6482 = vld [vmem:[%s3 + $0x1] sm:$0x1]
      %v6483 = vlaneseq
      %v6484 = vshrl.u32 %v6483, 7
      %v6485 = vsub.s32 0, %v6484
      %v6486 = vrot.slane %v6482, %v6485
      %v6487 = vmul.f32 %v6475, %v6486
      %v6488 = vmul.f32 %v6477, %v6486
      %v6489 = vmul.f32 %v6479, %v6486
      %v6490 = vmul.f32 %v6481, %v6486
      %v6491 = vpack.c.bf16 %v6488, %v6487
      %v6492 = vpack.c.bf16 %v6490, %v6489
      %v6495 = vunpack.c.l.b16 %v6491
      %v6496 = vunpack.c.h.b16 %v6491
      %v6497 = vunpack.c.l.b16 %v6492
      %v6498 = vunpack.c.h.b16 %v6492
      %v6499 = vpack.c.b16 %v6495, %v6495
      %v6500 = vpack.c.b16 %v6496, %v6496
      %v6501 = vpack.c.b16 %v6497, %v6497
      %v6502 = vpack.c.b16 %v6498, %v6498
      %6507 = vst [vmem:[#allocation3 + $0x10] sm:$0xf] %v6499
      %6508 = vst [vmem:[#allocation3 + $0x14] sm:$0xf] %v6500
      %6509 = vst [vmem:[#allocation3 + $0x18] sm:$0xf] %v6501
      %6510 = vst [vmem:[#allocation3 + $0x1c] sm:$0xf] %v6502
      %6511 = vrot.lane.b32.xlu0 %v6422, 8
      %v6512 = vpop.permute.xlu0 %6511
      %6513 = vrot.lane.b32.xlu0 %v6424, 8
      %v6514 = vpop.permute.xlu0 %6513
      %6515 = vrot.lane.b32.xlu0 %v6426, 8
      %v6516 = vpop.permute.xlu0 %6515
      %6517 = vrot.lane.b32.xlu0 %v6428, 8
      %v6518 = vpop.permute.xlu0 %6517
      %v6519 = vld [vmem:[%s3 + $0x2] sm:$0x1]
      %v6520 = vlaneseq
      %v6521 = vshrl.u32 %v6520, 7
      %v6522 = vsub.s32 0, %v6521
      %v6523 = vrot.slane %v6519, %v6522
      %v6524 = vmul.f32 %v6512, %v6523
      %v6525 = vmul.f32 %v6514, %v6523
      %v6526 = vmul.f32 %v6516, %v6523
      %v6527 = vmul.f32 %v6518, %v6523
      %v6528 = vpack.c.bf16 %v6525, %v6524
      %v6529 = vpack.c.bf16 %v6527, %v6526
      %v6532 = vunpack.c.l.b16 %v6528
      %v6533 = vunpack.c.h.b16 %v6528
      %v6534 = vunpack.c.l.b16 %v6529
      %v6535 = vunpack.c.h.b16 %v6529
      %v6536 = vpack.c.b16 %v6532, %v6532
      %v6537 = vpack.c.b16 %v6533, %v6533
      %v6538 = vpack.c.b16 %v6534, %v6534
      %v6539 = vpack.c.b16 %v6535, %v6535
      %6544 = vst [vmem:[#allocation3 + $0x20] sm:$0xf] %v6536
      %6545 = vst [vmem:[#allocation3 + $0x24] sm:$0xf] %v6537
      %6546 = vst [vmem:[#allocation3 + $0x28] sm:$0xf] %v6538
      %6547 = vst [vmem:[#allocation3 + $0x2c] sm:$0xf] %v6539
      %v6548 = vld [vmem:[%s3 + $0x3] sm:$0x1]
      %v6549 = vlaneseq
      %v6550 = vshrl.u32 %v6549, 7
      %v6551 = vsub.s32 0, %v6550
      %v6552 = vrot.slane %v6548, %v6551
      %v6553 = vmul.f32 %v6430, %v6552
      %v6554 = vmul.f32 %v6432, %v6552
      %v6555 = vmul.f32 %v6434, %v6552
      %v6556 = vmul.f32 %v6436, %v6552
      %v6557 = vpack.c.bf16 %v6554, %v6553
      %v6558 = vpack.c.bf16 %v6556, %v6555
      %v6561 = vunpack.c.l.b16 %v6557
      %v6562 = vunpack.c.h.b16 %v6557
      %v6563 = vunpack.c.l.b16 %v6558
      %v6564 = vunpack.c.h.b16 %v6558
      %v6565 = vpack.c.b16 %v6561, %v6561
      %v6566 = vpack.c.b16 %v6562, %v6562
      %v6567 = vpack.c.b16 %v6563, %v6563
      %v6568 = vpack.c.b16 %v6564, %v6564
      %6573 = vst [vmem:[#allocation3 + $0x30] sm:$0xf] %v6565
      %6574 = vst [vmem:[#allocation3 + $0x34] sm:$0xf] %v6566
      %6575 = vst [vmem:[#allocation3 + $0x38] sm:$0xf] %v6567
      %6576 = vst [vmem:[#allocation3 + $0x3c] sm:$0xf] %v6568
      %v6577 = vpack.c.bf16 %v6410, %v6407
      %v6578 = vpack.c.bf16 %v6418, %v6415
      %v6581 = vunpack.c.l.b16 %v6577
      %v6582 = vunpack.c.h.b16 %v6577
      %v6583 = vunpack.c.l.b16 %v6578
      %v6584 = vunpack.c.h.b16 %v6578
      %v6585 = vpack.c.b16 %v6581, %v6581
      %v6586 = vpack.c.b16 %v6582, %v6582
      %v6587 = vpack.c.b16 %v6583, %v6583
      %v6588 = vpack.c.b16 %v6584, %v6584
      %6593 = vst [vmem:[#allocation3 + $0x40] sm:$0xf] %v6585
      %6594 = vst [vmem:[#allocation3 + $0x44] sm:$0xf] %v6586
      %6595 = vst [vmem:[#allocation3 + $0x48] sm:$0xf] %v6587
      %6596 = vst [vmem:[#allocation3 + $0x4c] sm:$0xf] %v6588
      %v6597 = vld [vmem:[%s3 + $0x5] sm:$0x1]
      %v6598 = vlaneseq
      %v6599 = vshrl.u32 %v6598, 7
      %v6600 = vsub.s32 0, %v6599
      %v6601 = vrot.slane %v6597, %v6600
      %v6602 = vmul.f32 %v6422, %v6601
      %v6603 = vmul.f32 %v6424, %v6601
      %v6604 = vmul.f32 %v6426, %v6601
      %v6605 = vmul.f32 %v6428, %v6601
      %v6606 = vpack.c.bf16 %v6603, %v6602
      %v6607 = vpack.c.bf16 %v6605, %v6604
      %v6610 = vunpack.c.l.b16 %v6606
      %v6611 = vunpack.c.h.b16 %v6606
      %v6612 = vunpack.c.l.b16 %v6607
      %v6613 = vunpack.c.h.b16 %v6607
      %v6614 = vpack.c.b16 %v6610, %v6610
      %v6615 = vpack.c.b16 %v6611, %v6611
      %v6616 = vpack.c.b16 %v6612, %v6612
      %v6617 = vpack.c.b16 %v6613, %v6613
      %6622 = vst [vmem:[#allocation3 + $0x50] sm:$0xf] %v6614
      %6623 = vst [vmem:[#allocation3 + $0x54] sm:$0xf] %v6615
      %6624 = vst [vmem:[#allocation3 + $0x58] sm:$0xf] %v6616
      %6625 = vst [vmem:[#allocation3 + $0x5c] sm:$0xf] %v6617
      %6626 = vrot.lane.b32.xlu0 %v6430, 120
      %v6627 = vpop.permute.xlu0 %6626
      %6628 = vrot.lane.b32.xlu0 %v6432, 120
      %v6629 = vpop.permute.xlu0 %6628
      %6630 = vrot.lane.b32.xlu0 %v6434, 120
      %v6631 = vpop.permute.xlu0 %6630
      %6632 = vrot.lane.b32.xlu0 %v6436, 120
      %v6633 = vpop.permute.xlu0 %6632
      %v6634 = vld [vmem:[%s3 + $0x6] sm:$0x1]
      %v6635 = vlaneseq
      %v6636 = vshrl.u32 %v6635, 7
      %v6637 = vsub.s32 0, %v6636
      %v6638 = vrot.slane %v6634, %v6637
      %v6639 = vmul.f32 %v6627, %v6638
      %v6640 = vmul.f32 %v6629, %v6638
      %v6641 = vmul.f32 %v6631, %v6638
      %v6642 = vmul.f32 %v6633, %v6638
      %v6643 = vpack.c.bf16 %v6640, %v6639
      %v6644 = vpack.c.bf16 %v6642, %v6641
      %v6647 = vunpack.c.l.b16 %v6643
      %v6648 = vunpack.c.h.b16 %v6643
      %v6649 = vunpack.c.l.b16 %v6644
      %v6650 = vunpack.c.h.b16 %v6644
      %v6651 = vpack.c.b16 %v6647, %v6647
      %v6652 = vpack.c.b16 %v6648, %v6648
      %v6653 = vpack.c.b16 %v6649, %v6649
      %v6654 = vpack.c.b16 %v6650, %v6650
      %6659 = vst [vmem:[#allocation3 + $0x60] sm:$0xf] %v6651
      %6660 = vst [vmem:[#allocation3 + $0x64] sm:$0xf] %v6652
      %6661 = vst [vmem:[#allocation3 + $0x68] sm:$0xf] %v6653
      %6662 = vst [vmem:[#allocation3 + $0x6c] sm:$0xf] %v6654
      %6663 = vrot.lane.b32.xlu0 %v6407, 120
      %v6664 = vpop.permute.xlu0 %6663
      %6665 = vrot.lane.b32.xlu0 %v6410, 120
      %v6666 = vpop.permute.xlu0 %6665
      %6667 = vrot.lane.b32.xlu0 %v6415, 120
      %v6668 = vpop.permute.xlu0 %6667
      %6669 = vrot.lane.b32.xlu0 %v6418, 120
      %v6670 = vpop.permute.xlu0 %6669
      %v6671 = vld [vmem:[%s3 + $0x7] sm:$0x1]
      %v6672 = vlaneseq
      %v6673 = vshrl.u32 %v6672, 7
      %v6674 = vsub.s32 0, %v6673
      %v6675 = vrot.slane %v6671, %v6674
      %v6676 = vmul.f32 %v6664, %v6675
      %v6677 = vmul.f32 %v6666, %v6675
      %v6678 = vmul.f32 %v6668, %v6675
      %v6679 = vmul.f32 %v6670, %v6675
      %v6680 = vpack.c.bf16 %v6677, %v6676
      %v6681 = vpack.c.bf16 %v6679, %v6678
      %v6684 = vunpack.c.l.b16 %v6680
      %v6685 = vunpack.c.h.b16 %v6680
      %v6686 = vunpack.c.l.b16 %v6681
      %v6687 = vunpack.c.h.b16 %v6681
      %v6688 = vpack.c.b16 %v6684, %v6684
      %v6689 = vpack.c.b16 %v6685, %v6685
      %v6690 = vpack.c.b16 %v6686, %v6686
      %v6691 = vpack.c.b16 %v6687, %v6687
      %6696 = vst [vmem:[#allocation3 + $0x70] sm:$0xf] %v6688
      %6697 = vst [vmem:[#allocation3 + $0x74] sm:$0xf] %v6689
      %6698 = vst [vmem:[#allocation3 + $0x78] sm:$0xf] %v6690
      %6699 = vst [vmem:[#allocation3 + $0x7c] sm:$0xf] %v6691
      %6700 = vrot.lane.b32.xlu0 %v6422, 120
      %v6701 = vpop.permute.xlu0 %6700
      %6702 = vrot.lane.b32.xlu0 %v6424, 120
      %v6703 = vpop.permute.xlu0 %6702
      %6704 = vrot.lane.b32.xlu0 %v6426, 120
      %v6705 = vpop.permute.xlu0 %6704
      %6706 = vrot.lane.b32.xlu0 %v6428, 120
      %v6707 = vpop.permute.xlu0 %6706
      %v6708 = vld [vmem:[%s3 + $0x8] sm:$0x1]
      %v6709 = vlaneseq
      %v6710 = vshrl.u32 %v6709, 7
      %v6711 = vsub.s32 0, %v6710
      %v6712 = vrot.slane %v6708, %v6711
      %v6713 = vmul.f32 %v6701, %v6712
      %v6714 = vmul.f32 %v6703, %v6712
      %v6715 = vmul.f32 %v6705, %v6712
      %v6716 = vmul.f32 %v6707, %v6712
      %v6717 = vpack.c.bf16 %v6714, %v6713
      %v6718 = vpack.c.bf16 %v6716, %v6715
      %v6721 = vunpack.c.l.b16 %v6717
      %v6722 = vunpack.c.h.b16 %v6717
      %v6723 = vunpack.c.l.b16 %v6718
      %v6724 = vunpack.c.h.b16 %v6718
      %v6725 = vpack.c.b16 %v6721, %v6721
      %v6726 = vpack.c.b16 %v6722, %v6722
      %v6727 = vpack.c.b16 %v6723, %v6723
      %v6728 = vpack.c.b16 %v6724, %v6724
      %6733 = vst [vmem:[#allocation3 + $0x80] sm:$0xf] %v6725
      %6734 = vst [vmem:[#allocation3 + $0x84] sm:$0xf] %v6726
      %6735 = vst [vmem:[#allocation3 + $0x88] sm:$0xf] %v6727
      %6736 = vst [vmem:[#allocation3 + $0x8c] sm:$0xf] %v6728
      %s6737 = scalar_lea.vmem %s1, 432
      %v6738 = vld [vmem:[%s6737] sm:$0xff]
      %v6739 = vld [vmem:[%s6737 + $0x8] sm:$0xf]
      %v6740 = vld [vmem:[%s6737 + $0xc] sm:$0xff]
      %v6741 = vld [vmem:[%s6737 + $0x14] sm:$0xf]
      %v6742 = vld [vmem:[%s6737 + $0x18] sm:$0xff]
      %v6743 = vld [vmem:[%s6737 + $0x20] sm:$0xf]
      %v6744 = vld [vmem:[%s6737 + $0x24] sm:$0xff]
      %v6745 = vld [vmem:[%s6737 + $0x2c] sm:$0xf]
      %v6746 = vld [vmem:[#allocation3] sm:$0xf]
      %v6747 = vld [vmem:[#allocation3 + $0x4] sm:$0xf]
      %v6748 = vld [vmem:[#allocation3 + $0x8] sm:$0xf]
      %v6749 = vld [vmem:[#allocation3 + $0xc] sm:$0xf]
      %v6750 = vld [vmem:[#allocation3 + $0x10] sm:$0xf]
      %v6751 = vld [vmem:[#allocation3 + $0x14] sm:$0xf]
      %v6752 = vld [vmem:[#allocation3 + $0x18] sm:$0xf]
      %v6753 = vld [vmem:[#allocation3 + $0x1c] sm:$0xf]
      %v6754 = vld [vmem:[#allocation3 + $0x20] sm:$0xf]
      %v6755 = vld [vmem:[#allocation3 + $0x24] sm:$0xf]
      %v6756 = vld [vmem:[#allocation3 + $0x28] sm:$0xf]
      %v6757 = vld [vmem:[#allocation3 + $0x2c] sm:$0xf]
      %v6758 = vld [vmem:[#allocation3 + $0x30] sm:$0xf]
      %v6759 = vld [vmem:[#allocation3 + $0x34] sm:$0xf]
      %v6760 = vld [vmem:[#allocation3 + $0x38] sm:$0xf]
      %v6761 = vld [vmem:[#allocation3 + $0x3c] sm:$0xf]
      %v6762 = vld [vmem:[#allocation3 + $0x40] sm:$0xf]
      %v6763 = vld [vmem:[#allocation3 + $0x44] sm:$0xf]
      %v6764 = vld [vmem:[#allocation3 + $0x48] sm:$0xf]
      %v6765 = vld [vmem:[#allocation3 + $0x4c] sm:$0xf]
      %v6766 = vld [vmem:[#allocation3 + $0x50] sm:$0xf]
      %v6767 = vld [vmem:[#allocation3 + $0x54] sm:$0xf]
      %v6768 = vld [vmem:[#allocation3 + $0x58] sm:$0xf]
      %v6769 = vld [vmem:[#allocation3 + $0x5c] sm:$0xf]
      %v6770 = vld [vmem:[#allocation3 + $0x60] sm:$0xf]
      %v6771 = vld [vmem:[#allocation3 + $0x64] sm:$0xf]
      %v6772 = vld [vmem:[#allocation3 + $0x68] sm:$0xf]
      %v6773 = vld [vmem:[#allocation3 + $0x6c] sm:$0xf]
      %v6774 = vld [vmem:[#allocation3 + $0x70] sm:$0xf]
      %v6775 = vld [vmem:[#allocation3 + $0x74] sm:$0xf]
      %v6776 = vld [vmem:[#allocation3 + $0x78] sm:$0xf]
      %v6777 = vld [vmem:[#allocation3 + $0x7c] sm:$0xf]
      %v6778 = vld [vmem:[#allocation3 + $0x80] sm:$0xf]
      %v6779 = vld [vmem:[#allocation3 + $0x84] sm:$0xf]
      %v6780 = vld [vmem:[#allocation3 + $0x88] sm:$0xf]
      %v6781 = vld [vmem:[#allocation3 + $0x8c] sm:$0xf]
      %v6782 = vld [vmem:[#allocation3 + $0x90] sm:$0xf]
      %v6791 = vunpack.c.l.b16 %v6738
      %v6792 = vunpack.c.h.b16 %v6738
      %v6793 = vunpack.c.l.b16 %v6739
      %v6794 = vunpack.c.l.b16 %v6740
      %v6795 = vunpack.c.h.b16 %v6740
      %v6796 = vunpack.c.l.b16 %v6741
      %v6797 = vunpack.c.l.b16 %v6742
      %v6798 = vunpack.c.h.b16 %v6742
      %v6799 = vunpack.c.l.b16 %v6743
      %v6800 = vunpack.c.l.b16 %v6744
      %v6801 = vunpack.c.h.b16 %v6744
      %v6802 = vunpack.c.l.b16 %v6745
      %v6803 = vpack.c.b16 %v6794, %v6791
      %v6804 = vpack.c.b16 %v6795, %v6792
      %v6805 = vpack.c.b16 %v6796, %v6793
      %v6806 = vpack.c.b16 %v6800, %v6797
      %v6807 = vpack.c.b16 %v6801, %v6798
      %v6808 = vpack.c.b16 %v6802, %v6799
      %v6850 = vunpack.c.l.b16 %v6746
      %v6851 = vunpack.c.l.b16 %v6747
      %v6852 = vunpack.c.l.b16 %v6748
      %v6853 = vunpack.c.l.b16 %v6749
      %v6854 = vunpack.c.l.b16 %v6750
      %v6855 = vunpack.c.l.b16 %v6751
      %v6856 = vunpack.c.l.b16 %v6752
      %v6857 = vunpack.c.l.b16 %v6753
      %v6858 = vunpack.c.l.b16 %v6754
      %v6859 = vunpack.c.l.b16 %v6755
      %v6860 = vunpack.c.l.b16 %v6756
      %v6861 = vunpack.c.l.b16 %v6757
      %v6862 = vunpack.c.l.b16 %v6758
      %v6863 = vunpack.c.l.b16 %v6759
      %v6864 = vunpack.c.l.b16 %v6760
      %v6865 = vunpack.c.l.b16 %v6761
      %v6866 = vunpack.c.l.b16 %v6762
      %v6867 = vunpack.c.l.b16 %v6763
      %v6868 = vunpack.c.l.b16 %v6764
      %v6869 = vunpack.c.l.b16 %v6765
      %v6870 = vunpack.c.l.b16 %v6766
      %v6871 = vunpack.c.l.b16 %v6767
      %v6872 = vunpack.c.l.b16 %v6768
      %v6873 = vunpack.c.l.b16 %v6769
      %v6874 = vunpack.c.l.b16 %v6770
      %v6875 = vunpack.c.l.b16 %v6771
      %v6876 = vunpack.c.l.b16 %v6772
      %v6877 = vunpack.c.l.b16 %v6773
      %v6878 = vunpack.c.l.b16 %v6774
      %v6879 = vunpack.c.l.b16 %v6775
      %v6880 = vunpack.c.l.b16 %v6776
      %v6881 = vunpack.c.l.b16 %v6777
      %v6882 = vunpack.c.l.b16 %v6778
      %v6883 = vunpack.c.l.b16 %v6779
      %v6884 = vunpack.c.l.b16 %v6780
      %v6885 = vunpack.c.l.b16 %v6781
      %v6886 = vunpack.c.l.b16 %v6782
      %v6887 = vpack.c.b16 %v6851, %v6850
      %v6888 = vpack.c.b16 %v6853, %v6852
      %v6889 = vpack.c.b16 %v6855, %v6854
      %v6890 = vpack.c.b16 %v6857, %v6856
      %v6891 = vpack.c.b16 %v6859, %v6858
      %v6892 = vpack.c.b16 %v6861, %v6860
      %v6893 = vpack.c.b16 %v6863, %v6862
      %v6894 = vpack.c.b16 %v6865, %v6864
      %v6895 = vpack.c.b16 %v6867, %v6866
      %v6896 = vpack.c.b16 %v6869, %v6868
      %v6897 = vpack.c.b16 %v6871, %v6870
      %v6898 = vpack.c.b16 %v6873, %v6872
      %v6899 = vpack.c.b16 %v6875, %v6874
      %v6900 = vpack.c.b16 %v6877, %v6876
      %v6901 = vpack.c.b16 %v6879, %v6878
      %v6902 = vpack.c.b16 %v6881, %v6880
      %v6903 = vpack.c.b16 %v6883, %v6882
      %v6904 = vpack.c.b16 %v6885, %v6884
      %v6905 = vpack.c.b16 %v6886, %v6886
      %v6925 = vsel %vm1127, %v6805, 0
      %v6928 = vsel %vm1127, %v6808, 0
      %v6931 = vsel %vm1134, %v6905, 0
      %6933 = vmatprep.subr.bf16.mxu0 0
      %6934 = vmatpush1.bf16.msra.mxu0 %v6887
      %6935 = vmatprep.subr.bf16.mxu0 0
      %6936 = vmatpush1.bf16.msra.mxu0 %v6888
      %6937 = vmatprep.subr.bf16.mxu0 0
      %6938 = vmatpush1.bf16.msra.mxu0 %v6889
      %6939 = vmatprep.subr.bf16.mxu0 0
      %6940 = vmatpush1.bf16.msra.mxu0 %v6890
      %6941 = vmatprep.subr.bf16.mxu0 0
      %6942 = vmatpush1.bf16.msra.mxu0 %v6891
      %6943 = vmatprep.subr.bf16.mxu0 0
      %6944 = vmatpush1.bf16.msra.mxu0 %v6892
      %6945 = vmatprep.subr.bf16.mxu0 0
      %6946 = vmatpush1.bf16.msra.mxu0 %v6893
      %6947 = vmatprep.subr.bf16.mxu0 0
      %6948 = vmatpush1.bf16.msra.mxu0 %v6894
      %6949 = vmatprep.subr.bf16.mxu0 0
      %6950 = vmatpush1.bf16.msra.mxu0 %v6895
      %6951 = vmatprep.subr.bf16.mxu0 0
      %6952 = vmatpush1.bf16.msra.mxu0 %v6896
      %6953 = vmatprep.subr.bf16.mxu0 0
      %6954 = vmatpush1.bf16.msra.mxu0 %v6897
      %6955 = vmatprep.subr.bf16.mxu0 0
      %6956 = vmatpush1.bf16.msra.mxu0 %v6898
      %6957 = vmatprep.subr.bf16.mxu0 0
      %6958 = vmatpush1.bf16.msra.mxu0 %v6899
      %6959 = vmatprep.subr.bf16.mxu0 0
      %6960 = vmatpush1.bf16.msra.mxu0 %v6900
      %6961 = vmatprep.subr.bf16.mxu0 0
      %6962 = vmatpush1.bf16.msra.mxu0 %v6901
      %6963 = vmatprep.subr.bf16.mxu0 0
      %6964 = vmatpush1.bf16.msra.mxu0 %v6902
      %6965 = vmatprep.mubr.bf16.mxu0 %v6804
      %6966 = vmatmul.mubr.bf16.gmra.mrb[0].mxu0 %v6803
      %v6967 = vpop.f32.mrb[0].mxu0
      %v6968 = vadd.f32 0.0, %v6967
      %v6969 = vpop.f32.mrb[0].mxu0
      %v6970 = vpop.f32.mrb[0].mxu0
      %v6971 = vadd.f32 0.0, %v6970
      %v6972 = vpop.f32.mrb[0].mxu0
      %6973 = vmatprep.mubr.bf16.mxu0 %v6807
      %6974 = vmatmul.mubr.bf16.gmra.mrb[0].mxu0 %v6806
      %v6975 = vpop.f32.mrb[0].mxu0
      %v6976 = vadd.f32 0.0, %v6975
      %v6977 = vpop.f32.mrb[0].mxu0
      %v6978 = vpop.f32.mrb[0].mxu0
      %v6979 = vadd.f32 0.0, %v6978
      %v6980 = vpop.f32.mrb[0].mxu0
      %6981 = vdwg.mxu0
      %6982 = vmatprep.subr.bf16.mxu0 0
      %6983 = vmatpush1.bf16.msra.mxu0 %v6903
      %6984 = vmatprep.subr.bf16.mxu0 0
      %6985 = vmatpush1.bf16.msra.mxu0 %v6904
      %6986 = vmatprep.subr.bf16.mxu0 0
      %6987 = vmatpush1.bf16.msra.mxu0 %v6931
      %6988 = vmatprep.subr.bf16.mxu0 0
      %6989 = vmatpush1.bf16.msra.mxu0 0
      %6990 = vmatprep.subr.bf16.mxu0 0
      %6991 = vmatpush1.bf16.msra.mxu0 0
      %6992 = vmatprep.subr.bf16.mxu0 0
      %6993 = vmatpush1.bf16.msra.mxu0 0
      %6994 = vmatprep.subr.bf16.mxu0 0
      %6995 = vmatpush1.bf16.msra.mxu0 0
      %6996 = vmatprep.subr.bf16.mxu0 0
      %6997 = vmatpush1.bf16.msra.mxu0 0
      %6998 = vmatprep.subr.bf16.mxu0 0
      %6999 = vmatpush1.bf16.msra.mxu0 0
      %7000 = vmatprep.subr.bf16.mxu0 0
      %7001 = vmatpush1.bf16.msra.mxu0 0
      %7002 = vmatprep.subr.bf16.mxu0 0
      %7003 = vmatpush1.bf16.msra.mxu0 0
      %7004 = vmatprep.subr.bf16.mxu0 0
      %7005 = vmatpush1.bf16.msra.mxu0 0
      %7006 = vmatprep.subr.bf16.mxu0 0
      %7007 = vmatpush1.bf16.msra.mxu0 0
      %7008 = vmatprep.subr.bf16.mxu0 0
      %7009 = vmatpush1.bf16.msra.mxu0 0
      %7010 = vmatprep.subr.bf16.mxu0 0
      %7011 = vmatpush1.bf16.msra.mxu0 0
      %7012 = vmatprep.subr.bf16.mxu0 0
      %7013 = vmatpush1.bf16.msra.mxu0 0
      %7014 = vmatprep.mubr.bf16.mxu0 0
      %7015 = vmatmul.mubr.bf16.gmra.mrb[0].mxu0 %v6925
      %v7016 = vpop.f32.mrb[0].mxu0
      %v7017 = vadd.f32 %v6968, %v7016
      %v7018 = vpop.f32.mrb[0].mxu0
      %v7019 = vpop.f32.mrb[0].mxu0
      %v7020 = vadd.f32 %v6971, %v7019
      %v7021 = vpop.f32.mrb[0].mxu0
      %7022 = vmatprep.mubr.bf16.mxu0 0
      %7023 = vmatmul.mubr.bf16.gmra.mrb[0].mxu0 %v6928
      %v7024 = vpop.f32.mrb[0].mxu0
      %v7025 = vadd.f32 %v6976, %v7024
      %v7026 = vpop.f32.mrb[0].mxu0
      %v7027 = vpop.f32.mrb[0].mxu0
      %v7028 = vadd.f32 %v6979, %v7027
      %v7029 = vpop.f32.mrb[0].mxu0
      %7030 = vdwg.mxu0
      %v7031 = vmax.f32 %v7017, 0.0
      %v7032 = vmax.f32 %v7020, 0.0
      %v7033 = vmax.f32 %v7025, 0.0
      %v7034 = vmax.f32 %v7028, 0.0
      %7035 = vrot.lane.b32.xlu0 %v7031, 127
      %v7036 = vpop.permute.xlu0 %7035
      %7037 = vrot.lane.b32.xlu0 %v7032, 127
      %v7038 = vpop.permute.xlu0 %7037
      %7039 = vrot.lane.b32.xlu0 %v7033, 127
      %v7040 = vpop.permute.xlu0 %7039
      %7041 = vrot.lane.b32.xlu0 %v7034, 127
      %v7042 = vpop.permute.xlu0 %7041
      %7043 = vrot.lane.b32.xlu0 %v7031, 1
      %v7044 = vpop.permute.xlu0 %7043
      %7045 = vrot.lane.b32.xlu0 %v7032, 1
      %v7046 = vpop.permute.xlu0 %7045
      %7047 = vrot.lane.b32.xlu0 %v7033, 1
      %v7048 = vpop.permute.xlu0 %7047
      %7049 = vrot.lane.b32.xlu0 %v7034, 1
      %v7050 = vpop.permute.xlu0 %7049
      %7051 = vrot.lane.b32.xlu0 %v7044, 8
      %v7052 = vpop.permute.xlu0 %7051
      %7053 = vrot.lane.b32.xlu0 %v7046, 8
      %v7054 = vpop.permute.xlu0 %7053
      %7055 = vrot.lane.b32.xlu0 %v7048, 8
      %v7056 = vpop.permute.xlu0 %7055
      %7057 = vrot.lane.b32.xlu0 %v7050, 8
      %v7058 = vpop.permute.xlu0 %7057
      %v7059 = vld [vmem:[%s3] sm:$0x1]
      %v7060 = vlaneseq
      %v7061 = vshrl.u32 %v7060, 7
      %v7062 = vsub.s32 0, %v7061
      %v7063 = vrot.slane %v7059, %v7062
      %v7064 = vmul.f32 %v7052, %v7063
      %v7065 = vmul.f32 %v7054, %v7063
      %v7066 = vmul.f32 %v7056, %v7063
      %v7067 = vmul.f32 %v7058, %v7063
      %v7068 = vpack.c.bf16 %v7065, %v7064
      %v7069 = vpack.c.bf16 %v7067, %v7066
      %v7072 = vunpack.c.l.b16 %v7068
      %v7073 = vunpack.c.h.b16 %v7068
      %v7074 = vunpack.c.l.b16 %v7069
      %v7075 = vunpack.c.h.b16 %v7069
      %v7076 = vpack.c.b16 %v7072, %v7072
      %v7077 = vpack.c.b16 %v7073, %v7073
      %v7078 = vpack.c.b16 %v7074, %v7074
      %v7079 = vpack.c.b16 %v7075, %v7075
      %7084 = vst [vmem:[#allocation3] sm:$0xf] %v7076
      %7085 = vst [vmem:[#allocation3 + $0x4] sm:$0xf] %v7077
      %7086 = vst [vmem:[#allocation3 + $0x8] sm:$0xf] %v7078
      %7087 = vst [vmem:[#allocation3 + $0xc] sm:$0xf] %v7079
      %7088 = vrot.lane.b32.xlu0 %v7031, 8
      %v7089 = vpop.permute.xlu0 %7088
      %7090 = vrot.lane.b32.xlu0 %v7032, 8
      %v7091 = vpop.permute.xlu0 %7090
      %7092 = vrot.lane.b32.xlu0 %v7033, 8
      %v7093 = vpop.permute.xlu0 %7092
      %7094 = vrot.lane.b32.xlu0 %v7034, 8
      %v7095 = vpop.permute.xlu0 %7094
      %v7096 = vld [vmem:[%s3 + $0x1] sm:$0x1]
      %v7097 = vlaneseq
      %v7098 = vshrl.u32 %v7097, 7
      %v7099 = vsub.s32 0, %v7098
      %v7100 = vrot.slane %v7096, %v7099
      %v7101 = vmul.f32 %v7089, %v7100
      %v7102 = vmul.f32 %v7091, %v7100
      %v7103 = vmul.f32 %v7093, %v7100
      %v7104 = vmul.f32 %v7095, %v7100
      %v7105 = vpack.c.bf16 %v7102, %v7101
      %v7106 = vpack.c.bf16 %v7104, %v7103
      %v7109 = vunpack.c.l.b16 %v7105
      %v7110 = vunpack.c.h.b16 %v7105
      %v7111 = vunpack.c.l.b16 %v7106
      %v7112 = vunpack.c.h.b16 %v7106
      %v7113 = vpack.c.b16 %v7109, %v7109
      %v7114 = vpack.c.b16 %v7110, %v7110
      %v7115 = vpack.c.b16 %v7111, %v7111
      %v7116 = vpack.c.b16 %v7112, %v7112
      %7121 = vst [vmem:[#allocation3 + $0x10] sm:$0xf] %v7113
      %7122 = vst [vmem:[#allocation3 + $0x14] sm:$0xf] %v7114
      %7123 = vst [vmem:[#allocation3 + $0x18] sm:$0xf] %v7115
      %7124 = vst [vmem:[#allocation3 + $0x1c] sm:$0xf] %v7116
      %7125 = vrot.lane.b32.xlu0 %v7036, 8
      %v7126 = vpop.permute.xlu0 %7125
      %7127 = vrot.lane.b32.xlu0 %v7038, 8
      %v7128 = vpop.permute.xlu0 %7127
      %7129 = vrot.lane.b32.xlu0 %v7040, 8
      %v7130 = vpop.permute.xlu0 %7129
      %7131 = vrot.lane.b32.xlu0 %v7042, 8
      %v7132 = vpop.permute.xlu0 %7131
      %v7133 = vld [vmem:[%s3 + $0x2] sm:$0x1]
      %v7134 = vlaneseq
      %v7135 = vshrl.u32 %v7134, 7
      %v7136 = vsub.s32 0, %v7135
      %v7137 = vrot.slane %v7133, %v7136
      %v7138 = vmul.f32 %v7126, %v7137
      %v7139 = vmul.f32 %v7128, %v7137
      %v7140 = vmul.f32 %v7130, %v7137
      %v7141 = vmul.f32 %v7132, %v7137
      %v7142 = vpack.c.bf16 %v7139, %v7138
      %v7143 = vpack.c.bf16 %v7141, %v7140
      %v7146 = vunpack.c.l.b16 %v7142
      %v7147 = vunpack.c.h.b16 %v7142
      %v7148 = vunpack.c.l.b16 %v7143
      %v7149 = vunpack.c.h.b16 %v7143
      %v7150 = vpack.c.b16 %v7146, %v7146
      %v7151 = vpack.c.b16 %v7147, %v7147
      %v7152 = vpack.c.b16 %v7148, %v7148
      %v7153 = vpack.c.b16 %v7149, %v7149
      %7158 = vst [vmem:[#allocation3 + $0x20] sm:$0xf] %v7150
      %7159 = vst [vmem:[#allocation3 + $0x24] sm:$0xf] %v7151
      %7160 = vst [vmem:[#allocation3 + $0x28] sm:$0xf] %v7152
      %7161 = vst [vmem:[#allocation3 + $0x2c] sm:$0xf] %v7153
      %v7162 = vld [vmem:[%s3 + $0x3] sm:$0x1]
      %v7163 = vlaneseq
      %v7164 = vshrl.u32 %v7163, 7
      %v7165 = vsub.s32 0, %v7164
      %v7166 = vrot.slane %v7162, %v7165
      %v7167 = vmul.f32 %v7044, %v7166
      %v7168 = vmul.f32 %v7046, %v7166
      %v7169 = vmul.f32 %v7048, %v7166
      %v7170 = vmul.f32 %v7050, %v7166
      %v7171 = vpack.c.bf16 %v7168, %v7167
      %v7172 = vpack.c.bf16 %v7170, %v7169
      %v7175 = vunpack.c.l.b16 %v7171
      %v7176 = vunpack.c.h.b16 %v7171
      %v7177 = vunpack.c.l.b16 %v7172
      %v7178 = vunpack.c.h.b16 %v7172
      %v7179 = vpack.c.b16 %v7175, %v7175
      %v7180 = vpack.c.b16 %v7176, %v7176
      %v7181 = vpack.c.b16 %v7177, %v7177
      %v7182 = vpack.c.b16 %v7178, %v7178
      %7187 = vst [vmem:[#allocation3 + $0x30] sm:$0xf] %v7179
      %7188 = vst [vmem:[#allocation3 + $0x34] sm:$0xf] %v7180
      %7189 = vst [vmem:[#allocation3 + $0x38] sm:$0xf] %v7181
      %7190 = vst [vmem:[#allocation3 + $0x3c] sm:$0xf] %v7182
      %v7191 = vpack.c.bf16 %v7032, %v7031
      %v7192 = vpack.c.bf16 %v7034, %v7033
      %v7195 = vunpack.c.l.b16 %v7191
      %v7196 = vunpack.c.h.b16 %v7191
      %v7197 = vunpack.c.l.b16 %v7192
      %v7198 = vunpack.c.h.b16 %v7192
      %v7199 = vpack.c.b16 %v7195, %v7195
      %v7200 = vpack.c.b16 %v7196, %v7196
      %v7201 = vpack.c.b16 %v7197, %v7197
      %v7202 = vpack.c.b16 %v7198, %v7198
      %7207 = vst [vmem:[#allocation3 + $0x40] sm:$0xf] %v7199
      %7208 = vst [vmem:[#allocation3 + $0x44] sm:$0xf] %v7200
      %7209 = vst [vmem:[#allocation3 + $0x48] sm:$0xf] %v7201
      %7210 = vst [vmem:[#allocation3 + $0x4c] sm:$0xf] %v7202
      %v7211 = vld [vmem:[%s3 + $0x5] sm:$0x1]
      %v7212 = vlaneseq
      %v7213 = vshrl.u32 %v7212, 7
      %v7214 = vsub.s32 0, %v7213
      %v7215 = vrot.slane %v7211, %v7214
      %v7216 = vmul.f32 %v7036, %v7215
      %v7217 = vmul.f32 %v7038, %v7215
      %v7218 = vmul.f32 %v7040, %v7215
      %v7219 = vmul.f32 %v7042, %v7215
      %v7220 = vpack.c.bf16 %v7217, %v7216
      %v7221 = vpack.c.bf16 %v7219, %v7218
      %v7224 = vunpack.c.l.b16 %v7220
      %v7225 = vunpack.c.h.b16 %v7220
      %v7226 = vunpack.c.l.b16 %v7221
      %v7227 = vunpack.c.h.b16 %v7221
      %v7228 = vpack.c.b16 %v7224, %v7224
      %v7229 = vpack.c.b16 %v7225, %v7225
      %v7230 = vpack.c.b16 %v7226, %v7226
      %v7231 = vpack.c.b16 %v7227, %v7227
      %7236 = vst [vmem:[#allocation3 + $0x50] sm:$0xf] %v7228
      %7237 = vst [vmem:[#allocation3 + $0x54] sm:$0xf] %v7229
      %7238 = vst [vmem:[#allocation3 + $0x58] sm:$0xf] %v7230
      %7239 = vst [vmem:[#allocation3 + $0x5c] sm:$0xf] %v7231
      %7240 = vrot.lane.b32.xlu0 %v7044, 120
      %v7241 = vpop.permute.xlu0 %7240
      %7242 = vrot.lane.b32.xlu0 %v7046, 120
      %v7243 = vpop.permute.xlu0 %7242
      %7244 = vrot.lane.b32.xlu0 %v7048, 120
      %v7245 = vpop.permute.xlu0 %7244
      %7246 = vrot.lane.b32.xlu0 %v7050, 120
      %v7247 = vpop.permute.xlu0 %7246
      %v7248 = vld [vmem:[%s3 + $0x6] sm:$0x1]
      %v7249 = vlaneseq
      %v7250 = vshrl.u32 %v7249, 7
      %v7251 = vsub.s32 0, %v7250
      %v7252 = vrot.slane %v7248, %v7251
      %v7253 = vmul.f32 %v7241, %v7252
      %v7254 = vmul.f32 %v7243, %v7252
      %v7255 = vmul.f32 %v7245, %v7252
      %v7256 = vmul.f32 %v7247, %v7252
      %v7257 = vpack.c.bf16 %v7254, %v7253
      %v7258 = vpack.c.bf16 %v7256, %v7255
      %v7261 = vunpack.c.l.b16 %v7257
      %v7262 = vunpack.c.h.b16 %v7257
      %v7263 = vunpack.c.l.b16 %v7258
      %v7264 = vunpack.c.h.b16 %v7258
      %v7265 = vpack.c.b16 %v7261, %v7261
      %v7266 = vpack.c.b16 %v7262, %v7262
      %v7267 = vpack.c.b16 %v7263, %v7263
      %v7268 = vpack.c.b16 %v7264, %v7264
      %7273 = vst [vmem:[#allocation3 + $0x60] sm:$0xf] %v7265
      %7274 = vst [vmem:[#allocation3 + $0x64] sm:$0xf] %v7266
      %7275 = vst [vmem:[#allocation3 + $0x68] sm:$0xf] %v7267
      %7276 = vst [vmem:[#allocation3 + $0x6c] sm:$0xf] %v7268
      %7277 = vrot.lane.b32.xlu0 %v7031, 120
      %v7278 = vpop.permute.xlu0 %7277
      %7279 = vrot.lane.b32.xlu0 %v7032, 120
      %v7280 = vpop.permute.xlu0 %7279
      %7281 = vrot.lane.b32.xlu0 %v7033, 120
      %v7282 = vpop.permute.xlu0 %7281
      %7283 = vrot.lane.b32.xlu0 %v7034, 120
      %v7284 = vpop.permute.xlu0 %7283
      %v7285 = vld [vmem:[%s3 + $0x7] sm:$0x1]
      %v7286 = vlaneseq
      %v7287 = vshrl.u32 %v7286, 7
      %v7288 = vsub.s32 0, %v7287
      %v7289 = vrot.slane %v7285, %v7288
      %v7290 = vmul.f32 %v7278, %v7289
      %v7291 = vmul.f32 %v7280, %v7289
      %v7292 = vmul.f32 %v7282, %v7289
      %v7293 = vmul.f32 %v7284, %v7289
      %v7294 = vpack.c.bf16 %v7291, %v7290
      %v7295 = vpack.c.bf16 %v7293, %v7292
      %v7298 = vunpack.c.l.b16 %v7294
      %v7299 = vunpack.c.h.b16 %v7294
      %v7300 = vunpack.c.l.b16 %v7295
      %v7301 = vunpack.c.h.b16 %v7295
      %v7302 = vpack.c.b16 %v7298, %v7298
      %v7303 = vpack.c.b16 %v7299, %v7299
      %v7304 = vpack.c.b16 %v7300, %v7300
      %v7305 = vpack.c.b16 %v7301, %v7301
      %7310 = vst [vmem:[#allocation3 + $0x70] sm:$0xf] %v7302
      %7311 = vst [vmem:[#allocation3 + $0x74] sm:$0xf] %v7303
      %7312 = vst [vmem:[#allocation3 + $0x78] sm:$0xf] %v7304
      %7313 = vst [vmem:[#allocation3 + $0x7c] sm:$0xf] %v7305
      %7314 = vrot.lane.b32.xlu0 %v7036, 120
      %v7315 = vpop.permute.xlu0 %7314
      %7316 = vrot.lane.b32.xlu0 %v7038, 120
      %v7317 = vpop.permute.xlu0 %7316
      %7318 = vrot.lane.b32.xlu0 %v7040, 120
      %v7319 = vpop.permute.xlu0 %7318
      %7320 = vrot.lane.b32.xlu0 %v7042, 120
      %v7321 = vpop.permute.xlu0 %7320
      %v7322 = vld [vmem:[%s3 + $0x8] sm:$0x1]
      %v7323 = vlaneseq
      %v7324 = vshrl.u32 %v7323, 7
      %v7325 = vsub.s32 0, %v7324
      %v7326 = vrot.slane %v7322, %v7325
      %v7327 = vmul.f32 %v7315, %v7326
      %v7328 = vmul.f32 %v7317, %v7326
      %v7329 = vmul.f32 %v7319, %v7326
      %v7330 = vmul.f32 %v7321, %v7326
      %v7331 = vpack.c.bf16 %v7328, %v7327
      %v7332 = vpack.c.bf16 %v7330, %v7329
      %v7335 = vunpack.c.l.b16 %v7331
      %v7336 = vunpack.c.h.b16 %v7331
      %v7337 = vunpack.c.l.b16 %v7332
      %v7338 = vunpack.c.h.b16 %v7332
      %v7339 = vpack.c.b16 %v7335, %v7335
      %v7340 = vpack.c.b16 %v7336, %v7336
      %v7341 = vpack.c.b16 %v7337, %v7337
      %v7342 = vpack.c.b16 %v7338, %v7338
      %7347 = vst [vmem:[#allocation3 + $0x80] sm:$0xf] %v7339
      %7348 = vst [vmem:[#allocation3 + $0x84] sm:$0xf] %v7340
      %7349 = vst [vmem:[#allocation3 + $0x88] sm:$0xf] %v7341
      %7350 = vst [vmem:[#allocation3 + $0x8c] sm:$0xf] %v7342
      %s7351 = scalar_lea.vmem %s1, 480
      %v7352 = vld [vmem:[%s7351] sm:$0xff]
      %v7353 = vld [vmem:[%s7351 + $0x8] sm:$0xf]
      %v7354 = vld [vmem:[%s7351 + $0xc] sm:$0xff]
      %v7355 = vld [vmem:[%s7351 + $0x14] sm:$0xf]
      %v7356 = vld [vmem:[%s7351 + $0x18] sm:$0xff]
      %v7357 = vld [vmem:[%s7351 + $0x20] sm:$0xf]
      %v7358 = vld [vmem:[%s7351 + $0x24] sm:$0xff]
      %v7359 = vld [vmem:[%s7351 + $0x2c] sm:$0xf]
      %v7360 = vld [vmem:[#allocation3] sm:$0xf]
      %v7361 = vld [vmem:[#allocation3 + $0x4] sm:$0xf]
      %v7362 = vld [vmem:[#allocation3 + $0x8] sm:$0xf]
      %v7363 = vld [vmem:[#allocation3 + $0xc] sm:$0xf]
      %v7364 = vld [vmem:[#allocation3 + $0x10] sm:$0xf]
      %v7365 = vld [vmem:[#allocation3 + $0x14] sm:$0xf]
      %v7366 = vld [vmem:[#allocation3 + $0x18] sm:$0xf]
      %v7367 = vld [vmem:[#allocation3 + $0x1c] sm:$0xf]
      %v7368 = vld [vmem:[#allocation3 + $0x20] sm:$0xf]
      %v7369 = vld [vmem:[#allocation3 + $0x24] sm:$0xf]
      %v7370 = vld [vmem:[#allocation3 + $0x28] sm:$0xf]
      %v7371 = vld [vmem:[#allocation3 + $0x2c] sm:$0xf]
      %v7372 = vld [vmem:[#allocation3 + $0x30] sm:$0xf]
      %v7373 = vld [vmem:[#allocation3 + $0x34] sm:$0xf]
      %v7374 = vld [vmem:[#allocation3 + $0x38] sm:$0xf]
      %v7375 = vld [vmem:[#allocation3 + $0x3c] sm:$0xf]
      %v7376 = vld [vmem:[#allocation3 + $0x40] sm:$0xf]
      %v7377 = vld [vmem:[#allocation3 + $0x44] sm:$0xf]
      %v7378 = vld [vmem:[#allocation3 + $0x48] sm:$0xf]
      %v7379 = vld [vmem:[#allocation3 + $0x4c] sm:$0xf]
      %v7380 = vld [vmem:[#allocation3 + $0x50] sm:$0xf]
      %v7381 = vld [vmem:[#allocation3 + $0x54] sm:$0xf]
      %v7382 = vld [vmem:[#allocation3 + $0x58] sm:$0xf]
      %v7383 = vld [vmem:[#allocation3 + $0x5c] sm:$0xf]
      %v7384 = vld [vmem:[#allocation3 + $0x60] sm:$0xf]
      %v7385 = vld [vmem:[#allocation3 + $0x64] sm:$0xf]
      %v7386 = vld [vmem:[#allocation3 + $0x68] sm:$0xf]
      %v7387 = vld [vmem:[#allocation3 + $0x6c] sm:$0xf]
      %v7388 = vld [vmem:[#allocation3 + $0x70] sm:$0xf]
      %v7389 = vld [vmem:[#allocation3 + $0x74] sm:$0xf]
      %v7390 = vld [vmem:[#allocation3 + $0x78] sm:$0xf]
      %v7391 = vld [vmem:[#allocation3 + $0x7c] sm:$0xf]
      %v7392 = vld [vmem:[#allocation3 + $0x80] sm:$0xf]
      %v7393 = vld [vmem:[#allocation3 + $0x84] sm:$0xf]
      %v7394 = vld [vmem:[#allocation3 + $0x88] sm:$0xf]
      %v7395 = vld [vmem:[#allocation3 + $0x8c] sm:$0xf]
      %v7396 = vld [vmem:[#allocation3 + $0x90] sm:$0xf]
      %v7405 = vunpack.c.l.b16 %v7352
      %v7406 = vunpack.c.h.b16 %v7352
      %v7407 = vunpack.c.l.b16 %v7353
      %v7408 = vunpack.c.l.b16 %v7354
      %v7409 = vunpack.c.h.b16 %v7354
      %v7410 = vunpack.c.l.b16 %v7355
      %v7411 = vunpack.c.l.b16 %v7356
      %v7412 = vunpack.c.h.b16 %v7356
      %v7413 = vunpack.c.l.b16 %v7357
      %v7414 = vunpack.c.l.b16 %v7358
      %v7415 = vunpack.c.h.b16 %v7358
      %v7416 = vunpack.c.l.b16 %v7359
      %v7417 = vpack.c.b16 %v7408, %v7405
      %v7418 = vpack.c.b16 %v7409, %v7406
      %v7419 = vpack.c.b16 %v7410, %v7407
      %v7420 = vpack.c.b16 %v7414, %v7411
      %v7421 = vpack.c.b16 %v7415, %v7412
      %v7422 = vpack.c.b16 %v7416, %v7413
      %v7464 = vunpack.c.l.b16 %v7360
      %v7465 = vunpack.c.l.b16 %v7361
      %v7466 = vunpack.c.l.b16 %v7362
      %v7467 = vunpack.c.l.b16 %v7363
      %v7468 = vunpack.c.l.b16 %v7364
      %v7469 = vunpack.c.l.b16 %v7365
      %v7470 = vunpack.c.l.b16 %v7366
      %v7471 = vunpack.c.l.b16 %v7367
      %v7472 = vunpack.c.l.b16 %v7368
      %v7473 = vunpack.c.l.b16 %v7369
      %v7474 = vunpack.c.l.b16 %v7370
      %v7475 = vunpack.c.l.b16 %v7371
      %v7476 = vunpack.c.l.b16 %v7372
      %v7477 = vunpack.c.l.b16 %v7373
      %v7478 = vunpack.c.l.b16 %v7374
      %v7479 = vunpack.c.l.b16 %v7375
      %v7480 = vunpack.c.l.b16 %v7376
      %v7481 = vunpack.c.l.b16 %v7377
      %v7482 = vunpack.c.l.b16 %v7378
      %v7483 = vunpack.c.l.b16 %v7379
      %v7484 = vunpack.c.l.b16 %v7380
      %v7485 = vunpack.c.l.b16 %v7381
      %v7486 = vunpack.c.l.b16 %v7382
      %v7487 = vunpack.c.l.b16 %v7383
      %v7488 = vunpack.c.l.b16 %v7384
      %v7489 = vunpack.c.l.b16 %v7385
      %v7490 = vunpack.c.l.b16 %v7386
      %v7491 = vunpack.c.l.b16 %v7387
      %v7492 = vunpack.c.l.b16 %v7388
      %v7493 = vunpack.c.l.b16 %v7389
      %v7494 = vunpack.c.l.b16 %v7390
      %v7495 = vunpack.c.l.b16 %v7391
      %v7496 = vunpack.c.l.b16 %v7392
      %v7497 = vunpack.c.l.b16 %v7393
      %v7498 = vunpack.c.l.b16 %v7394
      %v7499 = vunpack.c.l.b16 %v7395
      %v7500 = vunpack.c.l.b16 %v7396
      %v7501 = vpack.c.b16 %v7465, %v7464
      %v7502 = vpack.c.b16 %v7467, %v7466
      %v7503 = vpack.c.b16 %v7469, %v7468
      %v7504 = vpack.c.b16 %v7471, %v7470
      %v7505 = vpack.c.b16 %v7473, %v7472
      %v7506 = vpack.c.b16 %v7475, %v7474
      %v7507 = vpack.c.b16 %v7477, %v7476
      %v7508 = vpack.c.b16 %v7479, %v7478
      %v7509 = vpack.c.b16 %v7481, %v7480
      %v7510 = vpack.c.b16 %v7483, %v7482
      %v7511 = vpack.c.b16 %v7485, %v7484
      %v7512 = vpack.c.b16 %v7487, %v7486
      %v7513 = vpack.c.b16 %v7489, %v7488
      %v7514 = vpack.c.b16 %v7491, %v7490
      %v7515 = vpack.c.b16 %v7493, %v7492
      %v7516 = vpack.c.b16 %v7495, %v7494
      %v7517 = vpack.c.b16 %v7497, %v7496
      %v7518 = vpack.c.b16 %v7499, %v7498
      %v7519 = vpack.c.b16 %v7500, %v7500
      %v7539 = vsel %vm1127, %v7419, 0
      %v7542 = vsel %vm1127, %v7422, 0
      %v7545 = vsel %vm1134, %v7519, 0
      %7547 = vmatprep.subr.bf16.mxu0 0
      %7548 = vmatpush1.bf16.msra.mxu0 %v7501
      %7549 = vmatprep.subr.bf16.mxu0 0
      %7550 = vmatpush1.bf16.msra.mxu0 %v7502
      %7551 = vmatprep.subr.bf16.mxu0 0
      %7552 = vmatpush1.bf16.msra.mxu0 %v7503
      %7553 = vmatprep.subr.bf16.mxu0 0
      %7554 = vmatpush1.bf16.msra.mxu0 %v7504
      %7555 = vmatprep.subr.bf16.mxu0 0
      %7556 = vmatpush1.bf16.msra.mxu0 %v7505
      %7557 = vmatprep.subr.bf16.mxu0 0
      %7558 = vmatpush1.bf16.msra.mxu0 %v7506
      %7559 = vmatprep.subr.bf16.mxu0 0
      %7560 = vmatpush1.bf16.msra.mxu0 %v7507
      %7561 = vmatprep.subr.bf16.mxu0 0
      %7562 = vmatpush1.bf16.msra.mxu0 %v7508
      %7563 = vmatprep.subr.bf16.mxu0 0
      %7564 = vmatpush1.bf16.msra.mxu0 %v7509
      %7565 = vmatprep.subr.bf16.mxu0 0
      %7566 = vmatpush1.bf16.msra.mxu0 %v7510
      %7567 = vmatprep.subr.bf16.mxu0 0
      %7568 = vmatpush1.bf16.msra.mxu0 %v7511
      %7569 = vmatprep.subr.bf16.mxu0 0
      %7570 = vmatpush1.bf16.msra.mxu0 %v7512
      %7571 = vmatprep.subr.bf16.mxu0 0
      %7572 = vmatpush1.bf16.msra.mxu0 %v7513
      %7573 = vmatprep.subr.bf16.mxu0 0
      %7574 = vmatpush1.bf16.msra.mxu0 %v7514
      %7575 = vmatprep.subr.bf16.mxu0 0
      %7576 = vmatpush1.bf16.msra.mxu0 %v7515
      %7577 = vmatprep.subr.bf16.mxu0 0
      %7578 = vmatpush1.bf16.msra.mxu0 %v7516
      %7579 = vmatprep.mubr.bf16.mxu0 %v7418
      %7580 = vmatmul.mubr.bf16.gmra.mrb[0].mxu0 %v7417
      %v7581 = vpop.f32.mrb[0].mxu0
      %v7582 = vadd.f32 %v6407, %v7581
      %v7583 = vpop.f32.mrb[0].mxu0
      %v7584 = vpop.f32.mrb[0].mxu0
      %v7585 = vadd.f32 %v6410, %v7584
      %v7586 = vpop.f32.mrb[0].mxu0
      %7587 = vmatprep.mubr.bf16.mxu0 %v7421
      %7588 = vmatmul.mubr.bf16.gmra.mrb[0].mxu0 %v7420
      %v7589 = vpop.f32.mrb[0].mxu0
      %v7590 = vadd.f32 %v6415, %v7589
      %v7591 = vpop.f32.mrb[0].mxu0
      %v7592 = vpop.f32.mrb[0].mxu0
      %v7593 = vadd.f32 %v6418, %v7592
      %v7594 = vpop.f32.mrb[0].mxu0
      %7595 = vdwg.mxu0
      %7596 = vmatprep.subr.bf16.mxu0 0
      %7597 = vmatpush1.bf16.msra.mxu0 %v7517
      %7598 = vmatprep.subr.bf16.mxu0 0
      %7599 = vmatpush1.bf16.msra.mxu0 %v7518
      %7600 = vmatprep.subr.bf16.mxu0 0
      %7601 = vmatpush1.bf16.msra.mxu0 %v7545
      %7602 = vmatprep.subr.bf16.mxu0 0
      %7603 = vmatpush1.bf16.msra.mxu0 0
      %7604 = vmatprep.subr.bf16.mxu0 0
      %7605 = vmatpush1.bf16.msra.mxu0 0
      %7606 = vmatprep.subr.bf16.mxu0 0
      %7607 = vmatpush1.bf16.msra.mxu0 0
      %7608 = vmatprep.subr.bf16.mxu0 0
      %7609 = vmatpush1.bf16.msra.mxu0 0
      %7610 = vmatprep.subr.bf16.mxu0 0
      %7611 = vmatpush1.bf16.msra.mxu0 0
      %7612 = vmatprep.subr.bf16.mxu0 0
      %7613 = vmatpush1.bf16.msra.mxu0 0
      %7614 = vmatprep.subr.bf16.mxu0 0
      %7615 = vmatpush1.bf16.msra.mxu0 0
      %7616 = vmatprep.subr.bf16.mxu0 0
      %7617 = vmatpush1.bf16.msra.mxu0 0
      %7618 = vmatprep.subr.bf16.mxu0 0
      %7619 = vmatpush1.bf16.msra.mxu0 0
      %7620 = vmatprep.subr.bf16.mxu0 0
      %7621 = vmatpush1.bf16.msra.mxu0 0
      %7622 = vmatprep.subr.bf16.mxu0 0
      %7623 = vmatpush1.bf16.msra.mxu0 0
      %7624 = vmatprep.subr.bf16.mxu0 0
      %7625 = vmatpush1.bf16.msra.mxu0 0
      %7626 = vmatprep.subr.bf16.mxu0 0
      %7627 = vmatpush1.bf16.msra.mxu0 0
      %7628 = vmatprep.mubr.bf16.mxu0 0
      %7629 = vmatmul.mubr.bf16.gmra.mrb[0].mxu0 %v7539
      %v7630 = vpop.f32.mrb[0].mxu0
      %v7631 = vadd.f32 %v7582, %v7630
      %v7632 = vpop.f32.mrb[0].mxu0
      %v7633 = vpop.f32.mrb[0].mxu0
      %v7634 = vadd.f32 %v7585, %v7633
      %v7635 = vpop.f32.mrb[0].mxu0
      %7636 = vmatprep.mubr.bf16.mxu0 0
      %7637 = vmatmul.mubr.bf16.gmra.mrb[0].mxu0 %v7542
      %v7638 = vpop.f32.mrb[0].mxu0
      %v7639 = vadd.f32 %v7590, %v7638
      %v7640 = vpop.f32.mrb[0].mxu0
      %v7641 = vpop.f32.mrb[0].mxu0
      %v7642 = vadd.f32 %v7593, %v7641
      %v7643 = vpop.f32.mrb[0].mxu0
      %7644 = vdwg.mxu0
      %7645 = vrot.lane.b32.xlu0 %v7631, 127
      %v7646 = vpop.permute.xlu0 %7645
      %7647 = vrot.lane.b32.xlu0 %v7634, 127
      %v7648 = vpop.permute.xlu0 %7647
      %7649 = vrot.lane.b32.xlu0 %v7639, 127
      %v7650 = vpop.permute.xlu0 %7649
      %7651 = vrot.lane.b32.xlu0 %v7642, 127
      %v7652 = vpop.permute.xlu0 %7651
      %7653 = vrot.lane.b32.xlu0 %v7631, 1
      %v7654 = vpop.permute.xlu0 %7653
      %7655 = vrot.lane.b32.xlu0 %v7634, 1
      %v7656 = vpop.permute.xlu0 %7655
      %7657 = vrot.lane.b32.xlu0 %v7639, 1
      %v7658 = vpop.permute.xlu0 %7657
      %7659 = vrot.lane.b32.xlu0 %v7642, 1
      %v7660 = vpop.permute.xlu0 %7659
      %7661 = vrot.lane.b32.xlu0 %v7654, 8
      %v7662 = vpop.permute.xlu0 %7661
      %7663 = vrot.lane.b32.xlu0 %v7656, 8
      %v7664 = vpop.permute.xlu0 %7663
      %7665 = vrot.lane.b32.xlu0 %v7658, 8
      %v7666 = vpop.permute.xlu0 %7665
      %7667 = vrot.lane.b32.xlu0 %v7660, 8
      %v7668 = vpop.permute.xlu0 %7667
      %v7669 = vld [vmem:[%s3] sm:$0x1]
      %v7670 = vlaneseq
      %v7671 = vshrl.u32 %v7670, 7
      %v7672 = vsub.s32 0, %v7671
      %v7673 = vrot.slane %v7669, %v7672
      %v7674 = vmul.f32 %v7662, %v7673
      %v7675 = vmul.f32 %v7664, %v7673
      %v7676 = vmul.f32 %v7666, %v7673
      %v7677 = vmul.f32 %v7668, %v7673
      %v7678 = vpack.c.bf16 %v7675, %v7674
      %v7679 = vpack.c.bf16 %v7677, %v7676
      %v7682 = vunpack.c.l.b16 %v7678
      %v7683 = vunpack.c.h.b16 %v7678
      %v7684 = vunpack.c.l.b16 %v7679
      %v7685 = vunpack.c.h.b16 %v7679
      %v7686 = vpack.c.b16 %v7682, %v7682
      %v7687 = vpack.c.b16 %v7683, %v7683
      %v7688 = vpack.c.b16 %v7684, %v7684
      %v7689 = vpack.c.b16 %v7685, %v7685
      %7694 = vst [vmem:[#allocation3] sm:$0xf] %v7686
      %7695 = vst [vmem:[#allocation3 + $0x4] sm:$0xf] %v7687
      %7696 = vst [vmem:[#allocation3 + $0x8] sm:$0xf] %v7688
      %7697 = vst [vmem:[#allocation3 + $0xc] sm:$0xf] %v7689
      %7698 = vrot.lane.b32.xlu0 %v7631, 8
      %v7699 = vpop.permute.xlu0 %7698
      %7700 = vrot.lane.b32.xlu0 %v7634, 8
      %v7701 = vpop.permute.xlu0 %7700
      %7702 = vrot.lane.b32.xlu0 %v7639, 8
      %v7703 = vpop.permute.xlu0 %7702
      %7704 = vrot.lane.b32.xlu0 %v7642, 8
      %v7705 = vpop.permute.xlu0 %7704
      %v7706 = vld [vmem:[%s3 + $0x1] sm:$0x1]
      %v7707 = vlaneseq
      %v7708 = vshrl.u32 %v7707, 7
      %v7709 = vsub.s32 0, %v7708
      %v7710 = vrot.slane %v7706, %v7709
      %v7711 = vmul.f32 %v7699, %v7710
      %v7712 = vmul.f32 %v7701, %v7710
      %v7713 = vmul.f32 %v7703, %v7710
      %v7714 = vmul.f32 %v7705, %v7710
      %v7715 = vpack.c.bf16 %v7712, %v7711
      %v7716 = vpack.c.bf16 %v7714, %v7713
      %v7719 = vunpack.c.l.b16 %v7715
      %v7720 = vunpack.c.h.b16 %v7715
      %v7721 = vunpack.c.l.b16 %v7716
      %v7722 = vunpack.c.h.b16 %v7716
      %v7723 = vpack.c.b16 %v7719, %v7719
      %v7724 = vpack.c.b16 %v7720, %v7720
      %v7725 = vpack.c.b16 %v7721, %v7721
      %v7726 = vpack.c.b16 %v7722, %v7722
      %7731 = vst [vmem:[#allocation3 + $0x10] sm:$0xf] %v7723
      %7732 = vst [vmem:[#allocation3 + $0x14] sm:$0xf] %v7724
      %7733 = vst [vmem:[#allocation3 + $0x18] sm:$0xf] %v7725
      %7734 = vst [vmem:[#allocation3 + $0x1c] sm:$0xf] %v7726
      %7735 = vrot.lane.b32.xlu0 %v7646, 8
      %v7736 = vpop.permute.xlu0 %7735
      %7737 = vrot.lane.b32.xlu0 %v7648, 8
      %v7738 = vpop.permute.xlu0 %7737
      %7739 = vrot.lane.b32.xlu0 %v7650, 8
      %v7740 = vpop.permute.xlu0 %7739
      %7741 = vrot.lane.b32.xlu0 %v7652, 8
      %v7742 = vpop.permute.xlu0 %7741
      %v7743 = vld [vmem:[%s3 + $0x2] sm:$0x1]
      %v7744 = vlaneseq
      %v7745 = vshrl.u32 %v7744, 7
      %v7746 = vsub.s32 0, %v7745
      %v7747 = vrot.slane %v7743, %v7746
      %v7748 = vmul.f32 %v7736, %v7747
      %v7749 = vmul.f32 %v7738, %v7747
      %v7750 = vmul.f32 %v7740, %v7747
      %v7751 = vmul.f32 %v7742, %v7747
      %v7752 = vpack.c.bf16 %v7749, %v7748
      %v7753 = vpack.c.bf16 %v7751, %v7750
      %v7756 = vunpack.c.l.b16 %v7752
      %v7757 = vunpack.c.h.b16 %v7752
      %v7758 = vunpack.c.l.b16 %v7753
      %v7759 = vunpack.c.h.b16 %v7753
      %v7760 = vpack.c.b16 %v7756, %v7756
      %v7761 = vpack.c.b16 %v7757, %v7757
      %v7762 = vpack.c.b16 %v7758, %v7758
      %v7763 = vpack.c.b16 %v7759, %v7759
      %7768 = vst [vmem:[#allocation3 + $0x20] sm:$0xf] %v7760
      %7769 = vst [vmem:[#allocation3 + $0x24] sm:$0xf] %v7761
      %7770 = vst [vmem:[#allocation3 + $0x28] sm:$0xf] %v7762
      %7771 = vst [vmem:[#allocation3 + $0x2c] sm:$0xf] %v7763
      %v7772 = vld [vmem:[%s3 + $0x3] sm:$0x1]
      %v7773 = vlaneseq
      %v7774 = vshrl.u32 %v7773, 7
      %v7775 = vsub.s32 0, %v7774
      %v7776 = vrot.slane %v7772, %v7775
      %v7777 = vmul.f32 %v7654, %v7776
      %v7778 = vmul.f32 %v7656, %v7776
      %v7779 = vmul.f32 %v7658, %v7776
      %v7780 = vmul.f32 %v7660, %v7776
      %v7781 = vpack.c.bf16 %v7778, %v7777
      %v7782 = vpack.c.bf16 %v7780, %v7779
      %v7785 = vunpack.c.l.b16 %v7781
      %v7786 = vunpack.c.h.b16 %v7781
      %v7787 = vunpack.c.l.b16 %v7782
      %v7788 = vunpack.c.h.b16 %v7782
      %v7789 = vpack.c.b16 %v7785, %v7785
      %v7790 = vpack.c.b16 %v7786, %v7786
      %v7791 = vpack.c.b16 %v7787, %v7787
      %v7792 = vpack.c.b16 %v7788, %v7788
      %7797 = vst [vmem:[#allocation3 + $0x30] sm:$0xf] %v7789
      %7798 = vst [vmem:[#allocation3 + $0x34] sm:$0xf] %v7790
      %7799 = vst [vmem:[#allocation3 + $0x38] sm:$0xf] %v7791
      %7800 = vst [vmem:[#allocation3 + $0x3c] sm:$0xf] %v7792
      %v7801 = vpack.c.bf16 %v7634, %v7631
      %v7802 = vpack.c.bf16 %v7642, %v7639
      %v7805 = vunpack.c.l.b16 %v7801
      %v7806 = vunpack.c.h.b16 %v7801
      %v7807 = vunpack.c.l.b16 %v7802
      %v7808 = vunpack.c.h.b16 %v7802
      %v7809 = vpack.c.b16 %v7805, %v7805
      %v7810 = vpack.c.b16 %v7806, %v7806
      %v7811 = vpack.c.b16 %v7807, %v7807
      %v7812 = vpack.c.b16 %v7808, %v7808
      %7817 = vst [vmem:[#allocation3 + $0x40] sm:$0xf] %v7809
      %7818 = vst [vmem:[#allocation3 + $0x44] sm:$0xf] %v7810
      %7819 = vst [vmem:[#allocation3 + $0x48] sm:$0xf] %v7811
      %7820 = vst [vmem:[#allocation3 + $0x4c] sm:$0xf] %v7812
      %v7821 = vld [vmem:[%s3 + $0x5] sm:$0x1]
      %v7822 = vlaneseq
      %v7823 = vshrl.u32 %v7822, 7
      %v7824 = vsub.s32 0, %v7823
      %v7825 = vrot.slane %v7821, %v7824
      %v7826 = vmul.f32 %v7646, %v7825
      %v7827 = vmul.f32 %v7648, %v7825
      %v7828 = vmul.f32 %v7650, %v7825
      %v7829 = vmul.f32 %v7652, %v7825
      %v7830 = vpack.c.bf16 %v7827, %v7826
      %v7831 = vpack.c.bf16 %v7829, %v7828
      %v7834 = vunpack.c.l.b16 %v7830
      %v7835 = vunpack.c.h.b16 %v7830
      %v7836 = vunpack.c.l.b16 %v7831
      %v7837 = vunpack.c.h.b16 %v7831
      %v7838 = vpack.c.b16 %v7834, %v7834
      %v7839 = vpack.c.b16 %v7835, %v7835
      %v7840 = vpack.c.b16 %v7836, %v7836
      %v7841 = vpack.c.b16 %v7837, %v7837
      %7846 = vst [vmem:[#allocation3 + $0x50] sm:$0xf] %v7838
      %7847 = vst [vmem:[#allocation3 + $0x54] sm:$0xf] %v7839
      %7848 = vst [vmem:[#allocation3 + $0x58] sm:$0xf] %v7840
      %7849 = vst [vmem:[#allocation3 + $0x5c] sm:$0xf] %v7841
      %7850 = vrot.lane.b32.xlu0 %v7654, 120
      %v7851 = vpop.permute.xlu0 %7850
      %7852 = vrot.lane.b32.xlu0 %v7656, 120
      %v7853 = vpop.permute.xlu0 %7852
      %7854 = vrot.lane.b32.xlu0 %v7658, 120
      %v7855 = vpop.permute.xlu0 %7854
      %7856 = vrot.lane.b32.xlu0 %v7660, 120
      %v7857 = vpop.permute.xlu0 %7856
      %v7858 = vld [vmem:[%s3 + $0x6] sm:$0x1]
      %v7859 = vlaneseq
      %v7860 = vshrl.u32 %v7859, 7
      %v7861 = vsub.s32 0, %v7860
      %v7862 = vrot.slane %v7858, %v7861
      %v7863 = vmul.f32 %v7851, %v7862
      %v7864 = vmul.f32 %v7853, %v7862
      %v7865 = vmul.f32 %v7855, %v7862
      %v7866 = vmul.f32 %v7857, %v7862
      %v7867 = vpack.c.bf16 %v7864, %v7863
      %v7868 = vpack.c.bf16 %v7866, %v7865
      %v7871 = vunpack.c.l.b16 %v7867
      %v7872 = vunpack.c.h.b16 %v7867
      %v7873 = vunpack.c.l.b16 %v7868
      %v7874 = vunpack.c.h.b16 %v7868
      %v7875 = vpack.c.b16 %v7871, %v7871
      %v7876 = vpack.c.b16 %v7872, %v7872
      %v7877 = vpack.c.b16 %v7873, %v7873
      %v7878 = vpack.c.b16 %v7874, %v7874
      %7883 = vst [vmem:[#allocation3 + $0x60] sm:$0xf] %v7875
      %7884 = vst [vmem:[#allocation3 + $0x64] sm:$0xf] %v7876
      %7885 = vst [vmem:[#allocation3 + $0x68] sm:$0xf] %v7877
      %7886 = vst [vmem:[#allocation3 + $0x6c] sm:$0xf] %v7878
      %7887 = vrot.lane.b32.xlu0 %v7631, 120
      %v7888 = vpop.permute.xlu0 %7887
      %7889 = vrot.lane.b32.xlu0 %v7634, 120
      %v7890 = vpop.permute.xlu0 %7889
      %7891 = vrot.lane.b32.xlu0 %v7639, 120
      %v7892 = vpop.permute.xlu0 %7891
      %7893 = vrot.lane.b32.xlu0 %v7642, 120
      %v7894 = vpop.permute.xlu0 %7893
      %v7895 = vld [vmem:[%s3 + $0x7] sm:$0x1]
      %v7896 = vlaneseq
      %v7897 = vshrl.u32 %v7896, 7
      %v7898 = vsub.s32 0, %v7897
      %v7899 = vrot.slane %v7895, %v7898
      %v7900 = vmul.f32 %v7888, %v7899
      %v7901 = vmul.f32 %v7890, %v7899
      %v7902 = vmul.f32 %v7892, %v7899
      %v7903 = vmul.f32 %v7894, %v7899
      %v7904 = vpack.c.bf16 %v7901, %v7900
      %v7905 = vpack.c.bf16 %v7903, %v7902
      %v7908 = vunpack.c.l.b16 %v7904
      %v7909 = vunpack.c.h.b16 %v7904
      %v7910 = vunpack.c.l.b16 %v7905
      %v7911 = vunpack.c.h.b16 %v7905
      %v7912 = vpack.c.b16 %v7908, %v7908
      %v7913 = vpack.c.b16 %v7909, %v7909
      %v7914 = vpack.c.b16 %v7910, %v7910
      %v7915 = vpack.c.b16 %v7911, %v7911
      %7920 = vst [vmem:[#allocation3 + $0x70] sm:$0xf] %v7912
      %7921 = vst [vmem:[#allocation3 + $0x74] sm:$0xf] %v7913
      %7922 = vst [vmem:[#allocation3 + $0x78] sm:$0xf] %v7914
      %7923 = vst [vmem:[#allocation3 + $0x7c] sm:$0xf] %v7915
      %7924 = vrot.lane.b32.xlu0 %v7646, 120
      %v7925 = vpop.permute.xlu0 %7924
      %7926 = vrot.lane.b32.xlu0 %v7648, 120
      %v7927 = vpop.permute.xlu0 %7926
      %7928 = vrot.lane.b32.xlu0 %v7650, 120
      %v7929 = vpop.permute.xlu0 %7928
      %7930 = vrot.lane.b32.xlu0 %v7652, 120
      %v7931 = vpop.permute.xlu0 %7930
      %v7932 = vld [vmem:[%s3 + $0x8] sm:$0x1]
      %v7933 = vlaneseq
      %v7934 = vshrl.u32 %v7933, 7
      %v7935 = vsub.s32 0, %v7934
      %v7936 = vrot.slane %v7932, %v7935
      %v7937 = vmul.f32 %v7925, %v7936
      %v7938 = vmul.f32 %v7927, %v7936
      %v7939 = vmul.f32 %v7929, %v7936
      %v7940 = vmul.f32 %v7931, %v7936
      %v7941 = vpack.c.bf16 %v7938, %v7937
      %v7942 = vpack.c.bf16 %v7940, %v7939
      %v7945 = vunpack.c.l.b16 %v7941
      %v7946 = vunpack.c.h.b16 %v7941
      %v7947 = vunpack.c.l.b16 %v7942
      %v7948 = vunpack.c.h.b16 %v7942
      %v7949 = vpack.c.b16 %v7945, %v7945
      %v7950 = vpack.c.b16 %v7946, %v7946
      %v7951 = vpack.c.b16 %v7947, %v7947
      %v7952 = vpack.c.b16 %v7948, %v7948
      %7957 = vst [vmem:[#allocation3 + $0x80] sm:$0xf] %v7949
      %7958 = vst [vmem:[#allocation3 + $0x84] sm:$0xf] %v7950
      %7959 = vst [vmem:[#allocation3 + $0x88] sm:$0xf] %v7951
      %7960 = vst [vmem:[#allocation3 + $0x8c] sm:$0xf] %v7952
      %s7961 = scalar_lea.vmem %s1, 528
      %v7962 = vld [vmem:[%s7961] sm:$0xff]
      %v7963 = vld [vmem:[%s7961 + $0x8] sm:$0xf]
      %v7964 = vld [vmem:[%s7961 + $0xc] sm:$0xff]
      %v7965 = vld [vmem:[%s7961 + $0x14] sm:$0xf]
      %v7966 = vld [vmem:[%s7961 + $0x18] sm:$0xff]
      %v7967 = vld [vmem:[%s7961 + $0x20] sm:$0xf]
      %v7968 = vld [vmem:[%s7961 + $0x24] sm:$0xff]
      %v7969 = vld [vmem:[%s7961 + $0x2c] sm:$0xf]
      %v7970 = vld [vmem:[#allocation3] sm:$0xf]
      %v7971 = vld [vmem:[#allocation3 + $0x4] sm:$0xf]
      %v7972 = vld [vmem:[#allocation3 + $0x8] sm:$0xf]
      %v7973 = vld [vmem:[#allocation3 + $0xc] sm:$0xf]
      %v7974 = vld [vmem:[#allocation3 + $0x10] sm:$0xf]
      %v7975 = vld [vmem:[#allocation3 + $0x14] sm:$0xf]
      %v7976 = vld [vmem:[#allocation3 + $0x18] sm:$0xf]
      %v7977 = vld [vmem:[#allocation3 + $0x1c] sm:$0xf]
      %v7978 = vld [vmem:[#allocation3 + $0x20] sm:$0xf]
      %v7979 = vld [vmem:[#allocation3 + $0x24] sm:$0xf]
      %v7980 = vld [vmem:[#allocation3 + $0x28] sm:$0xf]
      %v7981 = vld [vmem:[#allocation3 + $0x2c] sm:$0xf]
      %v7982 = vld [vmem:[#allocation3 + $0x30] sm:$0xf]
      %v7983 = vld [vmem:[#allocation3 + $0x34] sm:$0xf]
      %v7984 = vld [vmem:[#allocation3 + $0x38] sm:$0xf]
      %v7985 = vld [vmem:[#allocation3 + $0x3c] sm:$0xf]
      %v7986 = vld [vmem:[#allocation3 + $0x40] sm:$0xf]
      %v7987 = vld [vmem:[#allocation3 + $0x44] sm:$0xf]
      %v7988 = vld [vmem:[#allocation3 + $0x48] sm:$0xf]
      %v7989 = vld [vmem:[#allocation3 + $0x4c] sm:$0xf]
      %v7990 = vld [vmem:[#allocation3 + $0x50] sm:$0xf]
      %v7991 = vld [vmem:[#allocation3 + $0x54] sm:$0xf]
      %v7992 = vld [vmem:[#allocation3 + $0x58] sm:$0xf]
      %v7993 = vld [vmem:[#allocation3 + $0x5c] sm:$0xf]
      %v7994 = vld [vmem:[#allocation3 + $0x60] sm:$0xf]
      %v7995 = vld [vmem:[#allocation3 + $0x64] sm:$0xf]
      %v7996 = vld [vmem:[#allocation3 + $0x68] sm:$0xf]
      %v7997 = vld [vmem:[#allocation3 + $0x6c] sm:$0xf]
      %v7998 = vld [vmem:[#allocation3 + $0x70] sm:$0xf]
      %v7999 = vld [vmem:[#allocation3 + $0x74] sm:$0xf]
      %v8000 = vld [vmem:[#allocation3 + $0x78] sm:$0xf]
      %v8001 = vld [vmem:[#allocation3 + $0x7c] sm:$0xf]
      %v8002 = vld [vmem:[#allocation3 + $0x80] sm:$0xf]
      %v8003 = vld [vmem:[#allocation3 + $0x84] sm:$0xf]
      %v8004 = vld [vmem:[#allocation3 + $0x88] sm:$0xf]
      %v8005 = vld [vmem:[#allocation3 + $0x8c] sm:$0xf]
      %v8006 = vld [vmem:[#allocation3 + $0x90] sm:$0xf]
      %v8015 = vunpack.c.l.b16 %v7962
      %v8016 = vunpack.c.h.b16 %v7962
      %v8017 = vunpack.c.l.b16 %v7963
      %v8018 = vunpack.c.l.b16 %v7964
      %v8019 = vunpack.c.h.b16 %v7964
      %v8020 = vunpack.c.l.b16 %v7965
      %v8021 = vunpack.c.l.b16 %v7966
      %v8022 = vunpack.c.h.b16 %v7966
      %v8023 = vunpack.c.l.b16 %v7967
      %v8024 = vunpack.c.l.b16 %v7968
      %v8025 = vunpack.c.h.b16 %v7968
      %v8026 = vunpack.c.l.b16 %v7969
      %v8027 = vpack.c.b16 %v8018, %v8015
      %v8028 = vpack.c.b16 %v8019, %v8016
      %v8029 = vpack.c.b16 %v8020, %v8017
      %v8030 = vpack.c.b16 %v8024, %v8021
      %v8031 = vpack.c.b16 %v8025, %v8022
      %v8032 = vpack.c.b16 %v8026, %v8023
      %v8074 = vunpack.c.l.b16 %v7970
      %v8075 = vunpack.c.l.b16 %v7971
      %v8076 = vunpack.c.l.b16 %v7972
      %v8077 = vunpack.c.l.b16 %v7973
      %v8078 = vunpack.c.l.b16 %v7974
      %v8079 = vunpack.c.l.b16 %v7975
      %v8080 = vunpack.c.l.b16 %v7976
      %v8081 = vunpack.c.l.b16 %v7977
      %v8082 = vunpack.c.l.b16 %v7978
      %v8083 = vunpack.c.l.b16 %v7979
      %v8084 = vunpack.c.l.b16 %v7980
      %v8085 = vunpack.c.l.b16 %v7981
      %v8086 = vunpack.c.l.b16 %v7982
      %v8087 = vunpack.c.l.b16 %v7983
      %v8088 = vunpack.c.l.b16 %v7984
      %v8089 = vunpack.c.l.b16 %v7985
      %v8090 = vunpack.c.l.b16 %v7986
      %v8091 = vunpack.c.l.b16 %v7987
      %v8092 = vunpack.c.l.b16 %v7988
      %v8093 = vunpack.c.l.b16 %v7989
      %v8094 = vunpack.c.l.b16 %v7990
      %v8095 = vunpack.c.l.b16 %v7991
      %v8096 = vunpack.c.l.b16 %v7992
      %v8097 = vunpack.c.l.b16 %v7993
      %v8098 = vunpack.c.l.b16 %v7994
      %v8099 = vunpack.c.l.b16 %v7995
      %v8100 = vunpack.c.l.b16 %v7996
      %v8101 = vunpack.c.l.b16 %v7997
      %v8102 = vunpack.c.l.b16 %v7998
      %v8103 = vunpack.c.l.b16 %v7999
      %v8104 = vunpack.c.l.b16 %v8000
      %v8105 = vunpack.c.l.b16 %v8001
      %v8106 = vunpack.c.l.b16 %v8002
      %v8107 = vunpack.c.l.b16 %v8003
      %v8108 = vunpack.c.l.b16 %v8004
      %v8109 = vunpack.c.l.b16 %v8005
      %v8110 = vunpack.c.l.b16 %v8006
      %v8111 = vpack.c.b16 %v8075, %v8074
      %v8112 = vpack.c.b16 %v8077, %v8076
      %v8113 = vpack.c.b16 %v8079, %v8078
      %v8114 = vpack.c.b16 %v8081, %v8080
      %v8115 = vpack.c.b16 %v8083, %v8082
      %v8116 = vpack.c.b16 %v8085, %v8084
      %v8117 = vpack.c.b16 %v8087, %v8086
      %v8118 = vpack.c.b16 %v8089, %v8088
      %v8119 = vpack.c.b16 %v8091, %v8090
      %v8120 = vpack.c.b16 %v8093, %v8092
      %v8121 = vpack.c.b16 %v8095, %v8094
      %v8122 = vpack.c.b16 %v8097, %v8096
      %v8123 = vpack.c.b16 %v8099, %v8098
      %v8124 = vpack.c.b16 %v8101, %v8100
      %v8125 = vpack.c.b16 %v8103, %v8102
      %v8126 = vpack.c.b16 %v8105, %v8104
      %v8127 = vpack.c.b16 %v8107, %v8106
      %v8128 = vpack.c.b16 %v8109, %v8108
      %v8129 = vpack.c.b16 %v8110, %v8110
      %v8149 = vsel %vm1127, %v8029, 0
      %v8152 = vsel %vm1127, %v8032, 0
      %v8155 = vsel %vm1134, %v8129, 0
      %8157 = vmatprep.subr.bf16.mxu0 0
      %8158 = vmatpush1.bf16.msra.mxu0 %v8111
      %8159 = vmatprep.subr.bf16.mxu0 0
      %8160 = vmatpush1.bf16.msra.mxu0 %v8112
      %8161 = vmatprep.subr.bf16.mxu0 0
      %8162 = vmatpush1.bf16.msra.mxu0 %v8113
      %8163 = vmatprep.subr.bf16.mxu0 0
      %8164 = vmatpush1.bf16.msra.mxu0 %v8114
      %8165 = vmatprep.subr.bf16.mxu0 0
      %8166 = vmatpush1.bf16.msra.mxu0 %v8115
      %8167 = vmatprep.subr.bf16.mxu0 0
      %8168 = vmatpush1.bf16.msra.mxu0 %v8116
      %8169 = vmatprep.subr.bf16.mxu0 0
      %8170 = vmatpush1.bf16.msra.mxu0 %v8117
      %8171 = vmatprep.subr.bf16.mxu0 0
      %8172 = vmatpush1.bf16.msra.mxu0 %v8118
      %8173 = vmatprep.subr.bf16.mxu0 0
      %8174 = vmatpush1.bf16.msra.mxu0 %v8119
      %8175 = vmatprep.subr.bf16.mxu0 0
      %8176 = vmatpush1.bf16.msra.mxu0 %v8120
      %8177 = vmatprep.subr.bf16.mxu0 0
      %8178 = vmatpush1.bf16.msra.mxu0 %v8121
      %8179 = vmatprep.subr.bf16.mxu0 0
      %8180 = vmatpush1.bf16.msra.mxu0 %v8122
      %8181 = vmatprep.subr.bf16.mxu0 0
      %8182 = vmatpush1.bf16.msra.mxu0 %v8123
      %8183 = vmatprep.subr.bf16.mxu0 0
      %8184 = vmatpush1.bf16.msra.mxu0 %v8124
      %8185 = vmatprep.subr.bf16.mxu0 0
      %8186 = vmatpush1.bf16.msra.mxu0 %v8125
      %8187 = vmatprep.subr.bf16.mxu0 0
      %8188 = vmatpush1.bf16.msra.mxu0 %v8126
      %8189 = vmatprep.mubr.bf16.mxu0 %v8028
      %8190 = vmatmul.mubr.bf16.gmra.mrb[0].mxu0 %v8027
      %v8191 = vpop.f32.mrb[0].mxu0
      %v8192 = vadd.f32 0.0, %v8191
      %v8193 = vpop.f32.mrb[0].mxu0
      %v8194 = vpop.f32.mrb[0].mxu0
      %v8195 = vadd.f32 0.0, %v8194
      %v8196 = vpop.f32.mrb[0].mxu0
      %8197 = vmatprep.mubr.bf16.mxu0 %v8031
      %8198 = vmatmul.mubr.bf16.gmra.mrb[0].mxu0 %v8030
      %v8199 = vpop.f32.mrb[0].mxu0
      %v8200 = vadd.f32 0.0, %v8199
      %v8201 = vpop.f32.mrb[0].mxu0
      %v8202 = vpop.f32.mrb[0].mxu0
      %v8203 = vadd.f32 0.0, %v8202
      %v8204 = vpop.f32.mrb[0].mxu0
      %8205 = vdwg.mxu0
      %8206 = vmatprep.subr.bf16.mxu0 0
      %8207 = vmatpush1.bf16.msra.mxu0 %v8127
      %8208 = vmatprep.subr.bf16.mxu0 0
      %8209 = vmatpush1.bf16.msra.mxu0 %v8128
      %8210 = vmatprep.subr.bf16.mxu0 0
      %8211 = vmatpush1.bf16.msra.mxu0 %v8155
      %8212 = vmatprep.subr.bf16.mxu0 0
      %8213 = vmatpush1.bf16.msra.mxu0 0
      %8214 = vmatprep.subr.bf16.mxu0 0
      %8215 = vmatpush1.bf16.msra.mxu0 0
      %8216 = vmatprep.subr.bf16.mxu0 0
      %8217 = vmatpush1.bf16.msra.mxu0 0
      %8218 = vmatprep.subr.bf16.mxu0 0
      %8219 = vmatpush1.bf16.msra.mxu0 0
      %8220 = vmatprep.subr.bf16.mxu0 0
      %8221 = vmatpush1.bf16.msra.mxu0 0
      %8222 = vmatprep.subr.bf16.mxu0 0
      %8223 = vmatpush1.bf16.msra.mxu0 0
      %8224 = vmatprep.subr.bf16.mxu0 0
      %8225 = vmatpush1.bf16.msra.mxu0 0
      %8226 = vmatprep.subr.bf16.mxu0 0
      %8227 = vmatpush1.bf16.msra.mxu0 0
      %8228 = vmatprep.subr.bf16.mxu0 0
      %8229 = vmatpush1.bf16.msra.mxu0 0
      %8230 = vmatprep.subr.bf16.mxu0 0
      %8231 = vmatpush1.bf16.msra.mxu0 0
      %8232 = vmatprep.subr.bf16.mxu0 0
      %8233 = vmatpush1.bf16.msra.mxu0 0
      %8234 = vmatprep.subr.bf16.mxu0 0
      %8235 = vmatpush1.bf16.msra.mxu0 0
      %8236 = vmatprep.subr.bf16.mxu0 0
      %8237 = vmatpush1.bf16.msra.mxu0 0
      %8238 = vmatprep.mubr.bf16.mxu0 0
      %8239 = vmatmul.mubr.bf16.gmra.mrb[0].mxu0 %v8149
      %v8240 = vpop.f32.mrb[0].mxu0
      %v8241 = vadd.f32 %v8192, %v8240
      %v8242 = vpop.f32.mrb[0].mxu0
      %v8243 = vpop.f32.mrb[0].mxu0
      %v8244 = vadd.f32 %v8195, %v8243
      %v8245 = vpop.f32.mrb[0].mxu0
      %8246 = vmatprep.mubr.bf16.mxu0 0
      %8247 = vmatmul.mubr.bf16.gmra.mrb[0].mxu0 %v8152
      %v8248 = vpop.f32.mrb[0].mxu0
      %v8249 = vadd.f32 %v8200, %v8248
      %v8250 = vpop.f32.mrb[0].mxu0
      %v8251 = vpop.f32.mrb[0].mxu0
      %v8252 = vadd.f32 %v8203, %v8251
      %v8253 = vpop.f32.mrb[0].mxu0
      %8254 = vdwg.mxu0
      %8255 = vst [vmem:[%s224] sm:$0xff] %v8241
      %8256 = vst [vmem:[%s224 + $0x8] sm:$0xff] %v8244
      %8257 = vst [vmem:[%s224 + $0x10] sm:$0xff] %v8249
      %8258 = vst [vmem:[%s224 + $0x18] sm:$0xff] %v8252
      %p8259 = scmp.lt.s32.totalorder %s16, 1
      %s8260 = scalar_select %p8259, %s16, 1
      %s8261 = smul.addr %s8260, 4
      %s8262 = smul.addr %s8261, 8
      %s8263 = scalar_lea.vmem %s5, %s8262
      // Predicated region
      $region41: #{conv_mapping_forward.1} parent=39 // pred_check
        %p8264 = pneg %p144
      $region42: #{conv_mapping_forward.1} parent=39 // pred_check_branch
        %8266 = sbr.rel (%p8264) target = $region44
      $region43: #{conv_mapping_forward.1} parent=39 // pred_region
        _
      $region44: #{conv_mapping_forward.1} parent=39 // pred_fallthru
        _
    $region40: #{conv_mapping_forward.1} parent=5 // pred_fallthru
      _
    %p8267 = scmp.le.s32.totalorder 2, %s11
    // Predicated region
    $region45: #{conv_mapping_forward.1} parent=5 // pred_check
      %p8268 = pneg %p8267
    $region46: #{conv_mapping_forward.1} parent=5 // pred_check_branch
      %8270 = sbr.rel (%p8268) target = $region48
    $region47: #{conv_mapping_forward.1} parent=5 // pred_region
      %s8271 = ssub.s32 %s11, 2
      // Predicated region
      $region49: #{conv_mapping_forward.1} parent=47 // pred_check
        %p8272 = pneg %p150
      $region50: #{conv_mapping_forward.1} parent=47 // pred_check_branch
        %8274 = sbr.rel (%p8272) target = $region52
      $region51: #{conv_mapping_forward.1} parent=47 // pred_region
        %p8275 = scmp.lt.s32.totalorder %s17, 1
        %s8276 = scalar_select %p8275, %s17, 1
        %s8277 = smul.addr %s8276, 4
        %s8278 = smul.addr %s8277, 8
        %s8279 = scalar_lea.vmem %s5, %s8278
      $region52: #{conv_mapping_forward.1} parent=47 // pred_fallthru
        _
    $region48: #{conv_mapping_forward.1} parent=5 // pred_fallthru
      _
  $region6: #{conv_mapping_forward.1} parent=0 // loop_footer
    %s15 = sadd.s32 1, %s11
  $region7: #{conv_mapping_forward.1} parent=0 // loop_footer_branch
    %10 = sbr.rel target = $region3
  $region8: #{conv_mapping_forward.1} parent=0 // loop_exit
    _

</llo_original>
